<compile_context>
chip_gen: v7x
topology: tpu7x:2x2x1
jax: 0.10.0
libtpu: 0.0.40
codegen_flags: <defaults>
</compile_context>

<pallas_src>
import math

import numpy as np

import jax
import jax.numpy as jnp
from jax.experimental import pallas as pl
from jax.experimental.pallas import tpu as pltpu

_LANE = 128
# Scoped-VMEM ceiling handed to Mosaic; 32 MiB is safe on every generation
# (v7x only has 64 MiB physical VMEM).  _pick_tm budgets well below it.
_VMEM_LIMIT = 32 * 1024 * 1024
# Per-step budget used to size the M tiles (headroom left for the resident weight
# tile, per-channel vectors and compiler scratch under _VMEM_LIMIT).
_TILE_VMEM_BUDGET = 16 * 1024 * 1024
_TM_CAP = 2048


def _cdiv(a, b):
    return -(-a // b)


def _round_up(a, b):
    return _cdiv(a, b) * b


# ---------------------------------------------------------------------------
# Pallas kernels
# ---------------------------------------------------------------------------
def _matmul_bias_act_kernel(slope):
    """(tm, K) @ (K, C) + bias, optional LeakyReLU.  No BatchNorm."""

    def kernel(x_ref, w_ref, b_ref, o_ref):
        y = jnp.dot(x_ref[...], w_ref[...], preferred_element_type=jnp.float32)
        y = y + b_ref[...]
        if slope is not None:
            y = jnp.where(y >= 0.0, y, slope * y)
        o_ref[...] = y.astype(o_ref.dtype)

    return kernel


def _fused_conv_bn_act_kernel(slope, eps):
    """Single-tile fusion: matmul + bias + exact training-mode BatchNorm
    (centered variance) + LeakyReLU, one HBM write."""

    def kernel(x_ref, w_ref, b_ref, g_ref, be_ref, o_ref):
        y = jnp.dot(x_ref[...], w_ref[...], preferred_element_type=jnp.float32)
        y = y + b_ref[...]
        inv_cnt = 1.0 / y.shape[0]
        mean = jnp.sum(y, axis=0, keepdims=True) * inv_cnt
        d = y - mean
        var = jnp.sum(d * d, axis=0, keepdims=True) * inv_cnt
        scale = g_ref[...] * jax.lax.rsqrt(var + eps)
        shift = be_ref[...] - mean * scale
        y = y * scale + shift
        if slope is not None:
            y = jnp.where(y >= 0.0, y, slope * y)
        o_ref[...] = y.astype(o_ref.dtype)

    return kernel


def _matmul_bias_partial_stats_kernel(tm, m_real):
    """Multi-tile BN pass 1: matmul + bias, bf16 store of pre-norm activations and
    per-tile partial sum / sum-of-squares of the *pre-bias* matmul output over the
    real (un-padded) rows.  Per-tile partials keep the grid axis 'parallel'."""

    def kernel(x_ref, w_ref, b_ref, y_ref, psum_ref, psq_ref):
        i = pl.program_id(0)
        z = jnp.dot(x_ref[...], w_ref[...], preferred_element_type=jnp.float32)
        y_ref[...] = (z + b_ref[...]).astype(y_ref.dtype)
        rows = jax.lax.broadcasted_iota(jnp.int32, (tm, 1), 0) + i * tm
        mask = rows < m_real
        zs = jnp.where(mask, z, 0.0)
        zq = jnp.where(mask, z * z, 0.0)
        psum_ref[...] = jnp.broadcast_to(
            jnp.sum(zs, axis=0, keepdims=True), psum_ref.shape)
        psq_ref[...] = jnp.broadcast_to(
            jnp.sum(zq, axis=0, keepdims=True), psq_ref.shape)

    return kernel


def _affine_act_kernel(slope):
    """Multi-tile BN pass 2: y * scale + shift (folded BatchNorm), LeakyReLU."""

    def kernel(y_ref, scale_ref, shift_ref, o_ref):
        y = y_ref[...].astype(jnp.float32) * scale_ref[...] + shift_ref[...]
        if slope is not None:
            y = jnp.where(y >= 0.0, y, slope * y)
        o_ref[...] = y.astype(o_ref.dtype)

    return kernel


def _conv1_spp_kernel(x_ref, w_ref, mask_ref, spp_ref):
    """Final conv1 (single output channel, no bias) fused with spatial-pyramid max
    pooling: lane-broadcast the conv map across the (sample, bin) columns, mask with
    the static window-membership mask, reduce max over rows.  Lane-dense output."""
    y = jnp.dot(x_ref[...], w_ref[...], preferred_element_type=jnp.float32)
    col = y[:, 0:1]                                     # conv1 has cout == 1
    cand = jnp.where(mask_ref[...] > 0.5, col, -jnp.inf)
    spp_ref[...] = jnp.max(cand, axis=0, keepdims=True)


# ---------------------------------------------------------------------------
# Glue (plain JAX): im2col, tiling, parameter setup
# ---------------------------------------------------------------------------
def _im2col_padded(x_nhwc, kh, kw, k_pad):
    """im2col with the K zero-padding folded into the same concatenate, so the
    (M, k_pad) patch matrix is materialized exactly once."""
    n, h, w, c = x_nhwc.shape
    ho, wo = h - kh + 1, w - kw + 1
    cols = [x_nhwc[:, dy:dy + ho, dx:dx + wo, :]
            for dy in range(kh) for dx in range(kw)]
    k = kh * kw * c
    if k_pad > k:
        cols.append(jnp.zeros((n, ho, wo, k_pad - k), x_nhwc.dtype))
    patches = jnp.concatenate(cols, axis=-1)
    return patches.reshape(n * ho * wo, k_pad), (n, ho, wo)


def _pick_tm(m, k_pad, c_pad):
    """Balanced M tiling: a single full-size tile when it fits the VMEM budget
    (enables the fully fused BN path), otherwise equal-sized 8-aligned tiles (no
    mostly-padded last tile).  NOTE(v7x): at the shipped tiny sizes one fused call
    beats splitting across the 2 TensorCores (launch/HBM overhead dominates);
    larger inputs automatically get a multi-tile 'parallel' grid."""
    per_row = 2 * (k_pad * 2) + 2 * (c_pad * 4)     # dbl-buffered bf16 in + f32 out
    cap = max(256, min(_TM_CAP, (_TILE_VMEM_BUDGET // per_row) // 8 * 8))
    if m <= cap:
        return m, 1
    n_tiles = _cdiv(m, cap)
    tm = _round_up(_cdiv(m, n_tiles), 8)
    return tm, _cdiv(m, tm)


def _pad_vec(v, cout, c_pad):
    return jnp.pad(v.reshape(1, cout).astype(jnp.float32),
                   ((0, 0), (0, c_pad - cout)))


def conv_layer(x_nhwc, w_hwio, bias, gamma, beta, *, padding, use_bn, slope,
               out_dtype=jnp.bfloat16, eps=1e-5):
    kh, kw, cin, cout = w_hwio.shape
    if padding:
        x_nhwc = jnp.pad(
            x_nhwc, ((0, 0), (padding, padding), (padding, padding), (0, 0)))
    k = kh * kw * cin
    k_pad = _round_up(k, _LANE)
    c_pad = _round_up(cout, _LANE)
    x2d, (n, ho, wo) = _im2col_padded(x_nhwc.astype(jnp.bfloat16), kh, kw, k_pad)
    m = n * ho * wo
    tm, n_tiles = _pick_tm(m, k_pad, c_pad)

    w2d = jnp.pad(w_hwio.reshape(k, cout).astype(jnp.bfloat16),
                  ((0, k_pad - k), (0, c_pad - cout)))
    b2d = _pad_vec(bias, cout, c_pad)

    x_spec = pl.BlockSpec((tm, k_pad), lambda i: (i, 0))      # tiled over M
    w_spec = pl.BlockSpec((k_pad, c_pad), lambda i: (0, 0))   # resident weights
    v_spec = pl.BlockSpec((1, c_pad), lambda i: (0, 0))       # per-channel vectors
    y_spec = pl.BlockSpec((tm, c_pad), lambda i: (i, 0))
    params_par = pltpu.CompilerParams(dimension_semantics=("parallel",),
                                      vmem_limit_bytes=_VMEM_LIMIT)
    params_one = pltpu.CompilerParams(dimension_semantics=("arbitrary",),
                                      vmem_limit_bytes=_VMEM_LIMIT)

    if not use_bn:
        out2d = pl.pallas_call(
            _matmul_bias_act_kernel(slope),
            out_shape=jax.ShapeDtypeStruct((m, c_pad), out_dtype),
            grid=(n_tiles,),
            in_specs=[x_spec, w_spec, v_spec],
            out_specs=y_spec,
            compiler_params=params_par,
        )(x2d, w2d, b2d)
    elif n_tiles == 1:
        # Fully fused: conv + bias + exact centered BN stats + affine + LeakyReLU.
        g2d = _pad_vec(gamma, cout, c_pad)
        be2d = _pad_vec(beta, cout, c_pad)
        out2d = pl.pallas_call(
            _fused_conv_bn_act_kernel(slope, eps),
            out_shape=jax.ShapeDtypeStruct((m, c_pad), out_dtype),
            grid=(1,),
            in_specs=[x_spec, w_spec, v_spec, v_spec, v_spec],
            out_specs=y_spec,
            compiler_params=params_one,
        )(x2d, w2d, b2d, g2d, be2d)
    else:
        # Pass 1: tiled matmul + bias (bf16 store) + per-tile partial moments.
        p_spec = pl.BlockSpec((8, c_pad), lambda i: (i, 0))
        y2d, psum, psq = pl.pallas_call(
            _matmul_bias_partial_stats_kernel(tm, m),
            out_shape=(jax.ShapeDtypeStruct((m, c_pad), jnp.bfloat16),
                       jax.ShapeDtypeStruct((n_tiles * 8, c_pad), jnp.float32),
                       jax.ShapeDtypeStruct((n_tiles * 8, c_pad), jnp.float32)),
            grid=(n_tiles,),
            in_specs=[x_spec, w_spec, v_spec],
            out_specs=(y_spec, p_spec, p_spec),
            compiler_params=params_par,
        )(x2d, w2d, b2d)

        # Tiny per-channel folding in plain JAX (moments are of the pre-bias output).
        mean_z = jnp.sum(psum[0::8, :], axis=0, keepdims=True) / m
        e_z2 = jnp.sum(psq[0::8, :], axis=0, keepdims=True) / m
        var = jnp.maximum(e_z2 - mean_z * mean_z, 0.0)
        inv = jax.lax.rsqrt(var + eps)
        scale = _pad_vec(gamma, cout, c_pad) * inv
        shift = _pad_vec(beta, cout, c_pad) - (mean_z + b2d) * scale

        # Pass 2: tiled normalize + LeakyReLU.
        out2d = pl.pallas_call(
            _affine_act_kernel(slope),
            out_shape=jax.ShapeDtypeStruct((m, c_pad), out_dtype),
            grid=(n_tiles,),
            in_specs=[y_spec, v_spec, v_spec],
            out_specs=y_spec,
            compiler_params=params_par,
        )(y2d, scale, shift)

    return out2d[:, :cout].reshape(n, ho, wo, cout)


def _build_spp_mask(n, hf, wf, out_pool_size, lanes):
    """Static (M, lanes) window-membership mask for the fused conv1 + SPP kernel.
    Column n*total + bin selects the rows (flattened n,h,w) belonging to that bin."""
    total = sum(b * b for b in out_pool_size)
    mask = np.zeros((n * hf * wf, lanes), np.float32)
    bin0 = 0
    for b in out_pool_size:
        khh = math.ceil(hf / b)
        kww = math.ceil(wf / b)
        ph = (khh * b - hf + 1) // 2
        pw = (kww * b - wf + 1) // 2
        for i in range(b):
            for j in range(b):
                h0, h1 = max(i * khh - ph, 0), min((i + 1) * khh - ph, hf)
                w0, w1 = max(j * kww - pw, 0), min((j + 1) * kww - pw, wf)
                for s in range(n):
                    col = s * total + bin0 + i * b + j
                    for hh in range(h0, h1):
                        row0 = s * hf * wf + hh * wf
                        mask[row0 + w0:row0 + w1, col] = 1.0
        bin0 += b * b
    return mask


def _spp_reference(x_map, out_pool_size):
    """Plain-JAX SPP fallback (per perf review a dedicated pallas_call on the ~KB
    conv1 map costs more than the work it does)."""
    n, h, w = x_map.shape
    outs = []
    for b in out_pool_size:
        khh = math.ceil(h / b)
        kww = math.ceil(w / b)
        ph = (khh * b - h + 1) // 2
        pw = (kww * b - w + 1) // 2
        xp = jnp.pad(x_map, ((0, 0), (ph, ph), (pw, pw)),
                     constant_values=-jnp.inf)
        xp = xp[:, :b * khh, :b * kww]
        xw = xp.reshape(n, b, khh, b, kww)
        outs.append(jnp.max(xw, axis=(2, 4)).reshape(n, b * b))
    return jnp.concatenate(outs, axis=-1)


def conv1_spp_layer(x_nhwc, w_hwio, out_pool_size):
    """Final Conv2d(curr_dim, 1, k=3, p=0, bias=False) + spatial_pyramid_pool."""
    kh, kw, cin, cout = w_hwio.shape
    k = kh * kw * cin
    k_pad = _round_up(k, _LANE)
    c_pad = _round_up(cout, _LANE)
    x2d, (n, ho, wo) = _im2col_padded(x_nhwc.astype(jnp.bfloat16), kh, kw, k_pad)
    m = n * ho * wo
    total = sum(b * b for b in out_pool_size)
    tm, n_tiles = _pick_tm(m, k_pad, c_pad)

    w2d = jnp.pad(w_hwio.reshape(k, cout).astype(jnp.bfloat16),
                  ((0, k_pad - k), (0, c_pad - cout)))

    if cout == 1 and n_tiles == 1 and n * total <= _LANE:
        # Fused conv1 + SPP: one kernel, lane-dense (1, 128) output, no conv map
        # ever written to HBM.
        lanes = _LANE
        mask = jnp.asarray(_build_spp_mask(n, ho, wo, out_pool_size, lanes))
        spp = pl.pallas_call(
            _conv1_spp_kernel,
            out_shape=jax.ShapeDtypeStruct((1, lanes), jnp.float32),
            grid=(1,),
            in_specs=[pl.BlockSpec((m, k_pad), lambda i: (0, 0)),
                      pl.BlockSpec((k_pad, c_pad), lambda i: (0, 0)),
                      pl.BlockSpec((m, lanes), lambda i: (0, 0))],
            out_specs=pl.BlockSpec((1, lanes), lambda i: (0, 0)),
            compiler_params=pltpu.CompilerParams(
                dimension_semantics=("arbitrary",),
                vmem_limit_bytes=_VMEM_LIMIT),
        )(x2d, w2d, mask)
        return spp[0, :n * total].reshape(n, total)

    # Fallback: tiled conv1 matmul, SPP on the tiny single-channel map in plain JAX.
    x_spec = pl.BlockSpec((tm, k_pad), lambda i: (i, 0))
    w_spec = pl.BlockSpec((k_pad, c_pad), lambda i: (0, 0))
    v_spec = pl.BlockSpec((1, c_pad), lambda i: (0, 0))
    y_spec = pl.BlockSpec((tm, c_pad), lambda i: (i, 0))
    out2d = pl.pallas_call(
        _matmul_bias_act_kernel(None),
        out_shape=jax.ShapeDtypeStruct((m, c_pad), jnp.float32),
        grid=(n_tiles,),
        in_specs=[x_spec, w_spec, v_spec],
        out_specs=y_spec,
        compiler_params=pltpu.CompilerParams(
            dimension_semantics=("parallel",),
            vmem_limit_bytes=_VMEM_LIMIT),
    )(x2d, w2d, jnp.zeros((1, c_pad), jnp.float32))
    x_map = out2d[:, 0].reshape(n, ho, wo)
    return _spp_reference(x_map, out_pool_size)


# ---------------------------------------------------------------------------
# Parameters and forward pass
# ---------------------------------------------------------------------------
def init_params(key, conv_dim=8, repeat_num=4):
    """Deterministic synthetic parameters matching D_V's layer shapes (HWIO weights)."""
    params = []
    # layer 0: Conv2d(3, conv_dim, k=3, s=1, p=0) + LeakyReLU(0.1)
    key, k1, k2 = jax.random.split(key, 3)
    params.append(dict(
        w=0.1 * jax.random.normal(k1, (3, 3, 3, conv_dim), jnp.float32),
        b=0.05 * jax.random.normal(k2, (conv_dim,), jnp.float32),
        gamma=jnp.ones((conv_dim,), jnp.float32),
        beta=jnp.zeros((conv_dim,), jnp.float32),
        padding=0, use_bn=False, slope=0.1))
    curr = conv_dim
    for _ in range(repeat_num):
        # Conv2d(curr, 2*curr, k=4, s=1, p=1) + BatchNorm2d + LeakyReLU(0.2)
        key, k1, k2, k3, k4 = jax.random.split(key, 5)
        scale = 1.0 / math.sqrt(16 * curr)
        params.append(dict(
            w=scale * jax.random.normal(k1, (4, 4, curr, 2 * curr), jnp.float32),
            b=0.05 * jax.random.normal(k2, (2 * curr,), jnp.float32),
            gamma=1.0 + 0.1 * jax.random.normal(k3, (2 * curr,), jnp.float32),
            beta=0.1 * jax.random.normal(k4, (2 * curr,), jnp.float32),
            padding=1, use_bn=True, slope=0.2))
        curr *= 2
    # conv1: Conv2d(curr, 1, k=3, s=1, p=0, bias=False), no activation
    key, k1 = jax.random.split(key)
    params.append(dict(
        w=(1.0 / math.sqrt(9 * curr)) * jax.random.normal(
            k1, (3, 3, curr, 1), jnp.float32),
        b=jnp.zeros((1,), jnp.float32),      # bias=False
        gamma=jnp.ones((1,), jnp.float32),
        beta=jnp.zeros((1,), jnp.float32),
        padding=0, use_bn=False, slope=None))
    return params


def d_v_forward(x_nchw, params, output_num=(4, 2, 1)):
    x = jnp.transpose(x_nchw, (0, 2, 3, 1)).astype(jnp.float32)  # NCHW -> NHWC
    for p in params[:-1]:
        x = conv_layer(x, p["w"], p["b"], p["gamma"], p["beta"],
                       padding=p["padding"], use_bn=p["use_bn"], slope=p["slope"],
                       out_dtype=jnp.bfloat16)
    return conv1_spp_layer(x, params[-1]["w"], list(output_num))


if __name__ == "__main__":
    key = jax.random.PRNGKey(0)
    kx, kp = jax.random.split(key)
    params = init_params(kp, conv_dim=8, repeat_num=4)
    fwd = jax.jit(lambda xx: d_v_forward(xx, params))

    # Small input: every layer is a single fully-fused pallas_call (conv+BN+act and
    # conv1+SPP), the dominant regime the perf review targets.
    x = jax.random.normal(kx, (2, 3, 16, 16), jnp.float32)
    out = jax.block_until_ready(fwd(x))
    assert out.shape == (2, 21), out.shape
    assert bool(jnp.all(jnp.isfinite(out)))

    # Larger input: exercises the multi-tile "parallel" path (balanced tiles, ragged
    # last tile, per-tile BN partial moments, bf16 pre-norm store, SPP fallback).
    x_big = jax.random.normal(kx, (1, 3, 56, 56), jnp.float32)
    out_big = jax.block_until_ready(fwd(x_big))
    assert out_big.shape == (1, 21), out_big.shape
    assert bool(jnp.all(jnp.isfinite(out_big)))

    print("KERNEL_OK")
</pallas_src>

<mosaic_0001>
module attributes {stable_mosaic.version = 11 : i64} {
  func.func @kernel(%arg0: i32, %arg1: memref<392x128xbf16, #tpu.memory_space<vmem>>, %arg2: memref<128x128xbf16, #tpu.memory_space<vmem>>, %arg3: memref<1x128xf32, #tpu.memory_space<vmem>>, %arg4: memref<392x128xbf16, #tpu.memory_space<vmem>>) attributes {dimension_semantics = [#tpu.dimension_semantics<parallel>], iteration_bounds = array<i64: 1>, scalar_prefetch = 0 : i64, scratch_operands = 0 : i64, tpu.core_type = #tpu.core_type<tc>, window_params = [{transform_indices = @transform_0, window_bounds = array<i64: 392, 128>}, {pipeline_mode = #tpu.pipeline_mode<synchronous>, transform_indices = @transform_1, window_bounds = array<i64: 128, 128>}, {pipeline_mode = #tpu.pipeline_mode<synchronous>, transform_indices = @transform_2, window_bounds = array<i64: 1, 128>}, {transform_indices = @transform_3, window_bounds = array<i64: 392, 128>}]} {
    %c0 = arith.constant 0 : index
    %c0_0 = arith.constant 0 : index
    %0 = vector.load %arg1[%c0, %c0_0] : memref<392x128xbf16, #tpu.memory_space<vmem>>, vector<392x128xbf16>
    %c0_1 = arith.constant 0 : index
    %c0_2 = arith.constant 0 : index
    %1 = vector.load %arg2[%c0_1, %c0_2] : memref<128x128xbf16, #tpu.memory_space<vmem>>, vector<128x128xbf16>
    %cst = arith.constant dense<0.000000e+00> : vector<392x128xf32>
    %2 = tpu.matmul %0, %1, %cst {dimension_numbers = #tpu.dot_dimension_numbers<[1], [0], [0], [1], [0, 0, 1, 1], [], []>} : vector<392x128xbf16>, vector<128x128xbf16>, vector<392x128xf32> -> vector<392x128xf32>
    %c0_3 = arith.constant 0 : index
    %c0_4 = arith.constant 0 : index
    %3 = vector.load %arg3[%c0_3, %c0_4] : memref<1x128xf32, #tpu.memory_space<vmem>>, vector<1x128xf32>
    %4 = vector.broadcast %3 : vector<1x128xf32> to vector<392x128xf32>
    %5 = arith.addf %2, %4 : vector<392x128xf32>
    %cst_5 = arith.constant 0.000000e+00 : f32
    %6 = vector.broadcast %cst_5 : f32 to vector<392x128xf32>
    %7 = arith.cmpf oge, %5, %6 : vector<392x128xf32>
    %cst_6 = arith.constant 1.000000e-01 : f32
    %8 = vector.broadcast %cst_6 : f32 to vector<392x128xf32>
    %9 = arith.mulf %8, %5 : vector<392x128xf32>
    %10 = arith.select %7, %5, %9 : vector<392x128xi1>, vector<392x128xf32>
    %11 = arith.truncf %10 : vector<392x128xf32> to vector<392x128xbf16>
    %c0_7 = arith.constant 0 : index
    %c0_8 = arith.constant 0 : index
    %12 = vector.load %arg4[%c0_7, %c0_8] : memref<392x128xbf16, #tpu.memory_space<vmem>>, vector<392x128xbf16>
    tpu.vector_store %arg4[%c0_7, %c0_8], %11 {strides = array<i32>} : memref<392x128xbf16, #tpu.memory_space<vmem>>, vector<392x128xbf16>,
    return
  }
  func.func @transform_0(%arg0: i32) -> (i32, i32) {
    %c0_i32 = arith.constant 0 : i32
    %c0_i32_0 = arith.constant 0 : i32
    return %arg0, %c0_i32 : i32, i32
  }
  func.func @transform_1(%arg0: i32) -> (i32, i32) {
    %c0_i32 = arith.constant 0 : i32
    %c0_i32_0 = arith.constant 0 : i32
    %c0_i32_1 = arith.constant 0 : i32
    return %c0_i32, %c0_i32_0 : i32, i32
  }
  func.func @transform_2(%arg0: i32) -> (i32, i32) {
    %c0_i32 = arith.constant 0 : i32
    %c0_i32_0 = arith.constant 0 : i32
    %c0_i32_1 = arith.constant 0 : i32
    return %c0_i32, %c0_i32_0 : i32, i32
  }
  func.func @transform_3(%arg0: i32) -> (i32, i32) {
    %c0_i32 = arith.constant 0 : i32
    %c0_i32_0 = arith.constant 0 : i32
    return %arg0, %c0_i32 : i32, i32
  }
}

module attributes {stable_mosaic.version = 11 : i64} {
  func.func @kernel(%arg0: i32, %arg1: memref<338x128xbf16, #tpu.memory_space<vmem>>, %arg2: memref<128x128xbf16, #tpu.memory_space<vmem>>, %arg3: memref<1x128xf32, #tpu.memory_space<vmem>>, %arg4: memref<1x128xf32, #tpu.memory_space<vmem>>, %arg5: memref<1x128xf32, #tpu.memory_space<vmem>>, %arg6: memref<338x128xbf16, #tpu.memory_space<vmem>>) attributes {dimension_semantics = [#tpu.dimension_semantics<arbitrary>], iteration_bounds = array<i64: 1>, scalar_prefetch = 0 : i64, scratch_operands = 0 : i64, tpu.core_type = #tpu.core_type<tc>, window_params = [{transform_indices = @transform_0, window_bounds = array<i64: 338, 128>}, {pipeline_mode = #tpu.pipeline_mode<synchronous>, transform_indices = @transform_1, window_bounds = array<i64: 128, 128>}, {pipeline_mode = #tpu.pipeline_mode<synchronous>, transform_indices = @transform_2, window_bounds = array<i64: 1, 128>}, {pipeline_mode = #tpu.pipeline_mode<synchronous>, transform_indices = @transform_3, window_bounds = array<i64: 1, 128>}, {pipeline_mode = #tpu.pipeline_mode<synchronous>, transform_indices = @transform_4, window_bounds = array<i64: 1, 128>}, {transform_indices = @transform_5, window_bounds = array<i64: 338, 128>}]} {
    %c0 = arith.constant 0 : index
    %c0_0 = arith.constant 0 : index
    %0 = vector.load %arg1[%c0, %c0_0] : memref<338x128xbf16, #tpu.memory_space<vmem>>, vector<338x128xbf16>
    %c0_1 = arith.constant 0 : index
    %c0_2 = arith.constant 0 : index
    %1 = vector.load %arg2[%c0_1, %c0_2] : memref<128x128xbf16, #tpu.memory_space<vmem>>, vector<128x128xbf16>
    %cst = arith.constant dense<0.000000e+00> : vector<338x128xf32>
    %2 = tpu.matmul %0, %1, %cst {dimension_numbers = #tpu.dot_dimension_numbers<[1], [0], [0], [1], [0, 0, 1, 1], [], []>} : vector<338x128xbf16>, vector<128x128xbf16>, vector<338x128xf32> -> vector<338x128xf32>
    %c0_3 = arith.constant 0 : index
    %c0_4 = arith.constant 0 : index
    %3 = vector.load %arg3[%c0_3, %c0_4] : memref<1x128xf32, #tpu.memory_space<vmem>>, vector<1x128xf32>
    %4 = vector.broadcast %3 : vector<1x128xf32> to vector<338x128xf32>
    %5 = arith.addf %2, %4 : vector<338x128xf32>
    %cst_5 = arith.constant dense<0.000000e+00> : vector<128xf32>
    %6 = vector.multi_reduction <add>, %5, %cst_5 [0] : vector<338x128xf32> to vector<128xf32>
    %7 = vector.shape_cast %6 : vector<128xf32> to vector<1x128xf32>
    %cst_6 = arith.constant 2.958580e-03 : f32
    %8 = vector.broadcast %cst_6 : f32 to vector<1x128xf32>
    %9 = arith.mulf %7, %8 : vector<1x128xf32>
    %10 = vector.broadcast %9 : vector<1x128xf32> to vector<338x128xf32>
    %11 = arith.subf %5, %10 : vector<338x128xf32>
    %12 = arith.mulf %11, %11 : vector<338x128xf32>
    %cst_7 = arith.constant dense<0.000000e+00> : vector<128xf32>
    %13 = vector.multi_reduction <add>, %12, %cst_7 [0] : vector<338x128xf32> to vector<128xf32>
    %14 = vector.shape_cast %13 : vector<128xf32> to vector<1x128xf32>
    %cst_8 = arith.constant 2.958580e-03 : f32
    %15 = vector.broadcast %cst_8 : f32 to vector<1x128xf32>
    %16 = arith.mulf %14, %15 : vector<1x128xf32>
    %c0_9 = arith.constant 0 : index
    %c0_10 = arith.constant 0 : index
    %17 = vector.load %arg4[%c0_9, %c0_10] : memref<1x128xf32, #tpu.memory_space<vmem>>, vector<1x128xf32>
    %cst_11 = arith.constant 9.99999974E-6 : f32
    %18 = vector.broadcast %cst_11 : f32 to vector<1x128xf32>
    %19 = arith.addf %16, %18 : vector<1x128xf32>
    %20 = math.rsqrt %19 : vector<1x128xf32>
    %21 = arith.mulf %17, %20 : vector<1x128xf32>
    %c0_12 = arith.constant 0 : index
    %c0_13 = arith.constant 0 : index
    %22 = vector.load %arg5[%c0_12, %c0_13] : memref<1x128xf32, #tpu.memory_space<vmem>>, vector<1x128xf32>
    %23 = arith.mulf %9, %21 : vector<1x128xf32>
    %24 = arith.subf %22, %23 : vector<1x128xf32>
    %25 = vector.broadcast %21 : vector<1x128xf32> to vector<338x128xf32>
    %26 = arith.mulf %5, %25 : vector<338x128xf32>
    %27 = vector.broadcast %24 : vector<1x128xf32> to vector<338x128xf32>
    %28 = arith.addf %26, %27 : vector<338x128xf32>
    %cst_14 = arith.constant 0.000000e+00 : f32
    %29 = vector.broadcast %cst_14 : f32 to vector<338x128xf32>
    %30 = arith.cmpf oge, %28, %29 : vector<338x128xf32>
    %cst_15 = arith.constant 2.000000e-01 : f32
    %31 = vector.broadcast %cst_15 : f32 to vector<338x128xf32>
    %32 = arith.mulf %31, %28 : vector<338x128xf32>
    %33 = arith.select %30, %28, %32 : vector<338x128xi1>, vector<338x128xf32>
    %34 = arith.truncf %33 : vector<338x128xf32> to vector<338x128xbf16>
    %c0_16 = arith.constant 0 : index
    %c0_17 = arith.constant 0 : index
    %35 = vector.load %arg6[%c0_16, %c0_17] : memref<338x128xbf16, #tpu.memory_space<vmem>>, vector<338x128xbf16>
    tpu.vector_store %arg6[%c0_16, %c0_17], %34 {strides = array<i32>} : memref<338x128xbf16, #tpu.memory_space<vmem>>, vector<338x128xbf16>,
    return
  }
  func.func @transform_0(%arg0: i32) -> (i32, i32) {
    %c0_i32 = arith.constant 0 : i32
    %c0_i32_0 = arith.constant 0 : i32
    return %arg0, %c0_i32 : i32, i32
  }
  func.func @transform_1(%arg0: i32) -> (i32, i32) {
    %c0_i32 = arith.constant 0 : i32
    %c0_i32_0 = arith.constant 0 : i32
    %c0_i32_1 = arith.constant 0 : i32
    return %c0_i32, %c0_i32_0 : i32, i32
  }
  func.func @transform_2(%arg0: i32) -> (i32, i32) {
    %c0_i32 = arith.constant 0 : i32
    %c0_i32_0 = arith.constant 0 : i32
    %c0_i32_1 = arith.constant 0 : i32
    return %c0_i32, %c0_i32_0 : i32, i32
  }
  func.func @transform_3(%arg0: i32) -> (i32, i32) {
    %c0_i32 = arith.constant 0 : i32
    %c0_i32_0 = arith.constant 0 : i32
    %c0_i32_1 = arith.constant 0 : i32
    return %c0_i32, %c0_i32_0 : i32, i32
  }
  func.func @transform_4(%arg0: i32) -> (i32, i32) {
    %c0_i32 = arith.constant 0 : i32
    %c0_i32_0 = arith.constant 0 : i32
    %c0_i32_1 = arith.constant 0 : i32
    return %c0_i32, %c0_i32_0 : i32, i32
  }
  func.func @transform_5(%arg0: i32) -> (i32, i32) {
    %c0_i32 = arith.constant 0 : i32
    %c0_i32_0 = arith.constant 0 : i32
    return %arg0, %c0_i32 : i32, i32
  }
}

module attributes {stable_mosaic.version = 11 : i64} {
  func.func @kernel(%arg0: i32, %arg1: memref<288x256xbf16, #tpu.memory_space<vmem>>, %arg2: memref<256x128xbf16, #tpu.memory_space<vmem>>, %arg3: memref<1x128xf32, #tpu.memory_space<vmem>>, %arg4: memref<1x128xf32, #tpu.memory_space<vmem>>, %arg5: memref<1x128xf32, #tpu.memory_space<vmem>>, %arg6: memref<288x128xbf16, #tpu.memory_space<vmem>>) attributes {dimension_semantics = [#tpu.dimension_semantics<arbitrary>], iteration_bounds = array<i64: 1>, scalar_prefetch = 0 : i64, scratch_operands = 0 : i64, tpu.core_type = #tpu.core_type<tc>, window_params = [{transform_indices = @transform_0, window_bounds = array<i64: 288, 256>}, {pipeline_mode = #tpu.pipeline_mode<synchronous>, transform_indices = @transform_1, window_bounds = array<i64: 256, 128>}, {pipeline_mode = #tpu.pipeline_mode<synchronous>, transform_indices = @transform_2, window_bounds = array<i64: 1, 128>}, {pipeline_mode = #tpu.pipeline_mode<synchronous>, transform_indices = @transform_3, window_bounds = array<i64: 1, 128>}, {pipeline_mode = #tpu.pipeline_mode<synchronous>, transform_indices = @transform_4, window_bounds = array<i64: 1, 128>}, {transform_indices = @transform_5, window_bounds = array<i64: 288, 128>}]} {
    %c0 = arith.constant 0 : index
    %c0_0 = arith.constant 0 : index
    %0 = vector.load %arg1[%c0, %c0_0] : memref<288x256xbf16, #tpu.memory_space<vmem>>, vector<288x256xbf16>
    %c0_1 = arith.constant 0 : index
    %c0_2 = arith.constant 0 : index
    %1 = vector.load %arg2[%c0_1, %c0_2] : memref<256x128xbf16, #tpu.memory_space<vmem>>, vector<256x128xbf16>
    %cst = arith.constant dense<0.000000e+00> : vector<288x128xf32>
    %2 = tpu.matmul %0, %1, %cst {dimension_numbers = #tpu.dot_dimension_numbers<[1], [0], [0], [1], [0, 0, 1, 1], [], []>} : vector<288x256xbf16>, vector<256x128xbf16>, vector<288x128xf32> -> vector<288x128xf32>
    %c0_3 = arith.constant 0 : index
    %c0_4 = arith.constant 0 : index
    %3 = vector.load %arg3[%c0_3, %c0_4] : memref<1x128xf32, #tpu.memory_space<vmem>>, vector<1x128xf32>
    %4 = vector.broadcast %3 : vector<1x128xf32> to vector<288x128xf32>
    %5 = arith.addf %2, %4 : vector<288x128xf32>
    %cst_5 = arith.constant dense<0.000000e+00> : vector<128xf32>
    %6 = vector.multi_reduction <add>, %5, %cst_5 [0] : vector<288x128xf32> to vector<128xf32>
    %7 = vector.shape_cast %6 : vector<128xf32> to vector<1x128xf32>
    %cst_6 = arith.constant 0.00347222225 : f32
    %8 = vector.broadcast %cst_6 : f32 to vector<1x128xf32>
    %9 = arith.mulf %7, %8 : vector<1x128xf32>
    %10 = vector.broadcast %9 : vector<1x128xf32> to vector<288x128xf32>
    %11 = arith.subf %5, %10 : vector<288x128xf32>
    %12 = arith.mulf %11, %11 : vector<288x128xf32>
    %cst_7 = arith.constant dense<0.000000e+00> : vector<128xf32>
    %13 = vector.multi_reduction <add>, %12, %cst_7 [0] : vector<288x128xf32> to vector<128xf32>
    %14 = vector.shape_cast %13 : vector<128xf32> to vector<1x128xf32>
    %cst_8 = arith.constant 0.00347222225 : f32
    %15 = vector.broadcast %cst_8 : f32 to vector<1x128xf32>
    %16 = arith.mulf %14, %15 : vector<1x128xf32>
    %c0_9 = arith.constant 0 : index
    %c0_10 = arith.constant 0 : index
    %17 = vector.load %arg4[%c0_9, %c0_10] : memref<1x128xf32, #tpu.memory_space<vmem>>, vector<1x128xf32>
    %cst_11 = arith.constant 9.99999974E-6 : f32
    %18 = vector.broadcast %cst_11 : f32 to vector<1x128xf32>
    %19 = arith.addf %16, %18 : vector<1x128xf32>
    %20 = math.rsqrt %19 : vector<1x128xf32>
    %21 = arith.mulf %17, %20 : vector<1x128xf32>
    %c0_12 = arith.constant 0 : index
    %c0_13 = arith.constant 0 : index
    %22 = vector.load %arg5[%c0_12, %c0_13] : memref<1x128xf32, #tpu.memory_space<vmem>>, vector<1x128xf32>
    %23 = arith.mulf %9, %21 : vector<1x128xf32>
    %24 = arith.subf %22, %23 : vector<1x128xf32>
    %25 = vector.broadcast %21 : vector<1x128xf32> to vector<288x128xf32>
    %26 = arith.mulf %5, %25 : vector<288x128xf32>
    %27 = vector.broadcast %24 : vector<1x128xf32> to vector<288x128xf32>
    %28 = arith.addf %26, %27 : vector<288x128xf32>
    %cst_14 = arith.constant 0.000000e+00 : f32
    %29 = vector.broadcast %cst_14 : f32 to vector<288x128xf32>
    %30 = arith.cmpf oge, %28, %29 : vector<288x128xf32>
    %cst_15 = arith.constant 2.000000e-01 : f32
    %31 = vector.broadcast %cst_15 : f32 to vector<288x128xf32>
    %32 = arith.mulf %31, %28 : vector<288x128xf32>
    %33 = arith.select %30, %28, %32 : vector<288x128xi1>, vector<288x128xf32>
    %34 = arith.truncf %33 : vector<288x128xf32> to vector<288x128xbf16>
    %c0_16 = arith.constant 0 : index
    %c0_17 = arith.constant 0 : index
    %35 = vector.load %arg6[%c0_16, %c0_17] : memref<288x128xbf16, #tpu.memory_space<vmem>>, vector<288x128xbf16>
    tpu.vector_store %arg6[%c0_16, %c0_17], %34 {strides = array<i32>} : memref<288x128xbf16, #tpu.memory_space<vmem>>, vector<288x128xbf16>,
    return
  }
  func.func @transform_0(%arg0: i32) -> (i32, i32) {
    %c0_i32 = arith.constant 0 : i32
    %c0_i32_0 = arith.constant 0 : i32
    return %arg0, %c0_i32 : i32, i32
  }
  func.func @transform_1(%arg0: i32) -> (i32, i32) {
    %c0_i32 = arith.constant 0 : i32
    %c0_i32_0 = arith.constant 0 : i32
    %c0_i32_1 = arith.constant 0 : i32
    return %c0_i32, %c0_i32_0 : i32, i32
  }
  func.func @transform_2(%arg0: i32) -> (i32, i32) {
    %c0_i32 = arith.constant 0 : i32
    %c0_i32_0 = arith.constant 0 : i32
    %c0_i32_1 = arith.constant 0 : i32
    return %c0_i32, %c0_i32_0 : i32, i32
  }
  func.func @transform_3(%arg0: i32) -> (i32, i32) {
    %c0_i32 = arith.constant 0 : i32
    %c0_i32_0 = arith.constant 0 : i32
    %c0_i32_1 = arith.constant 0 : i32
    return %c0_i32, %c0_i32_0 : i32, i32
  }
  func.func @transform_4(%arg0: i32) -> (i32, i32) {
    %c0_i32 = arith.constant 0 : i32
    %c0_i32_0 = arith.constant 0 : i32
    %c0_i32_1 = arith.constant 0 : i32
    return %c0_i32, %c0_i32_0 : i32, i32
  }
  func.func @transform_5(%arg0: i32) -> (i32, i32) {
    %c0_i32 = arith.constant 0 : i32
    %c0_i32_0 = arith.constant 0 : i32
    return %arg0, %c0_i32 : i32, i32
  }
}

module attributes {stable_mosaic.version = 11 : i64} {
  func.func @kernel(%arg0: i32, %arg1: memref<242x512xbf16, #tpu.memory_space<vmem>>, %arg2: memref<512x128xbf16, #tpu.memory_space<vmem>>, %arg3: memref<1x128xf32, #tpu.memory_space<vmem>>, %arg4: memref<1x128xf32, #tpu.memory_space<vmem>>, %arg5: memref<1x128xf32, #tpu.memory_space<vmem>>, %arg6: memref<242x128xbf16, #tpu.memory_space<vmem>>) attributes {dimension_semantics = [#tpu.dimension_semantics<arbitrary>], iteration_bounds = array<i64: 1>, scalar_prefetch = 0 : i64, scratch_operands = 0 : i64, tpu.core_type = #tpu.core_type<tc>, window_params = [{transform_indices = @transform_0, window_bounds = array<i64: 242, 512>}, {pipeline_mode = #tpu.pipeline_mode<synchronous>, transform_indices = @transform_1, window_bounds = array<i64: 512, 128>}, {pipeline_mode = #tpu.pipeline_mode<synchronous>, transform_indices = @transform_2, window_bounds = array<i64: 1, 128>}, {pipeline_mode = #tpu.pipeline_mode<synchronous>, transform_indices = @transform_3, window_bounds = array<i64: 1, 128>}, {pipeline_mode = #tpu.pipeline_mode<synchronous>, transform_indices = @transform_4, window_bounds = array<i64: 1, 128>}, {transform_indices = @transform_5, window_bounds = array<i64: 242, 128>}]} {
    %c0 = arith.constant 0 : index
    %c0_0 = arith.constant 0 : index
    %0 = vector.load %arg1[%c0, %c0_0] : memref<242x512xbf16, #tpu.memory_space<vmem>>, vector<242x512xbf16>
    %c0_1 = arith.constant 0 : index
    %c0_2 = arith.constant 0 : index
    %1 = vector.load %arg2[%c0_1, %c0_2] : memref<512x128xbf16, #tpu.memory_space<vmem>>, vector<512x128xbf16>
    %cst = arith.constant dense<0.000000e+00> : vector<242x128xf32>
    %2 = tpu.matmul %0, %1, %cst {dimension_numbers = #tpu.dot_dimension_numbers<[1], [0], [0], [1], [0, 0, 1, 1], [], []>} : vector<242x512xbf16>, vector<512x128xbf16>, vector<242x128xf32> -> vector<242x128xf32>
    %c0_3 = arith.constant 0 : index
    %c0_4 = arith.constant 0 : index
    %3 = vector.load %arg3[%c0_3, %c0_4] : memref<1x128xf32, #tpu.memory_space<vmem>>, vector<1x128xf32>
    %4 = vector.broadcast %3 : vector<1x128xf32> to vector<242x128xf32>
    %5 = arith.addf %2, %4 : vector<242x128xf32>
    %cst_5 = arith.constant dense<0.000000e+00> : vector<128xf32>
    %6 = vector.multi_reduction <add>, %5, %cst_5 [0] : vector<242x128xf32> to vector<128xf32>
    %7 = vector.shape_cast %6 : vector<128xf32> to vector<1x128xf32>
    %cst_6 = arith.constant 0.00413223123 : f32
    %8 = vector.broadcast %cst_6 : f32 to vector<1x128xf32>
    %9 = arith.mulf %7, %8 : vector<1x128xf32>
    %10 = vector.broadcast %9 : vector<1x128xf32> to vector<242x128xf32>
    %11 = arith.subf %5, %10 : vector<242x128xf32>
    %12 = arith.mulf %11, %11 : vector<242x128xf32>
    %cst_7 = arith.constant dense<0.000000e+00> : vector<128xf32>
    %13 = vector.multi_reduction <add>, %12, %cst_7 [0] : vector<242x128xf32> to vector<128xf32>
    %14 = vector.shape_cast %13 : vector<128xf32> to vector<1x128xf32>
    %cst_8 = arith.constant 0.00413223123 : f32
    %15 = vector.broadcast %cst_8 : f32 to vector<1x128xf32>
    %16 = arith.mulf %14, %15 : vector<1x128xf32>
    %c0_9 = arith.constant 0 : index
    %c0_10 = arith.constant 0 : index
    %17 = vector.load %arg4[%c0_9, %c0_10] : memref<1x128xf32, #tpu.memory_space<vmem>>, vector<1x128xf32>
    %cst_11 = arith.constant 9.99999974E-6 : f32
    %18 = vector.broadcast %cst_11 : f32 to vector<1x128xf32>
    %19 = arith.addf %16, %18 : vector<1x128xf32>
    %20 = math.rsqrt %19 : vector<1x128xf32>
    %21 = arith.mulf %17, %20 : vector<1x128xf32>
    %c0_12 = arith.constant 0 : index
    %c0_13 = arith.constant 0 : index
    %22 = vector.load %arg5[%c0_12, %c0_13] : memref<1x128xf32, #tpu.memory_space<vmem>>, vector<1x128xf32>
    %23 = arith.mulf %9, %21 : vector<1x128xf32>
    %24 = arith.subf %22, %23 : vector<1x128xf32>
    %25 = vector.broadcast %21 : vector<1x128xf32> to vector<242x128xf32>
    %26 = arith.mulf %5, %25 : vector<242x128xf32>
    %27 = vector.broadcast %24 : vector<1x128xf32> to vector<242x128xf32>
    %28 = arith.addf %26, %27 : vector<242x128xf32>
    %cst_14 = arith.constant 0.000000e+00 : f32
    %29 = vector.broadcast %cst_14 : f32 to vector<242x128xf32>
    %30 = arith.cmpf oge, %28, %29 : vector<242x128xf32>
    %cst_15 = arith.constant 2.000000e-01 : f32
    %31 = vector.broadcast %cst_15 : f32 to vector<242x128xf32>
    %32 = arith.mulf %31, %28 : vector<242x128xf32>
    %33 = arith.select %30, %28, %32 : vector<242x128xi1>, vector<242x128xf32>
    %34 = arith.truncf %33 : vector<242x128xf32> to vector<242x128xbf16>
    %c0_16 = arith.constant 0 : index
    %c0_17 = arith.constant 0 : index
    %35 = vector.load %arg6[%c0_16, %c0_17] : memref<242x128xbf16, #tpu.memory_space<vmem>>, vector<242x128xbf16>
    tpu.vector_store %arg6[%c0_16, %c0_17], %34 {strides = array<i32>} : memref<242x128xbf16, #tpu.memory_space<vmem>>, vector<242x128xbf16>,
    return
  }
  func.func @transform_0(%arg0: i32) -> (i32, i32) {
    %c0_i32 = arith.constant 0 : i32
    %c0_i32_0 = arith.constant 0 : i32
    return %arg0, %c0_i32 : i32, i32
  }
  func.func @transform_1(%arg0: i32) -> (i32, i32) {
    %c0_i32 = arith.constant 0 : i32
    %c0_i32_0 = arith.constant 0 : i32
    %c0_i32_1 = arith.constant 0 : i32
    return %c0_i32, %c0_i32_0 : i32, i32
  }
  func.func @transform_2(%arg0: i32) -> (i32, i32) {
    %c0_i32 = arith.constant 0 : i32
    %c0_i32_0 = arith.constant 0 : i32
    %c0_i32_1 = arith.constant 0 : i32
    return %c0_i32, %c0_i32_0 : i32, i32
  }
  func.func @transform_3(%arg0: i32) -> (i32, i32) {
    %c0_i32 = arith.constant 0 : i32
    %c0_i32_0 = arith.constant 0 : i32
    %c0_i32_1 = arith.constant 0 : i32
    return %c0_i32, %c0_i32_0 : i32, i32
  }
  func.func @transform_4(%arg0: i32) -> (i32, i32) {
    %c0_i32 = arith.constant 0 : i32
    %c0_i32_0 = arith.constant 0 : i32
    %c0_i32_1 = arith.constant 0 : i32
    return %c0_i32, %c0_i32_0 : i32, i32
  }
  func.func @transform_5(%arg0: i32) -> (i32, i32) {
    %c0_i32 = arith.constant 0 : i32
    %c0_i32_0 = arith.constant 0 : i32
    return %arg0, %c0_i32 : i32, i32
  }
}

module attributes {stable_mosaic.version = 11 : i64} {
  func.func @kernel(%arg0: i32, %arg1: memref<200x1024xbf16, #tpu.memory_space<vmem>>, %arg2: memref<1024x128xbf16, #tpu.memory_space<vmem>>, %arg3: memref<1x128xf32, #tpu.memory_space<vmem>>, %arg4: memref<1x128xf32, #tpu.memory_space<vmem>>, %arg5: memref<1x128xf32, #tpu.memory_space<vmem>>, %arg6: memref<200x128xbf16, #tpu.memory_space<vmem>>) attributes {dimension_semantics = [#tpu.dimension_semantics<arbitrary>], iteration_bounds = array<i64: 1>, scalar_prefetch = 0 : i64, scratch_operands = 0 : i64, tpu.core_type = #tpu.core_type<tc>, window_params = [{transform_indices = @transform_0, window_bounds = array<i64: 200, 1024>}, {pipeline_mode = #tpu.pipeline_mode<synchronous>, transform_indices = @transform_1, window_bounds = array<i64: 1024, 128>}, {pipeline_mode = #tpu.pipeline_mode<synchronous>, transform_indices = @transform_2, window_bounds = array<i64: 1, 128>}, {pipeline_mode = #tpu.pipeline_mode<synchronous>, transform_indices = @transform_3, window_bounds = array<i64: 1, 128>}, {pipeline_mode = #tpu.pipeline_mode<synchronous>, transform_indices = @transform_4, window_bounds = array<i64: 1, 128>}, {transform_indices = @transform_5, window_bounds = array<i64: 200, 128>}]} {
    %c0 = arith.constant 0 : index
    %c0_0 = arith.constant 0 : index
    %0 = vector.load %arg1[%c0, %c0_0] : memref<200x1024xbf16, #tpu.memory_space<vmem>>, vector<200x1024xbf16>
    %c0_1 = arith.constant 0 : index
    %c0_2 = arith.constant 0 : index
    %1 = vector.load %arg2[%c0_1, %c0_2] : memref<1024x128xbf16, #tpu.memory_space<vmem>>, vector<1024x128xbf16>
    %cst = arith.constant dense<0.000000e+00> : vector<200x128xf32>
    %2 = tpu.matmul %0, %1, %cst {dimension_numbers = #tpu.dot_dimension_numbers<[1], [0], [0], [1], [0, 0, 1, 1], [], []>} : vector<200x1024xbf16>, vector<1024x128xbf16>, vector<200x128xf32> -> vector<200x128xf32>
    %c0_3 = arith.constant 0 : index
    %c0_4 = arith.constant 0 : index
    %3 = vector.load %arg3[%c0_3, %c0_4] : memref<1x128xf32, #tpu.memory_space<vmem>>, vector<1x128xf32>
    %4 = vector.broadcast %3 : vector<1x128xf32> to vector<200x128xf32>
    %5 = arith.addf %2, %4 : vector<200x128xf32>
    %cst_5 = arith.constant dense<0.000000e+00> : vector<128xf32>
    %6 = vector.multi_reduction <add>, %5, %cst_5 [0] : vector<200x128xf32> to vector<128xf32>
    %7 = vector.shape_cast %6 : vector<128xf32> to vector<1x128xf32>
    %cst_6 = arith.constant 5.000000e-03 : f32
    %8 = vector.broadcast %cst_6 : f32 to vector<1x128xf32>
    %9 = arith.mulf %7, %8 : vector<1x128xf32>
    %10 = vector.broadcast %9 : vector<1x128xf32> to vector<200x128xf32>
    %11 = arith.subf %5, %10 : vector<200x128xf32>
    %12 = arith.mulf %11, %11 : vector<200x128xf32>
    %cst_7 = arith.constant dense<0.000000e+00> : vector<128xf32>
    %13 = vector.multi_reduction <add>, %12, %cst_7 [0] : vector<200x128xf32> to vector<128xf32>
    %14 = vector.shape_cast %13 : vector<128xf32> to vector<1x128xf32>
    %cst_8 = arith.constant 5.000000e-03 : f32
    %15 = vector.broadcast %cst_8 : f32 to vector<1x128xf32>
    %16 = arith.mulf %14, %15 : vector<1x128xf32>
    %c0_9 = arith.constant 0 : index
    %c0_10 = arith.constant 0 : index
    %17 = vector.load %arg4[%c0_9, %c0_10] : memref<1x128xf32, #tpu.memory_space<vmem>>, vector<1x128xf32>
    %cst_11 = arith.constant 9.99999974E-6 : f32
    %18 = vector.broadcast %cst_11 : f32 to vector<1x128xf32>
    %19 = arith.addf %16, %18 : vector<1x128xf32>
    %20 = math.rsqrt %19 : vector<1x128xf32>
    %21 = arith.mulf %17, %20 : vector<1x128xf32>
    %c0_12 = arith.constant 0 : index
    %c0_13 = arith.constant 0 : index
    %22 = vector.load %arg5[%c0_12, %c0_13] : memref<1x128xf32, #tpu.memory_space<vmem>>, vector<1x128xf32>
    %23 = arith.mulf %9, %21 : vector<1x128xf32>
    %24 = arith.subf %22, %23 : vector<1x128xf32>
    %25 = vector.broadcast %21 : vector<1x128xf32> to vector<200x128xf32>
    %26 = arith.mulf %5, %25 : vector<200x128xf32>
    %27 = vector.broadcast %24 : vector<1x128xf32> to vector<200x128xf32>
    %28 = arith.addf %26, %27 : vector<200x128xf32>
    %cst_14 = arith.constant 0.000000e+00 : f32
    %29 = vector.broadcast %cst_14 : f32 to vector<200x128xf32>
    %30 = arith.cmpf oge, %28, %29 : vector<200x128xf32>
    %cst_15 = arith.constant 2.000000e-01 : f32
    %31 = vector.broadcast %cst_15 : f32 to vector<200x128xf32>
    %32 = arith.mulf %31, %28 : vector<200x128xf32>
    %33 = arith.select %30, %28, %32 : vector<200x128xi1>, vector<200x128xf32>
    %34 = arith.truncf %33 : vector<200x128xf32> to vector<200x128xbf16>
    %c0_16 = arith.constant 0 : index
    %c0_17 = arith.constant 0 : index
    %35 = vector.load %arg6[%c0_16, %c0_17] : memref<200x128xbf16, #tpu.memory_space<vmem>>, vector<200x128xbf16>
    tpu.vector_store %arg6[%c0_16, %c0_17], %34 {strides = array<i32>} : memref<200x128xbf16, #tpu.memory_space<vmem>>, vector<200x128xbf16>,
    return
  }
  func.func @transform_0(%arg0: i32) -> (i32, i32) {
    %c0_i32 = arith.constant 0 : i32
    %c0_i32_0 = arith.constant 0 : i32
    return %arg0, %c0_i32 : i32, i32
  }
  func.func @transform_1(%arg0: i32) -> (i32, i32) {
    %c0_i32 = arith.constant 0 : i32
    %c0_i32_0 = arith.constant 0 : i32
    %c0_i32_1 = arith.constant 0 : i32
    return %c0_i32, %c0_i32_0 : i32, i32
  }
  func.func @transform_2(%arg0: i32) -> (i32, i32) {
    %c0_i32 = arith.constant 0 : i32
    %c0_i32_0 = arith.constant 0 : i32
    %c0_i32_1 = arith.constant 0 : i32
    return %c0_i32, %c0_i32_0 : i32, i32
  }
  func.func @transform_3(%arg0: i32) -> (i32, i32) {
    %c0_i32 = arith.constant 0 : i32
    %c0_i32_0 = arith.constant 0 : i32
    %c0_i32_1 = arith.constant 0 : i32
    return %c0_i32, %c0_i32_0 : i32, i32
  }
  func.func @transform_4(%arg0: i32) -> (i32, i32) {
    %c0_i32 = arith.constant 0 : i32
    %c0_i32_0 = arith.constant 0 : i32
    %c0_i32_1 = arith.constant 0 : i32
    return %c0_i32, %c0_i32_0 : i32, i32
  }
  func.func @transform_5(%arg0: i32) -> (i32, i32) {
    %c0_i32 = arith.constant 0 : i32
    %c0_i32_0 = arith.constant 0 : i32
    return %arg0, %c0_i32 : i32, i32
  }
}

module attributes {stable_mosaic.version = 11 : i64} {
  func.func @_conv1_spp_kernel(%arg0: i32, %arg1: memref<128x1152xbf16, #tpu.memory_space<vmem>>, %arg2: memref<1152x128xbf16, #tpu.memory_space<vmem>>, %arg3: memref<128x128xf32, #tpu.memory_space<vmem>>, %arg4: memref<1x128xf32, #tpu.memory_space<vmem>>) attributes {dimension_semantics = [#tpu.dimension_semantics<arbitrary>], iteration_bounds = array<i64: 1>, scalar_prefetch = 0 : i64, scratch_operands = 0 : i64, tpu.core_type = #tpu.core_type<tc>, window_params = [{pipeline_mode = #tpu.pipeline_mode<synchronous>, transform_indices = @transform_0, window_bounds = array<i64: 128, 1152>}, {pipeline_mode = #tpu.pipeline_mode<synchronous>, transform_indices = @transform_1, window_bounds = array<i64: 1152, 128>}, {pipeline_mode = #tpu.pipeline_mode<synchronous>, transform_indices = @transform_2, window_bounds = array<i64: 128, 128>}, {pipeline_mode = #tpu.pipeline_mode<synchronous>, transform_indices = @transform_3, window_bounds = array<i64: 1, 128>}]} {
    %c0 = arith.constant 0 : index
    %c0_0 = arith.constant 0 : index
    %0 = vector.load %arg1[%c0, %c0_0] : memref<128x1152xbf16, #tpu.memory_space<vmem>>, vector<128x1152xbf16>
    %c0_1 = arith.constant 0 : index
    %c0_2 = arith.constant 0 : index
    %1 = vector.load %arg2[%c0_1, %c0_2] : memref<1152x128xbf16, #tpu.memory_space<vmem>>, vector<1152x128xbf16>
    %cst = arith.constant dense<0.000000e+00> : vector<128x128xf32>
    %2 = tpu.matmul %0, %1, %cst {dimension_numbers = #tpu.dot_dimension_numbers<[1], [0], [0], [1], [0, 0, 1, 1], [], []>} : vector<128x1152xbf16>, vector<1152x128xbf16>, vector<128x128xf32> -> vector<128x128xf32>
    %3 = vector.extract_strided_slice %2 {offsets = [0, 0], sizes = [128, 1], strides = [1, 1]} : vector<128x128xf32> to vector<128x1xf32>
    %c0_3 = arith.constant 0 : index
    %c0_4 = arith.constant 0 : index
    %4 = vector.load %arg3[%c0_3, %c0_4] : memref<128x128xf32, #tpu.memory_space<vmem>>, vector<128x128xf32>
    %cst_5 = arith.constant 5.000000e-01 : f32
    %5 = vector.broadcast %cst_5 : f32 to vector<128x128xf32>
    %6 = arith.cmpf ogt, %4, %5 : vector<128x128xf32>
    %cst_6 = arith.constant 0xFF800000 : f32
    %7 = vector.shape_cast %3 : vector<128x1xf32> to vector<128x1xf32>
    %8 = vector.broadcast %7 : vector<128x1xf32> to vector<128x128xf32>
    %9 = vector.broadcast %cst_6 : f32 to vector<128x128xf32>
    %10 = arith.select %6, %8, %9 : vector<128x128xi1>, vector<128x128xf32>
    %cst_7 = arith.constant dense<0xFF800000> : vector<128xf32>
    %11 = vector.multi_reduction <maximumf>, %10, %cst_7 [0] : vector<128x128xf32> to vector<128xf32>
    %12 = vector.shape_cast %11 : vector<128xf32> to vector<1x128xf32>
    %c0_8 = arith.constant 0 : index
    %c0_9 = arith.constant 0 : index
    %13 = vector.load %arg4[%c0_8, %c0_9] : memref<1x128xf32, #tpu.memory_space<vmem>>, vector<1x128xf32>
    tpu.vector_store %arg4[%c0_8, %c0_9], %12 {strides = array<i32>} : memref<1x128xf32, #tpu.memory_space<vmem>>, vector<1x128xf32>,
    return
  }
  func.func @transform_0(%arg0: i32) -> (i32, i32) {
    %c0_i32 = arith.constant 0 : i32
    %c0_i32_0 = arith.constant 0 : i32
    %c0_i32_1 = arith.constant 0 : i32
    return %c0_i32, %c0_i32_0 : i32, i32
  }
  func.func @transform_1(%arg0: i32) -> (i32, i32) {
    %c0_i32 = arith.constant 0 : i32
    %c0_i32_0 = arith.constant 0 : i32
    %c0_i32_1 = arith.constant 0 : i32
    return %c0_i32, %c0_i32_0 : i32, i32
  }
  func.func @transform_2(%arg0: i32) -> (i32, i32) {
    %c0_i32 = arith.constant 0 : i32
    %c0_i32_0 = arith.constant 0 : i32
    %c0_i32_1 = arith.constant 0 : i32
    return %c0_i32, %c0_i32_0 : i32, i32
  }
  func.func @transform_3(%arg0: i32) -> (i32, i32) {
    %c0_i32 = arith.constant 0 : i32
    %c0_i32_0 = arith.constant 0 : i32
    %c0_i32_1 = arith.constant 0 : i32
    return %c0_i32, %c0_i32_0 : i32, i32
  }
}

</mosaic_0001>

<llo_original>
// kernel: _lambda_.6
$region0: #{_lambda_.6}
  #allocation0 [shape = 'u32[]', space=smem, size = 0x4, offset = 0x4, fixed_abs, tag = 'smem constant byte address 0x4 - core index']
  #allocation1 [shape = 'u32[144,128]{1,0:T(1,128)}', space=vmem, size = 0x12000, scoped, tag = 'internal scratch']
  %s0 = inlined_call_operand.vmem [shape: bf16[392,128], index: 0, kind: input, shape index: {}]
  %s1 = inlined_call_operand.vmem [shape: bf16[128,128], index: 1, kind: input, shape index: {}]
  %s2 = inlined_call_operand.vmem [shape: f32[1,128], index: 2, kind: input, shape index: {}]
  %s3 = inlined_call_operand.vmem [shape: bf16[392,128], index: 3, kind: output, shape index: {}]
  %s4 = sld [smem:[#allocation0]]
  $region22: #{_lambda_.6} parent=0
    _
  %s6 = ssub.s32 1, %s4
  %s7 = scalar_select 0, %s6, %s4
  // Predicated region
  $region2: #{_lambda_.6} parent=0 // pred_check
    _
  $region3: #{_lambda_.6} parent=0 // pred_check_branch
    %9 = sbr.rel (0) target = $region5
  $region4: #{_lambda_.6} parent=0 // pred_region
    _
  $region5: #{_lambda_.6} parent=0 // pred_fallthru
    _
  // Predicated region
  $region6: #{_lambda_.6} parent=0 // pred_check
    _
  $region7: #{_lambda_.6} parent=0 // pred_check_branch
    %11 = sbr.rel (0) target = $region9
  $region8: #{_lambda_.6} parent=0 // pred_region
    _
  $region9: #{_lambda_.6} parent=0 // pred_fallthru
    _
  // Predicated region
  $region10: #{_lambda_.6} parent=0 // pred_check
    _
  $region11: #{_lambda_.6} parent=0 // pred_check_branch
    %13 = sbr.rel (0) target = $region13
  $region12: #{_lambda_.6} parent=0 // pred_region
    _
  $region13: #{_lambda_.6} parent=0 // pred_fallthru
    _
  %v15 = vld [vmem:[%s0] sm:$0xf]
  %v16 = vld [vmem:[%s0 + $0x4] sm:$0xf]
  %v17 = vld [vmem:[%s0 + $0x8] sm:$0xf]
  %v18 = vld [vmem:[%s0 + $0xc] sm:$0xf]
  %v19 = vld [vmem:[%s0 + $0x10] sm:$0xf]
  %v20 = vld [vmem:[%s0 + $0x14] sm:$0xf]
  %v21 = vld [vmem:[%s0 + $0x18] sm:$0xf]
  %v22 = vld [vmem:[%s0 + $0x1c] sm:$0xf]
  %v23 = vld [vmem:[%s0 + $0x20] sm:$0xf]
  %v24 = vld [vmem:[%s0 + $0x24] sm:$0xf]
  %v25 = vld [vmem:[%s0 + $0x28] sm:$0xf]
  %v26 = vld [vmem:[%s0 + $0x2c] sm:$0xf]
  %v27 = vld [vmem:[%s0 + $0x30] sm:$0xf]
  %v28 = vld [vmem:[%s0 + $0x34] sm:$0xf]
  %v29 = vld [vmem:[%s0 + $0x38] sm:$0xf]
  %v30 = vld [vmem:[%s0 + $0x3c] sm:$0xf]
  %v31 = vld [vmem:[%s0 + $0x40] sm:$0xf]
  %v32 = vld [vmem:[%s0 + $0x44] sm:$0xf]
  %v33 = vld [vmem:[%s0 + $0x48] sm:$0xf]
  %v34 = vld [vmem:[%s0 + $0x4c] sm:$0xf]
  %v35 = vld [vmem:[%s0 + $0x50] sm:$0xf]
  %v36 = vld [vmem:[%s0 + $0x54] sm:$0xf]
  %v37 = vld [vmem:[%s0 + $0x58] sm:$0xf]
  %v38 = vld [vmem:[%s0 + $0x5c] sm:$0xf]
  %v39 = vld [vmem:[%s0 + $0x60] sm:$0xf]
  %v40 = vld [vmem:[%s0 + $0x64] sm:$0xf]
  %v41 = vld [vmem:[%s0 + $0x68] sm:$0xf]
  %v42 = vld [vmem:[%s0 + $0x6c] sm:$0xf]
  %v43 = vld [vmem:[%s0 + $0x70] sm:$0xf]
  %v44 = vld [vmem:[%s0 + $0x74] sm:$0xf]
  %v45 = vld [vmem:[%s0 + $0x78] sm:$0xf]
  %v46 = vld [vmem:[%s0 + $0x7c] sm:$0xf]
  %v47 = vld [vmem:[%s0 + $0x80] sm:$0xf]
  %v48 = vld [vmem:[%s0 + $0x84] sm:$0xf]
  %v49 = vld [vmem:[%s0 + $0x88] sm:$0xf]
  %v50 = vld [vmem:[%s0 + $0x8c] sm:$0xf]
  %v51 = vld [vmem:[%s0 + $0x90] sm:$0xf]
  %v52 = vld [vmem:[%s0 + $0x94] sm:$0xf]
  %v53 = vld [vmem:[%s0 + $0x98] sm:$0xf]
  %v54 = vld [vmem:[%s0 + $0x9c] sm:$0xf]
  %v55 = vld [vmem:[%s0 + $0xa0] sm:$0xf]
  %v56 = vld [vmem:[%s0 + $0xa4] sm:$0xf]
  %v57 = vld [vmem:[%s0 + $0xa8] sm:$0xf]
  %v58 = vld [vmem:[%s0 + $0xac] sm:$0xf]
  %v59 = vld [vmem:[%s0 + $0xb0] sm:$0xf]
  %v60 = vld [vmem:[%s0 + $0xb4] sm:$0xf]
  %v61 = vld [vmem:[%s0 + $0xb8] sm:$0xf]
  %v62 = vld [vmem:[%s0 + $0xbc] sm:$0xf]
  %v63 = vld [vmem:[%s0 + $0xc0] sm:$0xf]
  %v64 = vld [vmem:[%s1] sm:$0xf]
  %v65 = vld [vmem:[%s1 + $0x4] sm:$0xf]
  %v66 = vld [vmem:[%s1 + $0x8] sm:$0xf]
  %v67 = vld [vmem:[%s1 + $0xc] sm:$0xf]
  %v68 = vld [vmem:[%s1 + $0x10] sm:$0xf]
  %v69 = vld [vmem:[%s1 + $0x14] sm:$0xf]
  %v70 = vld [vmem:[%s1 + $0x18] sm:$0xf]
  %v71 = vld [vmem:[%s1 + $0x1c] sm:$0xf]
  %v72 = vld [vmem:[%s1 + $0x20] sm:$0xf]
  %v73 = vld [vmem:[%s1 + $0x24] sm:$0xf]
  %v74 = vld [vmem:[%s1 + $0x28] sm:$0xf]
  %v75 = vld [vmem:[%s1 + $0x2c] sm:$0xf]
  %v76 = vld [vmem:[%s1 + $0x30] sm:$0xf]
  %v77 = vld [vmem:[%s1 + $0x34] sm:$0xf]
  %v78 = vld [vmem:[%s1 + $0x38] sm:$0xf]
  %v79 = vld [vmem:[%s1 + $0x3c] sm:$0xf]
  %v80 = vld [vmem:[%s2] sm:$0x1]
  %v82 = vlaneseq
  %v83 = vshrl.u32 %v82, 7
  %v84 = vsub.s32 0, %v83
  %v85 = vrot.slane %v80, %v84
  %v136 = vunpack.c.l.b16 %v15
  %v137 = vunpack.c.l.b16 %v16
  %v138 = vunpack.c.l.b16 %v17
  %v139 = vunpack.c.l.b16 %v18
  %v140 = vunpack.c.l.b16 %v19
  %v141 = vunpack.c.l.b16 %v20
  %v142 = vunpack.c.l.b16 %v21
  %v143 = vunpack.c.l.b16 %v22
  %v144 = vunpack.c.l.b16 %v23
  %v145 = vunpack.c.l.b16 %v24
  %v146 = vunpack.c.l.b16 %v25
  %v147 = vunpack.c.l.b16 %v26
  %v148 = vunpack.c.l.b16 %v27
  %v149 = vunpack.c.l.b16 %v28
  %v150 = vunpack.c.l.b16 %v29
  %v151 = vunpack.c.l.b16 %v30
  %v152 = vunpack.c.l.b16 %v31
  %v153 = vunpack.c.l.b16 %v32
  %v154 = vunpack.c.l.b16 %v33
  %v155 = vunpack.c.l.b16 %v34
  %v156 = vunpack.c.l.b16 %v35
  %v157 = vunpack.c.l.b16 %v36
  %v158 = vunpack.c.l.b16 %v37
  %v159 = vunpack.c.l.b16 %v38
  %v160 = vunpack.c.l.b16 %v39
  %v161 = vunpack.c.l.b16 %v40
  %v162 = vunpack.c.l.b16 %v41
  %v163 = vunpack.c.l.b16 %v42
  %v164 = vunpack.c.l.b16 %v43
  %v165 = vunpack.c.l.b16 %v44
  %v166 = vunpack.c.l.b16 %v45
  %v167 = vunpack.c.l.b16 %v46
  %v168 = vunpack.c.l.b16 %v47
  %v169 = vunpack.c.l.b16 %v48
  %v170 = vunpack.c.l.b16 %v49
  %v171 = vunpack.c.l.b16 %v50
  %v172 = vunpack.c.l.b16 %v51
  %v173 = vunpack.c.l.b16 %v52
  %v174 = vunpack.c.l.b16 %v53
  %v175 = vunpack.c.l.b16 %v54
  %v176 = vunpack.c.l.b16 %v55
  %v177 = vunpack.c.l.b16 %v56
  %v178 = vunpack.c.l.b16 %v57
  %v179 = vunpack.c.l.b16 %v58
  %v180 = vunpack.c.l.b16 %v59
  %v181 = vunpack.c.l.b16 %v60
  %v182 = vunpack.c.l.b16 %v61
  %v183 = vunpack.c.l.b16 %v62
  %v184 = vunpack.c.l.b16 %v63
  %v185 = vpack.c.b16 %v137, %v136
  %v186 = vpack.c.b16 %v139, %v138
  %v187 = vpack.c.b16 %v141, %v140
  %v188 = vpack.c.b16 %v143, %v142
  %v189 = vpack.c.b16 %v145, %v144
  %v190 = vpack.c.b16 %v147, %v146
  %v191 = vpack.c.b16 %v149, %v148
  %v192 = vpack.c.b16 %v151, %v150
  %v193 = vpack.c.b16 %v153, %v152
  %v194 = vpack.c.b16 %v155, %v154
  %v195 = vpack.c.b16 %v157, %v156
  %v196 = vpack.c.b16 %v159, %v158
  %v197 = vpack.c.b16 %v161, %v160
  %v198 = vpack.c.b16 %v163, %v162
  %v199 = vpack.c.b16 %v165, %v164
  %v200 = vpack.c.b16 %v167, %v166
  %v201 = vpack.c.b16 %v169, %v168
  %v202 = vpack.c.b16 %v171, %v170
  %v203 = vpack.c.b16 %v173, %v172
  %v204 = vpack.c.b16 %v175, %v174
  %v205 = vpack.c.b16 %v177, %v176
  %v206 = vpack.c.b16 %v179, %v178
  %v207 = vpack.c.b16 %v181, %v180
  %v208 = vpack.c.b16 %v183, %v182
  %v209 = vpack.c.b16 %v184, %v184
  %v251 = vunpack.c.l.b16 %v64
  %v252 = vunpack.c.l.b16 %v65
  %v253 = vunpack.c.l.b16 %v66
  %v254 = vunpack.c.l.b16 %v67
  %v255 = vunpack.c.l.b16 %v68
  %v256 = vunpack.c.l.b16 %v69
  %v257 = vunpack.c.l.b16 %v70
  %v258 = vunpack.c.l.b16 %v71
  %v259 = vunpack.c.l.b16 %v72
  %v260 = vunpack.c.l.b16 %v73
  %v261 = vunpack.c.l.b16 %v74
  %v262 = vunpack.c.l.b16 %v75
  %v263 = vunpack.c.l.b16 %v76
  %v264 = vunpack.c.l.b16 %v77
  %v265 = vunpack.c.l.b16 %v78
  %v266 = vunpack.c.l.b16 %v79
  %v267 = vpack.c.b16 %v252, %v251
  %v268 = vpack.c.b16 %v254, %v253
  %v269 = vpack.c.b16 %v256, %v255
  %v270 = vpack.c.b16 %v258, %v257
  %v271 = vpack.c.b16 %v260, %v259
  %v272 = vpack.c.b16 %v262, %v261
  %v273 = vpack.c.b16 %v264, %v263
  %v274 = vpack.c.b16 %v266, %v265
  %283 = vmatprep.subr.bf16.mxu0 0
  %284 = vmatpush1.bf16.msra.mxu0 %v267
  %285 = vmatprep.subr.bf16.mxu0 0
  %286 = vmatpush1.bf16.msra.mxu0 %v268
  %287 = vmatprep.subr.bf16.mxu0 0
  %288 = vmatpush1.bf16.msra.mxu0 %v269
  %289 = vmatprep.subr.bf16.mxu0 0
  %290 = vmatpush1.bf16.msra.mxu0 %v270
  %291 = vmatprep.subr.bf16.mxu0 0
  %292 = vmatpush1.bf16.msra.mxu0 %v271
  %293 = vmatprep.subr.bf16.mxu0 0
  %294 = vmatpush1.bf16.msra.mxu0 %v272
  %295 = vmatprep.subr.bf16.mxu0 0
  %296 = vmatpush1.bf16.msra.mxu0 %v273
  %297 = vmatprep.subr.bf16.mxu0 0
  %298 = vmatpush1.bf16.msra.mxu0 %v274
  %299 = vmatprep.subr.bf16.mxu0 0
  %300 = vmatpush1.bf16.msra.mxu0 0
  %301 = vmatprep.subr.bf16.mxu0 0
  %302 = vmatpush1.bf16.msra.mxu0 0
  %303 = vmatprep.subr.bf16.mxu0 0
  %304 = vmatpush1.bf16.msra.mxu0 0
  %305 = vmatprep.subr.bf16.mxu0 0
  %306 = vmatpush1.bf16.msra.mxu0 0
  %307 = vmatprep.subr.bf16.mxu0 0
  %308 = vmatpush1.bf16.msra.mxu0 0
  %309 = vmatprep.subr.bf16.mxu0 0
  %310 = vmatpush1.bf16.msra.mxu0 0
  %311 = vmatprep.subr.bf16.mxu0 0
  %312 = vmatpush1.bf16.msra.mxu0 0
  %313 = vmatprep.subr.bf16.mxu0 0
  %314 = vmatpush1.bf16.msra.mxu0 0
  %315 = vmatprep.mubr.bf16.mxu0 0
  %316 = vmatmul.mubr.bf16.gmra.mrb[0].mxu0 %v185
  %v317 = vpop.f32.mrb[0].mxu0
  %v318 = vadd.f32 %v85, %v317
  %v319 = vpop.f32.mrb[0].mxu0
  %v320 = vpop.f32.mrb[0].mxu0
  %v321 = vadd.f32 %v85, %v320
  %v322 = vpop.f32.mrb[0].mxu0
  %323 = vmatprep.mubr.bf16.mxu0 0
  %324 = vmatmul.mubr.bf16.gmra.mrb[0].mxu0 %v186
  %v325 = vpop.f32.mrb[0].mxu0
  %v326 = vadd.f32 %v85, %v325
  %v327 = vpop.f32.mrb[0].mxu0
  %v328 = vpop.f32.mrb[0].mxu0
  %v329 = vadd.f32 %v85, %v328
  %v330 = vpop.f32.mrb[0].mxu0
  %331 = vmatprep.mubr.bf16.mxu0 0
  %332 = vmatmul.mubr.bf16.gmra.mrb[0].mxu0 %v187
  %v333 = vpop.f32.mrb[0].mxu0
  %v334 = vadd.f32 %v85, %v333
  %v335 = vpop.f32.mrb[0].mxu0
  %v336 = vpop.f32.mrb[0].mxu0
  %v337 = vadd.f32 %v85, %v336
  %v338 = vpop.f32.mrb[0].mxu0
  %339 = vmatprep.mubr.bf16.mxu0 0
  %340 = vmatmul.mubr.bf16.gmra.mrb[0].mxu0 %v188
  %v341 = vpop.f32.mrb[0].mxu0
  %v342 = vadd.f32 %v85, %v341
  %v343 = vpop.f32.mrb[0].mxu0
  %v344 = vpop.f32.mrb[0].mxu0
  %v345 = vadd.f32 %v85, %v344
  %v346 = vpop.f32.mrb[0].mxu0
  %347 = vmatprep.mubr.bf16.mxu0 0
  %348 = vmatmul.mubr.bf16.gmra.mrb[0].mxu0 %v189
  %v349 = vpop.f32.mrb[0].mxu0
  %v350 = vadd.f32 %v85, %v349
  %v351 = vpop.f32.mrb[0].mxu0
  %v352 = vpop.f32.mrb[0].mxu0
  %v353 = vadd.f32 %v85, %v352
  %v354 = vpop.f32.mrb[0].mxu0
  %355 = vmatprep.mubr.bf16.mxu0 0
  %356 = vmatmul.mubr.bf16.gmra.mrb[0].mxu0 %v190
  %v357 = vpop.f32.mrb[0].mxu0
  %v358 = vadd.f32 %v85, %v357
  %v359 = vpop.f32.mrb[0].mxu0
  %v360 = vpop.f32.mrb[0].mxu0
  %v361 = vadd.f32 %v85, %v360
  %v362 = vpop.f32.mrb[0].mxu0
  %363 = vmatprep.mubr.bf16.mxu0 0
  %364 = vmatmul.mubr.bf16.gmra.mrb[0].mxu0 %v191
  %v365 = vpop.f32.mrb[0].mxu0
  %v366 = vadd.f32 %v85, %v365
  %v367 = vpop.f32.mrb[0].mxu0
  %v368 = vpop.f32.mrb[0].mxu0
  %v369 = vadd.f32 %v85, %v368
  %v370 = vpop.f32.mrb[0].mxu0
  %371 = vmatprep.mubr.bf16.mxu0 0
  %372 = vmatmul.mubr.bf16.gmra.mrb[0].mxu0 %v192
  %v373 = vpop.f32.mrb[0].mxu0
  %v374 = vadd.f32 %v85, %v373
  %v375 = vpop.f32.mrb[0].mxu0
  %v376 = vpop.f32.mrb[0].mxu0
  %v377 = vadd.f32 %v85, %v376
  %v378 = vpop.f32.mrb[0].mxu0
  %379 = vmatprep.mubr.bf16.mxu0 0
  %380 = vmatmul.mubr.bf16.gmra.mrb[0].mxu0 %v193
  %v381 = vpop.f32.mrb[0].mxu0
  %v382 = vadd.f32 %v85, %v381
  %v383 = vpop.f32.mrb[0].mxu0
  %v384 = vpop.f32.mrb[0].mxu0
  %v385 = vadd.f32 %v85, %v384
  %v386 = vpop.f32.mrb[0].mxu0
  %387 = vmatprep.mubr.bf16.mxu0 0
  %388 = vmatmul.mubr.bf16.gmra.mrb[0].mxu0 %v194
  %v389 = vpop.f32.mrb[0].mxu0
  %v390 = vadd.f32 %v85, %v389
  %v391 = vpop.f32.mrb[0].mxu0
  %v392 = vpop.f32.mrb[0].mxu0
  %v393 = vadd.f32 %v85, %v392
  %v394 = vpop.f32.mrb[0].mxu0
  %395 = vmatprep.mubr.bf16.mxu0 0
  %396 = vmatmul.mubr.bf16.gmra.mrb[0].mxu0 %v195
  %v397 = vpop.f32.mrb[0].mxu0
  %v398 = vadd.f32 %v85, %v397
  %v399 = vpop.f32.mrb[0].mxu0
  %v400 = vpop.f32.mrb[0].mxu0
  %v401 = vadd.f32 %v85, %v400
  %v402 = vpop.f32.mrb[0].mxu0
  %403 = vmatprep.mubr.bf16.mxu0 0
  %404 = vmatmul.mubr.bf16.gmra.mrb[0].mxu0 %v196
  %v405 = vpop.f32.mrb[0].mxu0
  %v406 = vadd.f32 %v85, %v405
  %v407 = vpop.f32.mrb[0].mxu0
  %v408 = vpop.f32.mrb[0].mxu0
  %v409 = vadd.f32 %v85, %v408
  %v410 = vpop.f32.mrb[0].mxu0
  %411 = vmatprep.mubr.bf16.mxu0 0
  %412 = vmatmul.mubr.bf16.gmra.mrb[0].mxu0 %v197
  %v413 = vpop.f32.mrb[0].mxu0
  %v414 = vadd.f32 %v85, %v413
  %v415 = vpop.f32.mrb[0].mxu0
  %v416 = vpop.f32.mrb[0].mxu0
  %v417 = vadd.f32 %v85, %v416
  %v418 = vpop.f32.mrb[0].mxu0
  %419 = vmatprep.mubr.bf16.mxu0 0
  %420 = vmatmul.mubr.bf16.gmra.mrb[0].mxu0 %v198
  %v421 = vpop.f32.mrb[0].mxu0
  %v422 = vadd.f32 %v85, %v421
  %v423 = vpop.f32.mrb[0].mxu0
  %v424 = vpop.f32.mrb[0].mxu0
  %v425 = vadd.f32 %v85, %v424
  %v426 = vpop.f32.mrb[0].mxu0
  %427 = vmatprep.mubr.bf16.mxu0 0
  %428 = vmatmul.mubr.bf16.gmra.mrb[0].mxu0 %v199
  %v429 = vpop.f32.mrb[0].mxu0
  %v430 = vadd.f32 %v85, %v429
  %v431 = vpop.f32.mrb[0].mxu0
  %v432 = vpop.f32.mrb[0].mxu0
  %v433 = vadd.f32 %v85, %v432
  %v434 = vpop.f32.mrb[0].mxu0
  %435 = vmatprep.mubr.bf16.mxu0 0
  %436 = vmatmul.mubr.bf16.gmra.mrb[0].mxu0 %v200
  %v437 = vpop.f32.mrb[0].mxu0
  %v438 = vadd.f32 %v85, %v437
  %v439 = vpop.f32.mrb[0].mxu0
  %v440 = vpop.f32.mrb[0].mxu0
  %v441 = vadd.f32 %v85, %v440
  %v442 = vpop.f32.mrb[0].mxu0
  %443 = vmatprep.mubr.bf16.mxu0 0
  %444 = vmatmul.mubr.bf16.gmra.mrb[0].mxu0 %v201
  %v445 = vpop.f32.mrb[0].mxu0
  %v446 = vadd.f32 %v85, %v445
  %v447 = vpop.f32.mrb[0].mxu0
  %v448 = vpop.f32.mrb[0].mxu0
  %v449 = vadd.f32 %v85, %v448
  %v450 = vpop.f32.mrb[0].mxu0
  %451 = vmatprep.mubr.bf16.mxu0 0
  %452 = vmatmul.mubr.bf16.gmra.mrb[0].mxu0 %v202
  %v453 = vpop.f32.mrb[0].mxu0
  %v454 = vadd.f32 %v85, %v453
  %v455 = vpop.f32.mrb[0].mxu0
  %v456 = vpop.f32.mrb[0].mxu0
  %v457 = vadd.f32 %v85, %v456
  %v458 = vpop.f32.mrb[0].mxu0
  %459 = vmatprep.mubr.bf16.mxu0 0
  %460 = vmatmul.mubr.bf16.gmra.mrb[0].mxu0 %v203
  %v461 = vpop.f32.mrb[0].mxu0
  %v462 = vadd.f32 %v85, %v461
  %v463 = vpop.f32.mrb[0].mxu0
  %v464 = vpop.f32.mrb[0].mxu0
  %v465 = vadd.f32 %v85, %v464
  %v466 = vpop.f32.mrb[0].mxu0
  %467 = vmatprep.mubr.bf16.mxu0 0
  %468 = vmatmul.mubr.bf16.gmra.mrb[0].mxu0 %v204
  %v469 = vpop.f32.mrb[0].mxu0
  %v470 = vadd.f32 %v85, %v469
  %v471 = vpop.f32.mrb[0].mxu0
  %v472 = vpop.f32.mrb[0].mxu0
  %v473 = vadd.f32 %v85, %v472
  %v474 = vpop.f32.mrb[0].mxu0
  %475 = vmatprep.mubr.bf16.mxu0 0
  %476 = vmatmul.mubr.bf16.gmra.mrb[0].mxu0 %v205
  %v477 = vpop.f32.mrb[0].mxu0
  %v478 = vadd.f32 %v85, %v477
  %v479 = vpop.f32.mrb[0].mxu0
  %v480 = vpop.f32.mrb[0].mxu0
  %v481 = vadd.f32 %v85, %v480
  %v482 = vpop.f32.mrb[0].mxu0
  %483 = vmatprep.mubr.bf16.mxu0 0
  %484 = vmatmul.mubr.bf16.gmra.mrb[0].mxu0 %v206
  %v485 = vpop.f32.mrb[0].mxu0
  %v486 = vadd.f32 %v85, %v485
  %v487 = vpop.f32.mrb[0].mxu0
  %v488 = vpop.f32.mrb[0].mxu0
  %v489 = vadd.f32 %v85, %v488
  %v490 = vpop.f32.mrb[0].mxu0
  %491 = vmatprep.mubr.bf16.mxu0 0
  %492 = vmatmul.mubr.bf16.gmra.mrb[0].mxu0 %v207
  %v493 = vpop.f32.mrb[0].mxu0
  %v494 = vadd.f32 %v85, %v493
  %v495 = vpop.f32.mrb[0].mxu0
  %v496 = vpop.f32.mrb[0].mxu0
  %v497 = vadd.f32 %v85, %v496
  %v498 = vpop.f32.mrb[0].mxu0
  %499 = vmatprep.mubr.bf16.mxu0 0
  %500 = vmatmul.mubr.bf16.gmra.mrb[0].mxu0 %v208
  %v501 = vpop.f32.mrb[0].mxu0
  %v502 = vadd.f32 %v85, %v501
  %v503 = vpop.f32.mrb[0].mxu0
  %v504 = vpop.f32.mrb[0].mxu0
  %v505 = vadd.f32 %v85, %v504
  %v506 = vpop.f32.mrb[0].mxu0
  %507 = vmatprep.mubr.bf16.mxu0 0
  %508 = vmatmul.mubr.bf16.gmra.mrb[0].mxu0 %v209
  %v509 = vpop.f32.mrb[0].mxu0
  %v510 = vadd.f32 %v85, %v509
  %v511 = vpop.f32.mrb[0].mxu0
  %v512 = vpop.f32.mrb[0].mxu0
  %v513 = vpop.f32.mrb[0].mxu0
  %514 = vdwg.mxu0
  %vm515 = vcmp.ge.f32.partialorder %v318, 0.0
  %vm516 = vcmp.ge.f32.partialorder %v321, 0.0
  %vm517 = vcmp.ge.f32.partialorder %v326, 0.0
  %vm518 = vcmp.ge.f32.partialorder %v329, 0.0
  %vm519 = vcmp.ge.f32.partialorder %v334, 0.0
  %vm520 = vcmp.ge.f32.partialorder %v337, 0.0
  %vm521 = vcmp.ge.f32.partialorder %v342, 0.0
  %vm522 = vcmp.ge.f32.partialorder %v345, 0.0
  %vm523 = vcmp.ge.f32.partialorder %v350, 0.0
  %vm524 = vcmp.ge.f32.partialorder %v353, 0.0
  %vm525 = vcmp.ge.f32.partialorder %v358, 0.0
  %vm526 = vcmp.ge.f32.partialorder %v361, 0.0
  %vm527 = vcmp.ge.f32.partialorder %v366, 0.0
  %vm528 = vcmp.ge.f32.partialorder %v369, 0.0
  %vm529 = vcmp.ge.f32.partialorder %v374, 0.0
  %vm530 = vcmp.ge.f32.partialorder %v377, 0.0
  %vm531 = vcmp.ge.f32.partialorder %v382, 0.0
  %vm532 = vcmp.ge.f32.partialorder %v385, 0.0
  %vm533 = vcmp.ge.f32.partialorder %v390, 0.0
  %vm534 = vcmp.ge.f32.partialorder %v393, 0.0
  %vm535 = vcmp.ge.f32.partialorder %v398, 0.0
  %vm536 = vcmp.ge.f32.partialorder %v401, 0.0
  %vm537 = vcmp.ge.f32.partialorder %v406, 0.0
  %vm538 = vcmp.ge.f32.partialorder %v409, 0.0
  %vm539 = vcmp.ge.f32.partialorder %v414, 0.0
  %vm540 = vcmp.ge.f32.partialorder %v417, 0.0
  %vm541 = vcmp.ge.f32.partialorder %v422, 0.0
  %vm542 = vcmp.ge.f32.partialorder %v425, 0.0
  %vm543 = vcmp.ge.f32.partialorder %v430, 0.0
  %vm544 = vcmp.ge.f32.partialorder %v433, 0.0
  %vm545 = vcmp.ge.f32.partialorder %v438, 0.0
  %vm546 = vcmp.ge.f32.partialorder %v441, 0.0
  %vm547 = vcmp.ge.f32.partialorder %v446, 0.0
  %vm548 = vcmp.ge.f32.partialorder %v449, 0.0
  %vm549 = vcmp.ge.f32.partialorder %v454, 0.0
  %vm550 = vcmp.ge.f32.partialorder %v457, 0.0
  %vm551 = vcmp.ge.f32.partialorder %v462, 0.0
  %vm552 = vcmp.ge.f32.partialorder %v465, 0.0
  %vm553 = vcmp.ge.f32.partialorder %v470, 0.0
  %vm554 = vcmp.ge.f32.partialorder %v473, 0.0
  %vm555 = vcmp.ge.f32.partialorder %v478, 0.0
  %vm556 = vcmp.ge.f32.partialorder %v481, 0.0
  %vm557 = vcmp.ge.f32.partialorder %v486, 0.0
  %vm558 = vcmp.ge.f32.partialorder %v489, 0.0
  %vm559 = vcmp.ge.f32.partialorder %v494, 0.0
  %vm560 = vcmp.ge.f32.partialorder %v497, 0.0
  %vm561 = vcmp.ge.f32.partialorder %v502, 0.0
  %vm562 = vcmp.ge.f32.partialorder %v505, 0.0
  %vm563 = vcmp.ge.f32.partialorder %v510, 0.0
  %v564 = vmul.f32 %v318, 0.1
  %v565 = vmul.f32 %v321, 0.1
  %v566 = vmul.f32 %v326, 0.1
  %v567 = vmul.f32 %v329, 0.1
  %v568 = vmul.f32 %v334, 0.1
  %v569 = vmul.f32 %v337, 0.1
  %v570 = vmul.f32 %v342, 0.1
  %v571 = vmul.f32 %v345, 0.1
  %v572 = vmul.f32 %v350, 0.1
  %v573 = vmul.f32 %v353, 0.1
  %v574 = vmul.f32 %v358, 0.1
  %v575 = vmul.f32 %v361, 0.1
  %v576 = vmul.f32 %v366, 0.1
  %v577 = vmul.f32 %v369, 0.1
  %v578 = vmul.f32 %v374, 0.1
  %v579 = vmul.f32 %v377, 0.1
  %v580 = vmul.f32 %v382, 0.1
  %v581 = vmul.f32 %v385, 0.1
  %v582 = vmul.f32 %v390, 0.1
  %v583 = vmul.f32 %v393, 0.1
  %v584 = vmul.f32 %v398, 0.1
  %v585 = vmul.f32 %v401, 0.1
  %v586 = vmul.f32 %v406, 0.1
  %v587 = vmul.f32 %v409, 0.1
  %v588 = vmul.f32 %v414, 0.1
  %v589 = vmul.f32 %v417, 0.1
  %v590 = vmul.f32 %v422, 0.1
  %v591 = vmul.f32 %v425, 0.1
  %v592 = vmul.f32 %v430, 0.1
  %v593 = vmul.f32 %v433, 0.1
  %v594 = vmul.f32 %v438, 0.1
  %v595 = vmul.f32 %v441, 0.1
  %v596 = vmul.f32 %v446, 0.1
  %v597 = vmul.f32 %v449, 0.1
  %v598 = vmul.f32 %v454, 0.1
  %v599 = vmul.f32 %v457, 0.1
  %v600 = vmul.f32 %v462, 0.1
  %v601 = vmul.f32 %v465, 0.1
  %v602 = vmul.f32 %v470, 0.1
  %v603 = vmul.f32 %v473, 0.1
  %v604 = vmul.f32 %v478, 0.1
  %v605 = vmul.f32 %v481, 0.1
  %v606 = vmul.f32 %v486, 0.1
  %v607 = vmul.f32 %v489, 0.1
  %v608 = vmul.f32 %v494, 0.1
  %v609 = vmul.f32 %v497, 0.1
  %v610 = vmul.f32 %v502, 0.1
  %v611 = vmul.f32 %v505, 0.1
  %v612 = vmul.f32 %v510, 0.1
  %v613 = vsel %vm515, %v318, %v564
  %v614 = vsel %vm516, %v321, %v565
  %v615 = vsel %vm517, %v326, %v566
  %v616 = vsel %vm518, %v329, %v567
  %v617 = vsel %vm519, %v334, %v568
  %v618 = vsel %vm520, %v337, %v569
  %v619 = vsel %vm521, %v342, %v570
  %v620 = vsel %vm522, %v345, %v571
  %v621 = vsel %vm523, %v350, %v572
  %v622 = vsel %vm524, %v353, %v573
  %v623 = vsel %vm525, %v358, %v574
  %v624 = vsel %vm526, %v361, %v575
  %v625 = vsel %vm527, %v366, %v576
  %v626 = vsel %vm528, %v369, %v577
  %v627 = vsel %vm529, %v374, %v578
  %v628 = vsel %vm530, %v377, %v579
  %v629 = vsel %vm531, %v382, %v580
  %v630 = vsel %vm532, %v385, %v581
  %v631 = vsel %vm533, %v390, %v582
  %v632 = vsel %vm534, %v393, %v583
  %v633 = vsel %vm535, %v398, %v584
  %v634 = vsel %vm536, %v401, %v585
  %v635 = vsel %vm537, %v406, %v586
  %v636 = vsel %vm538, %v409, %v587
  %v637 = vsel %vm539, %v414, %v588
  %v638 = vsel %vm540, %v417, %v589
  %v639 = vsel %vm541, %v422, %v590
  %v640 = vsel %vm542, %v425, %v591
  %v641 = vsel %vm543, %v430, %v592
  %v642 = vsel %vm544, %v433, %v593
  %v643 = vsel %vm545, %v438, %v594
  %v644 = vsel %vm546, %v441, %v595
  %v645 = vsel %vm547, %v446, %v596
  %v646 = vsel %vm548, %v449, %v597
  %v647 = vsel %vm549, %v454, %v598
  %v648 = vsel %vm550, %v457, %v599
  %v649 = vsel %vm551, %v462, %v600
  %v650 = vsel %vm552, %v465, %v601
  %v651 = vsel %vm553, %v470, %v602
  %v652 = vsel %vm554, %v473, %v603
  %v653 = vsel %vm555, %v478, %v604
  %v654 = vsel %vm556, %v481, %v605
  %v655 = vsel %vm557, %v486, %v606
  %v656 = vsel %vm558, %v489, %v607
  %v657 = vsel %vm559, %v494, %v608
  %v658 = vsel %vm560, %v497, %v609
  %v659 = vsel %vm561, %v502, %v610
  %v660 = vsel %vm562, %v505, %v611
  %v661 = vsel %vm563, %v510, %v612
  %v662 = vpack.c.bf16 %v614, %v613
  %v663 = vpack.c.bf16 %v616, %v615
  %v664 = vpack.c.bf16 %v618, %v617
  %v665 = vpack.c.bf16 %v620, %v619
  %v666 = vpack.c.bf16 %v622, %v621
  %v667 = vpack.c.bf16 %v624, %v623
  %v668 = vpack.c.bf16 %v626, %v625
  %v669 = vpack.c.bf16 %v628, %v627
  %v670 = vpack.c.bf16 %v630, %v629
  %v671 = vpack.c.bf16 %v632, %v631
  %v672 = vpack.c.bf16 %v634, %v633
  %v673 = vpack.c.bf16 %v636, %v635
  %v674 = vpack.c.bf16 %v638, %v637
  %v675 = vpack.c.bf16 %v640, %v639
  %v676 = vpack.c.bf16 %v642, %v641
  %v677 = vpack.c.bf16 %v644, %v643
  %v678 = vpack.c.bf16 %v646, %v645
  %v679 = vpack.c.bf16 %v648, %v647
  %v680 = vpack.c.bf16 %v650, %v649
  %v681 = vpack.c.bf16 %v652, %v651
  %v682 = vpack.c.bf16 %v654, %v653
  %v683 = vpack.c.bf16 %v656, %v655
  %v684 = vpack.c.bf16 %v658, %v657
  %v685 = vpack.c.bf16 %v660, %v659
  %v686 = vpack.c.bf16 %v661, %v661
  %v712 = vunpack.c.l.b16 %v662
  %v713 = vunpack.c.h.b16 %v662
  %v714 = vunpack.c.l.b16 %v663
  %v715 = vunpack.c.h.b16 %v663
  %v716 = vunpack.c.l.b16 %v664
  %v717 = vunpack.c.h.b16 %v664
  %v718 = vunpack.c.l.b16 %v665
  %v719 = vunpack.c.h.b16 %v665
  %v720 = vunpack.c.l.b16 %v666
  %v721 = vunpack.c.h.b16 %v666
  %v722 = vunpack.c.l.b16 %v667
  %v723 = vunpack.c.h.b16 %v667
  %v724 = vunpack.c.l.b16 %v668
  %v725 = vunpack.c.h.b16 %v668
  %v726 = vunpack.c.l.b16 %v669
  %v727 = vunpack.c.h.b16 %v669
  %v728 = vunpack.c.l.b16 %v670
  %v729 = vunpack.c.h.b16 %v670
  %v730 = vunpack.c.l.b16 %v671
  %v731 = vunpack.c.h.b16 %v671
  %v732 = vunpack.c.l.b16 %v672
  %v733 = vunpack.c.h.b16 %v672
  %v734 = vunpack.c.l.b16 %v673
  %v735 = vunpack.c.h.b16 %v673
  %v736 = vunpack.c.l.b16 %v674
  %v737 = vunpack.c.h.b16 %v674
  %v738 = vunpack.c.l.b16 %v675
  %v739 = vunpack.c.h.b16 %v675
  %v740 = vunpack.c.l.b16 %v676
  %v741 = vunpack.c.h.b16 %v676
  %v742 = vunpack.c.l.b16 %v677
  %v743 = vunpack.c.h.b16 %v677
  %v744 = vunpack.c.l.b16 %v678
  %v745 = vunpack.c.h.b16 %v678
  %v746 = vunpack.c.l.b16 %v679
  %v747 = vunpack.c.h.b16 %v679
  %v748 = vunpack.c.l.b16 %v680
  %v749 = vunpack.c.h.b16 %v680
  %v750 = vunpack.c.l.b16 %v681
  %v751 = vunpack.c.h.b16 %v681
  %v752 = vunpack.c.l.b16 %v682
  %v753 = vunpack.c.h.b16 %v682
  %v754 = vunpack.c.l.b16 %v683
  %v755 = vunpack.c.h.b16 %v683
  %v756 = vunpack.c.l.b16 %v684
  %v757 = vunpack.c.h.b16 %v684
  %v758 = vunpack.c.l.b16 %v685
  %v759 = vunpack.c.h.b16 %v685
  %v760 = vunpack.c.l.b16 %v686
  %v761 = vpack.c.b16 %v712, %v712
  %v762 = vpack.c.b16 %v713, %v713
  %v763 = vpack.c.b16 %v714, %v714
  %v764 = vpack.c.b16 %v715, %v715
  %v765 = vpack.c.b16 %v716, %v716
  %v766 = vpack.c.b16 %v717, %v717
  %v767 = vpack.c.b16 %v718, %v718
  %v768 = vpack.c.b16 %v719, %v719
  %v769 = vpack.c.b16 %v720, %v720
  %v770 = vpack.c.b16 %v721, %v721
  %v771 = vpack.c.b16 %v722, %v722
  %v772 = vpack.c.b16 %v723, %v723
  %v773 = vpack.c.b16 %v724, %v724
  %v774 = vpack.c.b16 %v725, %v725
  %v775 = vpack.c.b16 %v726, %v726
  %v776 = vpack.c.b16 %v727, %v727
  %v777 = vpack.c.b16 %v728, %v728
  %v778 = vpack.c.b16 %v729, %v729
  %v779 = vpack.c.b16 %v730, %v730
  %v780 = vpack.c.b16 %v731, %v731
  %v781 = vpack.c.b16 %v732, %v732
  %v782 = vpack.c.b16 %v733, %v733
  %v783 = vpack.c.b16 %v734, %v734
  %v784 = vpack.c.b16 %v735, %v735
  %v785 = vpack.c.b16 %v736, %v736
  %v786 = vpack.c.b16 %v737, %v737
  %v787 = vpack.c.b16 %v738, %v738
  %v788 = vpack.c.b16 %v739, %v739
  %v789 = vpack.c.b16 %v740, %v740
  %v790 = vpack.c.b16 %v741, %v741
  %v791 = vpack.c.b16 %v742, %v742
  %v792 = vpack.c.b16 %v743, %v743
  %v793 = vpack.c.b16 %v744, %v744
  %v794 = vpack.c.b16 %v745, %v745
  %v795 = vpack.c.b16 %v746, %v746
  %v796 = vpack.c.b16 %v747, %v747
  %v797 = vpack.c.b16 %v748, %v748
  %v798 = vpack.c.b16 %v749, %v749
  %v799 = vpack.c.b16 %v750, %v750
  %v800 = vpack.c.b16 %v751, %v751
  %v801 = vpack.c.b16 %v752, %v752
  %v802 = vpack.c.b16 %v753, %v753
  %v803 = vpack.c.b16 %v754, %v754
  %v804 = vpack.c.b16 %v755, %v755
  %v805 = vpack.c.b16 %v756, %v756
  %v806 = vpack.c.b16 %v757, %v757
  %v807 = vpack.c.b16 %v758, %v758
  %v808 = vpack.c.b16 %v759, %v759
  %v809 = vpack.c.b16 %v760, %v760
  %859 = vst [vmem:[%s3] sm:$0xf] %v761
  %860 = vst [vmem:[%s3 + $0x4] sm:$0xf] %v762
  %861 = vst [vmem:[%s3 + $0x8] sm:$0xf] %v763
  %862 = vst [vmem:[%s3 + $0xc] sm:$0xf] %v764
  %863 = vst [vmem:[%s3 + $0x10] sm:$0xf] %v765
  %864 = vst [vmem:[%s3 + $0x14] sm:$0xf] %v766
  %865 = vst [vmem:[%s3 + $0x18] sm:$0xf] %v767
  %866 = vst [vmem:[%s3 + $0x1c] sm:$0xf] %v768
  %867 = vst [vmem:[%s3 + $0x20] sm:$0xf] %v769
  %868 = vst [vmem:[%s3 + $0x24] sm:$0xf] %v770
  %869 = vst [vmem:[%s3 + $0x28] sm:$0xf] %v771
  %870 = vst [vmem:[%s3 + $0x2c] sm:$0xf] %v772
  %871 = vst [vmem:[%s3 + $0x30] sm:$0xf] %v773
  %872 = vst [vmem:[%s3 + $0x34] sm:$0xf] %v774
  %873 = vst [vmem:[%s3 + $0x38] sm:$0xf] %v775
  %874 = vst [vmem:[%s3 + $0x3c] sm:$0xf] %v776
  %875 = vst [vmem:[%s3 + $0x40] sm:$0xf] %v777
  %876 = vst [vmem:[%s3 + $0x44] sm:$0xf] %v778
  %877 = vst [vmem:[%s3 + $0x48] sm:$0xf] %v779
  %878 = vst [vmem:[%s3 + $0x4c] sm:$0xf] %v780
  %879 = vst [vmem:[%s3 + $0x50] sm:$0xf] %v781
  %880 = vst [vmem:[%s3 + $0x54] sm:$0xf] %v782
  %881 = vst [vmem:[%s3 + $0x58] sm:$0xf] %v783
  %882 = vst [vmem:[%s3 + $0x5c] sm:$0xf] %v784
  %883 = vst [vmem:[%s3 + $0x60] sm:$0xf] %v785
  %884 = vst [vmem:[%s3 + $0x64] sm:$0xf] %v786
  %885 = vst [vmem:[%s3 + $0x68] sm:$0xf] %v787
  %886 = vst [vmem:[%s3 + $0x6c] sm:$0xf] %v788
  %887 = vst [vmem:[%s3 + $0x70] sm:$0xf] %v789
  %888 = vst [vmem:[%s3 + $0x74] sm:$0xf] %v790
  %889 = vst [vmem:[%s3 + $0x78] sm:$0xf] %v791
  %890 = vst [vmem:[%s3 + $0x7c] sm:$0xf] %v792
  %891 = vst [vmem:[%s3 + $0x80] sm:$0xf] %v793
  %892 = vst [vmem:[%s3 + $0x84] sm:$0xf] %v794
  %893 = vst [vmem:[%s3 + $0x88] sm:$0xf] %v795
  %894 = vst [vmem:[%s3 + $0x8c] sm:$0xf] %v796
  %895 = vst [vmem:[%s3 + $0x90] sm:$0xf] %v797
  %896 = vst [vmem:[%s3 + $0x94] sm:$0xf] %v798
  %897 = vst [vmem:[%s3 + $0x98] sm:$0xf] %v799
  %898 = vst [vmem:[%s3 + $0x9c] sm:$0xf] %v800
  %899 = vst [vmem:[%s3 + $0xa0] sm:$0xf] %v801
  %900 = vst [vmem:[%s3 + $0xa4] sm:$0xf] %v802
  %901 = vst [vmem:[%s3 + $0xa8] sm:$0xf] %v803
  %902 = vst [vmem:[%s3 + $0xac] sm:$0xf] %v804
  %903 = vst [vmem:[%s3 + $0xb0] sm:$0xf] %v805
  %904 = vst [vmem:[%s3 + $0xb4] sm:$0xf] %v806
  %905 = vst [vmem:[%s3 + $0xb8] sm:$0xf] %v807
  %906 = vst [vmem:[%s3 + $0xbc] sm:$0xf] %v808
  %907 = vst [vmem:[%s3 + $0xc0] sm:$0xf] %v809
  // Predicated region
  $region14: #{_lambda_.6} parent=0 // pred_check
    _
  $region15: #{_lambda_.6} parent=0 // pred_check_branch
    %909 = sbr.rel (0) target = $region17
  $region16: #{_lambda_.6} parent=0 // pred_region
    _
  $region17: #{_lambda_.6} parent=0 // pred_fallthru
    _
  // Predicated region
  $region18: #{_lambda_.6} parent=0 // pred_check
    _
  $region19: #{_lambda_.6} parent=0 // pred_check_branch
    %911 = sbr.rel (0) target = $region21
  $region20: #{_lambda_.6} parent=0 // pred_region
    _
  $region21: #{_lambda_.6} parent=0 // pred_fallthru
    _

// kernel: _lambda_.7
$region0: #{_lambda_.7}
  #allocation0 [shape = 'u32[]', space=smem, size = 0x4, offset = 0x4, fixed_abs, tag = 'smem constant byte address 0x4 - core index']
  #allocation1 [shape = 'u32[144,128]{1,0:T(1,128)}', space=vmem, size = 0x12000, scoped, tag = 'internal scratch']
  %s0 = inlined_call_operand.vmem [shape: bf16[338,128], index: 0, kind: input, shape index: {}]
  %s1 = inlined_call_operand.vmem [shape: bf16[128,128], index: 1, kind: input, shape index: {}]
  %s2 = inlined_call_operand.vmem [shape: f32[1,128], index: 2, kind: input, shape index: {}]
  %s3 = inlined_call_operand.vmem [shape: f32[1,128], index: 3, kind: input, shape index: {}]
  %s4 = inlined_call_operand.vmem [shape: f32[1,128], index: 4, kind: input, shape index: {}]
  %s5 = inlined_call_operand.vmem [shape: bf16[338,128], index: 5, kind: output, shape index: {}]
  %s6 = sld [smem:[#allocation0]]
  $region30: #{_lambda_.7} parent=0
    _
  %s8 = ssub.s32 1, %s6
  %s9 = scalar_select 0, %s8, %s6
  // Predicated region
  $region2: #{_lambda_.7} parent=0 // pred_check
    _
  $region3: #{_lambda_.7} parent=0 // pred_check_branch
    %11 = sbr.rel (0) target = $region5
  $region4: #{_lambda_.7} parent=0 // pred_region
    _
  $region5: #{_lambda_.7} parent=0 // pred_fallthru
    _
  // Predicated region
  $region6: #{_lambda_.7} parent=0 // pred_check
    _
  $region7: #{_lambda_.7} parent=0 // pred_check_branch
    %13 = sbr.rel (0) target = $region9
  $region8: #{_lambda_.7} parent=0 // pred_region
    _
  $region9: #{_lambda_.7} parent=0 // pred_fallthru
    _
  // Predicated region
  $region10: #{_lambda_.7} parent=0 // pred_check
    _
  $region11: #{_lambda_.7} parent=0 // pred_check_branch
    %15 = sbr.rel (0) target = $region13
  $region12: #{_lambda_.7} parent=0 // pred_region
    _
  $region13: #{_lambda_.7} parent=0 // pred_fallthru
    _
  // Predicated region
  $region14: #{_lambda_.7} parent=0 // pred_check
    _
  $region15: #{_lambda_.7} parent=0 // pred_check_branch
    %17 = sbr.rel (0) target = $region17
  $region16: #{_lambda_.7} parent=0 // pred_region
    _
  $region17: #{_lambda_.7} parent=0 // pred_fallthru
    _
  // Predicated region
  $region18: #{_lambda_.7} parent=0 // pred_check
    _
  $region19: #{_lambda_.7} parent=0 // pred_check_branch
    %19 = sbr.rel (0) target = $region21
  $region20: #{_lambda_.7} parent=0 // pred_region
    _
  $region21: #{_lambda_.7} parent=0 // pred_fallthru
    _
  %v21 = vld [vmem:[%s0] sm:$0xf]
  %v22 = vld [vmem:[%s0 + $0x4] sm:$0xf]
  %v23 = vld [vmem:[%s0 + $0x8] sm:$0xf]
  %v24 = vld [vmem:[%s0 + $0xc] sm:$0xf]
  %v25 = vld [vmem:[%s0 + $0x10] sm:$0xf]
  %v26 = vld [vmem:[%s0 + $0x14] sm:$0xf]
  %v27 = vld [vmem:[%s0 + $0x18] sm:$0xf]
  %v28 = vld [vmem:[%s0 + $0x1c] sm:$0xf]
  %v29 = vld [vmem:[%s0 + $0x20] sm:$0xf]
  %v30 = vld [vmem:[%s0 + $0x24] sm:$0xf]
  %v31 = vld [vmem:[%s0 + $0x28] sm:$0xf]
  %v32 = vld [vmem:[%s0 + $0x2c] sm:$0xf]
  %v33 = vld [vmem:[%s0 + $0x30] sm:$0xf]
  %v34 = vld [vmem:[%s0 + $0x34] sm:$0xf]
  %v35 = vld [vmem:[%s0 + $0x38] sm:$0xf]
  %v36 = vld [vmem:[%s0 + $0x3c] sm:$0xf]
  %v37 = vld [vmem:[%s0 + $0x40] sm:$0xf]
  %v38 = vld [vmem:[%s0 + $0x44] sm:$0xf]
  %v39 = vld [vmem:[%s0 + $0x48] sm:$0xf]
  %v40 = vld [vmem:[%s0 + $0x4c] sm:$0xf]
  %v41 = vld [vmem:[%s0 + $0x50] sm:$0xf]
  %v42 = vld [vmem:[%s0 + $0x54] sm:$0xf]
  %v43 = vld [vmem:[%s0 + $0x58] sm:$0xf]
  %v44 = vld [vmem:[%s0 + $0x5c] sm:$0xf]
  %v45 = vld [vmem:[%s0 + $0x60] sm:$0xf]
  %v46 = vld [vmem:[%s0 + $0x64] sm:$0xf]
  %v47 = vld [vmem:[%s0 + $0x68] sm:$0xf]
  %v48 = vld [vmem:[%s0 + $0x6c] sm:$0xf]
  %v49 = vld [vmem:[%s0 + $0x70] sm:$0xf]
  %v50 = vld [vmem:[%s0 + $0x74] sm:$0xf]
  %v51 = vld [vmem:[%s0 + $0x78] sm:$0xf]
  %v52 = vld [vmem:[%s0 + $0x7c] sm:$0xf]
  %v53 = vld [vmem:[%s0 + $0x80] sm:$0xf]
  %v54 = vld [vmem:[%s0 + $0x84] sm:$0xf]
  %v55 = vld [vmem:[%s0 + $0x88] sm:$0xf]
  %v56 = vld [vmem:[%s0 + $0x8c] sm:$0xf]
  %v57 = vld [vmem:[%s0 + $0x90] sm:$0xf]
  %v58 = vld [vmem:[%s0 + $0x94] sm:$0xf]
  %v59 = vld [vmem:[%s0 + $0x98] sm:$0xf]
  %v60 = vld [vmem:[%s0 + $0x9c] sm:$0xf]
  %v61 = vld [vmem:[%s0 + $0xa0] sm:$0xf]
  %v62 = vld [vmem:[%s0 + $0xa4] sm:$0xf]
  %v63 = vld [vmem:[%s0 + $0xa8] sm:$0x1]
  %v64 = vld [vmem:[%s1] sm:$0xf]
  %v65 = vld [vmem:[%s1 + $0x4] sm:$0xf]
  %v66 = vld [vmem:[%s1 + $0x8] sm:$0xf]
  %v67 = vld [vmem:[%s1 + $0xc] sm:$0xf]
  %v68 = vld [vmem:[%s1 + $0x10] sm:$0xf]
  %v69 = vld [vmem:[%s1 + $0x14] sm:$0xf]
  %v70 = vld [vmem:[%s1 + $0x18] sm:$0xf]
  %v71 = vld [vmem:[%s1 + $0x1c] sm:$0xf]
  %v72 = vld [vmem:[%s1 + $0x20] sm:$0xf]
  %v73 = vld [vmem:[%s1 + $0x24] sm:$0xf]
  %v74 = vld [vmem:[%s1 + $0x28] sm:$0xf]
  %v75 = vld [vmem:[%s1 + $0x2c] sm:$0xf]
  %v76 = vld [vmem:[%s1 + $0x30] sm:$0xf]
  %v77 = vld [vmem:[%s1 + $0x34] sm:$0xf]
  %v78 = vld [vmem:[%s1 + $0x38] sm:$0xf]
  %v79 = vld [vmem:[%s1 + $0x3c] sm:$0xf]
  %v80 = vld [vmem:[%s2] sm:$0x1]
  %v82 = vlaneseq
  %v83 = vshrl.u32 %v82, 7
  %v84 = vsub.s32 0, %v83
  %v85 = vrot.slane %v80, %v84
  %v130 = vunpack.c.l.b16 %v21
  %v131 = vunpack.c.l.b16 %v22
  %v132 = vunpack.c.l.b16 %v23
  %v133 = vunpack.c.l.b16 %v24
  %v134 = vunpack.c.l.b16 %v25
  %v135 = vunpack.c.l.b16 %v26
  %v136 = vunpack.c.l.b16 %v27
  %v137 = vunpack.c.l.b16 %v28
  %v138 = vunpack.c.l.b16 %v29
  %v139 = vunpack.c.l.b16 %v30
  %v140 = vunpack.c.l.b16 %v31
  %v141 = vunpack.c.l.b16 %v32
  %v142 = vunpack.c.l.b16 %v33
  %v143 = vunpack.c.l.b16 %v34
  %v144 = vunpack.c.l.b16 %v35
  %v145 = vunpack.c.l.b16 %v36
  %v146 = vunpack.c.l.b16 %v37
  %v147 = vunpack.c.l.b16 %v38
  %v148 = vunpack.c.l.b16 %v39
  %v149 = vunpack.c.l.b16 %v40
  %v150 = vunpack.c.l.b16 %v41
  %v151 = vunpack.c.l.b16 %v42
  %v152 = vunpack.c.l.b16 %v43
  %v153 = vunpack.c.l.b16 %v44
  %v154 = vunpack.c.l.b16 %v45
  %v155 = vunpack.c.l.b16 %v46
  %v156 = vunpack.c.l.b16 %v47
  %v157 = vunpack.c.l.b16 %v48
  %v158 = vunpack.c.l.b16 %v49
  %v159 = vunpack.c.l.b16 %v50
  %v160 = vunpack.c.l.b16 %v51
  %v161 = vunpack.c.l.b16 %v52
  %v162 = vunpack.c.l.b16 %v53
  %v163 = vunpack.c.l.b16 %v54
  %v164 = vunpack.c.l.b16 %v55
  %v165 = vunpack.c.l.b16 %v56
  %v166 = vunpack.c.l.b16 %v57
  %v167 = vunpack.c.l.b16 %v58
  %v168 = vunpack.c.l.b16 %v59
  %v169 = vunpack.c.l.b16 %v60
  %v170 = vunpack.c.l.b16 %v61
  %v171 = vunpack.c.l.b16 %v62
  %v172 = vunpack.c.l.b16 %v63
  %v173 = vpack.c.b16 %v131, %v130
  %v174 = vpack.c.b16 %v133, %v132
  %v175 = vpack.c.b16 %v135, %v134
  %v176 = vpack.c.b16 %v137, %v136
  %v177 = vpack.c.b16 %v139, %v138
  %v178 = vpack.c.b16 %v141, %v140
  %v179 = vpack.c.b16 %v143, %v142
  %v180 = vpack.c.b16 %v145, %v144
  %v181 = vpack.c.b16 %v147, %v146
  %v182 = vpack.c.b16 %v149, %v148
  %v183 = vpack.c.b16 %v151, %v150
  %v184 = vpack.c.b16 %v153, %v152
  %v185 = vpack.c.b16 %v155, %v154
  %v186 = vpack.c.b16 %v157, %v156
  %v187 = vpack.c.b16 %v159, %v158
  %v188 = vpack.c.b16 %v161, %v160
  %v189 = vpack.c.b16 %v163, %v162
  %v190 = vpack.c.b16 %v165, %v164
  %v191 = vpack.c.b16 %v167, %v166
  %v192 = vpack.c.b16 %v169, %v168
  %v193 = vpack.c.b16 %v171, %v170
  %v194 = vpack.c.b16 %v172, %v172
  %v233 = vunpack.c.l.b16 %v64
  %v234 = vunpack.c.l.b16 %v65
  %v235 = vunpack.c.l.b16 %v66
  %v236 = vunpack.c.l.b16 %v67
  %v237 = vunpack.c.l.b16 %v68
  %v238 = vunpack.c.l.b16 %v69
  %v239 = vunpack.c.l.b16 %v70
  %v240 = vunpack.c.l.b16 %v71
  %v241 = vunpack.c.l.b16 %v72
  %v242 = vunpack.c.l.b16 %v73
  %v243 = vunpack.c.l.b16 %v74
  %v244 = vunpack.c.l.b16 %v75
  %v245 = vunpack.c.l.b16 %v76
  %v246 = vunpack.c.l.b16 %v77
  %v247 = vunpack.c.l.b16 %v78
  %v248 = vunpack.c.l.b16 %v79
  %v249 = vpack.c.b16 %v234, %v233
  %v250 = vpack.c.b16 %v236, %v235
  %v251 = vpack.c.b16 %v238, %v237
  %v252 = vpack.c.b16 %v240, %v239
  %v253 = vpack.c.b16 %v242, %v241
  %v254 = vpack.c.b16 %v244, %v243
  %v255 = vpack.c.b16 %v246, %v245
  %v256 = vpack.c.b16 %v248, %v247
  %265 = vmatprep.subr.bf16.mxu0 0
  %266 = vmatpush1.bf16.msra.mxu0 %v249
  %267 = vmatprep.subr.bf16.mxu0 0
  %268 = vmatpush1.bf16.msra.mxu0 %v250
  %269 = vmatprep.subr.bf16.mxu0 0
  %270 = vmatpush1.bf16.msra.mxu0 %v251
  %271 = vmatprep.subr.bf16.mxu0 0
  %272 = vmatpush1.bf16.msra.mxu0 %v252
  %273 = vmatprep.subr.bf16.mxu0 0
  %274 = vmatpush1.bf16.msra.mxu0 %v253
  %275 = vmatprep.subr.bf16.mxu0 0
  %276 = vmatpush1.bf16.msra.mxu0 %v254
  %277 = vmatprep.subr.bf16.mxu0 0
  %278 = vmatpush1.bf16.msra.mxu0 %v255
  %279 = vmatprep.subr.bf16.mxu0 0
  %280 = vmatpush1.bf16.msra.mxu0 %v256
  %281 = vmatprep.subr.bf16.mxu0 0
  %282 = vmatpush1.bf16.msra.mxu0 0
  %283 = vmatprep.subr.bf16.mxu0 0
  %284 = vmatpush1.bf16.msra.mxu0 0
  %285 = vmatprep.subr.bf16.mxu0 0
  %286 = vmatpush1.bf16.msra.mxu0 0
  %287 = vmatprep.subr.bf16.mxu0 0
  %288 = vmatpush1.bf16.msra.mxu0 0
  %289 = vmatprep.subr.bf16.mxu0 0
  %290 = vmatpush1.bf16.msra.mxu0 0
  %291 = vmatprep.subr.bf16.mxu0 0
  %292 = vmatpush1.bf16.msra.mxu0 0
  %293 = vmatprep.subr.bf16.mxu0 0
  %294 = vmatpush1.bf16.msra.mxu0 0
  %295 = vmatprep.subr.bf16.mxu0 0
  %296 = vmatpush1.bf16.msra.mxu0 0
  %297 = vmatprep.mubr.bf16.mxu0 0
  %298 = vmatmul.mubr.bf16.gmra.mrb[0].mxu0 %v173
  %v299 = vpop.f32.mrb[0].mxu0
  %v300 = vadd.f32 %v85, %v299
  %v301 = vpop.f32.mrb[0].mxu0
  %v302 = vpop.f32.mrb[0].mxu0
  %v303 = vadd.f32 %v85, %v302
  %v304 = vpop.f32.mrb[0].mxu0
  %305 = vmatprep.mubr.bf16.mxu0 0
  %306 = vmatmul.mubr.bf16.gmra.mrb[0].mxu0 %v174
  %v307 = vpop.f32.mrb[0].mxu0
  %v308 = vadd.f32 %v85, %v307
  %v309 = vpop.f32.mrb[0].mxu0
  %v310 = vpop.f32.mrb[0].mxu0
  %v311 = vadd.f32 %v85, %v310
  %v312 = vpop.f32.mrb[0].mxu0
  %313 = vmatprep.mubr.bf16.mxu0 0
  %314 = vmatmul.mubr.bf16.gmra.mrb[0].mxu0 %v175
  %v315 = vpop.f32.mrb[0].mxu0
  %v316 = vadd.f32 %v85, %v315
  %v317 = vpop.f32.mrb[0].mxu0
  %v318 = vpop.f32.mrb[0].mxu0
  %v319 = vadd.f32 %v85, %v318
  %v320 = vpop.f32.mrb[0].mxu0
  %321 = vmatprep.mubr.bf16.mxu0 0
  %322 = vmatmul.mubr.bf16.gmra.mrb[0].mxu0 %v176
  %v323 = vpop.f32.mrb[0].mxu0
  %v324 = vadd.f32 %v85, %v323
  %v325 = vpop.f32.mrb[0].mxu0
  %v326 = vpop.f32.mrb[0].mxu0
  %v327 = vadd.f32 %v85, %v326
  %v328 = vpop.f32.mrb[0].mxu0
  %329 = vmatprep.mubr.bf16.mxu0 0
  %330 = vmatmul.mubr.bf16.gmra.mrb[0].mxu0 %v177
  %v331 = vpop.f32.mrb[0].mxu0
  %v332 = vadd.f32 %v85, %v331
  %v333 = vpop.f32.mrb[0].mxu0
  %v334 = vpop.f32.mrb[0].mxu0
  %v335 = vadd.f32 %v85, %v334
  %v336 = vpop.f32.mrb[0].mxu0
  %337 = vmatprep.mubr.bf16.mxu0 0
  %338 = vmatmul.mubr.bf16.gmra.mrb[0].mxu0 %v178
  %v339 = vpop.f32.mrb[0].mxu0
  %v340 = vadd.f32 %v85, %v339
  %v341 = vpop.f32.mrb[0].mxu0
  %v342 = vpop.f32.mrb[0].mxu0
  %v343 = vadd.f32 %v85, %v342
  %v344 = vpop.f32.mrb[0].mxu0
  %345 = vmatprep.mubr.bf16.mxu0 0
  %346 = vmatmul.mubr.bf16.gmra.mrb[0].mxu0 %v179
  %v347 = vpop.f32.mrb[0].mxu0
  %v348 = vadd.f32 %v85, %v347
  %v349 = vpop.f32.mrb[0].mxu0
  %v350 = vpop.f32.mrb[0].mxu0
  %v351 = vadd.f32 %v85, %v350
  %v352 = vpop.f32.mrb[0].mxu0
  %353 = vmatprep.mubr.bf16.mxu0 0
  %354 = vmatmul.mubr.bf16.gmra.mrb[0].mxu0 %v180
  %v355 = vpop.f32.mrb[0].mxu0
  %v356 = vadd.f32 %v85, %v355
  %v357 = vpop.f32.mrb[0].mxu0
  %v358 = vpop.f32.mrb[0].mxu0
  %v359 = vadd.f32 %v85, %v358
  %v360 = vpop.f32.mrb[0].mxu0
  %361 = vmatprep.mubr.bf16.mxu0 0
  %362 = vmatmul.mubr.bf16.gmra.mrb[0].mxu0 %v181
  %v363 = vpop.f32.mrb[0].mxu0
  %v364 = vadd.f32 %v85, %v363
  %v365 = vpop.f32.mrb[0].mxu0
  %v366 = vpop.f32.mrb[0].mxu0
  %v367 = vadd.f32 %v85, %v366
  %v368 = vpop.f32.mrb[0].mxu0
  %369 = vmatprep.mubr.bf16.mxu0 0
  %370 = vmatmul.mubr.bf16.gmra.mrb[0].mxu0 %v182
  %v371 = vpop.f32.mrb[0].mxu0
  %v372 = vadd.f32 %v85, %v371
  %v373 = vpop.f32.mrb[0].mxu0
  %v374 = vpop.f32.mrb[0].mxu0
  %v375 = vadd.f32 %v85, %v374
  %v376 = vpop.f32.mrb[0].mxu0
  %377 = vmatprep.mubr.bf16.mxu0 0
  %378 = vmatmul.mubr.bf16.gmra.mrb[0].mxu0 %v183
  %v379 = vpop.f32.mrb[0].mxu0
  %v380 = vadd.f32 %v85, %v379
  %v381 = vpop.f32.mrb[0].mxu0
  %v382 = vpop.f32.mrb[0].mxu0
  %v383 = vadd.f32 %v85, %v382
  %v384 = vpop.f32.mrb[0].mxu0
  %385 = vmatprep.mubr.bf16.mxu0 0
  %386 = vmatmul.mubr.bf16.gmra.mrb[0].mxu0 %v184
  %v387 = vpop.f32.mrb[0].mxu0
  %v388 = vadd.f32 %v85, %v387
  %v389 = vpop.f32.mrb[0].mxu0
  %v390 = vpop.f32.mrb[0].mxu0
  %v391 = vadd.f32 %v85, %v390
  %v392 = vpop.f32.mrb[0].mxu0
  %393 = vmatprep.mubr.bf16.mxu0 0
  %394 = vmatmul.mubr.bf16.gmra.mrb[0].mxu0 %v185
  %v395 = vpop.f32.mrb[0].mxu0
  %v396 = vadd.f32 %v85, %v395
  %v397 = vpop.f32.mrb[0].mxu0
  %v398 = vpop.f32.mrb[0].mxu0
  %v399 = vadd.f32 %v85, %v398
  %v400 = vpop.f32.mrb[0].mxu0
  %401 = vmatprep.mubr.bf16.mxu0 0
  %402 = vmatmul.mubr.bf16.gmra.mrb[0].mxu0 %v186
  %v403 = vpop.f32.mrb[0].mxu0
  %v404 = vadd.f32 %v85, %v403
  %v405 = vpop.f32.mrb[0].mxu0
  %v406 = vpop.f32.mrb[0].mxu0
  %v407 = vadd.f32 %v85, %v406
  %v408 = vpop.f32.mrb[0].mxu0
  %409 = vmatprep.mubr.bf16.mxu0 0
  %410 = vmatmul.mubr.bf16.gmra.mrb[0].mxu0 %v187
  %v411 = vpop.f32.mrb[0].mxu0
  %v412 = vadd.f32 %v85, %v411
  %v413 = vpop.f32.mrb[0].mxu0
  %v414 = vpop.f32.mrb[0].mxu0
  %v415 = vadd.f32 %v85, %v414
  %v416 = vpop.f32.mrb[0].mxu0
  %417 = vmatprep.mubr.bf16.mxu0 0
  %418 = vmatmul.mubr.bf16.gmra.mrb[0].mxu0 %v188
  %v419 = vpop.f32.mrb[0].mxu0
  %v420 = vadd.f32 %v85, %v419
  %v421 = vpop.f32.mrb[0].mxu0
  %v422 = vpop.f32.mrb[0].mxu0
  %v423 = vadd.f32 %v85, %v422
  %v424 = vpop.f32.mrb[0].mxu0
  %425 = vmatprep.mubr.bf16.mxu0 0
  %426 = vmatmul.mubr.bf16.gmra.mrb[0].mxu0 %v189
  %v427 = vpop.f32.mrb[0].mxu0
  %v428 = vadd.f32 %v85, %v427
  %v429 = vpop.f32.mrb[0].mxu0
  %v430 = vpop.f32.mrb[0].mxu0
  %v431 = vadd.f32 %v85, %v430
  %v432 = vpop.f32.mrb[0].mxu0
  %433 = vmatprep.mubr.bf16.mxu0 0
  %434 = vmatmul.mubr.bf16.gmra.mrb[0].mxu0 %v190
  %v435 = vpop.f32.mrb[0].mxu0
  %v436 = vadd.f32 %v85, %v435
  %v437 = vpop.f32.mrb[0].mxu0
  %v438 = vpop.f32.mrb[0].mxu0
  %v439 = vadd.f32 %v85, %v438
  %v440 = vpop.f32.mrb[0].mxu0
  %441 = vmatprep.mubr.bf16.mxu0 0
  %442 = vmatmul.mubr.bf16.gmra.mrb[0].mxu0 %v191
  %v443 = vpop.f32.mrb[0].mxu0
  %v444 = vadd.f32 %v85, %v443
  %v445 = vpop.f32.mrb[0].mxu0
  %v446 = vpop.f32.mrb[0].mxu0
  %v447 = vadd.f32 %v85, %v446
  %v448 = vpop.f32.mrb[0].mxu0
  %449 = vmatprep.mubr.bf16.mxu0 0
  %450 = vmatmul.mubr.bf16.gmra.mrb[0].mxu0 %v192
  %v451 = vpop.f32.mrb[0].mxu0
  %v452 = vadd.f32 %v85, %v451
  %v453 = vpop.f32.mrb[0].mxu0
  %v454 = vpop.f32.mrb[0].mxu0
  %v455 = vadd.f32 %v85, %v454
  %v456 = vpop.f32.mrb[0].mxu0
  %457 = vmatprep.mubr.bf16.mxu0 0
  %458 = vmatmul.mubr.bf16.gmra.mrb[0].mxu0 %v193
  %v459 = vpop.f32.mrb[0].mxu0
  %v460 = vadd.f32 %v85, %v459
  %v461 = vpop.f32.mrb[0].mxu0
  %v462 = vpop.f32.mrb[0].mxu0
  %v463 = vadd.f32 %v85, %v462
  %v464 = vpop.f32.mrb[0].mxu0
  %465 = vmatprep.mubr.bf16.mxu0 0
  %466 = vmatmul.mubr.bf16.gmra.mrb[0].mxu0 %v194
  %v467 = vpop.f32.mrb[0].mxu0
  %v468 = vadd.f32 %v85, %v467
  %v469 = vpop.f32.mrb[0].mxu0
  %v470 = vpop.f32.mrb[0].mxu0
  %v471 = vpop.f32.mrb[0].mxu0
  %472 = vdwg.mxu0
  %v473 = vadd.f32 %v300, %v303
  %v474 = vadd.f32 %v473, %v308
  %v475 = vadd.f32 %v474, %v311
  %v476 = vadd.f32 %v475, %v316
  %v477 = vadd.f32 %v476, %v319
  %v478 = vadd.f32 %v477, %v324
  %v479 = vadd.f32 %v478, %v327
  %v480 = vadd.f32 %v479, %v332
  %v481 = vadd.f32 %v480, %v335
  %v482 = vadd.f32 %v481, %v340
  %v483 = vadd.f32 %v482, %v343
  %v484 = vadd.f32 %v483, %v348
  %v485 = vadd.f32 %v484, %v351
  %v486 = vadd.f32 %v485, %v356
  %v487 = vadd.f32 %v486, %v359
  %v488 = vadd.f32 %v487, %v364
  %v489 = vadd.f32 %v488, %v367
  %v490 = vadd.f32 %v489, %v372
  %v491 = vadd.f32 %v490, %v375
  %v492 = vadd.f32 %v491, %v380
  %v493 = vadd.f32 %v492, %v383
  %v494 = vadd.f32 %v493, %v388
  %v495 = vadd.f32 %v494, %v391
  %v496 = vadd.f32 %v495, %v396
  %v497 = vadd.f32 %v496, %v399
  %v498 = vadd.f32 %v497, %v404
  %v499 = vadd.f32 %v498, %v407
  %v500 = vadd.f32 %v499, %v412
  %v501 = vadd.f32 %v500, %v415
  %v502 = vadd.f32 %v501, %v420
  %v503 = vadd.f32 %v502, %v423
  %v504 = vadd.f32 %v503, %v428
  %v505 = vadd.f32 %v504, %v431
  %v506 = vadd.f32 %v505, %v436
  %v507 = vadd.f32 %v506, %v439
  %v508 = vadd.f32 %v507, %v444
  %v509 = vadd.f32 %v508, %v447
  %v510 = vadd.f32 %v509, %v452
  %v511 = vadd.f32 %v510, %v455
  %v512 = vadd.f32 %v511, %v460
  %v513 = vadd.f32 %v512, %v463
  %vm514 = vcmask 1041408
  %v515 = vsel %vm514, %v468, 0.0
  %v516 = vadd.f32 %v513, %v515
  %v517 = vrot.slane %v516, 4
  %v518 = vadd.f32 %v516, %v517
  %v519 = vrot.slane %v518, 2
  %v520 = vadd.f32 %v518, %v519
  %v521 = vrot.slane %v520, 1
  %v522 = vadd.f32 %v520, %v521
  %v523 = vmul.f32 %v522, 0.00295858
  %v524 = vsub.f32 %v300, %v523
  %v525 = vsub.f32 %v303, %v523
  %v526 = vsub.f32 %v308, %v523
  %v527 = vsub.f32 %v311, %v523
  %v528 = vsub.f32 %v316, %v523
  %v529 = vsub.f32 %v319, %v523
  %v530 = vsub.f32 %v324, %v523
  %v531 = vsub.f32 %v327, %v523
  %v532 = vsub.f32 %v332, %v523
  %v533 = vsub.f32 %v335, %v523
  %v534 = vsub.f32 %v340, %v523
  %v535 = vsub.f32 %v343, %v523
  %v536 = vsub.f32 %v348, %v523
  %v537 = vsub.f32 %v351, %v523
  %v538 = vsub.f32 %v356, %v523
  %v539 = vsub.f32 %v359, %v523
  %v540 = vsub.f32 %v364, %v523
  %v541 = vsub.f32 %v367, %v523
  %v542 = vsub.f32 %v372, %v523
  %v543 = vsub.f32 %v375, %v523
  %v544 = vsub.f32 %v380, %v523
  %v545 = vsub.f32 %v383, %v523
  %v546 = vsub.f32 %v388, %v523
  %v547 = vsub.f32 %v391, %v523
  %v548 = vsub.f32 %v396, %v523
  %v549 = vsub.f32 %v399, %v523
  %v550 = vsub.f32 %v404, %v523
  %v551 = vsub.f32 %v407, %v523
  %v552 = vsub.f32 %v412, %v523
  %v553 = vsub.f32 %v415, %v523
  %v554 = vsub.f32 %v420, %v523
  %v555 = vsub.f32 %v423, %v523
  %v556 = vsub.f32 %v428, %v523
  %v557 = vsub.f32 %v431, %v523
  %v558 = vsub.f32 %v436, %v523
  %v559 = vsub.f32 %v439, %v523
  %v560 = vsub.f32 %v444, %v523
  %v561 = vsub.f32 %v447, %v523
  %v562 = vsub.f32 %v452, %v523
  %v563 = vsub.f32 %v455, %v523
  %v564 = vsub.f32 %v460, %v523
  %v565 = vsub.f32 %v463, %v523
  %v566 = vsub.f32 %v468, %v523
  %v567 = vmul.f32 %v524, %v524
  %v568 = vmul.f32 %v525, %v525
  %v569 = vmul.f32 %v526, %v526
  %v570 = vmul.f32 %v527, %v527
  %v571 = vmul.f32 %v528, %v528
  %v572 = vmul.f32 %v529, %v529
  %v573 = vmul.f32 %v530, %v530
  %v574 = vmul.f32 %v531, %v531
  %v575 = vmul.f32 %v532, %v532
  %v576 = vmul.f32 %v533, %v533
  %v577 = vmul.f32 %v534, %v534
  %v578 = vmul.f32 %v535, %v535
  %v579 = vmul.f32 %v536, %v536
  %v580 = vmul.f32 %v537, %v537
  %v581 = vmul.f32 %v538, %v538
  %v582 = vmul.f32 %v539, %v539
  %v583 = vmul.f32 %v540, %v540
  %v584 = vmul.f32 %v541, %v541
  %v585 = vmul.f32 %v542, %v542
  %v586 = vmul.f32 %v543, %v543
  %v587 = vmul.f32 %v544, %v544
  %v588 = vmul.f32 %v545, %v545
  %v589 = vmul.f32 %v546, %v546
  %v590 = vmul.f32 %v547, %v547
  %v591 = vmul.f32 %v548, %v548
  %v592 = vmul.f32 %v549, %v549
  %v593 = vmul.f32 %v550, %v550
  %v594 = vmul.f32 %v551, %v551
  %v595 = vmul.f32 %v552, %v552
  %v596 = vmul.f32 %v553, %v553
  %v597 = vmul.f32 %v554, %v554
  %v598 = vmul.f32 %v555, %v555
  %v599 = vmul.f32 %v556, %v556
  %v600 = vmul.f32 %v557, %v557
  %v601 = vmul.f32 %v558, %v558
  %v602 = vmul.f32 %v559, %v559
  %v603 = vmul.f32 %v560, %v560
  %v604 = vmul.f32 %v561, %v561
  %v605 = vmul.f32 %v562, %v562
  %v606 = vmul.f32 %v563, %v563
  %v607 = vmul.f32 %v564, %v564
  %v608 = vmul.f32 %v565, %v565
  %v609 = vmul.f32 %v566, %v566
  %v610 = vadd.f32 %v567, %v568
  %v611 = vadd.f32 %v610, %v569
  %v612 = vadd.f32 %v611, %v570
  %v613 = vadd.f32 %v612, %v571
  %v614 = vadd.f32 %v613, %v572
  %v615 = vadd.f32 %v614, %v573
  %v616 = vadd.f32 %v615, %v574
  %v617 = vadd.f32 %v616, %v575
  %v618 = vadd.f32 %v617, %v576
  %v619 = vadd.f32 %v618, %v577
  %v620 = vadd.f32 %v619, %v578
  %v621 = vadd.f32 %v620, %v579
  %v622 = vadd.f32 %v621, %v580
  %v623 = vadd.f32 %v622, %v581
  %v624 = vadd.f32 %v623, %v582
  %v625 = vadd.f32 %v624, %v583
  %v626 = vadd.f32 %v625, %v584
  %v627 = vadd.f32 %v626, %v585
  %v628 = vadd.f32 %v627, %v586
  %v629 = vadd.f32 %v628, %v587
  %v630 = vadd.f32 %v629, %v588
  %v631 = vadd.f32 %v630, %v589
  %v632 = vadd.f32 %v631, %v590
  %v633 = vadd.f32 %v632, %v591
  %v634 = vadd.f32 %v633, %v592
  %v635 = vadd.f32 %v634, %v593
  %v636 = vadd.f32 %v635, %v594
  %v637 = vadd.f32 %v636, %v595
  %v638 = vadd.f32 %v637, %v596
  %v639 = vadd.f32 %v638, %v597
  %v640 = vadd.f32 %v639, %v598
  %v641 = vadd.f32 %v640, %v599
  %v642 = vadd.f32 %v641, %v600
  %v643 = vadd.f32 %v642, %v601
  %v644 = vadd.f32 %v643, %v602
  %v645 = vadd.f32 %v644, %v603
  %v646 = vadd.f32 %v645, %v604
  %v647 = vadd.f32 %v646, %v605
  %v648 = vadd.f32 %v647, %v606
  %v649 = vadd.f32 %v648, %v607
  %v650 = vadd.f32 %v649, %v608
  %v651 = vsel %vm514, %v609, 0.0
  %v652 = vadd.f32 %v650, %v651
  %v653 = vrot.slane %v652, 4
  %v654 = vadd.f32 %v652, %v653
  %v655 = vrot.slane %v654, 2
  %v656 = vadd.f32 %v654, %v655
  %v657 = vrot.slane %v656, 1
  %v658 = vadd.f32 %v656, %v657
  %v659 = vmul.f32 %v658, 0.00295858
  %v660 = vld [vmem:[%s3] sm:$0x1]
  %v661 = vadd.f32 %v659, 1e-05
  %v662 = vrsqrt.pop %v661
  %v663 = vmul.f32 %v660, %v662
  %v664 = vld [vmem:[%s4] sm:$0x1]
  %v665 = vmul.f32 %v523, %v663
  %v666 = vsub.f32 %v664, %v665
  %v668 = vlaneseq
  %v669 = vshrl.u32 %v668, 7
  %v670 = vsub.s32 0, %v669
  %v671 = vrot.slane %v663, %v670
  %v673 = vmul.f32 %v300, %v671
  %v674 = vmul.f32 %v303, %v671
  %v675 = vmul.f32 %v308, %v671
  %v676 = vmul.f32 %v311, %v671
  %v677 = vmul.f32 %v316, %v671
  %v678 = vmul.f32 %v319, %v671
  %v679 = vmul.f32 %v324, %v671
  %v680 = vmul.f32 %v327, %v671
  %v681 = vmul.f32 %v332, %v671
  %v682 = vmul.f32 %v335, %v671
  %v683 = vmul.f32 %v340, %v671
  %v684 = vmul.f32 %v343, %v671
  %v685 = vmul.f32 %v348, %v671
  %v686 = vmul.f32 %v351, %v671
  %v687 = vmul.f32 %v356, %v671
  %v688 = vmul.f32 %v359, %v671
  %v689 = vmul.f32 %v364, %v671
  %v690 = vmul.f32 %v367, %v671
  %v691 = vmul.f32 %v372, %v671
  %v692 = vmul.f32 %v375, %v671
  %v693 = vmul.f32 %v380, %v671
  %v694 = vmul.f32 %v383, %v671
  %v695 = vmul.f32 %v388, %v671
  %v696 = vmul.f32 %v391, %v671
  %v697 = vmul.f32 %v396, %v671
  %v698 = vmul.f32 %v399, %v671
  %v699 = vmul.f32 %v404, %v671
  %v700 = vmul.f32 %v407, %v671
  %v701 = vmul.f32 %v412, %v671
  %v702 = vmul.f32 %v415, %v671
  %v703 = vmul.f32 %v420, %v671
  %v704 = vmul.f32 %v423, %v671
  %v705 = vmul.f32 %v428, %v671
  %v706 = vmul.f32 %v431, %v671
  %v707 = vmul.f32 %v436, %v671
  %v708 = vmul.f32 %v439, %v671
  %v709 = vmul.f32 %v444, %v671
  %v710 = vmul.f32 %v447, %v671
  %v711 = vmul.f32 %v452, %v671
  %v712 = vmul.f32 %v455, %v671
  %v713 = vmul.f32 %v460, %v671
  %v714 = vmul.f32 %v463, %v671
  %v715 = vmul.f32 %v468, %v671
  %v717 = vlaneseq
  %v718 = vshrl.u32 %v717, 7
  %v719 = vsub.s32 0, %v718
  %v720 = vrot.slane %v666, %v719
  %v722 = vadd.f32 %v673, %v720
  %v723 = vadd.f32 %v674, %v720
  %v724 = vadd.f32 %v675, %v720
  %v725 = vadd.f32 %v676, %v720
  %v726 = vadd.f32 %v677, %v720
  %v727 = vadd.f32 %v678, %v720
  %v728 = vadd.f32 %v679, %v720
  %v729 = vadd.f32 %v680, %v720
  %v730 = vadd.f32 %v681, %v720
  %v731 = vadd.f32 %v682, %v720
  %v732 = vadd.f32 %v683, %v720
  %v733 = vadd.f32 %v684, %v720
  %v734 = vadd.f32 %v685, %v720
  %v735 = vadd.f32 %v686, %v720
  %v736 = vadd.f32 %v687, %v720
  %v737 = vadd.f32 %v688, %v720
  %v738 = vadd.f32 %v689, %v720
  %v739 = vadd.f32 %v690, %v720
  %v740 = vadd.f32 %v691, %v720
  %v741 = vadd.f32 %v692, %v720
  %v742 = vadd.f32 %v693, %v720
  %v743 = vadd.f32 %v694, %v720
  %v744 = vadd.f32 %v695, %v720
  %v745 = vadd.f32 %v696, %v720
  %v746 = vadd.f32 %v697, %v720
  %v747 = vadd.f32 %v698, %v720
  %v748 = vadd.f32 %v699, %v720
  %v749 = vadd.f32 %v700, %v720
  %v750 = vadd.f32 %v701, %v720
  %v751 = vadd.f32 %v702, %v720
  %v752 = vadd.f32 %v703, %v720
  %v753 = vadd.f32 %v704, %v720
  %v754 = vadd.f32 %v705, %v720
  %v755 = vadd.f32 %v706, %v720
  %v756 = vadd.f32 %v707, %v720
  %v757 = vadd.f32 %v708, %v720
  %v758 = vadd.f32 %v709, %v720
  %v759 = vadd.f32 %v710, %v720
  %v760 = vadd.f32 %v711, %v720
  %v761 = vadd.f32 %v712, %v720
  %v762 = vadd.f32 %v713, %v720
  %v763 = vadd.f32 %v714, %v720
  %v764 = vadd.f32 %v715, %v720
  %vm765 = vcmp.ge.f32.partialorder %v722, 0.0
  %vm766 = vcmp.ge.f32.partialorder %v723, 0.0
  %vm767 = vcmp.ge.f32.partialorder %v724, 0.0
  %vm768 = vcmp.ge.f32.partialorder %v725, 0.0
  %vm769 = vcmp.ge.f32.partialorder %v726, 0.0
  %vm770 = vcmp.ge.f32.partialorder %v727, 0.0
  %vm771 = vcmp.ge.f32.partialorder %v728, 0.0
  %vm772 = vcmp.ge.f32.partialorder %v729, 0.0
  %vm773 = vcmp.ge.f32.partialorder %v730, 0.0
  %vm774 = vcmp.ge.f32.partialorder %v731, 0.0
  %vm775 = vcmp.ge.f32.partialorder %v732, 0.0
  %vm776 = vcmp.ge.f32.partialorder %v733, 0.0
  %vm777 = vcmp.ge.f32.partialorder %v734, 0.0
  %vm778 = vcmp.ge.f32.partialorder %v735, 0.0
  %vm779 = vcmp.ge.f32.partialorder %v736, 0.0
  %vm780 = vcmp.ge.f32.partialorder %v737, 0.0
  %vm781 = vcmp.ge.f32.partialorder %v738, 0.0
  %vm782 = vcmp.ge.f32.partialorder %v739, 0.0
  %vm783 = vcmp.ge.f32.partialorder %v740, 0.0
  %vm784 = vcmp.ge.f32.partialorder %v741, 0.0
  %vm785 = vcmp.ge.f32.partialorder %v742, 0.0
  %vm786 = vcmp.ge.f32.partialorder %v743, 0.0
  %vm787 = vcmp.ge.f32.partialorder %v744, 0.0
  %vm788 = vcmp.ge.f32.partialorder %v745, 0.0
  %vm789 = vcmp.ge.f32.partialorder %v746, 0.0
  %vm790 = vcmp.ge.f32.partialorder %v747, 0.0
  %vm791 = vcmp.ge.f32.partialorder %v748, 0.0
  %vm792 = vcmp.ge.f32.partialorder %v749, 0.0
  %vm793 = vcmp.ge.f32.partialorder %v750, 0.0
  %vm794 = vcmp.ge.f32.partialorder %v751, 0.0
  %vm795 = vcmp.ge.f32.partialorder %v752, 0.0
  %vm796 = vcmp.ge.f32.partialorder %v753, 0.0
  %vm797 = vcmp.ge.f32.partialorder %v754, 0.0
  %vm798 = vcmp.ge.f32.partialorder %v755, 0.0
  %vm799 = vcmp.ge.f32.partialorder %v756, 0.0
  %vm800 = vcmp.ge.f32.partialorder %v757, 0.0
  %vm801 = vcmp.ge.f32.partialorder %v758, 0.0
  %vm802 = vcmp.ge.f32.partialorder %v759, 0.0
  %vm803 = vcmp.ge.f32.partialorder %v760, 0.0
  %vm804 = vcmp.ge.f32.partialorder %v761, 0.0
  %vm805 = vcmp.ge.f32.partialorder %v762, 0.0
  %vm806 = vcmp.ge.f32.partialorder %v763, 0.0
  %vm807 = vcmp.ge.f32.partialorder %v764, 0.0
  %v808 = vmul.f32 %v722, 0.2
  %v809 = vmul.f32 %v723, 0.2
  %v810 = vmul.f32 %v724, 0.2
  %v811 = vmul.f32 %v725, 0.2
  %v812 = vmul.f32 %v726, 0.2
  %v813 = vmul.f32 %v727, 0.2
  %v814 = vmul.f32 %v728, 0.2
  %v815 = vmul.f32 %v729, 0.2
  %v816 = vmul.f32 %v730, 0.2
  %v817 = vmul.f32 %v731, 0.2
  %v818 = vmul.f32 %v732, 0.2
  %v819 = vmul.f32 %v733, 0.2
  %v820 = vmul.f32 %v734, 0.2
  %v821 = vmul.f32 %v735, 0.2
  %v822 = vmul.f32 %v736, 0.2
  %v823 = vmul.f32 %v737, 0.2
  %v824 = vmul.f32 %v738, 0.2
  %v825 = vmul.f32 %v739, 0.2
  %v826 = vmul.f32 %v740, 0.2
  %v827 = vmul.f32 %v741, 0.2
  %v828 = vmul.f32 %v742, 0.2
  %v829 = vmul.f32 %v743, 0.2
  %v830 = vmul.f32 %v744, 0.2
  %v831 = vmul.f32 %v745, 0.2
  %v832 = vmul.f32 %v746, 0.2
  %v833 = vmul.f32 %v747, 0.2
  %v834 = vmul.f32 %v748, 0.2
  %v835 = vmul.f32 %v749, 0.2
  %v836 = vmul.f32 %v750, 0.2
  %v837 = vmul.f32 %v751, 0.2
  %v838 = vmul.f32 %v752, 0.2
  %v839 = vmul.f32 %v753, 0.2
  %v840 = vmul.f32 %v754, 0.2
  %v841 = vmul.f32 %v755, 0.2
  %v842 = vmul.f32 %v756, 0.2
  %v843 = vmul.f32 %v757, 0.2
  %v844 = vmul.f32 %v758, 0.2
  %v845 = vmul.f32 %v759, 0.2
  %v846 = vmul.f32 %v760, 0.2
  %v847 = vmul.f32 %v761, 0.2
  %v848 = vmul.f32 %v762, 0.2
  %v849 = vmul.f32 %v763, 0.2
  %v850 = vmul.f32 %v764, 0.2
  %v851 = vsel %vm765, %v722, %v808
  %v852 = vsel %vm766, %v723, %v809
  %v853 = vsel %vm767, %v724, %v810
  %v854 = vsel %vm768, %v725, %v811
  %v855 = vsel %vm769, %v726, %v812
  %v856 = vsel %vm770, %v727, %v813
  %v857 = vsel %vm771, %v728, %v814
  %v858 = vsel %vm772, %v729, %v815
  %v859 = vsel %vm773, %v730, %v816
  %v860 = vsel %vm774, %v731, %v817
  %v861 = vsel %vm775, %v732, %v818
  %v862 = vsel %vm776, %v733, %v819
  %v863 = vsel %vm777, %v734, %v820
  %v864 = vsel %vm778, %v735, %v821
  %v865 = vsel %vm779, %v736, %v822
  %v866 = vsel %vm780, %v737, %v823
  %v867 = vsel %vm781, %v738, %v824
  %v868 = vsel %vm782, %v739, %v825
  %v869 = vsel %vm783, %v740, %v826
  %v870 = vsel %vm784, %v741, %v827
  %v871 = vsel %vm785, %v742, %v828
  %v872 = vsel %vm786, %v743, %v829
  %v873 = vsel %vm787, %v744, %v830
  %v874 = vsel %vm788, %v745, %v831
  %v875 = vsel %vm789, %v746, %v832
  %v876 = vsel %vm790, %v747, %v833
  %v877 = vsel %vm791, %v748, %v834
  %v878 = vsel %vm792, %v749, %v835
  %v879 = vsel %vm793, %v750, %v836
  %v880 = vsel %vm794, %v751, %v837
  %v881 = vsel %vm795, %v752, %v838
  %v882 = vsel %vm796, %v753, %v839
  %v883 = vsel %vm797, %v754, %v840
  %v884 = vsel %vm798, %v755, %v841
  %v885 = vsel %vm799, %v756, %v842
  %v886 = vsel %vm800, %v757, %v843
  %v887 = vsel %vm801, %v758, %v844
  %v888 = vsel %vm802, %v759, %v845
  %v889 = vsel %vm803, %v760, %v846
  %v890 = vsel %vm804, %v761, %v847
  %v891 = vsel %vm805, %v762, %v848
  %v892 = vsel %vm806, %v763, %v849
  %v893 = vsel %vm807, %v764, %v850
  %v894 = vpack.c.bf16 %v852, %v851
  %v895 = vpack.c.bf16 %v854, %v853
  %v896 = vpack.c.bf16 %v856, %v855
  %v897 = vpack.c.bf16 %v858, %v857
  %v898 = vpack.c.bf16 %v860, %v859
  %v899 = vpack.c.bf16 %v862, %v861
  %v900 = vpack.c.bf16 %v864, %v863
  %v901 = vpack.c.bf16 %v866, %v865
  %v902 = vpack.c.bf16 %v868, %v867
  %v903 = vpack.c.bf16 %v870, %v869
  %v904 = vpack.c.bf16 %v872, %v871
  %v905 = vpack.c.bf16 %v874, %v873
  %v906 = vpack.c.bf16 %v876, %v875
  %v907 = vpack.c.bf16 %v878, %v877
  %v908 = vpack.c.bf16 %v880, %v879
  %v909 = vpack.c.bf16 %v882, %v881
  %v910 = vpack.c.bf16 %v884, %v883
  %v911 = vpack.c.bf16 %v886, %v885
  %v912 = vpack.c.bf16 %v888, %v887
  %v913 = vpack.c.bf16 %v890, %v889
  %v914 = vpack.c.bf16 %v892, %v891
  %v915 = vpack.c.bf16 %v893, %v893
  %v938 = vunpack.c.l.b16 %v894
  %v939 = vunpack.c.h.b16 %v894
  %v940 = vunpack.c.l.b16 %v895
  %v941 = vunpack.c.h.b16 %v895
  %v942 = vunpack.c.l.b16 %v896
  %v943 = vunpack.c.h.b16 %v896
  %v944 = vunpack.c.l.b16 %v897
  %v945 = vunpack.c.h.b16 %v897
  %v946 = vunpack.c.l.b16 %v898
  %v947 = vunpack.c.h.b16 %v898
  %v948 = vunpack.c.l.b16 %v899
  %v949 = vunpack.c.h.b16 %v899
  %v950 = vunpack.c.l.b16 %v900
  %v951 = vunpack.c.h.b16 %v900
  %v952 = vunpack.c.l.b16 %v901
  %v953 = vunpack.c.h.b16 %v901
  %v954 = vunpack.c.l.b16 %v902
  %v955 = vunpack.c.h.b16 %v902
  %v956 = vunpack.c.l.b16 %v903
  %v957 = vunpack.c.h.b16 %v903
  %v958 = vunpack.c.l.b16 %v904
  %v959 = vunpack.c.h.b16 %v904
  %v960 = vunpack.c.l.b16 %v905
  %v961 = vunpack.c.h.b16 %v905
  %v962 = vunpack.c.l.b16 %v906
  %v963 = vunpack.c.h.b16 %v906
  %v964 = vunpack.c.l.b16 %v907
  %v965 = vunpack.c.h.b16 %v907
  %v966 = vunpack.c.l.b16 %v908
  %v967 = vunpack.c.h.b16 %v908
  %v968 = vunpack.c.l.b16 %v909
  %v969 = vunpack.c.h.b16 %v909
  %v970 = vunpack.c.l.b16 %v910
  %v971 = vunpack.c.h.b16 %v910
  %v972 = vunpack.c.l.b16 %v911
  %v973 = vunpack.c.h.b16 %v911
  %v974 = vunpack.c.l.b16 %v912
  %v975 = vunpack.c.h.b16 %v912
  %v976 = vunpack.c.l.b16 %v913
  %v977 = vunpack.c.h.b16 %v913
  %v978 = vunpack.c.l.b16 %v914
  %v979 = vunpack.c.h.b16 %v914
  %v980 = vunpack.c.l.b16 %v915
  %v981 = vpack.c.b16 %v938, %v938
  %v982 = vpack.c.b16 %v939, %v939
  %v983 = vpack.c.b16 %v940, %v940
  %v984 = vpack.c.b16 %v941, %v941
  %v985 = vpack.c.b16 %v942, %v942
  %v986 = vpack.c.b16 %v943, %v943
  %v987 = vpack.c.b16 %v944, %v944
  %v988 = vpack.c.b16 %v945, %v945
  %v989 = vpack.c.b16 %v946, %v946
  %v990 = vpack.c.b16 %v947, %v947
  %v991 = vpack.c.b16 %v948, %v948
  %v992 = vpack.c.b16 %v949, %v949
  %v993 = vpack.c.b16 %v950, %v950
  %v994 = vpack.c.b16 %v951, %v951
  %v995 = vpack.c.b16 %v952, %v952
  %v996 = vpack.c.b16 %v953, %v953
  %v997 = vpack.c.b16 %v954, %v954
  %v998 = vpack.c.b16 %v955, %v955
  %v999 = vpack.c.b16 %v956, %v956
  %v1000 = vpack.c.b16 %v957, %v957
  %v1001 = vpack.c.b16 %v958, %v958
  %v1002 = vpack.c.b16 %v959, %v959
  %v1003 = vpack.c.b16 %v960, %v960
  %v1004 = vpack.c.b16 %v961, %v961
  %v1005 = vpack.c.b16 %v962, %v962
  %v1006 = vpack.c.b16 %v963, %v963
  %v1007 = vpack.c.b16 %v964, %v964
  %v1008 = vpack.c.b16 %v965, %v965
  %v1009 = vpack.c.b16 %v966, %v966
  %v1010 = vpack.c.b16 %v967, %v967
  %v1011 = vpack.c.b16 %v968, %v968
  %v1012 = vpack.c.b16 %v969, %v969
  %v1013 = vpack.c.b16 %v970, %v970
  %v1014 = vpack.c.b16 %v971, %v971
  %v1015 = vpack.c.b16 %v972, %v972
  %v1016 = vpack.c.b16 %v973, %v973
  %v1017 = vpack.c.b16 %v974, %v974
  %v1018 = vpack.c.b16 %v975, %v975
  %v1019 = vpack.c.b16 %v976, %v976
  %v1020 = vpack.c.b16 %v977, %v977
  %v1021 = vpack.c.b16 %v978, %v978
  %v1022 = vpack.c.b16 %v979, %v979
  %v1023 = vpack.c.b16 %v980, %v980
  %1067 = vst [vmem:[%s5] sm:$0xf] %v981
  %1068 = vst [vmem:[%s5 + $0x4] sm:$0xf] %v982
  %1069 = vst [vmem:[%s5 + $0x8] sm:$0xf] %v983
  %1070 = vst [vmem:[%s5 + $0xc] sm:$0xf] %v984
  %1071 = vst [vmem:[%s5 + $0x10] sm:$0xf] %v985
  %1072 = vst [vmem:[%s5 + $0x14] sm:$0xf] %v986
  %1073 = vst [vmem:[%s5 + $0x18] sm:$0xf] %v987
  %1074 = vst [vmem:[%s5 + $0x1c] sm:$0xf] %v988
  %1075 = vst [vmem:[%s5 + $0x20] sm:$0xf] %v989
  %1076 = vst [vmem:[%s5 + $0x24] sm:$0xf] %v990
  %1077 = vst [vmem:[%s5 + $0x28] sm:$0xf] %v991
  %1078 = vst [vmem:[%s5 + $0x2c] sm:$0xf] %v992
  %1079 = vst [vmem:[%s5 + $0x30] sm:$0xf] %v993
  %1080 = vst [vmem:[%s5 + $0x34] sm:$0xf] %v994
  %1081 = vst [vmem:[%s5 + $0x38] sm:$0xf] %v995
  %1082 = vst [vmem:[%s5 + $0x3c] sm:$0xf] %v996
  %1083 = vst [vmem:[%s5 + $0x40] sm:$0xf] %v997
  %1084 = vst [vmem:[%s5 + $0x44] sm:$0xf] %v998
  %1085 = vst [vmem:[%s5 + $0x48] sm:$0xf] %v999
  %1086 = vst [vmem:[%s5 + $0x4c] sm:$0xf] %v1000
  %1087 = vst [vmem:[%s5 + $0x50] sm:$0xf] %v1001
  %1088 = vst [vmem:[%s5 + $0x54] sm:$0xf] %v1002
  %1089 = vst [vmem:[%s5 + $0x58] sm:$0xf] %v1003
  %1090 = vst [vmem:[%s5 + $0x5c] sm:$0xf] %v1004
  %1091 = vst [vmem:[%s5 + $0x60] sm:$0xf] %v1005
  %1092 = vst [vmem:[%s5 + $0x64] sm:$0xf] %v1006
  %1093 = vst [vmem:[%s5 + $0x68] sm:$0xf] %v1007
  %1094 = vst [vmem:[%s5 + $0x6c] sm:$0xf] %v1008
  %1095 = vst [vmem:[%s5 + $0x70] sm:$0xf] %v1009
  %1096 = vst [vmem:[%s5 + $0x74] sm:$0xf] %v1010
  %1097 = vst [vmem:[%s5 + $0x78] sm:$0xf] %v1011
  %1098 = vst [vmem:[%s5 + $0x7c] sm:$0xf] %v1012
  %1099 = vst [vmem:[%s5 + $0x80] sm:$0xf] %v1013
  %1100 = vst [vmem:[%s5 + $0x84] sm:$0xf] %v1014
  %1101 = vst [vmem:[%s5 + $0x88] sm:$0xf] %v1015
  %1102 = vst [vmem:[%s5 + $0x8c] sm:$0xf] %v1016
  %1103 = vst [vmem:[%s5 + $0x90] sm:$0xf] %v1017
  %1104 = vst [vmem:[%s5 + $0x94] sm:$0xf] %v1018
  %1105 = vst [vmem:[%s5 + $0x98] sm:$0xf] %v1019
  %1106 = vst [vmem:[%s5 + $0x9c] sm:$0xf] %v1020
  %1107 = vst [vmem:[%s5 + $0xa0] sm:$0xf] %v1021
  %1108 = vst [vmem:[%s5 + $0xa4] sm:$0xf] %v1022
  %1109 = vst [vmem:[%s5 + $0xa8] sm:$0x1] %v1023
  // Predicated region
  $region22: #{_lambda_.7} parent=0 // pred_check
    _
  $region23: #{_lambda_.7} parent=0 // pred_check_branch
    %1111 = sbr.rel (0) target = $region25
  $region24: #{_lambda_.7} parent=0 // pred_region
    _
  $region25: #{_lambda_.7} parent=0 // pred_fallthru
    _
  // Predicated region
  $region26: #{_lambda_.7} parent=0 // pred_check
    _
  $region27: #{_lambda_.7} parent=0 // pred_check_branch
    %1113 = sbr.rel (0) target = $region29
  $region28: #{_lambda_.7} parent=0 // pred_region
    _
  $region29: #{_lambda_.7} parent=0 // pred_fallthru
    _

// kernel: _lambda_.8
$region0: #{_lambda_.8}
  #allocation0 [shape = 'u32[]', space=smem, size = 0x4, offset = 0x4, fixed_abs, tag = 'smem constant byte address 0x4 - core index']
  #allocation1 [shape = 'u32[144,128]{1,0:T(1,128)}', space=vmem, size = 0x12000, scoped, tag = 'internal scratch']
  %s0 = inlined_call_operand.vmem [shape: bf16[288,256], index: 0, kind: input, shape index: {}]
  %s1 = inlined_call_operand.vmem [shape: bf16[256,128], index: 1, kind: input, shape index: {}]
  %s2 = inlined_call_operand.vmem [shape: f32[1,128], index: 2, kind: input, shape index: {}]
  %s3 = inlined_call_operand.vmem [shape: f32[1,128], index: 3, kind: input, shape index: {}]
  %s4 = inlined_call_operand.vmem [shape: f32[1,128], index: 4, kind: input, shape index: {}]
  %s5 = inlined_call_operand.vmem [shape: bf16[288,128], index: 5, kind: output, shape index: {}]
  %s6 = sld [smem:[#allocation0]]
  $region30: #{_lambda_.8} parent=0
    _
  %s8 = ssub.s32 1, %s6
  %s9 = scalar_select 0, %s8, %s6
  // Predicated region
  $region2: #{_lambda_.8} parent=0 // pred_check
    _
  $region3: #{_lambda_.8} parent=0 // pred_check_branch
    %11 = sbr.rel (0) target = $region5
  $region4: #{_lambda_.8} parent=0 // pred_region
    _
  $region5: #{_lambda_.8} parent=0 // pred_fallthru
    _
  // Predicated region
  $region6: #{_lambda_.8} parent=0 // pred_check
    _
  $region7: #{_lambda_.8} parent=0 // pred_check_branch
    %13 = sbr.rel (0) target = $region9
  $region8: #{_lambda_.8} parent=0 // pred_region
    _
  $region9: #{_lambda_.8} parent=0 // pred_fallthru
    _
  // Predicated region
  $region10: #{_lambda_.8} parent=0 // pred_check
    _
  $region11: #{_lambda_.8} parent=0 // pred_check_branch
    %15 = sbr.rel (0) target = $region13
  $region12: #{_lambda_.8} parent=0 // pred_region
    _
  $region13: #{_lambda_.8} parent=0 // pred_fallthru
    _
  // Predicated region
  $region14: #{_lambda_.8} parent=0 // pred_check
    _
  $region15: #{_lambda_.8} parent=0 // pred_check_branch
    %17 = sbr.rel (0) target = $region17
  $region16: #{_lambda_.8} parent=0 // pred_region
    _
  $region17: #{_lambda_.8} parent=0 // pred_fallthru
    _
  // Predicated region
  $region18: #{_lambda_.8} parent=0 // pred_check
    _
  $region19: #{_lambda_.8} parent=0 // pred_check_branch
    %19 = sbr.rel (0) target = $region21
  $region20: #{_lambda_.8} parent=0 // pred_region
    _
  $region21: #{_lambda_.8} parent=0 // pred_fallthru
    _
  %v21 = vld [vmem:[%s0] sm:$0xff]
  %v22 = vld [vmem:[%s0 + $0x8] sm:$0xff]
  %v23 = vld [vmem:[%s0 + $0x10] sm:$0xff]
  %v24 = vld [vmem:[%s0 + $0x18] sm:$0xff]
  %v25 = vld [vmem:[%s0 + $0x20] sm:$0xff]
  %v26 = vld [vmem:[%s0 + $0x28] sm:$0xff]
  %v27 = vld [vmem:[%s0 + $0x30] sm:$0xff]
  %v28 = vld [vmem:[%s0 + $0x38] sm:$0xff]
  %v29 = vld [vmem:[%s0 + $0x40] sm:$0xff]
  %v30 = vld [vmem:[%s0 + $0x48] sm:$0xff]
  %v31 = vld [vmem:[%s0 + $0x50] sm:$0xff]
  %v32 = vld [vmem:[%s0 + $0x58] sm:$0xff]
  %v33 = vld [vmem:[%s0 + $0x60] sm:$0xff]
  %v34 = vld [vmem:[%s0 + $0x68] sm:$0xff]
  %v35 = vld [vmem:[%s0 + $0x70] sm:$0xff]
  %v36 = vld [vmem:[%s0 + $0x78] sm:$0xff]
  %v37 = vld [vmem:[%s0 + $0x80] sm:$0xff]
  %v38 = vld [vmem:[%s0 + $0x88] sm:$0xff]
  %v39 = vld [vmem:[%s0 + $0x90] sm:$0xff]
  %v40 = vld [vmem:[%s0 + $0x98] sm:$0xff]
  %v41 = vld [vmem:[%s0 + $0xa0] sm:$0xff]
  %v42 = vld [vmem:[%s0 + $0xa8] sm:$0xff]
  %v43 = vld [vmem:[%s0 + $0xb0] sm:$0xff]
  %v44 = vld [vmem:[%s0 + $0xb8] sm:$0xff]
  %v45 = vld [vmem:[%s0 + $0xc0] sm:$0xff]
  %v46 = vld [vmem:[%s0 + $0xc8] sm:$0xff]
  %v47 = vld [vmem:[%s0 + $0xd0] sm:$0xff]
  %v48 = vld [vmem:[%s0 + $0xd8] sm:$0xff]
  %v49 = vld [vmem:[%s0 + $0xe0] sm:$0xff]
  %v50 = vld [vmem:[%s0 + $0xe8] sm:$0xff]
  %v51 = vld [vmem:[%s0 + $0xf0] sm:$0xff]
  %v52 = vld [vmem:[%s0 + $0xf8] sm:$0xff]
  %v53 = vld [vmem:[%s0 + $0x100] sm:$0xff]
  %v54 = vld [vmem:[%s0 + $0x108] sm:$0xff]
  %v55 = vld [vmem:[%s0 + $0x110] sm:$0xff]
  %v56 = vld [vmem:[%s0 + $0x118] sm:$0xff]
  %v57 = vld [vmem:[%s1] sm:$0xf]
  %v58 = vld [vmem:[%s1 + $0x4] sm:$0xf]
  %v59 = vld [vmem:[%s1 + $0x8] sm:$0xf]
  %v60 = vld [vmem:[%s1 + $0xc] sm:$0xf]
  %v61 = vld [vmem:[%s1 + $0x10] sm:$0xf]
  %v62 = vld [vmem:[%s1 + $0x14] sm:$0xf]
  %v63 = vld [vmem:[%s1 + $0x18] sm:$0xf]
  %v64 = vld [vmem:[%s1 + $0x1c] sm:$0xf]
  %v65 = vld [vmem:[%s1 + $0x20] sm:$0xf]
  %v66 = vld [vmem:[%s1 + $0x24] sm:$0xf]
  %v67 = vld [vmem:[%s1 + $0x28] sm:$0xf]
  %v68 = vld [vmem:[%s1 + $0x2c] sm:$0xf]
  %v69 = vld [vmem:[%s1 + $0x30] sm:$0xf]
  %v70 = vld [vmem:[%s1 + $0x34] sm:$0xf]
  %v71 = vld [vmem:[%s1 + $0x38] sm:$0xf]
  %v72 = vld [vmem:[%s1 + $0x3c] sm:$0xf]
  %v73 = vld [vmem:[%s1 + $0x40] sm:$0xf]
  %v74 = vld [vmem:[%s1 + $0x44] sm:$0xf]
  %v75 = vld [vmem:[%s1 + $0x48] sm:$0xf]
  %v76 = vld [vmem:[%s1 + $0x4c] sm:$0xf]
  %v77 = vld [vmem:[%s1 + $0x50] sm:$0xf]
  %v78 = vld [vmem:[%s1 + $0x54] sm:$0xf]
  %v79 = vld [vmem:[%s1 + $0x58] sm:$0xf]
  %v80 = vld [vmem:[%s1 + $0x5c] sm:$0xf]
  %v81 = vld [vmem:[%s1 + $0x60] sm:$0xf]
  %v82 = vld [vmem:[%s1 + $0x64] sm:$0xf]
  %v83 = vld [vmem:[%s1 + $0x68] sm:$0xf]
  %v84 = vld [vmem:[%s1 + $0x6c] sm:$0xf]
  %v85 = vld [vmem:[%s1 + $0x70] sm:$0xf]
  %v86 = vld [vmem:[%s1 + $0x74] sm:$0xf]
  %v87 = vld [vmem:[%s1 + $0x78] sm:$0xf]
  %v88 = vld [vmem:[%s1 + $0x7c] sm:$0xf]
  %v89 = vld [vmem:[%s2] sm:$0x1]
  %v91 = vlaneseq
  %v92 = vshrl.u32 %v91, 7
  %v93 = vsub.s32 0, %v92
  %v94 = vrot.slane %v89, %v93
  %v132 = vunpack.c.l.b16 %v21
  %v133 = vunpack.c.h.b16 %v21
  %v134 = vunpack.c.l.b16 %v22
  %v135 = vunpack.c.h.b16 %v22
  %v136 = vunpack.c.l.b16 %v23
  %v137 = vunpack.c.h.b16 %v23
  %v138 = vunpack.c.l.b16 %v24
  %v139 = vunpack.c.h.b16 %v24
  %v140 = vunpack.c.l.b16 %v25
  %v141 = vunpack.c.h.b16 %v25
  %v142 = vunpack.c.l.b16 %v26
  %v143 = vunpack.c.h.b16 %v26
  %v144 = vunpack.c.l.b16 %v27
  %v145 = vunpack.c.h.b16 %v27
  %v146 = vunpack.c.l.b16 %v28
  %v147 = vunpack.c.h.b16 %v28
  %v148 = vunpack.c.l.b16 %v29
  %v149 = vunpack.c.h.b16 %v29
  %v150 = vunpack.c.l.b16 %v30
  %v151 = vunpack.c.h.b16 %v30
  %v152 = vunpack.c.l.b16 %v31
  %v153 = vunpack.c.h.b16 %v31
  %v154 = vunpack.c.l.b16 %v32
  %v155 = vunpack.c.h.b16 %v32
  %v156 = vunpack.c.l.b16 %v33
  %v157 = vunpack.c.h.b16 %v33
  %v158 = vunpack.c.l.b16 %v34
  %v159 = vunpack.c.h.b16 %v34
  %v160 = vunpack.c.l.b16 %v35
  %v161 = vunpack.c.h.b16 %v35
  %v162 = vunpack.c.l.b16 %v36
  %v163 = vunpack.c.h.b16 %v36
  %v164 = vunpack.c.l.b16 %v37
  %v165 = vunpack.c.h.b16 %v37
  %v166 = vunpack.c.l.b16 %v38
  %v167 = vunpack.c.h.b16 %v38
  %v168 = vunpack.c.l.b16 %v39
  %v169 = vunpack.c.h.b16 %v39
  %v170 = vunpack.c.l.b16 %v40
  %v171 = vunpack.c.h.b16 %v40
  %v172 = vunpack.c.l.b16 %v41
  %v173 = vunpack.c.h.b16 %v41
  %v174 = vunpack.c.l.b16 %v42
  %v175 = vunpack.c.h.b16 %v42
  %v176 = vunpack.c.l.b16 %v43
  %v177 = vunpack.c.h.b16 %v43
  %v178 = vunpack.c.l.b16 %v44
  %v179 = vunpack.c.h.b16 %v44
  %v180 = vunpack.c.l.b16 %v45
  %v181 = vunpack.c.h.b16 %v45
  %v182 = vunpack.c.l.b16 %v46
  %v183 = vunpack.c.h.b16 %v46
  %v184 = vunpack.c.l.b16 %v47
  %v185 = vunpack.c.h.b16 %v47
  %v186 = vunpack.c.l.b16 %v48
  %v187 = vunpack.c.h.b16 %v48
  %v188 = vunpack.c.l.b16 %v49
  %v189 = vunpack.c.h.b16 %v49
  %v190 = vunpack.c.l.b16 %v50
  %v191 = vunpack.c.h.b16 %v50
  %v192 = vunpack.c.l.b16 %v51
  %v193 = vunpack.c.h.b16 %v51
  %v194 = vunpack.c.l.b16 %v52
  %v195 = vunpack.c.h.b16 %v52
  %v196 = vunpack.c.l.b16 %v53
  %v197 = vunpack.c.h.b16 %v53
  %v198 = vunpack.c.l.b16 %v54
  %v199 = vunpack.c.h.b16 %v54
  %v200 = vunpack.c.l.b16 %v55
  %v201 = vunpack.c.h.b16 %v55
  %v202 = vunpack.c.l.b16 %v56
  %v203 = vunpack.c.h.b16 %v56
  %v204 = vpack.c.b16 %v134, %v132
  %v205 = vpack.c.b16 %v135, %v133
  %v206 = vpack.c.b16 %v138, %v136
  %v207 = vpack.c.b16 %v139, %v137
  %v208 = vpack.c.b16 %v142, %v140
  %v209 = vpack.c.b16 %v143, %v141
  %v210 = vpack.c.b16 %v146, %v144
  %v211 = vpack.c.b16 %v147, %v145
  %v212 = vpack.c.b16 %v150, %v148
  %v213 = vpack.c.b16 %v151, %v149
  %v214 = vpack.c.b16 %v154, %v152
  %v215 = vpack.c.b16 %v155, %v153
  %v216 = vpack.c.b16 %v158, %v156
  %v217 = vpack.c.b16 %v159, %v157
  %v218 = vpack.c.b16 %v162, %v160
  %v219 = vpack.c.b16 %v163, %v161
  %v220 = vpack.c.b16 %v166, %v164
  %v221 = vpack.c.b16 %v167, %v165
  %v222 = vpack.c.b16 %v170, %v168
  %v223 = vpack.c.b16 %v171, %v169
  %v224 = vpack.c.b16 %v174, %v172
  %v225 = vpack.c.b16 %v175, %v173
  %v226 = vpack.c.b16 %v178, %v176
  %v227 = vpack.c.b16 %v179, %v177
  %v228 = vpack.c.b16 %v182, %v180
  %v229 = vpack.c.b16 %v183, %v181
  %v230 = vpack.c.b16 %v186, %v184
  %v231 = vpack.c.b16 %v187, %v185
  %v232 = vpack.c.b16 %v190, %v188
  %v233 = vpack.c.b16 %v191, %v189
  %v234 = vpack.c.b16 %v194, %v192
  %v235 = vpack.c.b16 %v195, %v193
  %v236 = vpack.c.b16 %v198, %v196
  %v237 = vpack.c.b16 %v199, %v197
  %v238 = vpack.c.b16 %v202, %v200
  %v239 = vpack.c.b16 %v203, %v201
  %v308 = vunpack.c.l.b16 %v57
  %v309 = vunpack.c.l.b16 %v58
  %v310 = vunpack.c.l.b16 %v59
  %v311 = vunpack.c.l.b16 %v60
  %v312 = vunpack.c.l.b16 %v61
  %v313 = vunpack.c.l.b16 %v62
  %v314 = vunpack.c.l.b16 %v63
  %v315 = vunpack.c.l.b16 %v64
  %v316 = vunpack.c.l.b16 %v65
  %v317 = vunpack.c.l.b16 %v66
  %v318 = vunpack.c.l.b16 %v67
  %v319 = vunpack.c.l.b16 %v68
  %v320 = vunpack.c.l.b16 %v69
  %v321 = vunpack.c.l.b16 %v70
  %v322 = vunpack.c.l.b16 %v71
  %v323 = vunpack.c.l.b16 %v72
  %v324 = vunpack.c.l.b16 %v73
  %v325 = vunpack.c.l.b16 %v74
  %v326 = vunpack.c.l.b16 %v75
  %v327 = vunpack.c.l.b16 %v76
  %v328 = vunpack.c.l.b16 %v77
  %v329 = vunpack.c.l.b16 %v78
  %v330 = vunpack.c.l.b16 %v79
  %v331 = vunpack.c.l.b16 %v80
  %v332 = vunpack.c.l.b16 %v81
  %v333 = vunpack.c.l.b16 %v82
  %v334 = vunpack.c.l.b16 %v83
  %v335 = vunpack.c.l.b16 %v84
  %v336 = vunpack.c.l.b16 %v85
  %v337 = vunpack.c.l.b16 %v86
  %v338 = vunpack.c.l.b16 %v87
  %v339 = vunpack.c.l.b16 %v88
  %v340 = vpack.c.b16 %v309, %v308
  %v341 = vpack.c.b16 %v311, %v310
  %v342 = vpack.c.b16 %v313, %v312
  %v343 = vpack.c.b16 %v315, %v314
  %v344 = vpack.c.b16 %v317, %v316
  %v345 = vpack.c.b16 %v319, %v318
  %v346 = vpack.c.b16 %v321, %v320
  %v347 = vpack.c.b16 %v323, %v322
  %v348 = vpack.c.b16 %v325, %v324
  %v349 = vpack.c.b16 %v327, %v326
  %v350 = vpack.c.b16 %v329, %v328
  %v351 = vpack.c.b16 %v331, %v330
  %v352 = vpack.c.b16 %v333, %v332
  %v353 = vpack.c.b16 %v335, %v334
  %v354 = vpack.c.b16 %v337, %v336
  %v355 = vpack.c.b16 %v339, %v338
  %372 = vmatprep.subr.bf16.mxu0 0
  %373 = vmatpush1.bf16.msra.mxu0 %v340
  %374 = vmatprep.subr.bf16.mxu0 0
  %375 = vmatpush1.bf16.msra.mxu0 %v341
  %376 = vmatprep.subr.bf16.mxu0 0
  %377 = vmatpush1.bf16.msra.mxu0 %v342
  %378 = vmatprep.subr.bf16.mxu0 0
  %379 = vmatpush1.bf16.msra.mxu0 %v343
  %380 = vmatprep.subr.bf16.mxu0 0
  %381 = vmatpush1.bf16.msra.mxu0 %v344
  %382 = vmatprep.subr.bf16.mxu0 0
  %383 = vmatpush1.bf16.msra.mxu0 %v345
  %384 = vmatprep.subr.bf16.mxu0 0
  %385 = vmatpush1.bf16.msra.mxu0 %v346
  %386 = vmatprep.subr.bf16.mxu0 0
  %387 = vmatpush1.bf16.msra.mxu0 %v347
  %388 = vmatprep.subr.bf16.mxu0 0
  %389 = vmatpush1.bf16.msra.mxu0 %v348
  %390 = vmatprep.subr.bf16.mxu0 0
  %391 = vmatpush1.bf16.msra.mxu0 %v349
  %392 = vmatprep.subr.bf16.mxu0 0
  %393 = vmatpush1.bf16.msra.mxu0 %v350
  %394 = vmatprep.subr.bf16.mxu0 0
  %395 = vmatpush1.bf16.msra.mxu0 %v351
  %396 = vmatprep.subr.bf16.mxu0 0
  %397 = vmatpush1.bf16.msra.mxu0 %v352
  %398 = vmatprep.subr.bf16.mxu0 0
  %399 = vmatpush1.bf16.msra.mxu0 %v353
  %400 = vmatprep.subr.bf16.mxu0 0
  %401 = vmatpush1.bf16.msra.mxu0 %v354
  %402 = vmatprep.subr.bf16.mxu0 0
  %403 = vmatpush1.bf16.msra.mxu0 %v355
  %404 = vmatprep.mubr.bf16.mxu0 %v205
  %405 = vmatmul.mubr.bf16.gmra.mrb[0].mxu0 %v204
  %v406 = vpop.f32.mrb[0].mxu0
  %v407 = vadd.f32 %v94, %v406
  %v408 = vpop.f32.mrb[0].mxu0
  %v409 = vpop.f32.mrb[0].mxu0
  %v410 = vadd.f32 %v94, %v409
  %v411 = vpop.f32.mrb[0].mxu0
  %412 = vmatprep.mubr.bf16.mxu0 %v207
  %413 = vmatmul.mubr.bf16.gmra.mrb[0].mxu0 %v206
  %v414 = vpop.f32.mrb[0].mxu0
  %v415 = vadd.f32 %v94, %v414
  %v416 = vpop.f32.mrb[0].mxu0
  %v417 = vpop.f32.mrb[0].mxu0
  %v418 = vadd.f32 %v94, %v417
  %v419 = vpop.f32.mrb[0].mxu0
  %420 = vmatprep.mubr.bf16.mxu0 %v209
  %421 = vmatmul.mubr.bf16.gmra.mrb[0].mxu0 %v208
  %v422 = vpop.f32.mrb[0].mxu0
  %v423 = vadd.f32 %v94, %v422
  %v424 = vpop.f32.mrb[0].mxu0
  %v425 = vpop.f32.mrb[0].mxu0
  %v426 = vadd.f32 %v94, %v425
  %v427 = vpop.f32.mrb[0].mxu0
  %428 = vmatprep.mubr.bf16.mxu0 %v211
  %429 = vmatmul.mubr.bf16.gmra.mrb[0].mxu0 %v210
  %v430 = vpop.f32.mrb[0].mxu0
  %v431 = vadd.f32 %v94, %v430
  %v432 = vpop.f32.mrb[0].mxu0
  %v433 = vpop.f32.mrb[0].mxu0
  %v434 = vadd.f32 %v94, %v433
  %v435 = vpop.f32.mrb[0].mxu0
  %436 = vmatprep.mubr.bf16.mxu0 %v213
  %437 = vmatmul.mubr.bf16.gmra.mrb[0].mxu0 %v212
  %v438 = vpop.f32.mrb[0].mxu0
  %v439 = vadd.f32 %v94, %v438
  %v440 = vpop.f32.mrb[0].mxu0
  %v441 = vpop.f32.mrb[0].mxu0
  %v442 = vadd.f32 %v94, %v441
  %v443 = vpop.f32.mrb[0].mxu0
  %444 = vmatprep.mubr.bf16.mxu0 %v215
  %445 = vmatmul.mubr.bf16.gmra.mrb[0].mxu0 %v214
  %v446 = vpop.f32.mrb[0].mxu0
  %v447 = vadd.f32 %v94, %v446
  %v448 = vpop.f32.mrb[0].mxu0
  %v449 = vpop.f32.mrb[0].mxu0
  %v450 = vadd.f32 %v94, %v449
  %v451 = vpop.f32.mrb[0].mxu0
  %452 = vmatprep.mubr.bf16.mxu0 %v217
  %453 = vmatmul.mubr.bf16.gmra.mrb[0].mxu0 %v216
  %v454 = vpop.f32.mrb[0].mxu0
  %v455 = vadd.f32 %v94, %v454
  %v456 = vpop.f32.mrb[0].mxu0
  %v457 = vpop.f32.mrb[0].mxu0
  %v458 = vadd.f32 %v94, %v457
  %v459 = vpop.f32.mrb[0].mxu0
  %460 = vmatprep.mubr.bf16.mxu0 %v219
  %461 = vmatmul.mubr.bf16.gmra.mrb[0].mxu0 %v218
  %v462 = vpop.f32.mrb[0].mxu0
  %v463 = vadd.f32 %v94, %v462
  %v464 = vpop.f32.mrb[0].mxu0
  %v465 = vpop.f32.mrb[0].mxu0
  %v466 = vadd.f32 %v94, %v465
  %v467 = vpop.f32.mrb[0].mxu0
  %468 = vmatprep.mubr.bf16.mxu0 %v221
  %469 = vmatmul.mubr.bf16.gmra.mrb[0].mxu0 %v220
  %v470 = vpop.f32.mrb[0].mxu0
  %v471 = vadd.f32 %v94, %v470
  %v472 = vpop.f32.mrb[0].mxu0
  %v473 = vpop.f32.mrb[0].mxu0
  %v474 = vadd.f32 %v94, %v473
  %v475 = vpop.f32.mrb[0].mxu0
  %476 = vmatprep.mubr.bf16.mxu0 %v223
  %477 = vmatmul.mubr.bf16.gmra.mrb[0].mxu0 %v222
  %v478 = vpop.f32.mrb[0].mxu0
  %v479 = vadd.f32 %v94, %v478
  %v480 = vpop.f32.mrb[0].mxu0
  %v481 = vpop.f32.mrb[0].mxu0
  %v482 = vadd.f32 %v94, %v481
  %v483 = vpop.f32.mrb[0].mxu0
  %484 = vmatprep.mubr.bf16.mxu0 %v225
  %485 = vmatmul.mubr.bf16.gmra.mrb[0].mxu0 %v224
  %v486 = vpop.f32.mrb[0].mxu0
  %v487 = vadd.f32 %v94, %v486
  %v488 = vpop.f32.mrb[0].mxu0
  %v489 = vpop.f32.mrb[0].mxu0
  %v490 = vadd.f32 %v94, %v489
  %v491 = vpop.f32.mrb[0].mxu0
  %492 = vmatprep.mubr.bf16.mxu0 %v227
  %493 = vmatmul.mubr.bf16.gmra.mrb[0].mxu0 %v226
  %v494 = vpop.f32.mrb[0].mxu0
  %v495 = vadd.f32 %v94, %v494
  %v496 = vpop.f32.mrb[0].mxu0
  %v497 = vpop.f32.mrb[0].mxu0
  %v498 = vadd.f32 %v94, %v497
  %v499 = vpop.f32.mrb[0].mxu0
  %500 = vmatprep.mubr.bf16.mxu0 %v229
  %501 = vmatmul.mubr.bf16.gmra.mrb[0].mxu0 %v228
  %v502 = vpop.f32.mrb[0].mxu0
  %v503 = vadd.f32 %v94, %v502
  %v504 = vpop.f32.mrb[0].mxu0
  %v505 = vpop.f32.mrb[0].mxu0
  %v506 = vadd.f32 %v94, %v505
  %v507 = vpop.f32.mrb[0].mxu0
  %508 = vmatprep.mubr.bf16.mxu0 %v231
  %509 = vmatmul.mubr.bf16.gmra.mrb[0].mxu0 %v230
  %v510 = vpop.f32.mrb[0].mxu0
  %v511 = vadd.f32 %v94, %v510
  %v512 = vpop.f32.mrb[0].mxu0
  %v513 = vpop.f32.mrb[0].mxu0
  %v514 = vadd.f32 %v94, %v513
  %v515 = vpop.f32.mrb[0].mxu0
  %516 = vmatprep.mubr.bf16.mxu0 %v233
  %517 = vmatmul.mubr.bf16.gmra.mrb[0].mxu0 %v232
  %v518 = vpop.f32.mrb[0].mxu0
  %v519 = vadd.f32 %v94, %v518
  %v520 = vpop.f32.mrb[0].mxu0
  %v521 = vpop.f32.mrb[0].mxu0
  %v522 = vadd.f32 %v94, %v521
  %v523 = vpop.f32.mrb[0].mxu0
  %524 = vmatprep.mubr.bf16.mxu0 %v235
  %525 = vmatmul.mubr.bf16.gmra.mrb[0].mxu0 %v234
  %v526 = vpop.f32.mrb[0].mxu0
  %v527 = vadd.f32 %v94, %v526
  %v528 = vpop.f32.mrb[0].mxu0
  %v529 = vpop.f32.mrb[0].mxu0
  %v530 = vadd.f32 %v94, %v529
  %v531 = vpop.f32.mrb[0].mxu0
  %532 = vmatprep.mubr.bf16.mxu0 %v237
  %533 = vmatmul.mubr.bf16.gmra.mrb[0].mxu0 %v236
  %v534 = vpop.f32.mrb[0].mxu0
  %v535 = vadd.f32 %v94, %v534
  %v536 = vpop.f32.mrb[0].mxu0
  %v537 = vpop.f32.mrb[0].mxu0
  %v538 = vadd.f32 %v94, %v537
  %v539 = vpop.f32.mrb[0].mxu0
  %540 = vmatprep.mubr.bf16.mxu0 %v239
  %541 = vmatmul.mubr.bf16.gmra.mrb[0].mxu0 %v238
  %v542 = vpop.f32.mrb[0].mxu0
  %v543 = vadd.f32 %v94, %v542
  %v544 = vpop.f32.mrb[0].mxu0
  %v545 = vpop.f32.mrb[0].mxu0
  %v546 = vadd.f32 %v94, %v545
  %v547 = vpop.f32.mrb[0].mxu0
  %548 = vdwg.mxu0
  %v549 = vadd.f32 %v407, %v410
  %v550 = vadd.f32 %v549, %v415
  %v551 = vadd.f32 %v550, %v418
  %v552 = vadd.f32 %v551, %v423
  %v553 = vadd.f32 %v552, %v426
  %v554 = vadd.f32 %v553, %v431
  %v555 = vadd.f32 %v554, %v434
  %v556 = vadd.f32 %v555, %v439
  %v557 = vadd.f32 %v556, %v442
  %v558 = vadd.f32 %v557, %v447
  %v559 = vadd.f32 %v558, %v450
  %v560 = vadd.f32 %v559, %v455
  %v561 = vadd.f32 %v560, %v458
  %v562 = vadd.f32 %v561, %v463
  %v563 = vadd.f32 %v562, %v466
  %v564 = vadd.f32 %v563, %v471
  %v565 = vadd.f32 %v564, %v474
  %v566 = vadd.f32 %v565, %v479
  %v567 = vadd.f32 %v566, %v482
  %v568 = vadd.f32 %v567, %v487
  %v569 = vadd.f32 %v568, %v490
  %v570 = vadd.f32 %v569, %v495
  %v571 = vadd.f32 %v570, %v498
  %v572 = vadd.f32 %v571, %v503
  %v573 = vadd.f32 %v572, %v506
  %v574 = vadd.f32 %v573, %v511
  %v575 = vadd.f32 %v574, %v514
  %v576 = vadd.f32 %v575, %v519
  %v577 = vadd.f32 %v576, %v522
  %v578 = vadd.f32 %v577, %v527
  %v579 = vadd.f32 %v578, %v530
  %v580 = vadd.f32 %v579, %v535
  %v581 = vadd.f32 %v580, %v538
  %v582 = vadd.f32 %v581, %v543
  %v583 = vadd.f32 %v582, %v546
  %v584 = vrot.slane %v583, 4
  %v585 = vadd.f32 %v583, %v584
  %v586 = vrot.slane %v585, 2
  %v587 = vadd.f32 %v585, %v586
  %v588 = vrot.slane %v587, 1
  %v589 = vadd.f32 %v587, %v588
  %v590 = vmul.f32 %v589, 0.0034722222
  %v591 = vsub.f32 %v407, %v590
  %v592 = vsub.f32 %v410, %v590
  %v593 = vsub.f32 %v415, %v590
  %v594 = vsub.f32 %v418, %v590
  %v595 = vsub.f32 %v423, %v590
  %v596 = vsub.f32 %v426, %v590
  %v597 = vsub.f32 %v431, %v590
  %v598 = vsub.f32 %v434, %v590
  %v599 = vsub.f32 %v439, %v590
  %v600 = vsub.f32 %v442, %v590
  %v601 = vsub.f32 %v447, %v590
  %v602 = vsub.f32 %v450, %v590
  %v603 = vsub.f32 %v455, %v590
  %v604 = vsub.f32 %v458, %v590
  %v605 = vsub.f32 %v463, %v590
  %v606 = vsub.f32 %v466, %v590
  %v607 = vsub.f32 %v471, %v590
  %v608 = vsub.f32 %v474, %v590
  %v609 = vsub.f32 %v479, %v590
  %v610 = vsub.f32 %v482, %v590
  %v611 = vsub.f32 %v487, %v590
  %v612 = vsub.f32 %v490, %v590
  %v613 = vsub.f32 %v495, %v590
  %v614 = vsub.f32 %v498, %v590
  %v615 = vsub.f32 %v503, %v590
  %v616 = vsub.f32 %v506, %v590
  %v617 = vsub.f32 %v511, %v590
  %v618 = vsub.f32 %v514, %v590
  %v619 = vsub.f32 %v519, %v590
  %v620 = vsub.f32 %v522, %v590
  %v621 = vsub.f32 %v527, %v590
  %v622 = vsub.f32 %v530, %v590
  %v623 = vsub.f32 %v535, %v590
  %v624 = vsub.f32 %v538, %v590
  %v625 = vsub.f32 %v543, %v590
  %v626 = vsub.f32 %v546, %v590
  %v627 = vmul.f32 %v591, %v591
  %v628 = vmul.f32 %v592, %v592
  %v629 = vmul.f32 %v593, %v593
  %v630 = vmul.f32 %v594, %v594
  %v631 = vmul.f32 %v595, %v595
  %v632 = vmul.f32 %v596, %v596
  %v633 = vmul.f32 %v597, %v597
  %v634 = vmul.f32 %v598, %v598
  %v635 = vmul.f32 %v599, %v599
  %v636 = vmul.f32 %v600, %v600
  %v637 = vmul.f32 %v601, %v601
  %v638 = vmul.f32 %v602, %v602
  %v639 = vmul.f32 %v603, %v603
  %v640 = vmul.f32 %v604, %v604
  %v641 = vmul.f32 %v605, %v605
  %v642 = vmul.f32 %v606, %v606
  %v643 = vmul.f32 %v607, %v607
  %v644 = vmul.f32 %v608, %v608
  %v645 = vmul.f32 %v609, %v609
  %v646 = vmul.f32 %v610, %v610
  %v647 = vmul.f32 %v611, %v611
  %v648 = vmul.f32 %v612, %v612
  %v649 = vmul.f32 %v613, %v613
  %v650 = vmul.f32 %v614, %v614
  %v651 = vmul.f32 %v615, %v615
  %v652 = vmul.f32 %v616, %v616
  %v653 = vmul.f32 %v617, %v617
  %v654 = vmul.f32 %v618, %v618
  %v655 = vmul.f32 %v619, %v619
  %v656 = vmul.f32 %v620, %v620
  %v657 = vmul.f32 %v621, %v621
  %v658 = vmul.f32 %v622, %v622
  %v659 = vmul.f32 %v623, %v623
  %v660 = vmul.f32 %v624, %v624
  %v661 = vmul.f32 %v625, %v625
  %v662 = vmul.f32 %v626, %v626
  %v663 = vadd.f32 %v627, %v628
  %v664 = vadd.f32 %v663, %v629
  %v665 = vadd.f32 %v664, %v630
  %v666 = vadd.f32 %v665, %v631
  %v667 = vadd.f32 %v666, %v632
  %v668 = vadd.f32 %v667, %v633
  %v669 = vadd.f32 %v668, %v634
  %v670 = vadd.f32 %v669, %v635
  %v671 = vadd.f32 %v670, %v636
  %v672 = vadd.f32 %v671, %v637
  %v673 = vadd.f32 %v672, %v638
  %v674 = vadd.f32 %v673, %v639
  %v675 = vadd.f32 %v674, %v640
  %v676 = vadd.f32 %v675, %v641
  %v677 = vadd.f32 %v676, %v642
  %v678 = vadd.f32 %v677, %v643
  %v679 = vadd.f32 %v678, %v644
  %v680 = vadd.f32 %v679, %v645
  %v681 = vadd.f32 %v680, %v646
  %v682 = vadd.f32 %v681, %v647
  %v683 = vadd.f32 %v682, %v648
  %v684 = vadd.f32 %v683, %v649
  %v685 = vadd.f32 %v684, %v650
  %v686 = vadd.f32 %v685, %v651
  %v687 = vadd.f32 %v686, %v652
  %v688 = vadd.f32 %v687, %v653
  %v689 = vadd.f32 %v688, %v654
  %v690 = vadd.f32 %v689, %v655
  %v691 = vadd.f32 %v690, %v656
  %v692 = vadd.f32 %v691, %v657
  %v693 = vadd.f32 %v692, %v658
  %v694 = vadd.f32 %v693, %v659
  %v695 = vadd.f32 %v694, %v660
  %v696 = vadd.f32 %v695, %v661
  %v697 = vadd.f32 %v696, %v662
  %v698 = vrot.slane %v697, 4
  %v699 = vadd.f32 %v697, %v698
  %v700 = vrot.slane %v699, 2
  %v701 = vadd.f32 %v699, %v700
  %v702 = vrot.slane %v701, 1
  %v703 = vadd.f32 %v701, %v702
  %v704 = vmul.f32 %v703, 0.0034722222
  %v705 = vld [vmem:[%s3] sm:$0x1]
  %v706 = vadd.f32 %v704, 1e-05
  %v707 = vrsqrt.pop %v706
  %v708 = vmul.f32 %v705, %v707
  %v709 = vld [vmem:[%s4] sm:$0x1]
  %v710 = vmul.f32 %v590, %v708
  %v711 = vsub.f32 %v709, %v710
  %v713 = vlaneseq
  %v714 = vshrl.u32 %v713, 7
  %v715 = vsub.s32 0, %v714
  %v716 = vrot.slane %v708, %v715
  %v718 = vmul.f32 %v407, %v716
  %v719 = vmul.f32 %v410, %v716
  %v720 = vmul.f32 %v415, %v716
  %v721 = vmul.f32 %v418, %v716
  %v722 = vmul.f32 %v423, %v716
  %v723 = vmul.f32 %v426, %v716
  %v724 = vmul.f32 %v431, %v716
  %v725 = vmul.f32 %v434, %v716
  %v726 = vmul.f32 %v439, %v716
  %v727 = vmul.f32 %v442, %v716
  %v728 = vmul.f32 %v447, %v716
  %v729 = vmul.f32 %v450, %v716
  %v730 = vmul.f32 %v455, %v716
  %v731 = vmul.f32 %v458, %v716
  %v732 = vmul.f32 %v463, %v716
  %v733 = vmul.f32 %v466, %v716
  %v734 = vmul.f32 %v471, %v716
  %v735 = vmul.f32 %v474, %v716
  %v736 = vmul.f32 %v479, %v716
  %v737 = vmul.f32 %v482, %v716
  %v738 = vmul.f32 %v487, %v716
  %v739 = vmul.f32 %v490, %v716
  %v740 = vmul.f32 %v495, %v716
  %v741 = vmul.f32 %v498, %v716
  %v742 = vmul.f32 %v503, %v716
  %v743 = vmul.f32 %v506, %v716
  %v744 = vmul.f32 %v511, %v716
  %v745 = vmul.f32 %v514, %v716
  %v746 = vmul.f32 %v519, %v716
  %v747 = vmul.f32 %v522, %v716
  %v748 = vmul.f32 %v527, %v716
  %v749 = vmul.f32 %v530, %v716
  %v750 = vmul.f32 %v535, %v716
  %v751 = vmul.f32 %v538, %v716
  %v752 = vmul.f32 %v543, %v716
  %v753 = vmul.f32 %v546, %v716
  %v755 = vlaneseq
  %v756 = vshrl.u32 %v755, 7
  %v757 = vsub.s32 0, %v756
  %v758 = vrot.slane %v711, %v757
  %v760 = vadd.f32 %v718, %v758
  %v761 = vadd.f32 %v719, %v758
  %v762 = vadd.f32 %v720, %v758
  %v763 = vadd.f32 %v721, %v758
  %v764 = vadd.f32 %v722, %v758
  %v765 = vadd.f32 %v723, %v758
  %v766 = vadd.f32 %v724, %v758
  %v767 = vadd.f32 %v725, %v758
  %v768 = vadd.f32 %v726, %v758
  %v769 = vadd.f32 %v727, %v758
  %v770 = vadd.f32 %v728, %v758
  %v771 = vadd.f32 %v729, %v758
  %v772 = vadd.f32 %v730, %v758
  %v773 = vadd.f32 %v731, %v758
  %v774 = vadd.f32 %v732, %v758
  %v775 = vadd.f32 %v733, %v758
  %v776 = vadd.f32 %v734, %v758
  %v777 = vadd.f32 %v735, %v758
  %v778 = vadd.f32 %v736, %v758
  %v779 = vadd.f32 %v737, %v758
  %v780 = vadd.f32 %v738, %v758
  %v781 = vadd.f32 %v739, %v758
  %v782 = vadd.f32 %v740, %v758
  %v783 = vadd.f32 %v741, %v758
  %v784 = vadd.f32 %v742, %v758
  %v785 = vadd.f32 %v743, %v758
  %v786 = vadd.f32 %v744, %v758
  %v787 = vadd.f32 %v745, %v758
  %v788 = vadd.f32 %v746, %v758
  %v789 = vadd.f32 %v747, %v758
  %v790 = vadd.f32 %v748, %v758
  %v791 = vadd.f32 %v749, %v758
  %v792 = vadd.f32 %v750, %v758
  %v793 = vadd.f32 %v751, %v758
  %v794 = vadd.f32 %v752, %v758
  %v795 = vadd.f32 %v753, %v758
  %vm796 = vcmp.ge.f32.partialorder %v760, 0.0
  %vm797 = vcmp.ge.f32.partialorder %v761, 0.0
  %vm798 = vcmp.ge.f32.partialorder %v762, 0.0
  %vm799 = vcmp.ge.f32.partialorder %v763, 0.0
  %vm800 = vcmp.ge.f32.partialorder %v764, 0.0
  %vm801 = vcmp.ge.f32.partialorder %v765, 0.0
  %vm802 = vcmp.ge.f32.partialorder %v766, 0.0
  %vm803 = vcmp.ge.f32.partialorder %v767, 0.0
  %vm804 = vcmp.ge.f32.partialorder %v768, 0.0
  %vm805 = vcmp.ge.f32.partialorder %v769, 0.0
  %vm806 = vcmp.ge.f32.partialorder %v770, 0.0
  %vm807 = vcmp.ge.f32.partialorder %v771, 0.0
  %vm808 = vcmp.ge.f32.partialorder %v772, 0.0
  %vm809 = vcmp.ge.f32.partialorder %v773, 0.0
  %vm810 = vcmp.ge.f32.partialorder %v774, 0.0
  %vm811 = vcmp.ge.f32.partialorder %v775, 0.0
  %vm812 = vcmp.ge.f32.partialorder %v776, 0.0
  %vm813 = vcmp.ge.f32.partialorder %v777, 0.0
  %vm814 = vcmp.ge.f32.partialorder %v778, 0.0
  %vm815 = vcmp.ge.f32.partialorder %v779, 0.0
  %vm816 = vcmp.ge.f32.partialorder %v780, 0.0
  %vm817 = vcmp.ge.f32.partialorder %v781, 0.0
  %vm818 = vcmp.ge.f32.partialorder %v782, 0.0
  %vm819 = vcmp.ge.f32.partialorder %v783, 0.0
  %vm820 = vcmp.ge.f32.partialorder %v784, 0.0
  %vm821 = vcmp.ge.f32.partialorder %v785, 0.0
  %vm822 = vcmp.ge.f32.partialorder %v786, 0.0
  %vm823 = vcmp.ge.f32.partialorder %v787, 0.0
  %vm824 = vcmp.ge.f32.partialorder %v788, 0.0
  %vm825 = vcmp.ge.f32.partialorder %v789, 0.0
  %vm826 = vcmp.ge.f32.partialorder %v790, 0.0
  %vm827 = vcmp.ge.f32.partialorder %v791, 0.0
  %vm828 = vcmp.ge.f32.partialorder %v792, 0.0
  %vm829 = vcmp.ge.f32.partialorder %v793, 0.0
  %vm830 = vcmp.ge.f32.partialorder %v794, 0.0
  %vm831 = vcmp.ge.f32.partialorder %v795, 0.0
  %v832 = vmul.f32 %v760, 0.2
  %v833 = vmul.f32 %v761, 0.2
  %v834 = vmul.f32 %v762, 0.2
  %v835 = vmul.f32 %v763, 0.2
  %v836 = vmul.f32 %v764, 0.2
  %v837 = vmul.f32 %v765, 0.2
  %v838 = vmul.f32 %v766, 0.2
  %v839 = vmul.f32 %v767, 0.2
  %v840 = vmul.f32 %v768, 0.2
  %v841 = vmul.f32 %v769, 0.2
  %v842 = vmul.f32 %v770, 0.2
  %v843 = vmul.f32 %v771, 0.2
  %v844 = vmul.f32 %v772, 0.2
  %v845 = vmul.f32 %v773, 0.2
  %v846 = vmul.f32 %v774, 0.2
  %v847 = vmul.f32 %v775, 0.2
  %v848 = vmul.f32 %v776, 0.2
  %v849 = vmul.f32 %v777, 0.2
  %v850 = vmul.f32 %v778, 0.2
  %v851 = vmul.f32 %v779, 0.2
  %v852 = vmul.f32 %v780, 0.2
  %v853 = vmul.f32 %v781, 0.2
  %v854 = vmul.f32 %v782, 0.2
  %v855 = vmul.f32 %v783, 0.2
  %v856 = vmul.f32 %v784, 0.2
  %v857 = vmul.f32 %v785, 0.2
  %v858 = vmul.f32 %v786, 0.2
  %v859 = vmul.f32 %v787, 0.2
  %v860 = vmul.f32 %v788, 0.2
  %v861 = vmul.f32 %v789, 0.2
  %v862 = vmul.f32 %v790, 0.2
  %v863 = vmul.f32 %v791, 0.2
  %v864 = vmul.f32 %v792, 0.2
  %v865 = vmul.f32 %v793, 0.2
  %v866 = vmul.f32 %v794, 0.2
  %v867 = vmul.f32 %v795, 0.2
  %v868 = vsel %vm796, %v760, %v832
  %v869 = vsel %vm797, %v761, %v833
  %v870 = vsel %vm798, %v762, %v834
  %v871 = vsel %vm799, %v763, %v835
  %v872 = vsel %vm800, %v764, %v836
  %v873 = vsel %vm801, %v765, %v837
  %v874 = vsel %vm802, %v766, %v838
  %v875 = vsel %vm803, %v767, %v839
  %v876 = vsel %vm804, %v768, %v840
  %v877 = vsel %vm805, %v769, %v841
  %v878 = vsel %vm806, %v770, %v842
  %v879 = vsel %vm807, %v771, %v843
  %v880 = vsel %vm808, %v772, %v844
  %v881 = vsel %vm809, %v773, %v845
  %v882 = vsel %vm810, %v774, %v846
  %v883 = vsel %vm811, %v775, %v847
  %v884 = vsel %vm812, %v776, %v848
  %v885 = vsel %vm813, %v777, %v849
  %v886 = vsel %vm814, %v778, %v850
  %v887 = vsel %vm815, %v779, %v851
  %v888 = vsel %vm816, %v780, %v852
  %v889 = vsel %vm817, %v781, %v853
  %v890 = vsel %vm818, %v782, %v854
  %v891 = vsel %vm819, %v783, %v855
  %v892 = vsel %vm820, %v784, %v856
  %v893 = vsel %vm821, %v785, %v857
  %v894 = vsel %vm822, %v786, %v858
  %v895 = vsel %vm823, %v787, %v859
  %v896 = vsel %vm824, %v788, %v860
  %v897 = vsel %vm825, %v789, %v861
  %v898 = vsel %vm826, %v790, %v862
  %v899 = vsel %vm827, %v791, %v863
  %v900 = vsel %vm828, %v792, %v864
  %v901 = vsel %vm829, %v793, %v865
  %v902 = vsel %vm830, %v794, %v866
  %v903 = vsel %vm831, %v795, %v867
  %v904 = vpack.c.bf16 %v869, %v868
  %v905 = vpack.c.bf16 %v871, %v870
  %v906 = vpack.c.bf16 %v873, %v872
  %v907 = vpack.c.bf16 %v875, %v874
  %v908 = vpack.c.bf16 %v877, %v876
  %v909 = vpack.c.bf16 %v879, %v878
  %v910 = vpack.c.bf16 %v881, %v880
  %v911 = vpack.c.bf16 %v883, %v882
  %v912 = vpack.c.bf16 %v885, %v884
  %v913 = vpack.c.bf16 %v887, %v886
  %v914 = vpack.c.bf16 %v889, %v888
  %v915 = vpack.c.bf16 %v891, %v890
  %v916 = vpack.c.bf16 %v893, %v892
  %v917 = vpack.c.bf16 %v895, %v894
  %v918 = vpack.c.bf16 %v897, %v896
  %v919 = vpack.c.bf16 %v899, %v898
  %v920 = vpack.c.bf16 %v901, %v900
  %v921 = vpack.c.bf16 %v903, %v902
  %v940 = vunpack.c.l.b16 %v904
  %v941 = vunpack.c.h.b16 %v904
  %v942 = vunpack.c.l.b16 %v905
  %v943 = vunpack.c.h.b16 %v905
  %v944 = vunpack.c.l.b16 %v906
  %v945 = vunpack.c.h.b16 %v906
  %v946 = vunpack.c.l.b16 %v907
  %v947 = vunpack.c.h.b16 %v907
  %v948 = vunpack.c.l.b16 %v908
  %v949 = vunpack.c.h.b16 %v908
  %v950 = vunpack.c.l.b16 %v909
  %v951 = vunpack.c.h.b16 %v909
  %v952 = vunpack.c.l.b16 %v910
  %v953 = vunpack.c.h.b16 %v910
  %v954 = vunpack.c.l.b16 %v911
  %v955 = vunpack.c.h.b16 %v911
  %v956 = vunpack.c.l.b16 %v912
  %v957 = vunpack.c.h.b16 %v912
  %v958 = vunpack.c.l.b16 %v913
  %v959 = vunpack.c.h.b16 %v913
  %v960 = vunpack.c.l.b16 %v914
  %v961 = vunpack.c.h.b16 %v914
  %v962 = vunpack.c.l.b16 %v915
  %v963 = vunpack.c.h.b16 %v915
  %v964 = vunpack.c.l.b16 %v916
  %v965 = vunpack.c.h.b16 %v916
  %v966 = vunpack.c.l.b16 %v917
  %v967 = vunpack.c.h.b16 %v917
  %v968 = vunpack.c.l.b16 %v918
  %v969 = vunpack.c.h.b16 %v918
  %v970 = vunpack.c.l.b16 %v919
  %v971 = vunpack.c.h.b16 %v919
  %v972 = vunpack.c.l.b16 %v920
  %v973 = vunpack.c.h.b16 %v920
  %v974 = vunpack.c.l.b16 %v921
  %v975 = vunpack.c.h.b16 %v921
  %v976 = vpack.c.b16 %v940, %v940
  %v977 = vpack.c.b16 %v941, %v941
  %v978 = vpack.c.b16 %v942, %v942
  %v979 = vpack.c.b16 %v943, %v943
  %v980 = vpack.c.b16 %v944, %v944
  %v981 = vpack.c.b16 %v945, %v945
  %v982 = vpack.c.b16 %v946, %v946
  %v983 = vpack.c.b16 %v947, %v947
  %v984 = vpack.c.b16 %v948, %v948
  %v985 = vpack.c.b16 %v949, %v949
  %v986 = vpack.c.b16 %v950, %v950
  %v987 = vpack.c.b16 %v951, %v951
  %v988 = vpack.c.b16 %v952, %v952
  %v989 = vpack.c.b16 %v953, %v953
  %v990 = vpack.c.b16 %v954, %v954
  %v991 = vpack.c.b16 %v955, %v955
  %v992 = vpack.c.b16 %v956, %v956
  %v993 = vpack.c.b16 %v957, %v957
  %v994 = vpack.c.b16 %v958, %v958
  %v995 = vpack.c.b16 %v959, %v959
  %v996 = vpack.c.b16 %v960, %v960
  %v997 = vpack.c.b16 %v961, %v961
  %v998 = vpack.c.b16 %v962, %v962
  %v999 = vpack.c.b16 %v963, %v963
  %v1000 = vpack.c.b16 %v964, %v964
  %v1001 = vpack.c.b16 %v965, %v965
  %v1002 = vpack.c.b16 %v966, %v966
  %v1003 = vpack.c.b16 %v967, %v967
  %v1004 = vpack.c.b16 %v968, %v968
  %v1005 = vpack.c.b16 %v969, %v969
  %v1006 = vpack.c.b16 %v970, %v970
  %v1007 = vpack.c.b16 %v971, %v971
  %v1008 = vpack.c.b16 %v972, %v972
  %v1009 = vpack.c.b16 %v973, %v973
  %v1010 = vpack.c.b16 %v974, %v974
  %v1011 = vpack.c.b16 %v975, %v975
  %1048 = vst [vmem:[%s5] sm:$0xf] %v976
  %1049 = vst [vmem:[%s5 + $0x4] sm:$0xf] %v977
  %1050 = vst [vmem:[%s5 + $0x8] sm:$0xf] %v978
  %1051 = vst [vmem:[%s5 + $0xc] sm:$0xf] %v979
  %1052 = vst [vmem:[%s5 + $0x10] sm:$0xf] %v980
  %1053 = vst [vmem:[%s5 + $0x14] sm:$0xf] %v981
  %1054 = vst [vmem:[%s5 + $0x18] sm:$0xf] %v982
  %1055 = vst [vmem:[%s5 + $0x1c] sm:$0xf] %v983
  %1056 = vst [vmem:[%s5 + $0x20] sm:$0xf] %v984
  %1057 = vst [vmem:[%s5 + $0x24] sm:$0xf] %v985
  %1058 = vst [vmem:[%s5 + $0x28] sm:$0xf] %v986
  %1059 = vst [vmem:[%s5 + $0x2c] sm:$0xf] %v987
  %1060 = vst [vmem:[%s5 + $0x30] sm:$0xf] %v988
  %1061 = vst [vmem:[%s5 + $0x34] sm:$0xf] %v989
  %1062 = vst [vmem:[%s5 + $0x38] sm:$0xf] %v990
  %1063 = vst [vmem:[%s5 + $0x3c] sm:$0xf] %v991
  %1064 = vst [vmem:[%s5 + $0x40] sm:$0xf] %v992
  %1065 = vst [vmem:[%s5 + $0x44] sm:$0xf] %v993
  %1066 = vst [vmem:[%s5 + $0x48] sm:$0xf] %v994
  %1067 = vst [vmem:[%s5 + $0x4c] sm:$0xf] %v995
  %1068 = vst [vmem:[%s5 + $0x50] sm:$0xf] %v996
  %1069 = vst [vmem:[%s5 + $0x54] sm:$0xf] %v997
  %1070 = vst [vmem:[%s5 + $0x58] sm:$0xf] %v998
  %1071 = vst [vmem:[%s5 + $0x5c] sm:$0xf] %v999
  %1072 = vst [vmem:[%s5 + $0x60] sm:$0xf] %v1000
  %1073 = vst [vmem:[%s5 + $0x64] sm:$0xf] %v1001
  %1074 = vst [vmem:[%s5 + $0x68] sm:$0xf] %v1002
  %1075 = vst [vmem:[%s5 + $0x6c] sm:$0xf] %v1003
  %1076 = vst [vmem:[%s5 + $0x70] sm:$0xf] %v1004
  %1077 = vst [vmem:[%s5 + $0x74] sm:$0xf] %v1005
  %1078 = vst [vmem:[%s5 + $0x78] sm:$0xf] %v1006
  %1079 = vst [vmem:[%s5 + $0x7c] sm:$0xf] %v1007
  %1080 = vst [vmem:[%s5 + $0x80] sm:$0xf] %v1008
  %1081 = vst [vmem:[%s5 + $0x84] sm:$0xf] %v1009
  %1082 = vst [vmem:[%s5 + $0x88] sm:$0xf] %v1010
  %1083 = vst [vmem:[%s5 + $0x8c] sm:$0xf] %v1011
  // Predicated region
  $region22: #{_lambda_.8} parent=0 // pred_check
    _
  $region23: #{_lambda_.8} parent=0 // pred_check_branch
    %1085 = sbr.rel (0) target = $region25
  $region24: #{_lambda_.8} parent=0 // pred_region
    _
  $region25: #{_lambda_.8} parent=0 // pred_fallthru
    _
  // Predicated region
  $region26: #{_lambda_.8} parent=0 // pred_check
    _
  $region27: #{_lambda_.8} parent=0 // pred_check_branch
    %1087 = sbr.rel (0) target = $region29
  $region28: #{_lambda_.8} parent=0 // pred_region
    _
  $region29: #{_lambda_.8} parent=0 // pred_fallthru
    _

// kernel: _lambda_.9
$region0: #{_lambda_.9}
  #allocation0 [shape = 'u32[]', space=smem, size = 0x4, offset = 0x4, fixed_abs, tag = 'smem constant byte address 0x4 - core index']
  #allocation1 [shape = 'u32[144,128]{1,0:T(1,128)}', space=vmem, size = 0x12000, scoped, tag = 'internal scratch']
  %s0 = inlined_call_operand.vmem [shape: bf16[242,512], index: 0, kind: input, shape index: {}]
  %s1 = inlined_call_operand.vmem [shape: bf16[512,128], index: 1, kind: input, shape index: {}]
  %s2 = inlined_call_operand.vmem [shape: f32[1,128], index: 2, kind: input, shape index: {}]
  %s3 = inlined_call_operand.vmem [shape: f32[1,128], index: 3, kind: input, shape index: {}]
  %s4 = inlined_call_operand.vmem [shape: f32[1,128], index: 4, kind: input, shape index: {}]
  %s5 = inlined_call_operand.vmem [shape: bf16[242,128], index: 5, kind: output, shape index: {}]
  %s6 = sld [smem:[#allocation0]]
  $region30: #{_lambda_.9} parent=0
    _
  %s8 = ssub.s32 1, %s6
  %s9 = scalar_select 0, %s8, %s6
  // Predicated region
  $region2: #{_lambda_.9} parent=0 // pred_check
    _
  $region3: #{_lambda_.9} parent=0 // pred_check_branch
    %11 = sbr.rel (0) target = $region5
  $region4: #{_lambda_.9} parent=0 // pred_region
    _
  $region5: #{_lambda_.9} parent=0 // pred_fallthru
    _
  // Predicated region
  $region6: #{_lambda_.9} parent=0 // pred_check
    _
  $region7: #{_lambda_.9} parent=0 // pred_check_branch
    %13 = sbr.rel (0) target = $region9
  $region8: #{_lambda_.9} parent=0 // pred_region
    _
  $region9: #{_lambda_.9} parent=0 // pred_fallthru
    _
  // Predicated region
  $region10: #{_lambda_.9} parent=0 // pred_check
    _
  $region11: #{_lambda_.9} parent=0 // pred_check_branch
    %15 = sbr.rel (0) target = $region13
  $region12: #{_lambda_.9} parent=0 // pred_region
    _
  $region13: #{_lambda_.9} parent=0 // pred_fallthru
    _
  // Predicated region
  $region14: #{_lambda_.9} parent=0 // pred_check
    _
  $region15: #{_lambda_.9} parent=0 // pred_check_branch
    %17 = sbr.rel (0) target = $region17
  $region16: #{_lambda_.9} parent=0 // pred_region
    _
  $region17: #{_lambda_.9} parent=0 // pred_fallthru
    _
  // Predicated region
  $region18: #{_lambda_.9} parent=0 // pred_check
    _
  $region19: #{_lambda_.9} parent=0 // pred_check_branch
    %19 = sbr.rel (0) target = $region21
  $region20: #{_lambda_.9} parent=0 // pred_region
    _
  $region21: #{_lambda_.9} parent=0 // pred_fallthru
    _
  %v21 = vld [vmem:[%s0] sm:$0xff]
  %v22 = vld [vmem:[%s0 + $0x8] sm:$0xff]
  %v23 = vld [vmem:[%s0 + $0x10] sm:$0xff]
  %v24 = vld [vmem:[%s0 + $0x18] sm:$0xff]
  %v25 = vld [vmem:[%s0 + $0x20] sm:$0xff]
  %v26 = vld [vmem:[%s0 + $0x28] sm:$0xff]
  %v27 = vld [vmem:[%s0 + $0x30] sm:$0xff]
  %v28 = vld [vmem:[%s0 + $0x38] sm:$0xff]
  %v29 = vld [vmem:[%s0 + $0x40] sm:$0xff]
  %v30 = vld [vmem:[%s0 + $0x48] sm:$0xff]
  %v31 = vld [vmem:[%s0 + $0x50] sm:$0xff]
  %v32 = vld [vmem:[%s0 + $0x58] sm:$0xff]
  %v33 = vld [vmem:[%s0 + $0x60] sm:$0xff]
  %v34 = vld [vmem:[%s0 + $0x68] sm:$0xff]
  %v35 = vld [vmem:[%s0 + $0x70] sm:$0xff]
  %v36 = vld [vmem:[%s0 + $0x78] sm:$0xff]
  %v37 = vld [vmem:[%s0 + $0x80] sm:$0xff]
  %v38 = vld [vmem:[%s0 + $0x88] sm:$0xff]
  %v39 = vld [vmem:[%s0 + $0x90] sm:$0xff]
  %v40 = vld [vmem:[%s0 + $0x98] sm:$0xff]
  %v41 = vld [vmem:[%s0 + $0xa0] sm:$0xff]
  %v42 = vld [vmem:[%s0 + $0xa8] sm:$0xff]
  %v43 = vld [vmem:[%s0 + $0xb0] sm:$0xff]
  %v44 = vld [vmem:[%s0 + $0xb8] sm:$0xff]
  %v45 = vld [vmem:[%s0 + $0xc0] sm:$0xff]
  %v46 = vld [vmem:[%s0 + $0xc8] sm:$0xff]
  %v47 = vld [vmem:[%s0 + $0xd0] sm:$0xff]
  %v48 = vld [vmem:[%s0 + $0xd8] sm:$0xff]
  %v49 = vld [vmem:[%s0 + $0xe0] sm:$0xff]
  %v50 = vld [vmem:[%s0 + $0xe8] sm:$0xff]
  %v51 = vld [vmem:[%s0 + $0xf0] sm:$0xff]
  %v52 = vld [vmem:[%s0 + $0xf8] sm:$0xff]
  %v53 = vld [vmem:[%s0 + $0x100] sm:$0xff]
  %v54 = vld [vmem:[%s0 + $0x108] sm:$0xff]
  %v55 = vld [vmem:[%s0 + $0x110] sm:$0xff]
  %v56 = vld [vmem:[%s0 + $0x118] sm:$0xff]
  %v57 = vld [vmem:[%s0 + $0x120] sm:$0xff]
  %v58 = vld [vmem:[%s0 + $0x128] sm:$0xff]
  %v59 = vld [vmem:[%s0 + $0x130] sm:$0xff]
  %v60 = vld [vmem:[%s0 + $0x138] sm:$0xff]
  %v61 = vld [vmem:[%s0 + $0x140] sm:$0xff]
  %v62 = vld [vmem:[%s0 + $0x148] sm:$0xff]
  %v63 = vld [vmem:[%s0 + $0x150] sm:$0xff]
  %v64 = vld [vmem:[%s0 + $0x158] sm:$0xff]
  %v65 = vld [vmem:[%s0 + $0x160] sm:$0xff]
  %v66 = vld [vmem:[%s0 + $0x168] sm:$0xff]
  %v67 = vld [vmem:[%s0 + $0x170] sm:$0xff]
  %v68 = vld [vmem:[%s0 + $0x178] sm:$0xff]
  %v69 = vld [vmem:[%s0 + $0x180] sm:$0xff]
  %v70 = vld [vmem:[%s0 + $0x188] sm:$0xff]
  %v71 = vld [vmem:[%s0 + $0x190] sm:$0xff]
  %v72 = vld [vmem:[%s0 + $0x198] sm:$0xff]
  %v73 = vld [vmem:[%s0 + $0x1a0] sm:$0xff]
  %v74 = vld [vmem:[%s0 + $0x1a8] sm:$0xff]
  %v75 = vld [vmem:[%s0 + $0x1b0] sm:$0xff]
  %v76 = vld [vmem:[%s0 + $0x1b8] sm:$0xff]
  %v77 = vld [vmem:[%s0 + $0x1c0] sm:$0xff]
  %v78 = vld [vmem:[%s0 + $0x1c8] sm:$0xff]
  %v79 = vld [vmem:[%s0 + $0x1d0] sm:$0xff]
  %v80 = vld [vmem:[%s0 + $0x1d8] sm:$0xff]
  %v81 = vld [vmem:[%s0 + $0x1e0] sm:$0x11]
  %v82 = vld [vmem:[%s0 + $0x1e8] sm:$0x11]
  %v83 = vld [vmem:[%s1] sm:$0xf]
  %v84 = vld [vmem:[%s1 + $0x4] sm:$0xf]
  %v85 = vld [vmem:[%s1 + $0x8] sm:$0xf]
  %v86 = vld [vmem:[%s1 + $0xc] sm:$0xf]
  %v87 = vld [vmem:[%s1 + $0x10] sm:$0xf]
  %v88 = vld [vmem:[%s1 + $0x14] sm:$0xf]
  %v89 = vld [vmem:[%s1 + $0x18] sm:$0xf]
  %v90 = vld [vmem:[%s1 + $0x1c] sm:$0xf]
  %v91 = vld [vmem:[%s1 + $0x20] sm:$0xf]
  %v92 = vld [vmem:[%s1 + $0x24] sm:$0xf]
  %v93 = vld [vmem:[%s1 + $0x28] sm:$0xf]
  %v94 = vld [vmem:[%s1 + $0x2c] sm:$0xf]
  %v95 = vld [vmem:[%s1 + $0x30] sm:$0xf]
  %v96 = vld [vmem:[%s1 + $0x34] sm:$0xf]
  %v97 = vld [vmem:[%s1 + $0x38] sm:$0xf]
  %v98 = vld [vmem:[%s1 + $0x3c] sm:$0xf]
  %v99 = vld [vmem:[%s1 + $0x40] sm:$0xf]
  %v100 = vld [vmem:[%s1 + $0x44] sm:$0xf]
  %v101 = vld [vmem:[%s1 + $0x48] sm:$0xf]
  %v102 = vld [vmem:[%s1 + $0x4c] sm:$0xf]
  %v103 = vld [vmem:[%s1 + $0x50] sm:$0xf]
  %v104 = vld [vmem:[%s1 + $0x54] sm:$0xf]
  %v105 = vld [vmem:[%s1 + $0x58] sm:$0xf]
  %v106 = vld [vmem:[%s1 + $0x5c] sm:$0xf]
  %v107 = vld [vmem:[%s1 + $0x60] sm:$0xf]
  %v108 = vld [vmem:[%s1 + $0x64] sm:$0xf]
  %v109 = vld [vmem:[%s1 + $0x68] sm:$0xf]
  %v110 = vld [vmem:[%s1 + $0x6c] sm:$0xf]
  %v111 = vld [vmem:[%s1 + $0x70] sm:$0xf]
  %v112 = vld [vmem:[%s1 + $0x74] sm:$0xf]
  %v113 = vld [vmem:[%s1 + $0x78] sm:$0xf]
  %v114 = vld [vmem:[%s1 + $0x7c] sm:$0xf]
  %v115 = vld [vmem:[%s1 + $0x80] sm:$0xf]
  %v116 = vld [vmem:[%s1 + $0x84] sm:$0xf]
  %v117 = vld [vmem:[%s1 + $0x88] sm:$0xf]
  %v118 = vld [vmem:[%s1 + $0x8c] sm:$0xf]
  %v119 = vld [vmem:[%s1 + $0x90] sm:$0xf]
  %v120 = vld [vmem:[%s1 + $0x94] sm:$0xf]
  %v121 = vld [vmem:[%s1 + $0x98] sm:$0xf]
  %v122 = vld [vmem:[%s1 + $0x9c] sm:$0xf]
  %v123 = vld [vmem:[%s1 + $0xa0] sm:$0xf]
  %v124 = vld [vmem:[%s1 + $0xa4] sm:$0xf]
  %v125 = vld [vmem:[%s1 + $0xa8] sm:$0xf]
  %v126 = vld [vmem:[%s1 + $0xac] sm:$0xf]
  %v127 = vld [vmem:[%s1 + $0xb0] sm:$0xf]
  %v128 = vld [vmem:[%s1 + $0xb4] sm:$0xf]
  %v129 = vld [vmem:[%s1 + $0xb8] sm:$0xf]
  %v130 = vld [vmem:[%s1 + $0xbc] sm:$0xf]
  %v131 = vld [vmem:[%s1 + $0xc0] sm:$0xf]
  %v132 = vld [vmem:[%s1 + $0xc4] sm:$0xf]
  %v133 = vld [vmem:[%s1 + $0xc8] sm:$0xf]
  %v134 = vld [vmem:[%s1 + $0xcc] sm:$0xf]
  %v135 = vld [vmem:[%s1 + $0xd0] sm:$0xf]
  %v136 = vld [vmem:[%s1 + $0xd4] sm:$0xf]
  %v137 = vld [vmem:[%s1 + $0xd8] sm:$0xf]
  %v138 = vld [vmem:[%s1 + $0xdc] sm:$0xf]
  %v139 = vld [vmem:[%s1 + $0xe0] sm:$0xf]
  %v140 = vld [vmem:[%s1 + $0xe4] sm:$0xf]
  %v141 = vld [vmem:[%s1 + $0xe8] sm:$0xf]
  %v142 = vld [vmem:[%s1 + $0xec] sm:$0xf]
  %v143 = vld [vmem:[%s1 + $0xf0] sm:$0xf]
  %v144 = vld [vmem:[%s1 + $0xf4] sm:$0xf]
  %v145 = vld [vmem:[%s1 + $0xf8] sm:$0xf]
  %v146 = vld [vmem:[%s1 + $0xfc] sm:$0xf]
  %v147 = vld [vmem:[%s2] sm:$0x1]
  %v149 = vlaneseq
  %v150 = vshrl.u32 %v149, 7
  %v151 = vsub.s32 0, %v150
  %v152 = vrot.slane %v147, %v151
  %v216 = vunpack.c.l.b16 %v21
  %v217 = vunpack.c.h.b16 %v21
  %v218 = vunpack.c.l.b16 %v22
  %v219 = vunpack.c.h.b16 %v22
  %v220 = vunpack.c.l.b16 %v23
  %v221 = vunpack.c.h.b16 %v23
  %v222 = vunpack.c.l.b16 %v24
  %v223 = vunpack.c.h.b16 %v24
  %v224 = vunpack.c.l.b16 %v25
  %v225 = vunpack.c.h.b16 %v25
  %v226 = vunpack.c.l.b16 %v26
  %v227 = vunpack.c.h.b16 %v26
  %v228 = vunpack.c.l.b16 %v27
  %v229 = vunpack.c.h.b16 %v27
  %v230 = vunpack.c.l.b16 %v28
  %v231 = vunpack.c.h.b16 %v28
  %v232 = vunpack.c.l.b16 %v29
  %v233 = vunpack.c.h.b16 %v29
  %v234 = vunpack.c.l.b16 %v30
  %v235 = vunpack.c.h.b16 %v30
  %v236 = vunpack.c.l.b16 %v31
  %v237 = vunpack.c.h.b16 %v31
  %v238 = vunpack.c.l.b16 %v32
  %v239 = vunpack.c.h.b16 %v32
  %v240 = vunpack.c.l.b16 %v33
  %v241 = vunpack.c.h.b16 %v33
  %v242 = vunpack.c.l.b16 %v34
  %v243 = vunpack.c.h.b16 %v34
  %v244 = vunpack.c.l.b16 %v35
  %v245 = vunpack.c.h.b16 %v35
  %v246 = vunpack.c.l.b16 %v36
  %v247 = vunpack.c.h.b16 %v36
  %v248 = vunpack.c.l.b16 %v37
  %v249 = vunpack.c.h.b16 %v37
  %v250 = vunpack.c.l.b16 %v38
  %v251 = vunpack.c.h.b16 %v38
  %v252 = vunpack.c.l.b16 %v39
  %v253 = vunpack.c.h.b16 %v39
  %v254 = vunpack.c.l.b16 %v40
  %v255 = vunpack.c.h.b16 %v40
  %v256 = vunpack.c.l.b16 %v41
  %v257 = vunpack.c.h.b16 %v41
  %v258 = vunpack.c.l.b16 %v42
  %v259 = vunpack.c.h.b16 %v42
  %v260 = vunpack.c.l.b16 %v43
  %v261 = vunpack.c.h.b16 %v43
  %v262 = vunpack.c.l.b16 %v44
  %v263 = vunpack.c.h.b16 %v44
  %v264 = vunpack.c.l.b16 %v45
  %v265 = vunpack.c.h.b16 %v45
  %v266 = vunpack.c.l.b16 %v46
  %v267 = vunpack.c.h.b16 %v46
  %v268 = vunpack.c.l.b16 %v47
  %v269 = vunpack.c.h.b16 %v47
  %v270 = vunpack.c.l.b16 %v48
  %v271 = vunpack.c.h.b16 %v48
  %v272 = vunpack.c.l.b16 %v49
  %v273 = vunpack.c.h.b16 %v49
  %v274 = vunpack.c.l.b16 %v50
  %v275 = vunpack.c.h.b16 %v50
  %v276 = vunpack.c.l.b16 %v51
  %v277 = vunpack.c.h.b16 %v51
  %v278 = vunpack.c.l.b16 %v52
  %v279 = vunpack.c.h.b16 %v52
  %v280 = vunpack.c.l.b16 %v53
  %v281 = vunpack.c.h.b16 %v53
  %v282 = vunpack.c.l.b16 %v54
  %v283 = vunpack.c.h.b16 %v54
  %v284 = vunpack.c.l.b16 %v55
  %v285 = vunpack.c.h.b16 %v55
  %v286 = vunpack.c.l.b16 %v56
  %v287 = vunpack.c.h.b16 %v56
  %v288 = vunpack.c.l.b16 %v57
  %v289 = vunpack.c.h.b16 %v57
  %v290 = vunpack.c.l.b16 %v58
  %v291 = vunpack.c.h.b16 %v58
  %v292 = vunpack.c.l.b16 %v59
  %v293 = vunpack.c.h.b16 %v59
  %v294 = vunpack.c.l.b16 %v60
  %v295 = vunpack.c.h.b16 %v60
  %v296 = vunpack.c.l.b16 %v61
  %v297 = vunpack.c.h.b16 %v61
  %v298 = vunpack.c.l.b16 %v62
  %v299 = vunpack.c.h.b16 %v62
  %v300 = vunpack.c.l.b16 %v63
  %v301 = vunpack.c.h.b16 %v63
  %v302 = vunpack.c.l.b16 %v64
  %v303 = vunpack.c.h.b16 %v64
  %v304 = vunpack.c.l.b16 %v65
  %v305 = vunpack.c.h.b16 %v65
  %v306 = vunpack.c.l.b16 %v66
  %v307 = vunpack.c.h.b16 %v66
  %v308 = vunpack.c.l.b16 %v67
  %v309 = vunpack.c.h.b16 %v67
  %v310 = vunpack.c.l.b16 %v68
  %v311 = vunpack.c.h.b16 %v68
  %v312 = vunpack.c.l.b16 %v69
  %v313 = vunpack.c.h.b16 %v69
  %v314 = vunpack.c.l.b16 %v70
  %v315 = vunpack.c.h.b16 %v70
  %v316 = vunpack.c.l.b16 %v71
  %v317 = vunpack.c.h.b16 %v71
  %v318 = vunpack.c.l.b16 %v72
  %v319 = vunpack.c.h.b16 %v72
  %v320 = vunpack.c.l.b16 %v73
  %v321 = vunpack.c.h.b16 %v73
  %v322 = vunpack.c.l.b16 %v74
  %v323 = vunpack.c.h.b16 %v74
  %v324 = vunpack.c.l.b16 %v75
  %v325 = vunpack.c.h.b16 %v75
  %v326 = vunpack.c.l.b16 %v76
  %v327 = vunpack.c.h.b16 %v76
  %v328 = vunpack.c.l.b16 %v77
  %v329 = vunpack.c.h.b16 %v77
  %v330 = vunpack.c.l.b16 %v78
  %v331 = vunpack.c.h.b16 %v78
  %v332 = vunpack.c.l.b16 %v79
  %v333 = vunpack.c.h.b16 %v79
  %v334 = vunpack.c.l.b16 %v80
  %v335 = vunpack.c.h.b16 %v80
  %v336 = vunpack.c.l.b16 %v81
  %v337 = vunpack.c.h.b16 %v81
  %v338 = vunpack.c.l.b16 %v82
  %v339 = vunpack.c.h.b16 %v82
  %v340 = vpack.c.b16 %v220, %v216
  %v341 = vpack.c.b16 %v221, %v217
  %v342 = vpack.c.b16 %v222, %v218
  %v343 = vpack.c.b16 %v223, %v219
  %v344 = vpack.c.b16 %v228, %v224
  %v345 = vpack.c.b16 %v229, %v225
  %v346 = vpack.c.b16 %v230, %v226
  %v347 = vpack.c.b16 %v231, %v227
  %v348 = vpack.c.b16 %v236, %v232
  %v349 = vpack.c.b16 %v237, %v233
  %v350 = vpack.c.b16 %v238, %v234
  %v351 = vpack.c.b16 %v239, %v235
  %v352 = vpack.c.b16 %v244, %v240
  %v353 = vpack.c.b16 %v245, %v241
  %v354 = vpack.c.b16 %v246, %v242
  %v355 = vpack.c.b16 %v247, %v243
  %v356 = vpack.c.b16 %v252, %v248
  %v357 = vpack.c.b16 %v253, %v249
  %v358 = vpack.c.b16 %v254, %v250
  %v359 = vpack.c.b16 %v255, %v251
  %v360 = vpack.c.b16 %v260, %v256
  %v361 = vpack.c.b16 %v261, %v257
  %v362 = vpack.c.b16 %v262, %v258
  %v363 = vpack.c.b16 %v263, %v259
  %v364 = vpack.c.b16 %v268, %v264
  %v365 = vpack.c.b16 %v269, %v265
  %v366 = vpack.c.b16 %v270, %v266
  %v367 = vpack.c.b16 %v271, %v267
  %v368 = vpack.c.b16 %v276, %v272
  %v369 = vpack.c.b16 %v277, %v273
  %v370 = vpack.c.b16 %v278, %v274
  %v371 = vpack.c.b16 %v279, %v275
  %v372 = vpack.c.b16 %v284, %v280
  %v373 = vpack.c.b16 %v285, %v281
  %v374 = vpack.c.b16 %v286, %v282
  %v375 = vpack.c.b16 %v287, %v283
  %v376 = vpack.c.b16 %v292, %v288
  %v377 = vpack.c.b16 %v293, %v289
  %v378 = vpack.c.b16 %v294, %v290
  %v379 = vpack.c.b16 %v295, %v291
  %v380 = vpack.c.b16 %v300, %v296
  %v381 = vpack.c.b16 %v301, %v297
  %v382 = vpack.c.b16 %v302, %v298
  %v383 = vpack.c.b16 %v303, %v299
  %v384 = vpack.c.b16 %v308, %v304
  %v385 = vpack.c.b16 %v309, %v305
  %v386 = vpack.c.b16 %v310, %v306
  %v387 = vpack.c.b16 %v311, %v307
  %v388 = vpack.c.b16 %v316, %v312
  %v389 = vpack.c.b16 %v317, %v313
  %v390 = vpack.c.b16 %v318, %v314
  %v391 = vpack.c.b16 %v319, %v315
  %v392 = vpack.c.b16 %v324, %v320
  %v393 = vpack.c.b16 %v325, %v321
  %v394 = vpack.c.b16 %v326, %v322
  %v395 = vpack.c.b16 %v327, %v323
  %v396 = vpack.c.b16 %v332, %v328
  %v397 = vpack.c.b16 %v333, %v329
  %v398 = vpack.c.b16 %v334, %v330
  %v399 = vpack.c.b16 %v335, %v331
  %v400 = vpack.c.b16 %v336, %v336
  %v401 = vpack.c.b16 %v337, %v337
  %v402 = vpack.c.b16 %v338, %v338
  %v403 = vpack.c.b16 %v339, %v339
  %v532 = vunpack.c.l.b16 %v83
  %v533 = vunpack.c.l.b16 %v84
  %v534 = vunpack.c.l.b16 %v85
  %v535 = vunpack.c.l.b16 %v86
  %v536 = vunpack.c.l.b16 %v87
  %v537 = vunpack.c.l.b16 %v88
  %v538 = vunpack.c.l.b16 %v89
  %v539 = vunpack.c.l.b16 %v90
  %v540 = vunpack.c.l.b16 %v91
  %v541 = vunpack.c.l.b16 %v92
  %v542 = vunpack.c.l.b16 %v93
  %v543 = vunpack.c.l.b16 %v94
  %v544 = vunpack.c.l.b16 %v95
  %v545 = vunpack.c.l.b16 %v96
  %v546 = vunpack.c.l.b16 %v97
  %v547 = vunpack.c.l.b16 %v98
  %v548 = vunpack.c.l.b16 %v99
  %v549 = vunpack.c.l.b16 %v100
  %v550 = vunpack.c.l.b16 %v101
  %v551 = vunpack.c.l.b16 %v102
  %v552 = vunpack.c.l.b16 %v103
  %v553 = vunpack.c.l.b16 %v104
  %v554 = vunpack.c.l.b16 %v105
  %v555 = vunpack.c.l.b16 %v106
  %v556 = vunpack.c.l.b16 %v107
  %v557 = vunpack.c.l.b16 %v108
  %v558 = vunpack.c.l.b16 %v109
  %v559 = vunpack.c.l.b16 %v110
  %v560 = vunpack.c.l.b16 %v111
  %v561 = vunpack.c.l.b16 %v112
  %v562 = vunpack.c.l.b16 %v113
  %v563 = vunpack.c.l.b16 %v114
  %v564 = vunpack.c.l.b16 %v115
  %v565 = vunpack.c.l.b16 %v116
  %v566 = vunpack.c.l.b16 %v117
  %v567 = vunpack.c.l.b16 %v118
  %v568 = vunpack.c.l.b16 %v119
  %v569 = vunpack.c.l.b16 %v120
  %v570 = vunpack.c.l.b16 %v121
  %v571 = vunpack.c.l.b16 %v122
  %v572 = vunpack.c.l.b16 %v123
  %v573 = vunpack.c.l.b16 %v124
  %v574 = vunpack.c.l.b16 %v125
  %v575 = vunpack.c.l.b16 %v126
  %v576 = vunpack.c.l.b16 %v127
  %v577 = vunpack.c.l.b16 %v128
  %v578 = vunpack.c.l.b16 %v129
  %v579 = vunpack.c.l.b16 %v130
  %v580 = vunpack.c.l.b16 %v131
  %v581 = vunpack.c.l.b16 %v132
  %v582 = vunpack.c.l.b16 %v133
  %v583 = vunpack.c.l.b16 %v134
  %v584 = vunpack.c.l.b16 %v135
  %v585 = vunpack.c.l.b16 %v136
  %v586 = vunpack.c.l.b16 %v137
  %v587 = vunpack.c.l.b16 %v138
  %v588 = vunpack.c.l.b16 %v139
  %v589 = vunpack.c.l.b16 %v140
  %v590 = vunpack.c.l.b16 %v141
  %v591 = vunpack.c.l.b16 %v142
  %v592 = vunpack.c.l.b16 %v143
  %v593 = vunpack.c.l.b16 %v144
  %v594 = vunpack.c.l.b16 %v145
  %v595 = vunpack.c.l.b16 %v146
  %v596 = vpack.c.b16 %v533, %v532
  %v597 = vpack.c.b16 %v535, %v534
  %v598 = vpack.c.b16 %v537, %v536
  %v599 = vpack.c.b16 %v539, %v538
  %v600 = vpack.c.b16 %v541, %v540
  %v601 = vpack.c.b16 %v543, %v542
  %v602 = vpack.c.b16 %v545, %v544
  %v603 = vpack.c.b16 %v547, %v546
  %v604 = vpack.c.b16 %v549, %v548
  %v605 = vpack.c.b16 %v551, %v550
  %v606 = vpack.c.b16 %v553, %v552
  %v607 = vpack.c.b16 %v555, %v554
  %v608 = vpack.c.b16 %v557, %v556
  %v609 = vpack.c.b16 %v559, %v558
  %v610 = vpack.c.b16 %v561, %v560
  %v611 = vpack.c.b16 %v563, %v562
  %v612 = vpack.c.b16 %v565, %v564
  %v613 = vpack.c.b16 %v567, %v566
  %v614 = vpack.c.b16 %v569, %v568
  %v615 = vpack.c.b16 %v571, %v570
  %v616 = vpack.c.b16 %v573, %v572
  %v617 = vpack.c.b16 %v575, %v574
  %v618 = vpack.c.b16 %v577, %v576
  %v619 = vpack.c.b16 %v579, %v578
  %v620 = vpack.c.b16 %v581, %v580
  %v621 = vpack.c.b16 %v583, %v582
  %v622 = vpack.c.b16 %v585, %v584
  %v623 = vpack.c.b16 %v587, %v586
  %v624 = vpack.c.b16 %v589, %v588
  %v625 = vpack.c.b16 %v591, %v590
  %v626 = vpack.c.b16 %v593, %v592
  %v627 = vpack.c.b16 %v595, %v594
  %660 = vmatprep.subr.bf16.mxu0 0
  %661 = vmatpush1.bf16.msra.mxu0 %v596
  %662 = vmatprep.subr.bf16.mxu0 0
  %663 = vmatpush1.bf16.msra.mxu0 %v597
  %664 = vmatprep.subr.bf16.mxu0 0
  %665 = vmatpush1.bf16.msra.mxu0 %v598
  %666 = vmatprep.subr.bf16.mxu0 0
  %667 = vmatpush1.bf16.msra.mxu0 %v599
  %668 = vmatprep.subr.bf16.mxu0 0
  %669 = vmatpush1.bf16.msra.mxu0 %v600
  %670 = vmatprep.subr.bf16.mxu0 0
  %671 = vmatpush1.bf16.msra.mxu0 %v601
  %672 = vmatprep.subr.bf16.mxu0 0
  %673 = vmatpush1.bf16.msra.mxu0 %v602
  %674 = vmatprep.subr.bf16.mxu0 0
  %675 = vmatpush1.bf16.msra.mxu0 %v603
  %676 = vmatprep.subr.bf16.mxu0 0
  %677 = vmatpush1.bf16.msra.mxu0 %v604
  %678 = vmatprep.subr.bf16.mxu0 0
  %679 = vmatpush1.bf16.msra.mxu0 %v605
  %680 = vmatprep.subr.bf16.mxu0 0
  %681 = vmatpush1.bf16.msra.mxu0 %v606
  %682 = vmatprep.subr.bf16.mxu0 0
  %683 = vmatpush1.bf16.msra.mxu0 %v607
  %684 = vmatprep.subr.bf16.mxu0 0
  %685 = vmatpush1.bf16.msra.mxu0 %v608
  %686 = vmatprep.subr.bf16.mxu0 0
  %687 = vmatpush1.bf16.msra.mxu0 %v609
  %688 = vmatprep.subr.bf16.mxu0 0
  %689 = vmatpush1.bf16.msra.mxu0 %v610
  %690 = vmatprep.subr.bf16.mxu0 0
  %691 = vmatpush1.bf16.msra.mxu0 %v611
  %692 = vmatprep.mubr.bf16.mxu0 %v341
  %693 = vmatmul.mubr.bf16.gmra.mrb[0].mxu0 %v340
  %v694 = vpop.f32.mrb[0].mxu0
  %v695 = vadd.f32 %v152, %v694
  %v696 = vpop.f32.mrb[0].mxu0
  %v697 = vpop.f32.mrb[0].mxu0
  %v698 = vadd.f32 %v152, %v697
  %v699 = vpop.f32.mrb[0].mxu0
  %700 = vmatprep.mubr.bf16.mxu0 %v345
  %701 = vmatmul.mubr.bf16.gmra.mrb[0].mxu0 %v344
  %v702 = vpop.f32.mrb[0].mxu0
  %v703 = vadd.f32 %v152, %v702
  %v704 = vpop.f32.mrb[0].mxu0
  %v705 = vpop.f32.mrb[0].mxu0
  %v706 = vadd.f32 %v152, %v705
  %v707 = vpop.f32.mrb[0].mxu0
  %708 = vmatprep.mubr.bf16.mxu0 %v349
  %709 = vmatmul.mubr.bf16.gmra.mrb[0].mxu0 %v348
  %v710 = vpop.f32.mrb[0].mxu0
  %v711 = vadd.f32 %v152, %v710
  %v712 = vpop.f32.mrb[0].mxu0
  %v713 = vpop.f32.mrb[0].mxu0
  %v714 = vadd.f32 %v152, %v713
  %v715 = vpop.f32.mrb[0].mxu0
  %716 = vmatprep.mubr.bf16.mxu0 %v353
  %717 = vmatmul.mubr.bf16.gmra.mrb[0].mxu0 %v352
  %v718 = vpop.f32.mrb[0].mxu0
  %v719 = vadd.f32 %v152, %v718
  %v720 = vpop.f32.mrb[0].mxu0
  %v721 = vpop.f32.mrb[0].mxu0
  %v722 = vadd.f32 %v152, %v721
  %v723 = vpop.f32.mrb[0].mxu0
  %724 = vmatprep.mubr.bf16.mxu0 %v357
  %725 = vmatmul.mubr.bf16.gmra.mrb[0].mxu0 %v356
  %v726 = vpop.f32.mrb[0].mxu0
  %v727 = vadd.f32 %v152, %v726
  %v728 = vpop.f32.mrb[0].mxu0
  %v729 = vpop.f32.mrb[0].mxu0
  %v730 = vadd.f32 %v152, %v729
  %v731 = vpop.f32.mrb[0].mxu0
  %732 = vmatprep.mubr.bf16.mxu0 %v361
  %733 = vmatmul.mubr.bf16.gmra.mrb[0].mxu0 %v360
  %v734 = vpop.f32.mrb[0].mxu0
  %v735 = vadd.f32 %v152, %v734
  %v736 = vpop.f32.mrb[0].mxu0
  %v737 = vpop.f32.mrb[0].mxu0
  %v738 = vadd.f32 %v152, %v737
  %v739 = vpop.f32.mrb[0].mxu0
  %740 = vmatprep.mubr.bf16.mxu0 %v365
  %741 = vmatmul.mubr.bf16.gmra.mrb[0].mxu0 %v364
  %v742 = vpop.f32.mrb[0].mxu0
  %v743 = vadd.f32 %v152, %v742
  %v744 = vpop.f32.mrb[0].mxu0
  %v745 = vpop.f32.mrb[0].mxu0
  %v746 = vadd.f32 %v152, %v745
  %v747 = vpop.f32.mrb[0].mxu0
  %748 = vmatprep.mubr.bf16.mxu0 %v369
  %749 = vmatmul.mubr.bf16.gmra.mrb[0].mxu0 %v368
  %v750 = vpop.f32.mrb[0].mxu0
  %v751 = vadd.f32 %v152, %v750
  %v752 = vpop.f32.mrb[0].mxu0
  %v753 = vpop.f32.mrb[0].mxu0
  %v754 = vadd.f32 %v152, %v753
  %v755 = vpop.f32.mrb[0].mxu0
  %756 = vmatprep.mubr.bf16.mxu0 %v373
  %757 = vmatmul.mubr.bf16.gmra.mrb[0].mxu0 %v372
  %v758 = vpop.f32.mrb[0].mxu0
  %v759 = vadd.f32 %v152, %v758
  %v760 = vpop.f32.mrb[0].mxu0
  %v761 = vpop.f32.mrb[0].mxu0
  %v762 = vadd.f32 %v152, %v761
  %v763 = vpop.f32.mrb[0].mxu0
  %764 = vmatprep.mubr.bf16.mxu0 %v377
  %765 = vmatmul.mubr.bf16.gmra.mrb[0].mxu0 %v376
  %v766 = vpop.f32.mrb[0].mxu0
  %v767 = vadd.f32 %v152, %v766
  %v768 = vpop.f32.mrb[0].mxu0
  %v769 = vpop.f32.mrb[0].mxu0
  %v770 = vadd.f32 %v152, %v769
  %v771 = vpop.f32.mrb[0].mxu0
  %772 = vmatprep.mubr.bf16.mxu0 %v381
  %773 = vmatmul.mubr.bf16.gmra.mrb[0].mxu0 %v380
  %v774 = vpop.f32.mrb[0].mxu0
  %v775 = vadd.f32 %v152, %v774
  %v776 = vpop.f32.mrb[0].mxu0
  %v777 = vpop.f32.mrb[0].mxu0
  %v778 = vadd.f32 %v152, %v777
  %v779 = vpop.f32.mrb[0].mxu0
  %780 = vmatprep.mubr.bf16.mxu0 %v385
  %781 = vmatmul.mubr.bf16.gmra.mrb[0].mxu0 %v384
  %v782 = vpop.f32.mrb[0].mxu0
  %v783 = vadd.f32 %v152, %v782
  %v784 = vpop.f32.mrb[0].mxu0
  %v785 = vpop.f32.mrb[0].mxu0
  %v786 = vadd.f32 %v152, %v785
  %v787 = vpop.f32.mrb[0].mxu0
  %788 = vmatprep.mubr.bf16.mxu0 %v389
  %789 = vmatmul.mubr.bf16.gmra.mrb[0].mxu0 %v388
  %v790 = vpop.f32.mrb[0].mxu0
  %v791 = vadd.f32 %v152, %v790
  %v792 = vpop.f32.mrb[0].mxu0
  %v793 = vpop.f32.mrb[0].mxu0
  %v794 = vadd.f32 %v152, %v793
  %v795 = vpop.f32.mrb[0].mxu0
  %796 = vmatprep.mubr.bf16.mxu0 %v393
  %797 = vmatmul.mubr.bf16.gmra.mrb[0].mxu0 %v392
  %v798 = vpop.f32.mrb[0].mxu0
  %v799 = vadd.f32 %v152, %v798
  %v800 = vpop.f32.mrb[0].mxu0
  %v801 = vpop.f32.mrb[0].mxu0
  %v802 = vadd.f32 %v152, %v801
  %v803 = vpop.f32.mrb[0].mxu0
  %804 = vmatprep.mubr.bf16.mxu0 %v397
  %805 = vmatmul.mubr.bf16.gmra.mrb[0].mxu0 %v396
  %v806 = vpop.f32.mrb[0].mxu0
  %v807 = vadd.f32 %v152, %v806
  %v808 = vpop.f32.mrb[0].mxu0
  %v809 = vpop.f32.mrb[0].mxu0
  %v810 = vadd.f32 %v152, %v809
  %v811 = vpop.f32.mrb[0].mxu0
  %812 = vmatprep.mubr.bf16.mxu0 %v401
  %813 = vmatmul.mubr.bf16.gmra.mrb[0].mxu0 %v400
  %v814 = vpop.f32.mrb[0].mxu0
  %v815 = vadd.f32 %v152, %v814
  %v816 = vpop.f32.mrb[0].mxu0
  %v817 = vpop.f32.mrb[0].mxu0
  %v818 = vpop.f32.mrb[0].mxu0
  %819 = vdwg.mxu0
  %820 = vmatprep.subr.bf16.mxu0 0
  %821 = vmatpush1.bf16.msra.mxu0 %v612
  %822 = vmatprep.subr.bf16.mxu0 0
  %823 = vmatpush1.bf16.msra.mxu0 %v613
  %824 = vmatprep.subr.bf16.mxu0 0
  %825 = vmatpush1.bf16.msra.mxu0 %v614
  %826 = vmatprep.subr.bf16.mxu0 0
  %827 = vmatpush1.bf16.msra.mxu0 %v615
  %828 = vmatprep.subr.bf16.mxu0 0
  %829 = vmatpush1.bf16.msra.mxu0 %v616
  %830 = vmatprep.subr.bf16.mxu0 0
  %831 = vmatpush1.bf16.msra.mxu0 %v617
  %832 = vmatprep.subr.bf16.mxu0 0
  %833 = vmatpush1.bf16.msra.mxu0 %v618
  %834 = vmatprep.subr.bf16.mxu0 0
  %835 = vmatpush1.bf16.msra.mxu0 %v619
  %836 = vmatprep.subr.bf16.mxu0 0
  %837 = vmatpush1.bf16.msra.mxu0 %v620
  %838 = vmatprep.subr.bf16.mxu0 0
  %839 = vmatpush1.bf16.msra.mxu0 %v621
  %840 = vmatprep.subr.bf16.mxu0 0
  %841 = vmatpush1.bf16.msra.mxu0 %v622
  %842 = vmatprep.subr.bf16.mxu0 0
  %843 = vmatpush1.bf16.msra.mxu0 %v623
  %844 = vmatprep.subr.bf16.mxu0 0
  %845 = vmatpush1.bf16.msra.mxu0 %v624
  %846 = vmatprep.subr.bf16.mxu0 0
  %847 = vmatpush1.bf16.msra.mxu0 %v625
  %848 = vmatprep.subr.bf16.mxu0 0
  %849 = vmatpush1.bf16.msra.mxu0 %v626
  %850 = vmatprep.subr.bf16.mxu0 0
  %851 = vmatpush1.bf16.msra.mxu0 %v627
  %852 = vmatprep.mubr.bf16.mxu0 %v343
  %853 = vmatmul.mubr.bf16.gmra.mrb[0].mxu0 %v342
  %v854 = vpop.f32.mrb[0].mxu0
  %v855 = vadd.f32 %v695, %v854
  %v856 = vpop.f32.mrb[0].mxu0
  %v857 = vpop.f32.mrb[0].mxu0
  %v858 = vadd.f32 %v698, %v857
  %v859 = vpop.f32.mrb[0].mxu0
  %860 = vmatprep.mubr.bf16.mxu0 %v347
  %861 = vmatmul.mubr.bf16.gmra.mrb[0].mxu0 %v346
  %v862 = vpop.f32.mrb[0].mxu0
  %v863 = vadd.f32 %v703, %v862
  %v864 = vpop.f32.mrb[0].mxu0
  %v865 = vpop.f32.mrb[0].mxu0
  %v866 = vadd.f32 %v706, %v865
  %v867 = vpop.f32.mrb[0].mxu0
  %868 = vmatprep.mubr.bf16.mxu0 %v351
  %869 = vmatmul.mubr.bf16.gmra.mrb[0].mxu0 %v350
  %v870 = vpop.f32.mrb[0].mxu0
  %v871 = vadd.f32 %v711, %v870
  %v872 = vpop.f32.mrb[0].mxu0
  %v873 = vpop.f32.mrb[0].mxu0
  %v874 = vadd.f32 %v714, %v873
  %v875 = vpop.f32.mrb[0].mxu0
  %876 = vmatprep.mubr.bf16.mxu0 %v355
  %877 = vmatmul.mubr.bf16.gmra.mrb[0].mxu0 %v354
  %v878 = vpop.f32.mrb[0].mxu0
  %v879 = vadd.f32 %v719, %v878
  %v880 = vpop.f32.mrb[0].mxu0
  %v881 = vpop.f32.mrb[0].mxu0
  %v882 = vadd.f32 %v722, %v881
  %v883 = vpop.f32.mrb[0].mxu0
  %884 = vmatprep.mubr.bf16.mxu0 %v359
  %885 = vmatmul.mubr.bf16.gmra.mrb[0].mxu0 %v358
  %v886 = vpop.f32.mrb[0].mxu0
  %v887 = vadd.f32 %v727, %v886
  %v888 = vpop.f32.mrb[0].mxu0
  %v889 = vpop.f32.mrb[0].mxu0
  %v890 = vadd.f32 %v730, %v889
  %v891 = vpop.f32.mrb[0].mxu0
  %892 = vmatprep.mubr.bf16.mxu0 %v363
  %893 = vmatmul.mubr.bf16.gmra.mrb[0].mxu0 %v362
  %v894 = vpop.f32.mrb[0].mxu0
  %v895 = vadd.f32 %v735, %v894
  %v896 = vpop.f32.mrb[0].mxu0
  %v897 = vpop.f32.mrb[0].mxu0
  %v898 = vadd.f32 %v738, %v897
  %v899 = vpop.f32.mrb[0].mxu0
  %900 = vmatprep.mubr.bf16.mxu0 %v367
  %901 = vmatmul.mubr.bf16.gmra.mrb[0].mxu0 %v366
  %v902 = vpop.f32.mrb[0].mxu0
  %v903 = vadd.f32 %v743, %v902
  %v904 = vpop.f32.mrb[0].mxu0
  %v905 = vpop.f32.mrb[0].mxu0
  %v906 = vadd.f32 %v746, %v905
  %v907 = vpop.f32.mrb[0].mxu0
  %908 = vmatprep.mubr.bf16.mxu0 %v371
  %909 = vmatmul.mubr.bf16.gmra.mrb[0].mxu0 %v370
  %v910 = vpop.f32.mrb[0].mxu0
  %v911 = vadd.f32 %v751, %v910
  %v912 = vpop.f32.mrb[0].mxu0
  %v913 = vpop.f32.mrb[0].mxu0
  %v914 = vadd.f32 %v754, %v913
  %v915 = vpop.f32.mrb[0].mxu0
  %916 = vmatprep.mubr.bf16.mxu0 %v375
  %917 = vmatmul.mubr.bf16.gmra.mrb[0].mxu0 %v374
  %v918 = vpop.f32.mrb[0].mxu0
  %v919 = vadd.f32 %v759, %v918
  %v920 = vpop.f32.mrb[0].mxu0
  %v921 = vpop.f32.mrb[0].mxu0
  %v922 = vadd.f32 %v762, %v921
  %v923 = vpop.f32.mrb[0].mxu0
  %924 = vmatprep.mubr.bf16.mxu0 %v379
  %925 = vmatmul.mubr.bf16.gmra.mrb[0].mxu0 %v378
  %v926 = vpop.f32.mrb[0].mxu0
  %v927 = vadd.f32 %v767, %v926
  %v928 = vpop.f32.mrb[0].mxu0
  %v929 = vpop.f32.mrb[0].mxu0
  %v930 = vadd.f32 %v770, %v929
  %v931 = vpop.f32.mrb[0].mxu0
  %932 = vmatprep.mubr.bf16.mxu0 %v383
  %933 = vmatmul.mubr.bf16.gmra.mrb[0].mxu0 %v382
  %v934 = vpop.f32.mrb[0].mxu0
  %v935 = vadd.f32 %v775, %v934
  %v936 = vpop.f32.mrb[0].mxu0
  %v937 = vpop.f32.mrb[0].mxu0
  %v938 = vadd.f32 %v778, %v937
  %v939 = vpop.f32.mrb[0].mxu0
  %940 = vmatprep.mubr.bf16.mxu0 %v387
  %941 = vmatmul.mubr.bf16.gmra.mrb[0].mxu0 %v386
  %v942 = vpop.f32.mrb[0].mxu0
  %v943 = vadd.f32 %v783, %v942
  %v944 = vpop.f32.mrb[0].mxu0
  %v945 = vpop.f32.mrb[0].mxu0
  %v946 = vadd.f32 %v786, %v945
  %v947 = vpop.f32.mrb[0].mxu0
  %948 = vmatprep.mubr.bf16.mxu0 %v391
  %949 = vmatmul.mubr.bf16.gmra.mrb[0].mxu0 %v390
  %v950 = vpop.f32.mrb[0].mxu0
  %v951 = vadd.f32 %v791, %v950
  %v952 = vpop.f32.mrb[0].mxu0
  %v953 = vpop.f32.mrb[0].mxu0
  %v954 = vadd.f32 %v794, %v953
  %v955 = vpop.f32.mrb[0].mxu0
  %956 = vmatprep.mubr.bf16.mxu0 %v395
  %957 = vmatmul.mubr.bf16.gmra.mrb[0].mxu0 %v394
  %v958 = vpop.f32.mrb[0].mxu0
  %v959 = vadd.f32 %v799, %v958
  %v960 = vpop.f32.mrb[0].mxu0
  %v961 = vpop.f32.mrb[0].mxu0
  %v962 = vadd.f32 %v802, %v961
  %v963 = vpop.f32.mrb[0].mxu0
  %964 = vmatprep.mubr.bf16.mxu0 %v399
  %965 = vmatmul.mubr.bf16.gmra.mrb[0].mxu0 %v398
  %v966 = vpop.f32.mrb[0].mxu0
  %v967 = vadd.f32 %v807, %v966
  %v968 = vpop.f32.mrb[0].mxu0
  %v969 = vpop.f32.mrb[0].mxu0
  %v970 = vadd.f32 %v810, %v969
  %v971 = vpop.f32.mrb[0].mxu0
  %972 = vmatprep.mubr.bf16.mxu0 %v403
  %973 = vmatmul.mubr.bf16.gmra.mrb[0].mxu0 %v402
  %v974 = vpop.f32.mrb[0].mxu0
  %v975 = vadd.f32 %v815, %v974
  %v976 = vpop.f32.mrb[0].mxu0
  %v977 = vpop.f32.mrb[0].mxu0
  %v978 = vpop.f32.mrb[0].mxu0
  %979 = vdwg.mxu0
  %v980 = vadd.f32 %v855, %v858
  %v981 = vadd.f32 %v980, %v863
  %v982 = vadd.f32 %v981, %v866
  %v983 = vadd.f32 %v982, %v871
  %v984 = vadd.f32 %v983, %v874
  %v985 = vadd.f32 %v984, %v879
  %v986 = vadd.f32 %v985, %v882
  %v987 = vadd.f32 %v986, %v887
  %v988 = vadd.f32 %v987, %v890
  %v989 = vadd.f32 %v988, %v895
  %v990 = vadd.f32 %v989, %v898
  %v991 = vadd.f32 %v990, %v903
  %v992 = vadd.f32 %v991, %v906
  %v993 = vadd.f32 %v992, %v911
  %v994 = vadd.f32 %v993, %v914
  %v995 = vadd.f32 %v994, %v919
  %v996 = vadd.f32 %v995, %v922
  %v997 = vadd.f32 %v996, %v927
  %v998 = vadd.f32 %v997, %v930
  %v999 = vadd.f32 %v998, %v935
  %v1000 = vadd.f32 %v999, %v938
  %v1001 = vadd.f32 %v1000, %v943
  %v1002 = vadd.f32 %v1001, %v946
  %v1003 = vadd.f32 %v1002, %v951
  %v1004 = vadd.f32 %v1003, %v954
  %v1005 = vadd.f32 %v1004, %v959
  %v1006 = vadd.f32 %v1005, %v962
  %v1007 = vadd.f32 %v1006, %v967
  %v1008 = vadd.f32 %v1007, %v970
  %vm1009 = vcmask 1041408
  %v1010 = vsel %vm1009, %v975, 0.0
  %v1011 = vadd.f32 %v1008, %v1010
  %v1012 = vrot.slane %v1011, 4
  %v1013 = vadd.f32 %v1011, %v1012
  %v1014 = vrot.slane %v1013, 2
  %v1015 = vadd.f32 %v1013, %v1014
  %v1016 = vrot.slane %v1015, 1
  %v1017 = vadd.f32 %v1015, %v1016
  %v1018 = vmul.f32 %v1017, 0.004132231
  %v1019 = vsub.f32 %v855, %v1018
  %v1020 = vsub.f32 %v858, %v1018
  %v1021 = vsub.f32 %v863, %v1018
  %v1022 = vsub.f32 %v866, %v1018
  %v1023 = vsub.f32 %v871, %v1018
  %v1024 = vsub.f32 %v874, %v1018
  %v1025 = vsub.f32 %v879, %v1018
  %v1026 = vsub.f32 %v882, %v1018
  %v1027 = vsub.f32 %v887, %v1018
  %v1028 = vsub.f32 %v890, %v1018
  %v1029 = vsub.f32 %v895, %v1018
  %v1030 = vsub.f32 %v898, %v1018
  %v1031 = vsub.f32 %v903, %v1018
  %v1032 = vsub.f32 %v906, %v1018
  %v1033 = vsub.f32 %v911, %v1018
  %v1034 = vsub.f32 %v914, %v1018
  %v1035 = vsub.f32 %v919, %v1018
  %v1036 = vsub.f32 %v922, %v1018
  %v1037 = vsub.f32 %v927, %v1018
  %v1038 = vsub.f32 %v930, %v1018
  %v1039 = vsub.f32 %v935, %v1018
  %v1040 = vsub.f32 %v938, %v1018
  %v1041 = vsub.f32 %v943, %v1018
  %v1042 = vsub.f32 %v946, %v1018
  %v1043 = vsub.f32 %v951, %v1018
  %v1044 = vsub.f32 %v954, %v1018
  %v1045 = vsub.f32 %v959, %v1018
  %v1046 = vsub.f32 %v962, %v1018
  %v1047 = vsub.f32 %v967, %v1018
  %v1048 = vsub.f32 %v970, %v1018
  %v1049 = vsub.f32 %v975, %v1018
  %v1050 = vmul.f32 %v1019, %v1019
  %v1051 = vmul.f32 %v1020, %v1020
  %v1052 = vmul.f32 %v1021, %v1021
  %v1053 = vmul.f32 %v1022, %v1022
  %v1054 = vmul.f32 %v1023, %v1023
  %v1055 = vmul.f32 %v1024, %v1024
  %v1056 = vmul.f32 %v1025, %v1025
  %v1057 = vmul.f32 %v1026, %v1026
  %v1058 = vmul.f32 %v1027, %v1027
  %v1059 = vmul.f32 %v1028, %v1028
  %v1060 = vmul.f32 %v1029, %v1029
  %v1061 = vmul.f32 %v1030, %v1030
  %v1062 = vmul.f32 %v1031, %v1031
  %v1063 = vmul.f32 %v1032, %v1032
  %v1064 = vmul.f32 %v1033, %v1033
  %v1065 = vmul.f32 %v1034, %v1034
  %v1066 = vmul.f32 %v1035, %v1035
  %v1067 = vmul.f32 %v1036, %v1036
  %v1068 = vmul.f32 %v1037, %v1037
  %v1069 = vmul.f32 %v1038, %v1038
  %v1070 = vmul.f32 %v1039, %v1039
  %v1071 = vmul.f32 %v1040, %v1040
  %v1072 = vmul.f32 %v1041, %v1041
  %v1073 = vmul.f32 %v1042, %v1042
  %v1074 = vmul.f32 %v1043, %v1043
  %v1075 = vmul.f32 %v1044, %v1044
  %v1076 = vmul.f32 %v1045, %v1045
  %v1077 = vmul.f32 %v1046, %v1046
  %v1078 = vmul.f32 %v1047, %v1047
  %v1079 = vmul.f32 %v1048, %v1048
  %v1080 = vmul.f32 %v1049, %v1049
  %v1081 = vadd.f32 %v1050, %v1051
  %v1082 = vadd.f32 %v1081, %v1052
  %v1083 = vadd.f32 %v1082, %v1053
  %v1084 = vadd.f32 %v1083, %v1054
  %v1085 = vadd.f32 %v1084, %v1055
  %v1086 = vadd.f32 %v1085, %v1056
  %v1087 = vadd.f32 %v1086, %v1057
  %v1088 = vadd.f32 %v1087, %v1058
  %v1089 = vadd.f32 %v1088, %v1059
  %v1090 = vadd.f32 %v1089, %v1060
  %v1091 = vadd.f32 %v1090, %v1061
  %v1092 = vadd.f32 %v1091, %v1062
  %v1093 = vadd.f32 %v1092, %v1063
  %v1094 = vadd.f32 %v1093, %v1064
  %v1095 = vadd.f32 %v1094, %v1065
  %v1096 = vadd.f32 %v1095, %v1066
  %v1097 = vadd.f32 %v1096, %v1067
  %v1098 = vadd.f32 %v1097, %v1068
  %v1099 = vadd.f32 %v1098, %v1069
  %v1100 = vadd.f32 %v1099, %v1070
  %v1101 = vadd.f32 %v1100, %v1071
  %v1102 = vadd.f32 %v1101, %v1072
  %v1103 = vadd.f32 %v1102, %v1073
  %v1104 = vadd.f32 %v1103, %v1074
  %v1105 = vadd.f32 %v1104, %v1075
  %v1106 = vadd.f32 %v1105, %v1076
  %v1107 = vadd.f32 %v1106, %v1077
  %v1108 = vadd.f32 %v1107, %v1078
  %v1109 = vadd.f32 %v1108, %v1079
  %v1110 = vsel %vm1009, %v1080, 0.0
  %v1111 = vadd.f32 %v1109, %v1110
  %v1112 = vrot.slane %v1111, 4
  %v1113 = vadd.f32 %v1111, %v1112
  %v1114 = vrot.slane %v1113, 2
  %v1115 = vadd.f32 %v1113, %v1114
  %v1116 = vrot.slane %v1115, 1
  %v1117 = vadd.f32 %v1115, %v1116
  %v1118 = vmul.f32 %v1117, 0.004132231
  %v1119 = vld [vmem:[%s3] sm:$0x1]
  %v1120 = vadd.f32 %v1118, 1e-05
  %v1121 = vrsqrt.pop %v1120
  %v1122 = vmul.f32 %v1119, %v1121
  %v1123 = vld [vmem:[%s4] sm:$0x1]
  %v1124 = vmul.f32 %v1018, %v1122
  %v1125 = vsub.f32 %v1123, %v1124
  %v1127 = vlaneseq
  %v1128 = vshrl.u32 %v1127, 7
  %v1129 = vsub.s32 0, %v1128
  %v1130 = vrot.slane %v1122, %v1129
  %v1132 = vmul.f32 %v855, %v1130
  %v1133 = vmul.f32 %v858, %v1130
  %v1134 = vmul.f32 %v863, %v1130
  %v1135 = vmul.f32 %v866, %v1130
  %v1136 = vmul.f32 %v871, %v1130
  %v1137 = vmul.f32 %v874, %v1130
  %v1138 = vmul.f32 %v879, %v1130
  %v1139 = vmul.f32 %v882, %v1130
  %v1140 = vmul.f32 %v887, %v1130
  %v1141 = vmul.f32 %v890, %v1130
  %v1142 = vmul.f32 %v895, %v1130
  %v1143 = vmul.f32 %v898, %v1130
  %v1144 = vmul.f32 %v903, %v1130
  %v1145 = vmul.f32 %v906, %v1130
  %v1146 = vmul.f32 %v911, %v1130
  %v1147 = vmul.f32 %v914, %v1130
  %v1148 = vmul.f32 %v919, %v1130
  %v1149 = vmul.f32 %v922, %v1130
  %v1150 = vmul.f32 %v927, %v1130
  %v1151 = vmul.f32 %v930, %v1130
  %v1152 = vmul.f32 %v935, %v1130
  %v1153 = vmul.f32 %v938, %v1130
  %v1154 = vmul.f32 %v943, %v1130
  %v1155 = vmul.f32 %v946, %v1130
  %v1156 = vmul.f32 %v951, %v1130
  %v1157 = vmul.f32 %v954, %v1130
  %v1158 = vmul.f32 %v959, %v1130
  %v1159 = vmul.f32 %v962, %v1130
  %v1160 = vmul.f32 %v967, %v1130
  %v1161 = vmul.f32 %v970, %v1130
  %v1162 = vmul.f32 %v975, %v1130
  %v1164 = vlaneseq
  %v1165 = vshrl.u32 %v1164, 7
  %v1166 = vsub.s32 0, %v1165
  %v1167 = vrot.slane %v1125, %v1166
  %v1169 = vadd.f32 %v1132, %v1167
  %v1170 = vadd.f32 %v1133, %v1167
  %v1171 = vadd.f32 %v1134, %v1167
  %v1172 = vadd.f32 %v1135, %v1167
  %v1173 = vadd.f32 %v1136, %v1167
  %v1174 = vadd.f32 %v1137, %v1167
  %v1175 = vadd.f32 %v1138, %v1167
  %v1176 = vadd.f32 %v1139, %v1167
  %v1177 = vadd.f32 %v1140, %v1167
  %v1178 = vadd.f32 %v1141, %v1167
  %v1179 = vadd.f32 %v1142, %v1167
  %v1180 = vadd.f32 %v1143, %v1167
  %v1181 = vadd.f32 %v1144, %v1167
  %v1182 = vadd.f32 %v1145, %v1167
  %v1183 = vadd.f32 %v1146, %v1167
  %v1184 = vadd.f32 %v1147, %v1167
  %v1185 = vadd.f32 %v1148, %v1167
  %v1186 = vadd.f32 %v1149, %v1167
  %v1187 = vadd.f32 %v1150, %v1167
  %v1188 = vadd.f32 %v1151, %v1167
  %v1189 = vadd.f32 %v1152, %v1167
  %v1190 = vadd.f32 %v1153, %v1167
  %v1191 = vadd.f32 %v1154, %v1167
  %v1192 = vadd.f32 %v1155, %v1167
  %v1193 = vadd.f32 %v1156, %v1167
  %v1194 = vadd.f32 %v1157, %v1167
  %v1195 = vadd.f32 %v1158, %v1167
  %v1196 = vadd.f32 %v1159, %v1167
  %v1197 = vadd.f32 %v1160, %v1167
  %v1198 = vadd.f32 %v1161, %v1167
  %v1199 = vadd.f32 %v1162, %v1167
  %vm1200 = vcmp.ge.f32.partialorder %v1169, 0.0
  %vm1201 = vcmp.ge.f32.partialorder %v1170, 0.0
  %vm1202 = vcmp.ge.f32.partialorder %v1171, 0.0
  %vm1203 = vcmp.ge.f32.partialorder %v1172, 0.0
  %vm1204 = vcmp.ge.f32.partialorder %v1173, 0.0
  %vm1205 = vcmp.ge.f32.partialorder %v1174, 0.0
  %vm1206 = vcmp.ge.f32.partialorder %v1175, 0.0
  %vm1207 = vcmp.ge.f32.partialorder %v1176, 0.0
  %vm1208 = vcmp.ge.f32.partialorder %v1177, 0.0
  %vm1209 = vcmp.ge.f32.partialorder %v1178, 0.0
  %vm1210 = vcmp.ge.f32.partialorder %v1179, 0.0
  %vm1211 = vcmp.ge.f32.partialorder %v1180, 0.0
  %vm1212 = vcmp.ge.f32.partialorder %v1181, 0.0
  %vm1213 = vcmp.ge.f32.partialorder %v1182, 0.0
  %vm1214 = vcmp.ge.f32.partialorder %v1183, 0.0
  %vm1215 = vcmp.ge.f32.partialorder %v1184, 0.0
  %vm1216 = vcmp.ge.f32.partialorder %v1185, 0.0
  %vm1217 = vcmp.ge.f32.partialorder %v1186, 0.0
  %vm1218 = vcmp.ge.f32.partialorder %v1187, 0.0
  %vm1219 = vcmp.ge.f32.partialorder %v1188, 0.0
  %vm1220 = vcmp.ge.f32.partialorder %v1189, 0.0
  %vm1221 = vcmp.ge.f32.partialorder %v1190, 0.0
  %vm1222 = vcmp.ge.f32.partialorder %v1191, 0.0
  %vm1223 = vcmp.ge.f32.partialorder %v1192, 0.0
  %vm1224 = vcmp.ge.f32.partialorder %v1193, 0.0
  %vm1225 = vcmp.ge.f32.partialorder %v1194, 0.0
  %vm1226 = vcmp.ge.f32.partialorder %v1195, 0.0
  %vm1227 = vcmp.ge.f32.partialorder %v1196, 0.0
  %vm1228 = vcmp.ge.f32.partialorder %v1197, 0.0
  %vm1229 = vcmp.ge.f32.partialorder %v1198, 0.0
  %vm1230 = vcmp.ge.f32.partialorder %v1199, 0.0
  %v1231 = vmul.f32 %v1169, 0.2
  %v1232 = vmul.f32 %v1170, 0.2
  %v1233 = vmul.f32 %v1171, 0.2
  %v1234 = vmul.f32 %v1172, 0.2
  %v1235 = vmul.f32 %v1173, 0.2
  %v1236 = vmul.f32 %v1174, 0.2
  %v1237 = vmul.f32 %v1175, 0.2
  %v1238 = vmul.f32 %v1176, 0.2
  %v1239 = vmul.f32 %v1177, 0.2
  %v1240 = vmul.f32 %v1178, 0.2
  %v1241 = vmul.f32 %v1179, 0.2
  %v1242 = vmul.f32 %v1180, 0.2
  %v1243 = vmul.f32 %v1181, 0.2
  %v1244 = vmul.f32 %v1182, 0.2
  %v1245 = vmul.f32 %v1183, 0.2
  %v1246 = vmul.f32 %v1184, 0.2
  %v1247 = vmul.f32 %v1185, 0.2
  %v1248 = vmul.f32 %v1186, 0.2
  %v1249 = vmul.f32 %v1187, 0.2
  %v1250 = vmul.f32 %v1188, 0.2
  %v1251 = vmul.f32 %v1189, 0.2
  %v1252 = vmul.f32 %v1190, 0.2
  %v1253 = vmul.f32 %v1191, 0.2
  %v1254 = vmul.f32 %v1192, 0.2
  %v1255 = vmul.f32 %v1193, 0.2
  %v1256 = vmul.f32 %v1194, 0.2
  %v1257 = vmul.f32 %v1195, 0.2
  %v1258 = vmul.f32 %v1196, 0.2
  %v1259 = vmul.f32 %v1197, 0.2
  %v1260 = vmul.f32 %v1198, 0.2
  %v1261 = vmul.f32 %v1199, 0.2
  %v1262 = vsel %vm1200, %v1169, %v1231
  %v1263 = vsel %vm1201, %v1170, %v1232
  %v1264 = vsel %vm1202, %v1171, %v1233
  %v1265 = vsel %vm1203, %v1172, %v1234
  %v1266 = vsel %vm1204, %v1173, %v1235
  %v1267 = vsel %vm1205, %v1174, %v1236
  %v1268 = vsel %vm1206, %v1175, %v1237
  %v1269 = vsel %vm1207, %v1176, %v1238
  %v1270 = vsel %vm1208, %v1177, %v1239
  %v1271 = vsel %vm1209, %v1178, %v1240
  %v1272 = vsel %vm1210, %v1179, %v1241
  %v1273 = vsel %vm1211, %v1180, %v1242
  %v1274 = vsel %vm1212, %v1181, %v1243
  %v1275 = vsel %vm1213, %v1182, %v1244
  %v1276 = vsel %vm1214, %v1183, %v1245
  %v1277 = vsel %vm1215, %v1184, %v1246
  %v1278 = vsel %vm1216, %v1185, %v1247
  %v1279 = vsel %vm1217, %v1186, %v1248
  %v1280 = vsel %vm1218, %v1187, %v1249
  %v1281 = vsel %vm1219, %v1188, %v1250
  %v1282 = vsel %vm1220, %v1189, %v1251
  %v1283 = vsel %vm1221, %v1190, %v1252
  %v1284 = vsel %vm1222, %v1191, %v1253
  %v1285 = vsel %vm1223, %v1192, %v1254
  %v1286 = vsel %vm1224, %v1193, %v1255
  %v1287 = vsel %vm1225, %v1194, %v1256
  %v1288 = vsel %vm1226, %v1195, %v1257
  %v1289 = vsel %vm1227, %v1196, %v1258
  %v1290 = vsel %vm1228, %v1197, %v1259
  %v1291 = vsel %vm1229, %v1198, %v1260
  %v1292 = vsel %vm1230, %v1199, %v1261
  %v1293 = vpack.c.bf16 %v1263, %v1262
  %v1294 = vpack.c.bf16 %v1265, %v1264
  %v1295 = vpack.c.bf16 %v1267, %v1266
  %v1296 = vpack.c.bf16 %v1269, %v1268
  %v1297 = vpack.c.bf16 %v1271, %v1270
  %v1298 = vpack.c.bf16 %v1273, %v1272
  %v1299 = vpack.c.bf16 %v1275, %v1274
  %v1300 = vpack.c.bf16 %v1277, %v1276
  %v1301 = vpack.c.bf16 %v1279, %v1278
  %v1302 = vpack.c.bf16 %v1281, %v1280
  %v1303 = vpack.c.bf16 %v1283, %v1282
  %v1304 = vpack.c.bf16 %v1285, %v1284
  %v1305 = vpack.c.bf16 %v1287, %v1286
  %v1306 = vpack.c.bf16 %v1289, %v1288
  %v1307 = vpack.c.bf16 %v1291, %v1290
  %v1308 = vpack.c.bf16 %v1292, %v1292
  %v1325 = vunpack.c.l.b16 %v1293
  %v1326 = vunpack.c.h.b16 %v1293
  %v1327 = vunpack.c.l.b16 %v1294
  %v1328 = vunpack.c.h.b16 %v1294
  %v1329 = vunpack.c.l.b16 %v1295
  %v1330 = vunpack.c.h.b16 %v1295
  %v1331 = vunpack.c.l.b16 %v1296
  %v1332 = vunpack.c.h.b16 %v1296
  %v1333 = vunpack.c.l.b16 %v1297
  %v1334 = vunpack.c.h.b16 %v1297
  %v1335 = vunpack.c.l.b16 %v1298
  %v1336 = vunpack.c.h.b16 %v1298
  %v1337 = vunpack.c.l.b16 %v1299
  %v1338 = vunpack.c.h.b16 %v1299
  %v1339 = vunpack.c.l.b16 %v1300
  %v1340 = vunpack.c.h.b16 %v1300
  %v1341 = vunpack.c.l.b16 %v1301
  %v1342 = vunpack.c.h.b16 %v1301
  %v1343 = vunpack.c.l.b16 %v1302
  %v1344 = vunpack.c.h.b16 %v1302
  %v1345 = vunpack.c.l.b16 %v1303
  %v1346 = vunpack.c.h.b16 %v1303
  %v1347 = vunpack.c.l.b16 %v1304
  %v1348 = vunpack.c.h.b16 %v1304
  %v1349 = vunpack.c.l.b16 %v1305
  %v1350 = vunpack.c.h.b16 %v1305
  %v1351 = vunpack.c.l.b16 %v1306
  %v1352 = vunpack.c.h.b16 %v1306
  %v1353 = vunpack.c.l.b16 %v1307
  %v1354 = vunpack.c.h.b16 %v1307
  %v1355 = vunpack.c.l.b16 %v1308
  %v1356 = vpack.c.b16 %v1325, %v1325
  %v1357 = vpack.c.b16 %v1326, %v1326
  %v1358 = vpack.c.b16 %v1327, %v1327
  %v1359 = vpack.c.b16 %v1328, %v1328
  %v1360 = vpack.c.b16 %v1329, %v1329
  %v1361 = vpack.c.b16 %v1330, %v1330
  %v1362 = vpack.c.b16 %v1331, %v1331
  %v1363 = vpack.c.b16 %v1332, %v1332
  %v1364 = vpack.c.b16 %v1333, %v1333
  %v1365 = vpack.c.b16 %v1334, %v1334
  %v1366 = vpack.c.b16 %v1335, %v1335
  %v1367 = vpack.c.b16 %v1336, %v1336
  %v1368 = vpack.c.b16 %v1337, %v1337
  %v1369 = vpack.c.b16 %v1338, %v1338
  %v1370 = vpack.c.b16 %v1339, %v1339
  %v1371 = vpack.c.b16 %v1340, %v1340
  %v1372 = vpack.c.b16 %v1341, %v1341
  %v1373 = vpack.c.b16 %v1342, %v1342
  %v1374 = vpack.c.b16 %v1343, %v1343
  %v1375 = vpack.c.b16 %v1344, %v1344
  %v1376 = vpack.c.b16 %v1345, %v1345
  %v1377 = vpack.c.b16 %v1346, %v1346
  %v1378 = vpack.c.b16 %v1347, %v1347
  %v1379 = vpack.c.b16 %v1348, %v1348
  %v1380 = vpack.c.b16 %v1349, %v1349
  %v1381 = vpack.c.b16 %v1350, %v1350
  %v1382 = vpack.c.b16 %v1351, %v1351
  %v1383 = vpack.c.b16 %v1352, %v1352
  %v1384 = vpack.c.b16 %v1353, %v1353
  %v1385 = vpack.c.b16 %v1354, %v1354
  %v1386 = vpack.c.b16 %v1355, %v1355
  %1418 = vst [vmem:[%s5] sm:$0xf] %v1356
  %1419 = vst [vmem:[%s5 + $0x4] sm:$0xf] %v1357
  %1420 = vst [vmem:[%s5 + $0x8] sm:$0xf] %v1358
  %1421 = vst [vmem:[%s5 + $0xc] sm:$0xf] %v1359
  %1422 = vst [vmem:[%s5 + $0x10] sm:$0xf] %v1360
  %1423 = vst [vmem:[%s5 + $0x14] sm:$0xf] %v1361
  %1424 = vst [vmem:[%s5 + $0x18] sm:$0xf] %v1362
  %1425 = vst [vmem:[%s5 + $0x1c] sm:$0xf] %v1363
  %1426 = vst [vmem:[%s5 + $0x20] sm:$0xf] %v1364
  %1427 = vst [vmem:[%s5 + $0x24] sm:$0xf] %v1365
  %1428 = vst [vmem:[%s5 + $0x28] sm:$0xf] %v1366
  %1429 = vst [vmem:[%s5 + $0x2c] sm:$0xf] %v1367
  %1430 = vst [vmem:[%s5 + $0x30] sm:$0xf] %v1368
  %1431 = vst [vmem:[%s5 + $0x34] sm:$0xf] %v1369
  %1432 = vst [vmem:[%s5 + $0x38] sm:$0xf] %v1370
  %1433 = vst [vmem:[%s5 + $0x3c] sm:$0xf] %v1371
  %1434 = vst [vmem:[%s5 + $0x40] sm:$0xf] %v1372
  %1435 = vst [vmem:[%s5 + $0x44] sm:$0xf] %v1373
  %1436 = vst [vmem:[%s5 + $0x48] sm:$0xf] %v1374
  %1437 = vst [vmem:[%s5 + $0x4c] sm:$0xf] %v1375
  %1438 = vst [vmem:[%s5 + $0x50] sm:$0xf] %v1376
  %1439 = vst [vmem:[%s5 + $0x54] sm:$0xf] %v1377
  %1440 = vst [vmem:[%s5 + $0x58] sm:$0xf] %v1378
  %1441 = vst [vmem:[%s5 + $0x5c] sm:$0xf] %v1379
  %1442 = vst [vmem:[%s5 + $0x60] sm:$0xf] %v1380
  %1443 = vst [vmem:[%s5 + $0x64] sm:$0xf] %v1381
  %1444 = vst [vmem:[%s5 + $0x68] sm:$0xf] %v1382
  %1445 = vst [vmem:[%s5 + $0x6c] sm:$0xf] %v1383
  %1446 = vst [vmem:[%s5 + $0x70] sm:$0xf] %v1384
  %1447 = vst [vmem:[%s5 + $0x74] sm:$0xf] %v1385
  %1448 = vst [vmem:[%s5 + $0x78] sm:$0x1] %v1386
  // Predicated region
  $region22: #{_lambda_.9} parent=0 // pred_check
    _
  $region23: #{_lambda_.9} parent=0 // pred_check_branch
    %1450 = sbr.rel (0) target = $region25
  $region24: #{_lambda_.9} parent=0 // pred_region
    _
  $region25: #{_lambda_.9} parent=0 // pred_fallthru
    _
  // Predicated region
  $region26: #{_lambda_.9} parent=0 // pred_check
    _
  $region27: #{_lambda_.9} parent=0 // pred_check_branch
    %1452 = sbr.rel (0) target = $region29
  $region28: #{_lambda_.9} parent=0 // pred_region
    _
  $region29: #{_lambda_.9} parent=0 // pred_fallthru
    _

// kernel: _lambda_.10
$region0: #{_lambda_.10}
  #allocation0 [shape = 'u32[]', space=smem, size = 0x4, offset = 0x4, fixed_abs, tag = 'smem constant byte address 0x4 - core index']
  #allocation1 [shape = 'u32[144,128]{1,0:T(1,128)}', space=vmem, size = 0x12000, scoped, tag = 'internal scratch']
  %s0 = inlined_call_operand.vmem [shape: bf16[200,1024], index: 0, kind: input, shape index: {}]
  %s1 = inlined_call_operand.vmem [shape: bf16[1024,128], index: 1, kind: input, shape index: {}]
  %s2 = inlined_call_operand.vmem [shape: f32[1,128], index: 2, kind: input, shape index: {}]
  %s3 = inlined_call_operand.vmem [shape: f32[1,128], index: 3, kind: input, shape index: {}]
  %s4 = inlined_call_operand.vmem [shape: f32[1,128], index: 4, kind: input, shape index: {}]
  %s5 = inlined_call_operand.vmem [shape: bf16[200,128], index: 5, kind: output, shape index: {}]
  %s6 = sld [smem:[#allocation0]]
  $region30: #{_lambda_.10} parent=0
    _
  %s8 = ssub.s32 1, %s6
  %s9 = scalar_select 0, %s8, %s6
  // Predicated region
  $region2: #{_lambda_.10} parent=0 // pred_check
    _
  $region3: #{_lambda_.10} parent=0 // pred_check_branch
    %11 = sbr.rel (0) target = $region5
  $region4: #{_lambda_.10} parent=0 // pred_region
    _
  $region5: #{_lambda_.10} parent=0 // pred_fallthru
    _
  // Predicated region
  $region6: #{_lambda_.10} parent=0 // pred_check
    _
  $region7: #{_lambda_.10} parent=0 // pred_check_branch
    %13 = sbr.rel (0) target = $region9
  $region8: #{_lambda_.10} parent=0 // pred_region
    _
  $region9: #{_lambda_.10} parent=0 // pred_fallthru
    _
  // Predicated region
  $region10: #{_lambda_.10} parent=0 // pred_check
    _
  $region11: #{_lambda_.10} parent=0 // pred_check_branch
    %15 = sbr.rel (0) target = $region13
  $region12: #{_lambda_.10} parent=0 // pred_region
    _
  $region13: #{_lambda_.10} parent=0 // pred_fallthru
    _
  // Predicated region
  $region14: #{_lambda_.10} parent=0 // pred_check
    _
  $region15: #{_lambda_.10} parent=0 // pred_check_branch
    %17 = sbr.rel (0) target = $region17
  $region16: #{_lambda_.10} parent=0 // pred_region
    _
  $region17: #{_lambda_.10} parent=0 // pred_fallthru
    _
  // Predicated region
  $region18: #{_lambda_.10} parent=0 // pred_check
    _
  $region19: #{_lambda_.10} parent=0 // pred_check_branch
    %19 = sbr.rel (0) target = $region21
  $region20: #{_lambda_.10} parent=0 // pred_region
    _
  $region21: #{_lambda_.10} parent=0 // pred_fallthru
    _
  %v21 = vld [vmem:[%s0] sm:$0xff]
  %v22 = vld [vmem:[%s0 + $0x8] sm:$0xff]
  %v23 = vld [vmem:[%s0 + $0x10] sm:$0xff]
  %v24 = vld [vmem:[%s0 + $0x18] sm:$0xff]
  %v25 = vld [vmem:[%s0 + $0x20] sm:$0xff]
  %v26 = vld [vmem:[%s0 + $0x28] sm:$0xff]
  %v27 = vld [vmem:[%s0 + $0x30] sm:$0xff]
  %v28 = vld [vmem:[%s0 + $0x38] sm:$0xff]
  %v29 = vld [vmem:[%s0 + $0x40] sm:$0xff]
  %v30 = vld [vmem:[%s0 + $0x48] sm:$0xff]
  %v31 = vld [vmem:[%s0 + $0x50] sm:$0xff]
  %v32 = vld [vmem:[%s0 + $0x58] sm:$0xff]
  %v33 = vld [vmem:[%s0 + $0x60] sm:$0xff]
  %v34 = vld [vmem:[%s0 + $0x68] sm:$0xff]
  %v35 = vld [vmem:[%s0 + $0x70] sm:$0xff]
  %v36 = vld [vmem:[%s0 + $0x78] sm:$0xff]
  %v37 = vld [vmem:[%s0 + $0x80] sm:$0xff]
  %v38 = vld [vmem:[%s0 + $0x88] sm:$0xff]
  %v39 = vld [vmem:[%s0 + $0x90] sm:$0xff]
  %v40 = vld [vmem:[%s0 + $0x98] sm:$0xff]
  %v41 = vld [vmem:[%s0 + $0xa0] sm:$0xff]
  %v42 = vld [vmem:[%s0 + $0xa8] sm:$0xff]
  %v43 = vld [vmem:[%s0 + $0xb0] sm:$0xff]
  %v44 = vld [vmem:[%s0 + $0xb8] sm:$0xff]
  %v45 = vld [vmem:[%s0 + $0xc0] sm:$0xff]
  %v46 = vld [vmem:[%s0 + $0xc8] sm:$0xff]
  %v47 = vld [vmem:[%s0 + $0xd0] sm:$0xff]
  %v48 = vld [vmem:[%s0 + $0xd8] sm:$0xff]
  %v49 = vld [vmem:[%s0 + $0xe0] sm:$0xff]
  %v50 = vld [vmem:[%s0 + $0xe8] sm:$0xff]
  %v51 = vld [vmem:[%s0 + $0xf0] sm:$0xff]
  %v52 = vld [vmem:[%s0 + $0xf8] sm:$0xff]
  %v53 = vld [vmem:[%s0 + $0x100] sm:$0xff]
  %v54 = vld [vmem:[%s0 + $0x108] sm:$0xff]
  %v55 = vld [vmem:[%s0 + $0x110] sm:$0xff]
  %v56 = vld [vmem:[%s0 + $0x118] sm:$0xff]
  %v57 = vld [vmem:[%s0 + $0x120] sm:$0xff]
  %v58 = vld [vmem:[%s0 + $0x128] sm:$0xff]
  %v59 = vld [vmem:[%s0 + $0x130] sm:$0xff]
  %v60 = vld [vmem:[%s0 + $0x138] sm:$0xff]
  %v61 = vld [vmem:[%s0 + $0x140] sm:$0xff]
  %v62 = vld [vmem:[%s0 + $0x148] sm:$0xff]
  %v63 = vld [vmem:[%s0 + $0x150] sm:$0xff]
  %v64 = vld [vmem:[%s0 + $0x158] sm:$0xff]
  %v65 = vld [vmem:[%s0 + $0x160] sm:$0xff]
  %v66 = vld [vmem:[%s0 + $0x168] sm:$0xff]
  %v67 = vld [vmem:[%s0 + $0x170] sm:$0xff]
  %v68 = vld [vmem:[%s0 + $0x178] sm:$0xff]
  %v69 = vld [vmem:[%s0 + $0x180] sm:$0xff]
  %v70 = vld [vmem:[%s0 + $0x188] sm:$0xff]
  %v71 = vld [vmem:[%s0 + $0x190] sm:$0xff]
  %v72 = vld [vmem:[%s0 + $0x198] sm:$0xff]
  %v73 = vld [vmem:[%s0 + $0x1a0] sm:$0xff]
  %v74 = vld [vmem:[%s0 + $0x1a8] sm:$0xff]
  %v75 = vld [vmem:[%s0 + $0x1b0] sm:$0xff]
  %v76 = vld [vmem:[%s0 + $0x1b8] sm:$0xff]
  %v77 = vld [vmem:[%s0 + $0x1c0] sm:$0xff]
  %v78 = vld [vmem:[%s0 + $0x1c8] sm:$0xff]
  %v79 = vld [vmem:[%s0 + $0x1d0] sm:$0xff]
  %v80 = vld [vmem:[%s0 + $0x1d8] sm:$0xff]
  %v81 = vld [vmem:[%s0 + $0x1e0] sm:$0xff]
  %v82 = vld [vmem:[%s0 + $0x1e8] sm:$0xff]
  %v83 = vld [vmem:[%s0 + $0x1f0] sm:$0xff]
  %v84 = vld [vmem:[%s0 + $0x1f8] sm:$0xff]
  %v85 = vld [vmem:[%s0 + $0x200] sm:$0xff]
  %v86 = vld [vmem:[%s0 + $0x208] sm:$0xff]
  %v87 = vld [vmem:[%s0 + $0x210] sm:$0xff]
  %v88 = vld [vmem:[%s0 + $0x218] sm:$0xff]
  %v89 = vld [vmem:[%s0 + $0x220] sm:$0xff]
  %v90 = vld [vmem:[%s0 + $0x228] sm:$0xff]
  %v91 = vld [vmem:[%s0 + $0x230] sm:$0xff]
  %v92 = vld [vmem:[%s0 + $0x238] sm:$0xff]
  %v93 = vld [vmem:[%s0 + $0x240] sm:$0xff]
  %v94 = vld [vmem:[%s0 + $0x248] sm:$0xff]
  %v95 = vld [vmem:[%s0 + $0x250] sm:$0xff]
  %v96 = vld [vmem:[%s0 + $0x258] sm:$0xff]
  %v97 = vld [vmem:[%s0 + $0x260] sm:$0xff]
  %v98 = vld [vmem:[%s0 + $0x268] sm:$0xff]
  %v99 = vld [vmem:[%s0 + $0x270] sm:$0xff]
  %v100 = vld [vmem:[%s0 + $0x278] sm:$0xff]
  %v101 = vld [vmem:[%s0 + $0x280] sm:$0xff]
  %v102 = vld [vmem:[%s0 + $0x288] sm:$0xff]
  %v103 = vld [vmem:[%s0 + $0x290] sm:$0xff]
  %v104 = vld [vmem:[%s0 + $0x298] sm:$0xff]
  %v105 = vld [vmem:[%s0 + $0x2a0] sm:$0xff]
  %v106 = vld [vmem:[%s0 + $0x2a8] sm:$0xff]
  %v107 = vld [vmem:[%s0 + $0x2b0] sm:$0xff]
  %v108 = vld [vmem:[%s0 + $0x2b8] sm:$0xff]
  %v109 = vld [vmem:[%s0 + $0x2c0] sm:$0xff]
  %v110 = vld [vmem:[%s0 + $0x2c8] sm:$0xff]
  %v111 = vld [vmem:[%s0 + $0x2d0] sm:$0xff]
  %v112 = vld [vmem:[%s0 + $0x2d8] sm:$0xff]
  %v113 = vld [vmem:[%s0 + $0x2e0] sm:$0xff]
  %v114 = vld [vmem:[%s0 + $0x2e8] sm:$0xff]
  %v115 = vld [vmem:[%s0 + $0x2f0] sm:$0xff]
  %v116 = vld [vmem:[%s0 + $0x2f8] sm:$0xff]
  %v117 = vld [vmem:[%s0 + $0x300] sm:$0xff]
  %v118 = vld [vmem:[%s0 + $0x308] sm:$0xff]
  %v119 = vld [vmem:[%s0 + $0x310] sm:$0xff]
  %v120 = vld [vmem:[%s0 + $0x318] sm:$0xff]
  %v121 = vld [vmem:[%s1] sm:$0xf]
  %v122 = vld [vmem:[%s1 + $0x4] sm:$0xf]
  %v123 = vld [vmem:[%s1 + $0x8] sm:$0xf]
  %v124 = vld [vmem:[%s1 + $0xc] sm:$0xf]
  %v125 = vld [vmem:[%s1 + $0x10] sm:$0xf]
  %v126 = vld [vmem:[%s1 + $0x14] sm:$0xf]
  %v127 = vld [vmem:[%s1 + $0x18] sm:$0xf]
  %v128 = vld [vmem:[%s1 + $0x1c] sm:$0xf]
  %v129 = vld [vmem:[%s1 + $0x20] sm:$0xf]
  %v130 = vld [vmem:[%s1 + $0x24] sm:$0xf]
  %v131 = vld [vmem:[%s1 + $0x28] sm:$0xf]
  %v132 = vld [vmem:[%s1 + $0x2c] sm:$0xf]
  %v133 = vld [vmem:[%s1 + $0x30] sm:$0xf]
  %v134 = vld [vmem:[%s1 + $0x34] sm:$0xf]
  %v135 = vld [vmem:[%s1 + $0x38] sm:$0xf]
  %v136 = vld [vmem:[%s1 + $0x3c] sm:$0xf]
  %v137 = vld [vmem:[%s1 + $0x40] sm:$0xf]
  %v138 = vld [vmem:[%s1 + $0x44] sm:$0xf]
  %v139 = vld [vmem:[%s1 + $0x48] sm:$0xf]
  %v140 = vld [vmem:[%s1 + $0x4c] sm:$0xf]
  %v141 = vld [vmem:[%s1 + $0x50] sm:$0xf]
  %v142 = vld [vmem:[%s1 + $0x54] sm:$0xf]
  %v143 = vld [vmem:[%s1 + $0x58] sm:$0xf]
  %v144 = vld [vmem:[%s1 + $0x5c] sm:$0xf]
  %v145 = vld [vmem:[%s1 + $0x60] sm:$0xf]
  %v146 = vld [vmem:[%s1 + $0x64] sm:$0xf]
  %v147 = vld [vmem:[%s1 + $0x68] sm:$0xf]
  %v148 = vld [vmem:[%s1 + $0x6c] sm:$0xf]
  %v149 = vld [vmem:[%s1 + $0x70] sm:$0xf]
  %v150 = vld [vmem:[%s1 + $0x74] sm:$0xf]
  %v151 = vld [vmem:[%s1 + $0x78] sm:$0xf]
  %v152 = vld [vmem:[%s1 + $0x7c] sm:$0xf]
  %v153 = vld [vmem:[%s1 + $0x80] sm:$0xf]
  %v154 = vld [vmem:[%s1 + $0x84] sm:$0xf]
  %v155 = vld [vmem:[%s1 + $0x88] sm:$0xf]
  %v156 = vld [vmem:[%s1 + $0x8c] sm:$0xf]
  %v157 = vld [vmem:[%s1 + $0x90] sm:$0xf]
  %v158 = vld [vmem:[%s1 + $0x94] sm:$0xf]
  %v159 = vld [vmem:[%s1 + $0x98] sm:$0xf]
  %v160 = vld [vmem:[%s1 + $0x9c] sm:$0xf]
  %v161 = vld [vmem:[%s1 + $0xa0] sm:$0xf]
  %v162 = vld [vmem:[%s1 + $0xa4] sm:$0xf]
  %v163 = vld [vmem:[%s1 + $0xa8] sm:$0xf]
  %v164 = vld [vmem:[%s1 + $0xac] sm:$0xf]
  %v165 = vld [vmem:[%s1 + $0xb0] sm:$0xf]
  %v166 = vld [vmem:[%s1 + $0xb4] sm:$0xf]
  %v167 = vld [vmem:[%s1 + $0xb8] sm:$0xf]
  %v168 = vld [vmem:[%s1 + $0xbc] sm:$0xf]
  %v169 = vld [vmem:[%s1 + $0xc0] sm:$0xf]
  %v170 = vld [vmem:[%s1 + $0xc4] sm:$0xf]
  %v171 = vld [vmem:[%s1 + $0xc8] sm:$0xf]
  %v172 = vld [vmem:[%s1 + $0xcc] sm:$0xf]
  %v173 = vld [vmem:[%s1 + $0xd0] sm:$0xf]
  %v174 = vld [vmem:[%s1 + $0xd4] sm:$0xf]
  %v175 = vld [vmem:[%s1 + $0xd8] sm:$0xf]
  %v176 = vld [vmem:[%s1 + $0xdc] sm:$0xf]
  %v177 = vld [vmem:[%s1 + $0xe0] sm:$0xf]
  %v178 = vld [vmem:[%s1 + $0xe4] sm:$0xf]
  %v179 = vld [vmem:[%s1 + $0xe8] sm:$0xf]
  %v180 = vld [vmem:[%s1 + $0xec] sm:$0xf]
  %v181 = vld [vmem:[%s1 + $0xf0] sm:$0xf]
  %v182 = vld [vmem:[%s1 + $0xf4] sm:$0xf]
  %v183 = vld [vmem:[%s1 + $0xf8] sm:$0xf]
  %v184 = vld [vmem:[%s1 + $0xfc] sm:$0xf]
  %v185 = vld [vmem:[%s1 + $0x100] sm:$0xf]
  %v186 = vld [vmem:[%s1 + $0x104] sm:$0xf]
  %v187 = vld [vmem:[%s1 + $0x108] sm:$0xf]
  %v188 = vld [vmem:[%s1 + $0x10c] sm:$0xf]
  %v189 = vld [vmem:[%s1 + $0x110] sm:$0xf]
  %v190 = vld [vmem:[%s1 + $0x114] sm:$0xf]
  %v191 = vld [vmem:[%s1 + $0x118] sm:$0xf]
  %v192 = vld [vmem:[%s1 + $0x11c] sm:$0xf]
  %v193 = vld [vmem:[%s1 + $0x120] sm:$0xf]
  %v194 = vld [vmem:[%s1 + $0x124] sm:$0xf]
  %v195 = vld [vmem:[%s1 + $0x128] sm:$0xf]
  %v196 = vld [vmem:[%s1 + $0x12c] sm:$0xf]
  %v197 = vld [vmem:[%s1 + $0x130] sm:$0xf]
  %v198 = vld [vmem:[%s1 + $0x134] sm:$0xf]
  %v199 = vld [vmem:[%s1 + $0x138] sm:$0xf]
  %v200 = vld [vmem:[%s1 + $0x13c] sm:$0xf]
  %v201 = vld [vmem:[%s1 + $0x140] sm:$0xf]
  %v202 = vld [vmem:[%s1 + $0x144] sm:$0xf]
  %v203 = vld [vmem:[%s1 + $0x148] sm:$0xf]
  %v204 = vld [vmem:[%s1 + $0x14c] sm:$0xf]
  %v205 = vld [vmem:[%s1 + $0x150] sm:$0xf]
  %v206 = vld [vmem:[%s1 + $0x154] sm:$0xf]
  %v207 = vld [vmem:[%s1 + $0x158] sm:$0xf]
  %v208 = vld [vmem:[%s1 + $0x15c] sm:$0xf]
  %v209 = vld [vmem:[%s1 + $0x160] sm:$0xf]
  %v210 = vld [vmem:[%s1 + $0x164] sm:$0xf]
  %v211 = vld [vmem:[%s1 + $0x168] sm:$0xf]
  %v212 = vld [vmem:[%s1 + $0x16c] sm:$0xf]
  %v213 = vld [vmem:[%s1 + $0x170] sm:$0xf]
  %v214 = vld [vmem:[%s1 + $0x174] sm:$0xf]
  %v215 = vld [vmem:[%s1 + $0x178] sm:$0xf]
  %v216 = vld [vmem:[%s1 + $0x17c] sm:$0xf]
  %v217 = vld [vmem:[%s1 + $0x180] sm:$0xf]
  %v218 = vld [vmem:[%s1 + $0x184] sm:$0xf]
  %v219 = vld [vmem:[%s1 + $0x188] sm:$0xf]
  %v220 = vld [vmem:[%s1 + $0x18c] sm:$0xf]
  %v221 = vld [vmem:[%s1 + $0x190] sm:$0xf]
  %v222 = vld [vmem:[%s1 + $0x194] sm:$0xf]
  %v223 = vld [vmem:[%s1 + $0x198] sm:$0xf]
  %v224 = vld [vmem:[%s1 + $0x19c] sm:$0xf]
  %v225 = vld [vmem:[%s1 + $0x1a0] sm:$0xf]
  %v226 = vld [vmem:[%s1 + $0x1a4] sm:$0xf]
  %v227 = vld [vmem:[%s1 + $0x1a8] sm:$0xf]
  %v228 = vld [vmem:[%s1 + $0x1ac] sm:$0xf]
  %v229 = vld [vmem:[%s1 + $0x1b0] sm:$0xf]
  %v230 = vld [vmem:[%s1 + $0x1b4] sm:$0xf]
  %v231 = vld [vmem:[%s1 + $0x1b8] sm:$0xf]
  %v232 = vld [vmem:[%s1 + $0x1bc] sm:$0xf]
  %v233 = vld [vmem:[%s1 + $0x1c0] sm:$0xf]
  %v234 = vld [vmem:[%s1 + $0x1c4] sm:$0xf]
  %v235 = vld [vmem:[%s1 + $0x1c8] sm:$0xf]
  %v236 = vld [vmem:[%s1 + $0x1cc] sm:$0xf]
  %v237 = vld [vmem:[%s1 + $0x1d0] sm:$0xf]
  %v238 = vld [vmem:[%s1 + $0x1d4] sm:$0xf]
  %v239 = vld [vmem:[%s1 + $0x1d8] sm:$0xf]
  %v240 = vld [vmem:[%s1 + $0x1dc] sm:$0xf]
  %v241 = vld [vmem:[%s1 + $0x1e0] sm:$0xf]
  %v242 = vld [vmem:[%s1 + $0x1e4] sm:$0xf]
  %v243 = vld [vmem:[%s1 + $0x1e8] sm:$0xf]
  %v244 = vld [vmem:[%s1 + $0x1ec] sm:$0xf]
  %v245 = vld [vmem:[%s1 + $0x1f0] sm:$0xf]
  %v246 = vld [vmem:[%s1 + $0x1f4] sm:$0xf]
  %v247 = vld [vmem:[%s1 + $0x1f8] sm:$0xf]
  %v248 = vld [vmem:[%s1 + $0x1fc] sm:$0xf]
  %v249 = vld [vmem:[%s2] sm:$0x1]
  %v251 = vlaneseq
  %v252 = vshrl.u32 %v251, 7
  %v253 = vsub.s32 0, %v252
  %v254 = vrot.slane %v249, %v253
  %v356 = vunpack.c.l.b16 %v21
  %v357 = vunpack.c.h.b16 %v21
  %v358 = vunpack.c.l.b16 %v22
  %v359 = vunpack.c.h.b16 %v22
  %v360 = vunpack.c.l.b16 %v23
  %v361 = vunpack.c.h.b16 %v23
  %v362 = vunpack.c.l.b16 %v24
  %v363 = vunpack.c.h.b16 %v24
  %v364 = vunpack.c.l.b16 %v25
  %v365 = vunpack.c.h.b16 %v25
  %v366 = vunpack.c.l.b16 %v26
  %v367 = vunpack.c.h.b16 %v26
  %v368 = vunpack.c.l.b16 %v27
  %v369 = vunpack.c.h.b16 %v27
  %v370 = vunpack.c.l.b16 %v28
  %v371 = vunpack.c.h.b16 %v28
  %v372 = vunpack.c.l.b16 %v29
  %v373 = vunpack.c.h.b16 %v29
  %v374 = vunpack.c.l.b16 %v30
  %v375 = vunpack.c.h.b16 %v30
  %v376 = vunpack.c.l.b16 %v31
  %v377 = vunpack.c.h.b16 %v31
  %v378 = vunpack.c.l.b16 %v32
  %v379 = vunpack.c.h.b16 %v32
  %v380 = vunpack.c.l.b16 %v33
  %v381 = vunpack.c.h.b16 %v33
  %v382 = vunpack.c.l.b16 %v34
  %v383 = vunpack.c.h.b16 %v34
  %v384 = vunpack.c.l.b16 %v35
  %v385 = vunpack.c.h.b16 %v35
  %v386 = vunpack.c.l.b16 %v36
  %v387 = vunpack.c.h.b16 %v36
  %v388 = vunpack.c.l.b16 %v37
  %v389 = vunpack.c.h.b16 %v37
  %v390 = vunpack.c.l.b16 %v38
  %v391 = vunpack.c.h.b16 %v38
  %v392 = vunpack.c.l.b16 %v39
  %v393 = vunpack.c.h.b16 %v39
  %v394 = vunpack.c.l.b16 %v40
  %v395 = vunpack.c.h.b16 %v40
  %v396 = vunpack.c.l.b16 %v41
  %v397 = vunpack.c.h.b16 %v41
  %v398 = vunpack.c.l.b16 %v42
  %v399 = vunpack.c.h.b16 %v42
  %v400 = vunpack.c.l.b16 %v43
  %v401 = vunpack.c.h.b16 %v43
  %v402 = vunpack.c.l.b16 %v44
  %v403 = vunpack.c.h.b16 %v44
  %v404 = vunpack.c.l.b16 %v45
  %v405 = vunpack.c.h.b16 %v45
  %v406 = vunpack.c.l.b16 %v46
  %v407 = vunpack.c.h.b16 %v46
  %v408 = vunpack.c.l.b16 %v47
  %v409 = vunpack.c.h.b16 %v47
  %v410 = vunpack.c.l.b16 %v48
  %v411 = vunpack.c.h.b16 %v48
  %v412 = vunpack.c.l.b16 %v49
  %v413 = vunpack.c.h.b16 %v49
  %v414 = vunpack.c.l.b16 %v50
  %v415 = vunpack.c.h.b16 %v50
  %v416 = vunpack.c.l.b16 %v51
  %v417 = vunpack.c.h.b16 %v51
  %v418 = vunpack.c.l.b16 %v52
  %v419 = vunpack.c.h.b16 %v52
  %v420 = vunpack.c.l.b16 %v53
  %v421 = vunpack.c.h.b16 %v53
  %v422 = vunpack.c.l.b16 %v54
  %v423 = vunpack.c.h.b16 %v54
  %v424 = vunpack.c.l.b16 %v55
  %v425 = vunpack.c.h.b16 %v55
  %v426 = vunpack.c.l.b16 %v56
  %v427 = vunpack.c.h.b16 %v56
  %v428 = vunpack.c.l.b16 %v57
  %v429 = vunpack.c.h.b16 %v57
  %v430 = vunpack.c.l.b16 %v58
  %v431 = vunpack.c.h.b16 %v58
  %v432 = vunpack.c.l.b16 %v59
  %v433 = vunpack.c.h.b16 %v59
  %v434 = vunpack.c.l.b16 %v60
  %v435 = vunpack.c.h.b16 %v60
  %v436 = vunpack.c.l.b16 %v61
  %v437 = vunpack.c.h.b16 %v61
  %v438 = vunpack.c.l.b16 %v62
  %v439 = vunpack.c.h.b16 %v62
  %v440 = vunpack.c.l.b16 %v63
  %v441 = vunpack.c.h.b16 %v63
  %v442 = vunpack.c.l.b16 %v64
  %v443 = vunpack.c.h.b16 %v64
  %v444 = vunpack.c.l.b16 %v65
  %v445 = vunpack.c.h.b16 %v65
  %v446 = vunpack.c.l.b16 %v66
  %v447 = vunpack.c.h.b16 %v66
  %v448 = vunpack.c.l.b16 %v67
  %v449 = vunpack.c.h.b16 %v67
  %v450 = vunpack.c.l.b16 %v68
  %v451 = vunpack.c.h.b16 %v68
  %v452 = vunpack.c.l.b16 %v69
  %v453 = vunpack.c.h.b16 %v69
  %v454 = vunpack.c.l.b16 %v70
  %v455 = vunpack.c.h.b16 %v70
  %v456 = vunpack.c.l.b16 %v71
  %v457 = vunpack.c.h.b16 %v71
  %v458 = vunpack.c.l.b16 %v72
  %v459 = vunpack.c.h.b16 %v72
  %v460 = vunpack.c.l.b16 %v73
  %v461 = vunpack.c.h.b16 %v73
  %v462 = vunpack.c.l.b16 %v74
  %v463 = vunpack.c.h.b16 %v74
  %v464 = vunpack.c.l.b16 %v75
  %v465 = vunpack.c.h.b16 %v75
  %v466 = vunpack.c.l.b16 %v76
  %v467 = vunpack.c.h.b16 %v76
  %v468 = vunpack.c.l.b16 %v77
  %v469 = vunpack.c.h.b16 %v77
  %v470 = vunpack.c.l.b16 %v78
  %v471 = vunpack.c.h.b16 %v78
  %v472 = vunpack.c.l.b16 %v79
  %v473 = vunpack.c.h.b16 %v79
  %v474 = vunpack.c.l.b16 %v80
  %v475 = vunpack.c.h.b16 %v80
  %v476 = vunpack.c.l.b16 %v81
  %v477 = vunpack.c.h.b16 %v81
  %v478 = vunpack.c.l.b16 %v82
  %v479 = vunpack.c.h.b16 %v82
  %v480 = vunpack.c.l.b16 %v83
  %v481 = vunpack.c.h.b16 %v83
  %v482 = vunpack.c.l.b16 %v84
  %v483 = vunpack.c.h.b16 %v84
  %v484 = vunpack.c.l.b16 %v85
  %v485 = vunpack.c.h.b16 %v85
  %v486 = vunpack.c.l.b16 %v86
  %v487 = vunpack.c.h.b16 %v86
  %v488 = vunpack.c.l.b16 %v87
  %v489 = vunpack.c.h.b16 %v87
  %v490 = vunpack.c.l.b16 %v88
  %v491 = vunpack.c.h.b16 %v88
  %v492 = vunpack.c.l.b16 %v89
  %v493 = vunpack.c.h.b16 %v89
  %v494 = vunpack.c.l.b16 %v90
  %v495 = vunpack.c.h.b16 %v90
  %v496 = vunpack.c.l.b16 %v91
  %v497 = vunpack.c.h.b16 %v91
  %v498 = vunpack.c.l.b16 %v92
  %v499 = vunpack.c.h.b16 %v92
  %v500 = vunpack.c.l.b16 %v93
  %v501 = vunpack.c.h.b16 %v93
  %v502 = vunpack.c.l.b16 %v94
  %v503 = vunpack.c.h.b16 %v94
  %v504 = vunpack.c.l.b16 %v95
  %v505 = vunpack.c.h.b16 %v95
  %v506 = vunpack.c.l.b16 %v96
  %v507 = vunpack.c.h.b16 %v96
  %v508 = vunpack.c.l.b16 %v97
  %v509 = vunpack.c.h.b16 %v97
  %v510 = vunpack.c.l.b16 %v98
  %v511 = vunpack.c.h.b16 %v98
  %v512 = vunpack.c.l.b16 %v99
  %v513 = vunpack.c.h.b16 %v99
  %v514 = vunpack.c.l.b16 %v100
  %v515 = vunpack.c.h.b16 %v100
  %v516 = vunpack.c.l.b16 %v101
  %v517 = vunpack.c.h.b16 %v101
  %v518 = vunpack.c.l.b16 %v102
  %v519 = vunpack.c.h.b16 %v102
  %v520 = vunpack.c.l.b16 %v103
  %v521 = vunpack.c.h.b16 %v103
  %v522 = vunpack.c.l.b16 %v104
  %v523 = vunpack.c.h.b16 %v104
  %v524 = vunpack.c.l.b16 %v105
  %v525 = vunpack.c.h.b16 %v105
  %v526 = vunpack.c.l.b16 %v106
  %v527 = vunpack.c.h.b16 %v106
  %v528 = vunpack.c.l.b16 %v107
  %v529 = vunpack.c.h.b16 %v107
  %v530 = vunpack.c.l.b16 %v108
  %v531 = vunpack.c.h.b16 %v108
  %v532 = vunpack.c.l.b16 %v109
  %v533 = vunpack.c.h.b16 %v109
  %v534 = vunpack.c.l.b16 %v110
  %v535 = vunpack.c.h.b16 %v110
  %v536 = vunpack.c.l.b16 %v111
  %v537 = vunpack.c.h.b16 %v111
  %v538 = vunpack.c.l.b16 %v112
  %v539 = vunpack.c.h.b16 %v112
  %v540 = vunpack.c.l.b16 %v113
  %v541 = vunpack.c.h.b16 %v113
  %v542 = vunpack.c.l.b16 %v114
  %v543 = vunpack.c.h.b16 %v114
  %v544 = vunpack.c.l.b16 %v115
  %v545 = vunpack.c.h.b16 %v115
  %v546 = vunpack.c.l.b16 %v116
  %v547 = vunpack.c.h.b16 %v116
  %v548 = vunpack.c.l.b16 %v117
  %v549 = vunpack.c.h.b16 %v117
  %v550 = vunpack.c.l.b16 %v118
  %v551 = vunpack.c.h.b16 %v118
  %v552 = vunpack.c.l.b16 %v119
  %v553 = vunpack.c.h.b16 %v119
  %v554 = vunpack.c.l.b16 %v120
  %v555 = vunpack.c.h.b16 %v120
  %v556 = vpack.c.b16 %v364, %v356
  %v557 = vpack.c.b16 %v365, %v357
  %v558 = vpack.c.b16 %v366, %v358
  %v559 = vpack.c.b16 %v367, %v359
  %v560 = vpack.c.b16 %v368, %v360
  %v561 = vpack.c.b16 %v369, %v361
  %v562 = vpack.c.b16 %v370, %v362
  %v563 = vpack.c.b16 %v371, %v363
  %v564 = vpack.c.b16 %v380, %v372
  %v565 = vpack.c.b16 %v381, %v373
  %v566 = vpack.c.b16 %v382, %v374
  %v567 = vpack.c.b16 %v383, %v375
  %v568 = vpack.c.b16 %v384, %v376
  %v569 = vpack.c.b16 %v385, %v377
  %v570 = vpack.c.b16 %v386, %v378
  %v571 = vpack.c.b16 %v387, %v379
  %v572 = vpack.c.b16 %v396, %v388
  %v573 = vpack.c.b16 %v397, %v389
  %v574 = vpack.c.b16 %v398, %v390
  %v575 = vpack.c.b16 %v399, %v391
  %v576 = vpack.c.b16 %v400, %v392
  %v577 = vpack.c.b16 %v401, %v393
  %v578 = vpack.c.b16 %v402, %v394
  %v579 = vpack.c.b16 %v403, %v395
  %v580 = vpack.c.b16 %v412, %v404
  %v581 = vpack.c.b16 %v413, %v405
  %v582 = vpack.c.b16 %v414, %v406
  %v583 = vpack.c.b16 %v415, %v407
  %v584 = vpack.c.b16 %v416, %v408
  %v585 = vpack.c.b16 %v417, %v409
  %v586 = vpack.c.b16 %v418, %v410
  %v587 = vpack.c.b16 %v419, %v411
  %v588 = vpack.c.b16 %v428, %v420
  %v589 = vpack.c.b16 %v429, %v421
  %v590 = vpack.c.b16 %v430, %v422
  %v591 = vpack.c.b16 %v431, %v423
  %v592 = vpack.c.b16 %v432, %v424
  %v593 = vpack.c.b16 %v433, %v425
  %v594 = vpack.c.b16 %v434, %v426
  %v595 = vpack.c.b16 %v435, %v427
  %v596 = vpack.c.b16 %v444, %v436
  %v597 = vpack.c.b16 %v445, %v437
  %v598 = vpack.c.b16 %v446, %v438
  %v599 = vpack.c.b16 %v447, %v439
  %v600 = vpack.c.b16 %v448, %v440
  %v601 = vpack.c.b16 %v449, %v441
  %v602 = vpack.c.b16 %v450, %v442
  %v603 = vpack.c.b16 %v451, %v443
  %v604 = vpack.c.b16 %v460, %v452
  %v605 = vpack.c.b16 %v461, %v453
  %v606 = vpack.c.b16 %v462, %v454
  %v607 = vpack.c.b16 %v463, %v455
  %v608 = vpack.c.b16 %v464, %v456
  %v609 = vpack.c.b16 %v465, %v457
  %v610 = vpack.c.b16 %v466, %v458
  %v611 = vpack.c.b16 %v467, %v459
  %v612 = vpack.c.b16 %v476, %v468
  %v613 = vpack.c.b16 %v477, %v469
  %v614 = vpack.c.b16 %v478, %v470
  %v615 = vpack.c.b16 %v479, %v471
  %v616 = vpack.c.b16 %v480, %v472
  %v617 = vpack.c.b16 %v481, %v473
  %v618 = vpack.c.b16 %v482, %v474
  %v619 = vpack.c.b16 %v483, %v475
  %v620 = vpack.c.b16 %v492, %v484
  %v621 = vpack.c.b16 %v493, %v485
  %v622 = vpack.c.b16 %v494, %v486
  %v623 = vpack.c.b16 %v495, %v487
  %v624 = vpack.c.b16 %v496, %v488
  %v625 = vpack.c.b16 %v497, %v489
  %v626 = vpack.c.b16 %v498, %v490
  %v627 = vpack.c.b16 %v499, %v491
  %v628 = vpack.c.b16 %v508, %v500
  %v629 = vpack.c.b16 %v509, %v501
  %v630 = vpack.c.b16 %v510, %v502
  %v631 = vpack.c.b16 %v511, %v503
  %v632 = vpack.c.b16 %v512, %v504
  %v633 = vpack.c.b16 %v513, %v505
  %v634 = vpack.c.b16 %v514, %v506
  %v635 = vpack.c.b16 %v515, %v507
  %v636 = vpack.c.b16 %v524, %v516
  %v637 = vpack.c.b16 %v525, %v517
  %v638 = vpack.c.b16 %v526, %v518
  %v639 = vpack.c.b16 %v527, %v519
  %v640 = vpack.c.b16 %v528, %v520
  %v641 = vpack.c.b16 %v529, %v521
  %v642 = vpack.c.b16 %v530, %v522
  %v643 = vpack.c.b16 %v531, %v523
  %v644 = vpack.c.b16 %v540, %v532
  %v645 = vpack.c.b16 %v541, %v533
  %v646 = vpack.c.b16 %v542, %v534
  %v647 = vpack.c.b16 %v543, %v535
  %v648 = vpack.c.b16 %v544, %v536
  %v649 = vpack.c.b16 %v545, %v537
  %v650 = vpack.c.b16 %v546, %v538
  %v651 = vpack.c.b16 %v547, %v539
  %v652 = vpack.c.b16 %v548, %v548
  %v653 = vpack.c.b16 %v549, %v549
  %v654 = vpack.c.b16 %v550, %v550
  %v655 = vpack.c.b16 %v551, %v551
  %v656 = vpack.c.b16 %v552, %v552
  %v657 = vpack.c.b16 %v553, %v553
  %v658 = vpack.c.b16 %v554, %v554
  %v659 = vpack.c.b16 %v555, %v555
  %v892 = vunpack.c.l.b16 %v121
  %v893 = vunpack.c.l.b16 %v122
  %v894 = vunpack.c.l.b16 %v123
  %v895 = vunpack.c.l.b16 %v124
  %v896 = vunpack.c.l.b16 %v125
  %v897 = vunpack.c.l.b16 %v126
  %v898 = vunpack.c.l.b16 %v127
  %v899 = vunpack.c.l.b16 %v128
  %v900 = vunpack.c.l.b16 %v129
  %v901 = vunpack.c.l.b16 %v130
  %v902 = vunpack.c.l.b16 %v131
  %v903 = vunpack.c.l.b16 %v132
  %v904 = vunpack.c.l.b16 %v133
  %v905 = vunpack.c.l.b16 %v134
  %v906 = vunpack.c.l.b16 %v135
  %v907 = vunpack.c.l.b16 %v136
  %v908 = vunpack.c.l.b16 %v137
  %v909 = vunpack.c.l.b16 %v138
  %v910 = vunpack.c.l.b16 %v139
  %v911 = vunpack.c.l.b16 %v140
  %v912 = vunpack.c.l.b16 %v141
  %v913 = vunpack.c.l.b16 %v142
  %v914 = vunpack.c.l.b16 %v143
  %v915 = vunpack.c.l.b16 %v144
  %v916 = vunpack.c.l.b16 %v145
  %v917 = vunpack.c.l.b16 %v146
  %v918 = vunpack.c.l.b16 %v147
  %v919 = vunpack.c.l.b16 %v148
  %v920 = vunpack.c.l.b16 %v149
  %v921 = vunpack.c.l.b16 %v150
  %v922 = vunpack.c.l.b16 %v151
  %v923 = vunpack.c.l.b16 %v152
  %v924 = vunpack.c.l.b16 %v153
  %v925 = vunpack.c.l.b16 %v154
  %v926 = vunpack.c.l.b16 %v155
  %v927 = vunpack.c.l.b16 %v156
  %v928 = vunpack.c.l.b16 %v157
  %v929 = vunpack.c.l.b16 %v158
  %v930 = vunpack.c.l.b16 %v159
  %v931 = vunpack.c.l.b16 %v160
  %v932 = vunpack.c.l.b16 %v161
  %v933 = vunpack.c.l.b16 %v162
  %v934 = vunpack.c.l.b16 %v163
  %v935 = vunpack.c.l.b16 %v164
  %v936 = vunpack.c.l.b16 %v165
  %v937 = vunpack.c.l.b16 %v166
  %v938 = vunpack.c.l.b16 %v167
  %v939 = vunpack.c.l.b16 %v168
  %v940 = vunpack.c.l.b16 %v169
  %v941 = vunpack.c.l.b16 %v170
  %v942 = vunpack.c.l.b16 %v171
  %v943 = vunpack.c.l.b16 %v172
  %v944 = vunpack.c.l.b16 %v173
  %v945 = vunpack.c.l.b16 %v174
  %v946 = vunpack.c.l.b16 %v175
  %v947 = vunpack.c.l.b16 %v176
  %v948 = vunpack.c.l.b16 %v177
  %v949 = vunpack.c.l.b16 %v178
  %v950 = vunpack.c.l.b16 %v179
  %v951 = vunpack.c.l.b16 %v180
  %v952 = vunpack.c.l.b16 %v181
  %v953 = vunpack.c.l.b16 %v182
  %v954 = vunpack.c.l.b16 %v183
  %v955 = vunpack.c.l.b16 %v184
  %v956 = vunpack.c.l.b16 %v185
  %v957 = vunpack.c.l.b16 %v186
  %v958 = vunpack.c.l.b16 %v187
  %v959 = vunpack.c.l.b16 %v188
  %v960 = vunpack.c.l.b16 %v189
  %v961 = vunpack.c.l.b16 %v190
  %v962 = vunpack.c.l.b16 %v191
  %v963 = vunpack.c.l.b16 %v192
  %v964 = vunpack.c.l.b16 %v193
  %v965 = vunpack.c.l.b16 %v194
  %v966 = vunpack.c.l.b16 %v195
  %v967 = vunpack.c.l.b16 %v196
  %v968 = vunpack.c.l.b16 %v197
  %v969 = vunpack.c.l.b16 %v198
  %v970 = vunpack.c.l.b16 %v199
  %v971 = vunpack.c.l.b16 %v200
  %v972 = vunpack.c.l.b16 %v201
  %v973 = vunpack.c.l.b16 %v202
  %v974 = vunpack.c.l.b16 %v203
  %v975 = vunpack.c.l.b16 %v204
  %v976 = vunpack.c.l.b16 %v205
  %v977 = vunpack.c.l.b16 %v206
  %v978 = vunpack.c.l.b16 %v207
  %v979 = vunpack.c.l.b16 %v208
  %v980 = vunpack.c.l.b16 %v209
  %v981 = vunpack.c.l.b16 %v210
  %v982 = vunpack.c.l.b16 %v211
  %v983 = vunpack.c.l.b16 %v212
  %v984 = vunpack.c.l.b16 %v213
  %v985 = vunpack.c.l.b16 %v214
  %v986 = vunpack.c.l.b16 %v215
  %v987 = vunpack.c.l.b16 %v216
  %v988 = vunpack.c.l.b16 %v217
  %v989 = vunpack.c.l.b16 %v218
  %v990 = vunpack.c.l.b16 %v219
  %v991 = vunpack.c.l.b16 %v220
  %v992 = vunpack.c.l.b16 %v221
  %v993 = vunpack.c.l.b16 %v222
  %v994 = vunpack.c.l.b16 %v223
  %v995 = vunpack.c.l.b16 %v224
  %v996 = vunpack.c.l.b16 %v225
  %v997 = vunpack.c.l.b16 %v226
  %v998 = vunpack.c.l.b16 %v227
  %v999 = vunpack.c.l.b16 %v228
  %v1000 = vunpack.c.l.b16 %v229
  %v1001 = vunpack.c.l.b16 %v230
  %v1002 = vunpack.c.l.b16 %v231
  %v1003 = vunpack.c.l.b16 %v232
  %v1004 = vunpack.c.l.b16 %v233
  %v1005 = vunpack.c.l.b16 %v234
  %v1006 = vunpack.c.l.b16 %v235
  %v1007 = vunpack.c.l.b16 %v236
  %v1008 = vunpack.c.l.b16 %v237
  %v1009 = vunpack.c.l.b16 %v238
  %v1010 = vunpack.c.l.b16 %v239
  %v1011 = vunpack.c.l.b16 %v240
  %v1012 = vunpack.c.l.b16 %v241
  %v1013 = vunpack.c.l.b16 %v242
  %v1014 = vunpack.c.l.b16 %v243
  %v1015 = vunpack.c.l.b16 %v244
  %v1016 = vunpack.c.l.b16 %v245
  %v1017 = vunpack.c.l.b16 %v246
  %v1018 = vunpack.c.l.b16 %v247
  %v1019 = vunpack.c.l.b16 %v248
  %v1020 = vpack.c.b16 %v893, %v892
  %v1021 = vpack.c.b16 %v895, %v894
  %v1022 = vpack.c.b16 %v897, %v896
  %v1023 = vpack.c.b16 %v899, %v898
  %v1024 = vpack.c.b16 %v901, %v900
  %v1025 = vpack.c.b16 %v903, %v902
  %v1026 = vpack.c.b16 %v905, %v904
  %v1027 = vpack.c.b16 %v907, %v906
  %v1028 = vpack.c.b16 %v909, %v908
  %v1029 = vpack.c.b16 %v911, %v910
  %v1030 = vpack.c.b16 %v913, %v912
  %v1031 = vpack.c.b16 %v915, %v914
  %v1032 = vpack.c.b16 %v917, %v916
  %v1033 = vpack.c.b16 %v919, %v918
  %v1034 = vpack.c.b16 %v921, %v920
  %v1035 = vpack.c.b16 %v923, %v922
  %v1036 = vpack.c.b16 %v925, %v924
  %v1037 = vpack.c.b16 %v927, %v926
  %v1038 = vpack.c.b16 %v929, %v928
  %v1039 = vpack.c.b16 %v931, %v930
  %v1040 = vpack.c.b16 %v933, %v932
  %v1041 = vpack.c.b16 %v935, %v934
  %v1042 = vpack.c.b16 %v937, %v936
  %v1043 = vpack.c.b16 %v939, %v938
  %v1044 = vpack.c.b16 %v941, %v940
  %v1045 = vpack.c.b16 %v943, %v942
  %v1046 = vpack.c.b16 %v945, %v944
  %v1047 = vpack.c.b16 %v947, %v946
  %v1048 = vpack.c.b16 %v949, %v948
  %v1049 = vpack.c.b16 %v951, %v950
  %v1050 = vpack.c.b16 %v953, %v952
  %v1051 = vpack.c.b16 %v955, %v954
  %v1052 = vpack.c.b16 %v957, %v956
  %v1053 = vpack.c.b16 %v959, %v958
  %v1054 = vpack.c.b16 %v961, %v960
  %v1055 = vpack.c.b16 %v963, %v962
  %v1056 = vpack.c.b16 %v965, %v964
  %v1057 = vpack.c.b16 %v967, %v966
  %v1058 = vpack.c.b16 %v969, %v968
  %v1059 = vpack.c.b16 %v971, %v970
  %v1060 = vpack.c.b16 %v973, %v972
  %v1061 = vpack.c.b16 %v975, %v974
  %v1062 = vpack.c.b16 %v977, %v976
  %v1063 = vpack.c.b16 %v979, %v978
  %v1064 = vpack.c.b16 %v981, %v980
  %v1065 = vpack.c.b16 %v983, %v982
  %v1066 = vpack.c.b16 %v985, %v984
  %v1067 = vpack.c.b16 %v987, %v986
  %v1068 = vpack.c.b16 %v989, %v988
  %v1069 = vpack.c.b16 %v991, %v990
  %v1070 = vpack.c.b16 %v993, %v992
  %v1071 = vpack.c.b16 %v995, %v994
  %v1072 = vpack.c.b16 %v997, %v996
  %v1073 = vpack.c.b16 %v999, %v998
  %v1074 = vpack.c.b16 %v1001, %v1000
  %v1075 = vpack.c.b16 %v1003, %v1002
  %v1076 = vpack.c.b16 %v1005, %v1004
  %v1077 = vpack.c.b16 %v1007, %v1006
  %v1078 = vpack.c.b16 %v1009, %v1008
  %v1079 = vpack.c.b16 %v1011, %v1010
  %v1080 = vpack.c.b16 %v1013, %v1012
  %v1081 = vpack.c.b16 %v1015, %v1014
  %v1082 = vpack.c.b16 %v1017, %v1016
  %v1083 = vpack.c.b16 %v1019, %v1018
  %1148 = vmatprep.subr.bf16.mxu0 0
  %1149 = vmatpush1.bf16.msra.mxu0 %v1020
  %1150 = vmatprep.subr.bf16.mxu0 0
  %1151 = vmatpush1.bf16.msra.mxu0 %v1021
  %1152 = vmatprep.subr.bf16.mxu0 0
  %1153 = vmatpush1.bf16.msra.mxu0 %v1022
  %1154 = vmatprep.subr.bf16.mxu0 0
  %1155 = vmatpush1.bf16.msra.mxu0 %v1023
  %1156 = vmatprep.subr.bf16.mxu0 0
  %1157 = vmatpush1.bf16.msra.mxu0 %v1024
  %1158 = vmatprep.subr.bf16.mxu0 0
  %1159 = vmatpush1.bf16.msra.mxu0 %v1025
  %1160 = vmatprep.subr.bf16.mxu0 0
  %1161 = vmatpush1.bf16.msra.mxu0 %v1026
  %1162 = vmatprep.subr.bf16.mxu0 0
  %1163 = vmatpush1.bf16.msra.mxu0 %v1027
  %1164 = vmatprep.subr.bf16.mxu0 0
  %1165 = vmatpush1.bf16.msra.mxu0 %v1028
  %1166 = vmatprep.subr.bf16.mxu0 0
  %1167 = vmatpush1.bf16.msra.mxu0 %v1029
  %1168 = vmatprep.subr.bf16.mxu0 0
  %1169 = vmatpush1.bf16.msra.mxu0 %v1030
  %1170 = vmatprep.subr.bf16.mxu0 0
  %1171 = vmatpush1.bf16.msra.mxu0 %v1031
  %1172 = vmatprep.subr.bf16.mxu0 0
  %1173 = vmatpush1.bf16.msra.mxu0 %v1032
  %1174 = vmatprep.subr.bf16.mxu0 0
  %1175 = vmatpush1.bf16.msra.mxu0 %v1033
  %1176 = vmatprep.subr.bf16.mxu0 0
  %1177 = vmatpush1.bf16.msra.mxu0 %v1034
  %1178 = vmatprep.subr.bf16.mxu0 0
  %1179 = vmatpush1.bf16.msra.mxu0 %v1035
  %1180 = vmatprep.mubr.bf16.mxu0 %v557
  %1181 = vmatmul.mubr.bf16.gmra.mrb[0].mxu0 %v556
  %v1182 = vpop.f32.mrb[0].mxu0
  %v1183 = vadd.f32 %v254, %v1182
  %v1184 = vpop.f32.mrb[0].mxu0
  %v1185 = vpop.f32.mrb[0].mxu0
  %v1186 = vadd.f32 %v254, %v1185
  %v1187 = vpop.f32.mrb[0].mxu0
  %1188 = vmatprep.mubr.bf16.mxu0 %v565
  %1189 = vmatmul.mubr.bf16.gmra.mrb[0].mxu0 %v564
  %v1190 = vpop.f32.mrb[0].mxu0
  %v1191 = vadd.f32 %v254, %v1190
  %v1192 = vpop.f32.mrb[0].mxu0
  %v1193 = vpop.f32.mrb[0].mxu0
  %v1194 = vadd.f32 %v254, %v1193
  %v1195 = vpop.f32.mrb[0].mxu0
  %1196 = vmatprep.mubr.bf16.mxu0 %v573
  %1197 = vmatmul.mubr.bf16.gmra.mrb[0].mxu0 %v572
  %v1198 = vpop.f32.mrb[0].mxu0
  %v1199 = vadd.f32 %v254, %v1198
  %v1200 = vpop.f32.mrb[0].mxu0
  %v1201 = vpop.f32.mrb[0].mxu0
  %v1202 = vadd.f32 %v254, %v1201
  %v1203 = vpop.f32.mrb[0].mxu0
  %1204 = vmatprep.mubr.bf16.mxu0 %v581
  %1205 = vmatmul.mubr.bf16.gmra.mrb[0].mxu0 %v580
  %v1206 = vpop.f32.mrb[0].mxu0
  %v1207 = vadd.f32 %v254, %v1206
  %v1208 = vpop.f32.mrb[0].mxu0
  %v1209 = vpop.f32.mrb[0].mxu0
  %v1210 = vadd.f32 %v254, %v1209
  %v1211 = vpop.f32.mrb[0].mxu0
  %1212 = vmatprep.mubr.bf16.mxu0 %v589
  %1213 = vmatmul.mubr.bf16.gmra.mrb[0].mxu0 %v588
  %v1214 = vpop.f32.mrb[0].mxu0
  %v1215 = vadd.f32 %v254, %v1214
  %v1216 = vpop.f32.mrb[0].mxu0
  %v1217 = vpop.f32.mrb[0].mxu0
  %v1218 = vadd.f32 %v254, %v1217
  %v1219 = vpop.f32.mrb[0].mxu0
  %1220 = vmatprep.mubr.bf16.mxu0 %v597
  %1221 = vmatmul.mubr.bf16.gmra.mrb[0].mxu0 %v596
  %v1222 = vpop.f32.mrb[0].mxu0
  %v1223 = vadd.f32 %v254, %v1222
  %v1224 = vpop.f32.mrb[0].mxu0
  %v1225 = vpop.f32.mrb[0].mxu0
  %v1226 = vadd.f32 %v254, %v1225
  %v1227 = vpop.f32.mrb[0].mxu0
  %1228 = vmatprep.mubr.bf16.mxu0 %v605
  %1229 = vmatmul.mubr.bf16.gmra.mrb[0].mxu0 %v604
  %v1230 = vpop.f32.mrb[0].mxu0
  %v1231 = vadd.f32 %v254, %v1230
  %v1232 = vpop.f32.mrb[0].mxu0
  %v1233 = vpop.f32.mrb[0].mxu0
  %v1234 = vadd.f32 %v254, %v1233
  %v1235 = vpop.f32.mrb[0].mxu0
  %1236 = vmatprep.mubr.bf16.mxu0 %v613
  %1237 = vmatmul.mubr.bf16.gmra.mrb[0].mxu0 %v612
  %v1238 = vpop.f32.mrb[0].mxu0
  %v1239 = vadd.f32 %v254, %v1238
  %v1240 = vpop.f32.mrb[0].mxu0
  %v1241 = vpop.f32.mrb[0].mxu0
  %v1242 = vadd.f32 %v254, %v1241
  %v1243 = vpop.f32.mrb[0].mxu0
  %1244 = vmatprep.mubr.bf16.mxu0 %v621
  %1245 = vmatmul.mubr.bf16.gmra.mrb[0].mxu0 %v620
  %v1246 = vpop.f32.mrb[0].mxu0
  %v1247 = vadd.f32 %v254, %v1246
  %v1248 = vpop.f32.mrb[0].mxu0
  %v1249 = vpop.f32.mrb[0].mxu0
  %v1250 = vadd.f32 %v254, %v1249
  %v1251 = vpop.f32.mrb[0].mxu0
  %1252 = vmatprep.mubr.bf16.mxu0 %v629
  %1253 = vmatmul.mubr.bf16.gmra.mrb[0].mxu0 %v628
  %v1254 = vpop.f32.mrb[0].mxu0
  %v1255 = vadd.f32 %v254, %v1254
  %v1256 = vpop.f32.mrb[0].mxu0
  %v1257 = vpop.f32.mrb[0].mxu0
  %v1258 = vadd.f32 %v254, %v1257
  %v1259 = vpop.f32.mrb[0].mxu0
  %1260 = vmatprep.mubr.bf16.mxu0 %v637
  %1261 = vmatmul.mubr.bf16.gmra.mrb[0].mxu0 %v636
  %v1262 = vpop.f32.mrb[0].mxu0
  %v1263 = vadd.f32 %v254, %v1262
  %v1264 = vpop.f32.mrb[0].mxu0
  %v1265 = vpop.f32.mrb[0].mxu0
  %v1266 = vadd.f32 %v254, %v1265
  %v1267 = vpop.f32.mrb[0].mxu0
  %1268 = vmatprep.mubr.bf16.mxu0 %v645
  %1269 = vmatmul.mubr.bf16.gmra.mrb[0].mxu0 %v644
  %v1270 = vpop.f32.mrb[0].mxu0
  %v1271 = vadd.f32 %v254, %v1270
  %v1272 = vpop.f32.mrb[0].mxu0
  %v1273 = vpop.f32.mrb[0].mxu0
  %v1274 = vadd.f32 %v254, %v1273
  %v1275 = vpop.f32.mrb[0].mxu0
  %1276 = vmatprep.mubr.bf16.mxu0 %v653
  %1277 = vmatmul.mubr.bf16.gmra.mrb[0].mxu0 %v652
  %v1278 = vpop.f32.mrb[0].mxu0
  %v1279 = vadd.f32 %v254, %v1278
  %v1280 = vpop.f32.mrb[0].mxu0
  %v1281 = vpop.f32.mrb[0].mxu0
  %v1282 = vpop.f32.mrb[0].mxu0
  %1283 = vdwg.mxu0
  %1284 = vmatprep.subr.bf16.mxu0 0
  %1285 = vmatpush1.bf16.msra.mxu0 %v1036
  %1286 = vmatprep.subr.bf16.mxu0 0
  %1287 = vmatpush1.bf16.msra.mxu0 %v1037
  %1288 = vmatprep.subr.bf16.mxu0 0
  %1289 = vmatpush1.bf16.msra.mxu0 %v1038
  %1290 = vmatprep.subr.bf16.mxu0 0
  %1291 = vmatpush1.bf16.msra.mxu0 %v1039
  %1292 = vmatprep.subr.bf16.mxu0 0
  %1293 = vmatpush1.bf16.msra.mxu0 %v1040
  %1294 = vmatprep.subr.bf16.mxu0 0
  %1295 = vmatpush1.bf16.msra.mxu0 %v1041
  %1296 = vmatprep.subr.bf16.mxu0 0
  %1297 = vmatpush1.bf16.msra.mxu0 %v1042
  %1298 = vmatprep.subr.bf16.mxu0 0
  %1299 = vmatpush1.bf16.msra.mxu0 %v1043
  %1300 = vmatprep.subr.bf16.mxu0 0
  %1301 = vmatpush1.bf16.msra.mxu0 %v1044
  %1302 = vmatprep.subr.bf16.mxu0 0
  %1303 = vmatpush1.bf16.msra.mxu0 %v1045
  %1304 = vmatprep.subr.bf16.mxu0 0
  %1305 = vmatpush1.bf16.msra.mxu0 %v1046
  %1306 = vmatprep.subr.bf16.mxu0 0
  %1307 = vmatpush1.bf16.msra.mxu0 %v1047
  %1308 = vmatprep.subr.bf16.mxu0 0
  %1309 = vmatpush1.bf16.msra.mxu0 %v1048
  %1310 = vmatprep.subr.bf16.mxu0 0
  %1311 = vmatpush1.bf16.msra.mxu0 %v1049
  %1312 = vmatprep.subr.bf16.mxu0 0
  %1313 = vmatpush1.bf16.msra.mxu0 %v1050
  %1314 = vmatprep.subr.bf16.mxu0 0
  %1315 = vmatpush1.bf16.msra.mxu0 %v1051
  %1316 = vmatprep.mubr.bf16.mxu0 %v559
  %1317 = vmatmul.mubr.bf16.gmra.mrb[0].mxu0 %v558
  %v1318 = vpop.f32.mrb[0].mxu0
  %v1319 = vadd.f32 %v1183, %v1318
  %v1320 = vpop.f32.mrb[0].mxu0
  %v1321 = vpop.f32.mrb[0].mxu0
  %v1322 = vadd.f32 %v1186, %v1321
  %v1323 = vpop.f32.mrb[0].mxu0
  %1324 = vmatprep.mubr.bf16.mxu0 %v567
  %1325 = vmatmul.mubr.bf16.gmra.mrb[0].mxu0 %v566
  %v1326 = vpop.f32.mrb[0].mxu0
  %v1327 = vadd.f32 %v1191, %v1326
  %v1328 = vpop.f32.mrb[0].mxu0
  %v1329 = vpop.f32.mrb[0].mxu0
  %v1330 = vadd.f32 %v1194, %v1329
  %v1331 = vpop.f32.mrb[0].mxu0
  %1332 = vmatprep.mubr.bf16.mxu0 %v575
  %1333 = vmatmul.mubr.bf16.gmra.mrb[0].mxu0 %v574
  %v1334 = vpop.f32.mrb[0].mxu0
  %v1335 = vadd.f32 %v1199, %v1334
  %v1336 = vpop.f32.mrb[0].mxu0
  %v1337 = vpop.f32.mrb[0].mxu0
  %v1338 = vadd.f32 %v1202, %v1337
  %v1339 = vpop.f32.mrb[0].mxu0
  %1340 = vmatprep.mubr.bf16.mxu0 %v583
  %1341 = vmatmul.mubr.bf16.gmra.mrb[0].mxu0 %v582
  %v1342 = vpop.f32.mrb[0].mxu0
  %v1343 = vadd.f32 %v1207, %v1342
  %v1344 = vpop.f32.mrb[0].mxu0
  %v1345 = vpop.f32.mrb[0].mxu0
  %v1346 = vadd.f32 %v1210, %v1345
  %v1347 = vpop.f32.mrb[0].mxu0
  %1348 = vmatprep.mubr.bf16.mxu0 %v591
  %1349 = vmatmul.mubr.bf16.gmra.mrb[0].mxu0 %v590
  %v1350 = vpop.f32.mrb[0].mxu0
  %v1351 = vadd.f32 %v1215, %v1350
  %v1352 = vpop.f32.mrb[0].mxu0
  %v1353 = vpop.f32.mrb[0].mxu0
  %v1354 = vadd.f32 %v1218, %v1353
  %v1355 = vpop.f32.mrb[0].mxu0
  %1356 = vmatprep.mubr.bf16.mxu0 %v599
  %1357 = vmatmul.mubr.bf16.gmra.mrb[0].mxu0 %v598
  %v1358 = vpop.f32.mrb[0].mxu0
  %v1359 = vadd.f32 %v1223, %v1358
  %v1360 = vpop.f32.mrb[0].mxu0
  %v1361 = vpop.f32.mrb[0].mxu0
  %v1362 = vadd.f32 %v1226, %v1361
  %v1363 = vpop.f32.mrb[0].mxu0
  %1364 = vmatprep.mubr.bf16.mxu0 %v607
  %1365 = vmatmul.mubr.bf16.gmra.mrb[0].mxu0 %v606
  %v1366 = vpop.f32.mrb[0].mxu0
  %v1367 = vadd.f32 %v1231, %v1366
  %v1368 = vpop.f32.mrb[0].mxu0
  %v1369 = vpop.f32.mrb[0].mxu0
  %v1370 = vadd.f32 %v1234, %v1369
  %v1371 = vpop.f32.mrb[0].mxu0
  %1372 = vmatprep.mubr.bf16.mxu0 %v615
  %1373 = vmatmul.mubr.bf16.gmra.mrb[0].mxu0 %v614
  %v1374 = vpop.f32.mrb[0].mxu0
  %v1375 = vadd.f32 %v1239, %v1374
  %v1376 = vpop.f32.mrb[0].mxu0
  %v1377 = vpop.f32.mrb[0].mxu0
  %v1378 = vadd.f32 %v1242, %v1377
  %v1379 = vpop.f32.mrb[0].mxu0
  %1380 = vmatprep.mubr.bf16.mxu0 %v623
  %1381 = vmatmul.mubr.bf16.gmra.mrb[0].mxu0 %v622
  %v1382 = vpop.f32.mrb[0].mxu0
  %v1383 = vadd.f32 %v1247, %v1382
  %v1384 = vpop.f32.mrb[0].mxu0
  %v1385 = vpop.f32.mrb[0].mxu0
  %v1386 = vadd.f32 %v1250, %v1385
  %v1387 = vpop.f32.mrb[0].mxu0
  %1388 = vmatprep.mubr.bf16.mxu0 %v631
  %1389 = vmatmul.mubr.bf16.gmra.mrb[0].mxu0 %v630
  %v1390 = vpop.f32.mrb[0].mxu0
  %v1391 = vadd.f32 %v1255, %v1390
  %v1392 = vpop.f32.mrb[0].mxu0
  %v1393 = vpop.f32.mrb[0].mxu0
  %v1394 = vadd.f32 %v1258, %v1393
  %v1395 = vpop.f32.mrb[0].mxu0
  %1396 = vmatprep.mubr.bf16.mxu0 %v639
  %1397 = vmatmul.mubr.bf16.gmra.mrb[0].mxu0 %v638
  %v1398 = vpop.f32.mrb[0].mxu0
  %v1399 = vadd.f32 %v1263, %v1398
  %v1400 = vpop.f32.mrb[0].mxu0
  %v1401 = vpop.f32.mrb[0].mxu0
  %v1402 = vadd.f32 %v1266, %v1401
  %v1403 = vpop.f32.mrb[0].mxu0
  %1404 = vmatprep.mubr.bf16.mxu0 %v647
  %1405 = vmatmul.mubr.bf16.gmra.mrb[0].mxu0 %v646
  %v1406 = vpop.f32.mrb[0].mxu0
  %v1407 = vadd.f32 %v1271, %v1406
  %v1408 = vpop.f32.mrb[0].mxu0
  %v1409 = vpop.f32.mrb[0].mxu0
  %v1410 = vadd.f32 %v1274, %v1409
  %v1411 = vpop.f32.mrb[0].mxu0
  %1412 = vmatprep.mubr.bf16.mxu0 %v655
  %1413 = vmatmul.mubr.bf16.gmra.mrb[0].mxu0 %v654
  %v1414 = vpop.f32.mrb[0].mxu0
  %v1415 = vadd.f32 %v1279, %v1414
  %v1416 = vpop.f32.mrb[0].mxu0
  %v1417 = vpop.f32.mrb[0].mxu0
  %v1418 = vpop.f32.mrb[0].mxu0
  %1419 = vdwg.mxu0
  %1420 = vmatprep.subr.bf16.mxu0 0
  %1421 = vmatpush1.bf16.msra.mxu0 %v1052
  %1422 = vmatprep.subr.bf16.mxu0 0
  %1423 = vmatpush1.bf16.msra.mxu0 %v1053
  %1424 = vmatprep.subr.bf16.mxu0 0
  %1425 = vmatpush1.bf16.msra.mxu0 %v1054
  %1426 = vmatprep.subr.bf16.mxu0 0
  %1427 = vmatpush1.bf16.msra.mxu0 %v1055
  %1428 = vmatprep.subr.bf16.mxu0 0
  %1429 = vmatpush1.bf16.msra.mxu0 %v1056
  %1430 = vmatprep.subr.bf16.mxu0 0
  %1431 = vmatpush1.bf16.msra.mxu0 %v1057
  %1432 = vmatprep.subr.bf16.mxu0 0
  %1433 = vmatpush1.bf16.msra.mxu0 %v1058
  %1434 = vmatprep.subr.bf16.mxu0 0
  %1435 = vmatpush1.bf16.msra.mxu0 %v1059
  %1436 = vmatprep.subr.bf16.mxu0 0
  %1437 = vmatpush1.bf16.msra.mxu0 %v1060
  %1438 = vmatprep.subr.bf16.mxu0 0
  %1439 = vmatpush1.bf16.msra.mxu0 %v1061
  %1440 = vmatprep.subr.bf16.mxu0 0
  %1441 = vmatpush1.bf16.msra.mxu0 %v1062
  %1442 = vmatprep.subr.bf16.mxu0 0
  %1443 = vmatpush1.bf16.msra.mxu0 %v1063
  %1444 = vmatprep.subr.bf16.mxu0 0
  %1445 = vmatpush1.bf16.msra.mxu0 %v1064
  %1446 = vmatprep.subr.bf16.mxu0 0
  %1447 = vmatpush1.bf16.msra.mxu0 %v1065
  %1448 = vmatprep.subr.bf16.mxu0 0
  %1449 = vmatpush1.bf16.msra.mxu0 %v1066
  %1450 = vmatprep.subr.bf16.mxu0 0
  %1451 = vmatpush1.bf16.msra.mxu0 %v1067
  %1452 = vmatprep.mubr.bf16.mxu0 %v561
  %1453 = vmatmul.mubr.bf16.gmra.mrb[0].mxu0 %v560
  %v1454 = vpop.f32.mrb[0].mxu0
  %v1455 = vadd.f32 %v1319, %v1454
  %v1456 = vpop.f32.mrb[0].mxu0
  %v1457 = vpop.f32.mrb[0].mxu0
  %v1458 = vadd.f32 %v1322, %v1457
  %v1459 = vpop.f32.mrb[0].mxu0
  %1460 = vmatprep.mubr.bf16.mxu0 %v569
  %1461 = vmatmul.mubr.bf16.gmra.mrb[0].mxu0 %v568
  %v1462 = vpop.f32.mrb[0].mxu0
  %v1463 = vadd.f32 %v1327, %v1462
  %v1464 = vpop.f32.mrb[0].mxu0
  %v1465 = vpop.f32.mrb[0].mxu0
  %v1466 = vadd.f32 %v1330, %v1465
  %v1467 = vpop.f32.mrb[0].mxu0
  %1468 = vmatprep.mubr.bf16.mxu0 %v577
  %1469 = vmatmul.mubr.bf16.gmra.mrb[0].mxu0 %v576
  %v1470 = vpop.f32.mrb[0].mxu0
  %v1471 = vadd.f32 %v1335, %v1470
  %v1472 = vpop.f32.mrb[0].mxu0
  %v1473 = vpop.f32.mrb[0].mxu0
  %v1474 = vadd.f32 %v1338, %v1473
  %v1475 = vpop.f32.mrb[0].mxu0
  %1476 = vmatprep.mubr.bf16.mxu0 %v585
  %1477 = vmatmul.mubr.bf16.gmra.mrb[0].mxu0 %v584
  %v1478 = vpop.f32.mrb[0].mxu0
  %v1479 = vadd.f32 %v1343, %v1478
  %v1480 = vpop.f32.mrb[0].mxu0
  %v1481 = vpop.f32.mrb[0].mxu0
  %v1482 = vadd.f32 %v1346, %v1481
  %v1483 = vpop.f32.mrb[0].mxu0
  %1484 = vmatprep.mubr.bf16.mxu0 %v593
  %1485 = vmatmul.mubr.bf16.gmra.mrb[0].mxu0 %v592
  %v1486 = vpop.f32.mrb[0].mxu0
  %v1487 = vadd.f32 %v1351, %v1486
  %v1488 = vpop.f32.mrb[0].mxu0
  %v1489 = vpop.f32.mrb[0].mxu0
  %v1490 = vadd.f32 %v1354, %v1489
  %v1491 = vpop.f32.mrb[0].mxu0
  %1492 = vmatprep.mubr.bf16.mxu0 %v601
  %1493 = vmatmul.mubr.bf16.gmra.mrb[0].mxu0 %v600
  %v1494 = vpop.f32.mrb[0].mxu0
  %v1495 = vadd.f32 %v1359, %v1494
  %v1496 = vpop.f32.mrb[0].mxu0
  %v1497 = vpop.f32.mrb[0].mxu0
  %v1498 = vadd.f32 %v1362, %v1497
  %v1499 = vpop.f32.mrb[0].mxu0
  %1500 = vmatprep.mubr.bf16.mxu0 %v609
  %1501 = vmatmul.mubr.bf16.gmra.mrb[0].mxu0 %v608
  %v1502 = vpop.f32.mrb[0].mxu0
  %v1503 = vadd.f32 %v1367, %v1502
  %v1504 = vpop.f32.mrb[0].mxu0
  %v1505 = vpop.f32.mrb[0].mxu0
  %v1506 = vadd.f32 %v1370, %v1505
  %v1507 = vpop.f32.mrb[0].mxu0
  %1508 = vmatprep.mubr.bf16.mxu0 %v617
  %1509 = vmatmul.mubr.bf16.gmra.mrb[0].mxu0 %v616
  %v1510 = vpop.f32.mrb[0].mxu0
  %v1511 = vadd.f32 %v1375, %v1510
  %v1512 = vpop.f32.mrb[0].mxu0
  %v1513 = vpop.f32.mrb[0].mxu0
  %v1514 = vadd.f32 %v1378, %v1513
  %v1515 = vpop.f32.mrb[0].mxu0
  %1516 = vmatprep.mubr.bf16.mxu0 %v625
  %1517 = vmatmul.mubr.bf16.gmra.mrb[0].mxu0 %v624
  %v1518 = vpop.f32.mrb[0].mxu0
  %v1519 = vadd.f32 %v1383, %v1518
  %v1520 = vpop.f32.mrb[0].mxu0
  %v1521 = vpop.f32.mrb[0].mxu0
  %v1522 = vadd.f32 %v1386, %v1521
  %v1523 = vpop.f32.mrb[0].mxu0
  %1524 = vmatprep.mubr.bf16.mxu0 %v633
  %1525 = vmatmul.mubr.bf16.gmra.mrb[0].mxu0 %v632
  %v1526 = vpop.f32.mrb[0].mxu0
  %v1527 = vadd.f32 %v1391, %v1526
  %v1528 = vpop.f32.mrb[0].mxu0
  %v1529 = vpop.f32.mrb[0].mxu0
  %v1530 = vadd.f32 %v1394, %v1529
  %v1531 = vpop.f32.mrb[0].mxu0
  %1532 = vmatprep.mubr.bf16.mxu0 %v641
  %1533 = vmatmul.mubr.bf16.gmra.mrb[0].mxu0 %v640
  %v1534 = vpop.f32.mrb[0].mxu0
  %v1535 = vadd.f32 %v1399, %v1534
  %v1536 = vpop.f32.mrb[0].mxu0
  %v1537 = vpop.f32.mrb[0].mxu0
  %v1538 = vadd.f32 %v1402, %v1537
  %v1539 = vpop.f32.mrb[0].mxu0
  %1540 = vmatprep.mubr.bf16.mxu0 %v649
  %1541 = vmatmul.mubr.bf16.gmra.mrb[0].mxu0 %v648
  %v1542 = vpop.f32.mrb[0].mxu0
  %v1543 = vadd.f32 %v1407, %v1542
  %v1544 = vpop.f32.mrb[0].mxu0
  %v1545 = vpop.f32.mrb[0].mxu0
  %v1546 = vadd.f32 %v1410, %v1545
  %v1547 = vpop.f32.mrb[0].mxu0
  %1548 = vmatprep.mubr.bf16.mxu0 %v657
  %1549 = vmatmul.mubr.bf16.gmra.mrb[0].mxu0 %v656
  %v1550 = vpop.f32.mrb[0].mxu0
  %v1551 = vadd.f32 %v1415, %v1550
  %v1552 = vpop.f32.mrb[0].mxu0
  %v1553 = vpop.f32.mrb[0].mxu0
  %v1554 = vpop.f32.mrb[0].mxu0
  %1555 = vdwg.mxu0
  %1556 = vmatprep.subr.bf16.mxu0 0
  %1557 = vmatpush1.bf16.msra.mxu0 %v1068
  %1558 = vmatprep.subr.bf16.mxu0 0
  %1559 = vmatpush1.bf16.msra.mxu0 %v1069
  %1560 = vmatprep.subr.bf16.mxu0 0
  %1561 = vmatpush1.bf16.msra.mxu0 %v1070
  %1562 = vmatprep.subr.bf16.mxu0 0
  %1563 = vmatpush1.bf16.msra.mxu0 %v1071
  %1564 = vmatprep.subr.bf16.mxu0 0
  %1565 = vmatpush1.bf16.msra.mxu0 %v1072
  %1566 = vmatprep.subr.bf16.mxu0 0
  %1567 = vmatpush1.bf16.msra.mxu0 %v1073
  %1568 = vmatprep.subr.bf16.mxu0 0
  %1569 = vmatpush1.bf16.msra.mxu0 %v1074
  %1570 = vmatprep.subr.bf16.mxu0 0
  %1571 = vmatpush1.bf16.msra.mxu0 %v1075
  %1572 = vmatprep.subr.bf16.mxu0 0
  %1573 = vmatpush1.bf16.msra.mxu0 %v1076
  %1574 = vmatprep.subr.bf16.mxu0 0
  %1575 = vmatpush1.bf16.msra.mxu0 %v1077
  %1576 = vmatprep.subr.bf16.mxu0 0
  %1577 = vmatpush1.bf16.msra.mxu0 %v1078
  %1578 = vmatprep.subr.bf16.mxu0 0
  %1579 = vmatpush1.bf16.msra.mxu0 %v1079
  %1580 = vmatprep.subr.bf16.mxu0 0
  %1581 = vmatpush1.bf16.msra.mxu0 %v1080
  %1582 = vmatprep.subr.bf16.mxu0 0
  %1583 = vmatpush1.bf16.msra.mxu0 %v1081
  %1584 = vmatprep.subr.bf16.mxu0 0
  %1585 = vmatpush1.bf16.msra.mxu0 %v1082
  %1586 = vmatprep.subr.bf16.mxu0 0
  %1587 = vmatpush1.bf16.msra.mxu0 %v1083
  %1588 = vmatprep.mubr.bf16.mxu0 %v563
  %1589 = vmatmul.mubr.bf16.gmra.mrb[0].mxu0 %v562
  %v1590 = vpop.f32.mrb[0].mxu0
  %v1591 = vadd.f32 %v1455, %v1590
  %v1592 = vpop.f32.mrb[0].mxu0
  %v1593 = vpop.f32.mrb[0].mxu0
  %v1594 = vadd.f32 %v1458, %v1593
  %v1595 = vpop.f32.mrb[0].mxu0
  %1596 = vmatprep.mubr.bf16.mxu0 %v571
  %1597 = vmatmul.mubr.bf16.gmra.mrb[0].mxu0 %v570
  %v1598 = vpop.f32.mrb[0].mxu0
  %v1599 = vadd.f32 %v1463, %v1598
  %v1600 = vpop.f32.mrb[0].mxu0
  %v1601 = vpop.f32.mrb[0].mxu0
  %v1602 = vadd.f32 %v1466, %v1601
  %v1603 = vpop.f32.mrb[0].mxu0
  %1604 = vmatprep.mubr.bf16.mxu0 %v579
  %1605 = vmatmul.mubr.bf16.gmra.mrb[0].mxu0 %v578
  %v1606 = vpop.f32.mrb[0].mxu0
  %v1607 = vadd.f32 %v1471, %v1606
  %v1608 = vpop.f32.mrb[0].mxu0
  %v1609 = vpop.f32.mrb[0].mxu0
  %v1610 = vadd.f32 %v1474, %v1609
  %v1611 = vpop.f32.mrb[0].mxu0
  %1612 = vmatprep.mubr.bf16.mxu0 %v587
  %1613 = vmatmul.mubr.bf16.gmra.mrb[0].mxu0 %v586
  %v1614 = vpop.f32.mrb[0].mxu0
  %v1615 = vadd.f32 %v1479, %v1614
  %v1616 = vpop.f32.mrb[0].mxu0
  %v1617 = vpop.f32.mrb[0].mxu0
  %v1618 = vadd.f32 %v1482, %v1617
  %v1619 = vpop.f32.mrb[0].mxu0
  %1620 = vmatprep.mubr.bf16.mxu0 %v595
  %1621 = vmatmul.mubr.bf16.gmra.mrb[0].mxu0 %v594
  %v1622 = vpop.f32.mrb[0].mxu0
  %v1623 = vadd.f32 %v1487, %v1622
  %v1624 = vpop.f32.mrb[0].mxu0
  %v1625 = vpop.f32.mrb[0].mxu0
  %v1626 = vadd.f32 %v1490, %v1625
  %v1627 = vpop.f32.mrb[0].mxu0
  %1628 = vmatprep.mubr.bf16.mxu0 %v603
  %1629 = vmatmul.mubr.bf16.gmra.mrb[0].mxu0 %v602
  %v1630 = vpop.f32.mrb[0].mxu0
  %v1631 = vadd.f32 %v1495, %v1630
  %v1632 = vpop.f32.mrb[0].mxu0
  %v1633 = vpop.f32.mrb[0].mxu0
  %v1634 = vadd.f32 %v1498, %v1633
  %v1635 = vpop.f32.mrb[0].mxu0
  %1636 = vmatprep.mubr.bf16.mxu0 %v611
  %1637 = vmatmul.mubr.bf16.gmra.mrb[0].mxu0 %v610
  %v1638 = vpop.f32.mrb[0].mxu0
  %v1639 = vadd.f32 %v1503, %v1638
  %v1640 = vpop.f32.mrb[0].mxu0
  %v1641 = vpop.f32.mrb[0].mxu0
  %v1642 = vadd.f32 %v1506, %v1641
  %v1643 = vpop.f32.mrb[0].mxu0
  %1644 = vmatprep.mubr.bf16.mxu0 %v619
  %1645 = vmatmul.mubr.bf16.gmra.mrb[0].mxu0 %v618
  %v1646 = vpop.f32.mrb[0].mxu0
  %v1647 = vadd.f32 %v1511, %v1646
  %v1648 = vpop.f32.mrb[0].mxu0
  %v1649 = vpop.f32.mrb[0].mxu0
  %v1650 = vadd.f32 %v1514, %v1649
  %v1651 = vpop.f32.mrb[0].mxu0
  %1652 = vmatprep.mubr.bf16.mxu0 %v627
  %1653 = vmatmul.mubr.bf16.gmra.mrb[0].mxu0 %v626
  %v1654 = vpop.f32.mrb[0].mxu0
  %v1655 = vadd.f32 %v1519, %v1654
  %v1656 = vpop.f32.mrb[0].mxu0
  %v1657 = vpop.f32.mrb[0].mxu0
  %v1658 = vadd.f32 %v1522, %v1657
  %v1659 = vpop.f32.mrb[0].mxu0
  %1660 = vmatprep.mubr.bf16.mxu0 %v635
  %1661 = vmatmul.mubr.bf16.gmra.mrb[0].mxu0 %v634
  %v1662 = vpop.f32.mrb[0].mxu0
  %v1663 = vadd.f32 %v1527, %v1662
  %v1664 = vpop.f32.mrb[0].mxu0
  %v1665 = vpop.f32.mrb[0].mxu0
  %v1666 = vadd.f32 %v1530, %v1665
  %v1667 = vpop.f32.mrb[0].mxu0
  %1668 = vmatprep.mubr.bf16.mxu0 %v643
  %1669 = vmatmul.mubr.bf16.gmra.mrb[0].mxu0 %v642
  %v1670 = vpop.f32.mrb[0].mxu0
  %v1671 = vadd.f32 %v1535, %v1670
  %v1672 = vpop.f32.mrb[0].mxu0
  %v1673 = vpop.f32.mrb[0].mxu0
  %v1674 = vadd.f32 %v1538, %v1673
  %v1675 = vpop.f32.mrb[0].mxu0
  %1676 = vmatprep.mubr.bf16.mxu0 %v651
  %1677 = vmatmul.mubr.bf16.gmra.mrb[0].mxu0 %v650
  %v1678 = vpop.f32.mrb[0].mxu0
  %v1679 = vadd.f32 %v1543, %v1678
  %v1680 = vpop.f32.mrb[0].mxu0
  %v1681 = vpop.f32.mrb[0].mxu0
  %v1682 = vadd.f32 %v1546, %v1681
  %v1683 = vpop.f32.mrb[0].mxu0
  %1684 = vmatprep.mubr.bf16.mxu0 %v659
  %1685 = vmatmul.mubr.bf16.gmra.mrb[0].mxu0 %v658
  %v1686 = vpop.f32.mrb[0].mxu0
  %v1687 = vadd.f32 %v1551, %v1686
  %v1688 = vpop.f32.mrb[0].mxu0
  %v1689 = vpop.f32.mrb[0].mxu0
  %v1690 = vpop.f32.mrb[0].mxu0
  %1691 = vdwg.mxu0
  %v1692 = vadd.f32 %v1591, %v1594
  %v1693 = vadd.f32 %v1692, %v1599
  %v1694 = vadd.f32 %v1693, %v1602
  %v1695 = vadd.f32 %v1694, %v1607
  %v1696 = vadd.f32 %v1695, %v1610
  %v1697 = vadd.f32 %v1696, %v1615
  %v1698 = vadd.f32 %v1697, %v1618
  %v1699 = vadd.f32 %v1698, %v1623
  %v1700 = vadd.f32 %v1699, %v1626
  %v1701 = vadd.f32 %v1700, %v1631
  %v1702 = vadd.f32 %v1701, %v1634
  %v1703 = vadd.f32 %v1702, %v1639
  %v1704 = vadd.f32 %v1703, %v1642
  %v1705 = vadd.f32 %v1704, %v1647
  %v1706 = vadd.f32 %v1705, %v1650
  %v1707 = vadd.f32 %v1706, %v1655
  %v1708 = vadd.f32 %v1707, %v1658
  %v1709 = vadd.f32 %v1708, %v1663
  %v1710 = vadd.f32 %v1709, %v1666
  %v1711 = vadd.f32 %v1710, %v1671
  %v1712 = vadd.f32 %v1711, %v1674
  %v1713 = vadd.f32 %v1712, %v1679
  %v1714 = vadd.f32 %v1713, %v1682
  %v1715 = vadd.f32 %v1714, %v1687
  %v1716 = vrot.slane %v1715, 4
  %v1717 = vadd.f32 %v1715, %v1716
  %v1718 = vrot.slane %v1717, 2
  %v1719 = vadd.f32 %v1717, %v1718
  %v1720 = vrot.slane %v1719, 1
  %v1721 = vadd.f32 %v1719, %v1720
  %v1722 = vmul.f32 %v1721, 0.005
  %v1723 = vsub.f32 %v1591, %v1722
  %v1724 = vsub.f32 %v1594, %v1722
  %v1725 = vsub.f32 %v1599, %v1722
  %v1726 = vsub.f32 %v1602, %v1722
  %v1727 = vsub.f32 %v1607, %v1722
  %v1728 = vsub.f32 %v1610, %v1722
  %v1729 = vsub.f32 %v1615, %v1722
  %v1730 = vsub.f32 %v1618, %v1722
  %v1731 = vsub.f32 %v1623, %v1722
  %v1732 = vsub.f32 %v1626, %v1722
  %v1733 = vsub.f32 %v1631, %v1722
  %v1734 = vsub.f32 %v1634, %v1722
  %v1735 = vsub.f32 %v1639, %v1722
  %v1736 = vsub.f32 %v1642, %v1722
  %v1737 = vsub.f32 %v1647, %v1722
  %v1738 = vsub.f32 %v1650, %v1722
  %v1739 = vsub.f32 %v1655, %v1722
  %v1740 = vsub.f32 %v1658, %v1722
  %v1741 = vsub.f32 %v1663, %v1722
  %v1742 = vsub.f32 %v1666, %v1722
  %v1743 = vsub.f32 %v1671, %v1722
  %v1744 = vsub.f32 %v1674, %v1722
  %v1745 = vsub.f32 %v1679, %v1722
  %v1746 = vsub.f32 %v1682, %v1722
  %v1747 = vsub.f32 %v1687, %v1722
  %v1748 = vmul.f32 %v1723, %v1723
  %v1749 = vmul.f32 %v1724, %v1724
  %v1750 = vmul.f32 %v1725, %v1725
  %v1751 = vmul.f32 %v1726, %v1726
  %v1752 = vmul.f32 %v1727, %v1727
  %v1753 = vmul.f32 %v1728, %v1728
  %v1754 = vmul.f32 %v1729, %v1729
  %v1755 = vmul.f32 %v1730, %v1730
  %v1756 = vmul.f32 %v1731, %v1731
  %v1757 = vmul.f32 %v1732, %v1732
  %v1758 = vmul.f32 %v1733, %v1733
  %v1759 = vmul.f32 %v1734, %v1734
  %v1760 = vmul.f32 %v1735, %v1735
  %v1761 = vmul.f32 %v1736, %v1736
  %v1762 = vmul.f32 %v1737, %v1737
  %v1763 = vmul.f32 %v1738, %v1738
  %v1764 = vmul.f32 %v1739, %v1739
  %v1765 = vmul.f32 %v1740, %v1740
  %v1766 = vmul.f32 %v1741, %v1741
  %v1767 = vmul.f32 %v1742, %v1742
  %v1768 = vmul.f32 %v1743, %v1743
  %v1769 = vmul.f32 %v1744, %v1744
  %v1770 = vmul.f32 %v1745, %v1745
  %v1771 = vmul.f32 %v1746, %v1746
  %v1772 = vmul.f32 %v1747, %v1747
  %v1773 = vadd.f32 %v1748, %v1749
  %v1774 = vadd.f32 %v1773, %v1750
  %v1775 = vadd.f32 %v1774, %v1751
  %v1776 = vadd.f32 %v1775, %v1752
  %v1777 = vadd.f32 %v1776, %v1753
  %v1778 = vadd.f32 %v1777, %v1754
  %v1779 = vadd.f32 %v1778, %v1755
  %v1780 = vadd.f32 %v1779, %v1756
  %v1781 = vadd.f32 %v1780, %v1757
  %v1782 = vadd.f32 %v1781, %v1758
  %v1783 = vadd.f32 %v1782, %v1759
  %v1784 = vadd.f32 %v1783, %v1760
  %v1785 = vadd.f32 %v1784, %v1761
  %v1786 = vadd.f32 %v1785, %v1762
  %v1787 = vadd.f32 %v1786, %v1763
  %v1788 = vadd.f32 %v1787, %v1764
  %v1789 = vadd.f32 %v1788, %v1765
  %v1790 = vadd.f32 %v1789, %v1766
  %v1791 = vadd.f32 %v1790, %v1767
  %v1792 = vadd.f32 %v1791, %v1768
  %v1793 = vadd.f32 %v1792, %v1769
  %v1794 = vadd.f32 %v1793, %v1770
  %v1795 = vadd.f32 %v1794, %v1771
  %v1796 = vadd.f32 %v1795, %v1772
  %v1797 = vrot.slane %v1796, 4
  %v1798 = vadd.f32 %v1796, %v1797
  %v1799 = vrot.slane %v1798, 2
  %v1800 = vadd.f32 %v1798, %v1799
  %v1801 = vrot.slane %v1800, 1
  %v1802 = vadd.f32 %v1800, %v1801
  %v1803 = vmul.f32 %v1802, 0.005
  %v1804 = vld [vmem:[%s3] sm:$0x1]
  %v1805 = vadd.f32 %v1803, 1e-05
  %v1806 = vrsqrt.pop %v1805
  %v1807 = vmul.f32 %v1804, %v1806
  %v1808 = vld [vmem:[%s4] sm:$0x1]
  %v1809 = vmul.f32 %v1722, %v1807
  %v1810 = vsub.f32 %v1808, %v1809
  %v1812 = vlaneseq
  %v1813 = vshrl.u32 %v1812, 7
  %v1814 = vsub.s32 0, %v1813
  %v1815 = vrot.slane %v1807, %v1814
  %v1817 = vmul.f32 %v1591, %v1815
  %v1818 = vmul.f32 %v1594, %v1815
  %v1819 = vmul.f32 %v1599, %v1815
  %v1820 = vmul.f32 %v1602, %v1815
  %v1821 = vmul.f32 %v1607, %v1815
  %v1822 = vmul.f32 %v1610, %v1815
  %v1823 = vmul.f32 %v1615, %v1815
  %v1824 = vmul.f32 %v1618, %v1815
  %v1825 = vmul.f32 %v1623, %v1815
  %v1826 = vmul.f32 %v1626, %v1815
  %v1827 = vmul.f32 %v1631, %v1815
  %v1828 = vmul.f32 %v1634, %v1815
  %v1829 = vmul.f32 %v1639, %v1815
  %v1830 = vmul.f32 %v1642, %v1815
  %v1831 = vmul.f32 %v1647, %v1815
  %v1832 = vmul.f32 %v1650, %v1815
  %v1833 = vmul.f32 %v1655, %v1815
  %v1834 = vmul.f32 %v1658, %v1815
  %v1835 = vmul.f32 %v1663, %v1815
  %v1836 = vmul.f32 %v1666, %v1815
  %v1837 = vmul.f32 %v1671, %v1815
  %v1838 = vmul.f32 %v1674, %v1815
  %v1839 = vmul.f32 %v1679, %v1815
  %v1840 = vmul.f32 %v1682, %v1815
  %v1841 = vmul.f32 %v1687, %v1815
  %v1843 = vlaneseq
  %v1844 = vshrl.u32 %v1843, 7
  %v1845 = vsub.s32 0, %v1844
  %v1846 = vrot.slane %v1810, %v1845
  %v1848 = vadd.f32 %v1817, %v1846
  %v1849 = vadd.f32 %v1818, %v1846
  %v1850 = vadd.f32 %v1819, %v1846
  %v1851 = vadd.f32 %v1820, %v1846
  %v1852 = vadd.f32 %v1821, %v1846
  %v1853 = vadd.f32 %v1822, %v1846
  %v1854 = vadd.f32 %v1823, %v1846
  %v1855 = vadd.f32 %v1824, %v1846
  %v1856 = vadd.f32 %v1825, %v1846
  %v1857 = vadd.f32 %v1826, %v1846
  %v1858 = vadd.f32 %v1827, %v1846
  %v1859 = vadd.f32 %v1828, %v1846
  %v1860 = vadd.f32 %v1829, %v1846
  %v1861 = vadd.f32 %v1830, %v1846
  %v1862 = vadd.f32 %v1831, %v1846
  %v1863 = vadd.f32 %v1832, %v1846
  %v1864 = vadd.f32 %v1833, %v1846
  %v1865 = vadd.f32 %v1834, %v1846
  %v1866 = vadd.f32 %v1835, %v1846
  %v1867 = vadd.f32 %v1836, %v1846
  %v1868 = vadd.f32 %v1837, %v1846
  %v1869 = vadd.f32 %v1838, %v1846
  %v1870 = vadd.f32 %v1839, %v1846
  %v1871 = vadd.f32 %v1840, %v1846
  %v1872 = vadd.f32 %v1841, %v1846
  %vm1873 = vcmp.ge.f32.partialorder %v1848, 0.0
  %vm1874 = vcmp.ge.f32.partialorder %v1849, 0.0
  %vm1875 = vcmp.ge.f32.partialorder %v1850, 0.0
  %vm1876 = vcmp.ge.f32.partialorder %v1851, 0.0
  %vm1877 = vcmp.ge.f32.partialorder %v1852, 0.0
  %vm1878 = vcmp.ge.f32.partialorder %v1853, 0.0
  %vm1879 = vcmp.ge.f32.partialorder %v1854, 0.0
  %vm1880 = vcmp.ge.f32.partialorder %v1855, 0.0
  %vm1881 = vcmp.ge.f32.partialorder %v1856, 0.0
  %vm1882 = vcmp.ge.f32.partialorder %v1857, 0.0
  %vm1883 = vcmp.ge.f32.partialorder %v1858, 0.0
  %vm1884 = vcmp.ge.f32.partialorder %v1859, 0.0
  %vm1885 = vcmp.ge.f32.partialorder %v1860, 0.0
  %vm1886 = vcmp.ge.f32.partialorder %v1861, 0.0
  %vm1887 = vcmp.ge.f32.partialorder %v1862, 0.0
  %vm1888 = vcmp.ge.f32.partialorder %v1863, 0.0
  %vm1889 = vcmp.ge.f32.partialorder %v1864, 0.0
  %vm1890 = vcmp.ge.f32.partialorder %v1865, 0.0
  %vm1891 = vcmp.ge.f32.partialorder %v1866, 0.0
  %vm1892 = vcmp.ge.f32.partialorder %v1867, 0.0
  %vm1893 = vcmp.ge.f32.partialorder %v1868, 0.0
  %vm1894 = vcmp.ge.f32.partialorder %v1869, 0.0
  %vm1895 = vcmp.ge.f32.partialorder %v1870, 0.0
  %vm1896 = vcmp.ge.f32.partialorder %v1871, 0.0
  %vm1897 = vcmp.ge.f32.partialorder %v1872, 0.0
  %v1898 = vmul.f32 %v1848, 0.2
  %v1899 = vmul.f32 %v1849, 0.2
  %v1900 = vmul.f32 %v1850, 0.2
  %v1901 = vmul.f32 %v1851, 0.2
  %v1902 = vmul.f32 %v1852, 0.2
  %v1903 = vmul.f32 %v1853, 0.2
  %v1904 = vmul.f32 %v1854, 0.2
  %v1905 = vmul.f32 %v1855, 0.2
  %v1906 = vmul.f32 %v1856, 0.2
  %v1907 = vmul.f32 %v1857, 0.2
  %v1908 = vmul.f32 %v1858, 0.2
  %v1909 = vmul.f32 %v1859, 0.2
  %v1910 = vmul.f32 %v1860, 0.2
  %v1911 = vmul.f32 %v1861, 0.2
  %v1912 = vmul.f32 %v1862, 0.2
  %v1913 = vmul.f32 %v1863, 0.2
  %v1914 = vmul.f32 %v1864, 0.2
  %v1915 = vmul.f32 %v1865, 0.2
  %v1916 = vmul.f32 %v1866, 0.2
  %v1917 = vmul.f32 %v1867, 0.2
  %v1918 = vmul.f32 %v1868, 0.2
  %v1919 = vmul.f32 %v1869, 0.2
  %v1920 = vmul.f32 %v1870, 0.2
  %v1921 = vmul.f32 %v1871, 0.2
  %v1922 = vmul.f32 %v1872, 0.2
  %v1923 = vsel %vm1873, %v1848, %v1898
  %v1924 = vsel %vm1874, %v1849, %v1899
  %v1925 = vsel %vm1875, %v1850, %v1900
  %v1926 = vsel %vm1876, %v1851, %v1901
  %v1927 = vsel %vm1877, %v1852, %v1902
  %v1928 = vsel %vm1878, %v1853, %v1903
  %v1929 = vsel %vm1879, %v1854, %v1904
  %v1930 = vsel %vm1880, %v1855, %v1905
  %v1931 = vsel %vm1881, %v1856, %v1906
  %v1932 = vsel %vm1882, %v1857, %v1907
  %v1933 = vsel %vm1883, %v1858, %v1908
  %v1934 = vsel %vm1884, %v1859, %v1909
  %v1935 = vsel %vm1885, %v1860, %v1910
  %v1936 = vsel %vm1886, %v1861, %v1911
  %v1937 = vsel %vm1887, %v1862, %v1912
  %v1938 = vsel %vm1888, %v1863, %v1913
  %v1939 = vsel %vm1889, %v1864, %v1914
  %v1940 = vsel %vm1890, %v1865, %v1915
  %v1941 = vsel %vm1891, %v1866, %v1916
  %v1942 = vsel %vm1892, %v1867, %v1917
  %v1943 = vsel %vm1893, %v1868, %v1918
  %v1944 = vsel %vm1894, %v1869, %v1919
  %v1945 = vsel %vm1895, %v1870, %v1920
  %v1946 = vsel %vm1896, %v1871, %v1921
  %v1947 = vsel %vm1897, %v1872, %v1922
  %v1948 = vpack.c.bf16 %v1924, %v1923
  %v1949 = vpack.c.bf16 %v1926, %v1925
  %v1950 = vpack.c.bf16 %v1928, %v1927
  %v1951 = vpack.c.bf16 %v1930, %v1929
  %v1952 = vpack.c.bf16 %v1932, %v1931
  %v1953 = vpack.c.bf16 %v1934, %v1933
  %v1954 = vpack.c.bf16 %v1936, %v1935
  %v1955 = vpack.c.bf16 %v1938, %v1937
  %v1956 = vpack.c.bf16 %v1940, %v1939
  %v1957 = vpack.c.bf16 %v1942, %v1941
  %v1958 = vpack.c.bf16 %v1944, %v1943
  %v1959 = vpack.c.bf16 %v1946, %v1945
  %v1960 = vpack.c.bf16 %v1947, %v1947
  %v1974 = vunpack.c.l.b16 %v1948
  %v1975 = vunpack.c.h.b16 %v1948
  %v1976 = vunpack.c.l.b16 %v1949
  %v1977 = vunpack.c.h.b16 %v1949
  %v1978 = vunpack.c.l.b16 %v1950
  %v1979 = vunpack.c.h.b16 %v1950
  %v1980 = vunpack.c.l.b16 %v1951
  %v1981 = vunpack.c.h.b16 %v1951
  %v1982 = vunpack.c.l.b16 %v1952
  %v1983 = vunpack.c.h.b16 %v1952
  %v1984 = vunpack.c.l.b16 %v1953
  %v1985 = vunpack.c.h.b16 %v1953
  %v1986 = vunpack.c.l.b16 %v1954
  %v1987 = vunpack.c.h.b16 %v1954
  %v1988 = vunpack.c.l.b16 %v1955
  %v1989 = vunpack.c.h.b16 %v1955
  %v1990 = vunpack.c.l.b16 %v1956
  %v1991 = vunpack.c.h.b16 %v1956
  %v1992 = vunpack.c.l.b16 %v1957
  %v1993 = vunpack.c.h.b16 %v1957
  %v1994 = vunpack.c.l.b16 %v1958
  %v1995 = vunpack.c.h.b16 %v1958
  %v1996 = vunpack.c.l.b16 %v1959
  %v1997 = vunpack.c.h.b16 %v1959
  %v1998 = vunpack.c.l.b16 %v1960
  %v1999 = vpack.c.b16 %v1974, %v1974
  %v2000 = vpack.c.b16 %v1975, %v1975
  %v2001 = vpack.c.b16 %v1976, %v1976
  %v2002 = vpack.c.b16 %v1977, %v1977
  %v2003 = vpack.c.b16 %v1978, %v1978
  %v2004 = vpack.c.b16 %v1979, %v1979
  %v2005 = vpack.c.b16 %v1980, %v1980
  %v2006 = vpack.c.b16 %v1981, %v1981
  %v2007 = vpack.c.b16 %v1982, %v1982
  %v2008 = vpack.c.b16 %v1983, %v1983
  %v2009 = vpack.c.b16 %v1984, %v1984
  %v2010 = vpack.c.b16 %v1985, %v1985
  %v2011 = vpack.c.b16 %v1986, %v1986
  %v2012 = vpack.c.b16 %v1987, %v1987
  %v2013 = vpack.c.b16 %v1988, %v1988
  %v2014 = vpack.c.b16 %v1989, %v1989
  %v2015 = vpack.c.b16 %v1990, %v1990
  %v2016 = vpack.c.b16 %v1991, %v1991
  %v2017 = vpack.c.b16 %v1992, %v1992
  %v2018 = vpack.c.b16 %v1993, %v1993
  %v2019 = vpack.c.b16 %v1994, %v1994
  %v2020 = vpack.c.b16 %v1995, %v1995
  %v2021 = vpack.c.b16 %v1996, %v1996
  %v2022 = vpack.c.b16 %v1997, %v1997
  %v2023 = vpack.c.b16 %v1998, %v1998
  %2049 = vst [vmem:[%s5] sm:$0xf] %v1999
  %2050 = vst [vmem:[%s5 + $0x4] sm:$0xf] %v2000
  %2051 = vst [vmem:[%s5 + $0x8] sm:$0xf] %v2001
  %2052 = vst [vmem:[%s5 + $0xc] sm:$0xf] %v2002
  %2053 = vst [vmem:[%s5 + $0x10] sm:$0xf] %v2003
  %2054 = vst [vmem:[%s5 + $0x14] sm:$0xf] %v2004
  %2055 = vst [vmem:[%s5 + $0x18] sm:$0xf] %v2005
  %2056 = vst [vmem:[%s5 + $0x1c] sm:$0xf] %v2006
  %2057 = vst [vmem:[%s5 + $0x20] sm:$0xf] %v2007
  %2058 = vst [vmem:[%s5 + $0x24] sm:$0xf] %v2008
  %2059 = vst [vmem:[%s5 + $0x28] sm:$0xf] %v2009
  %2060 = vst [vmem:[%s5 + $0x2c] sm:$0xf] %v2010
  %2061 = vst [vmem:[%s5 + $0x30] sm:$0xf] %v2011
  %2062 = vst [vmem:[%s5 + $0x34] sm:$0xf] %v2012
  %2063 = vst [vmem:[%s5 + $0x38] sm:$0xf] %v2013
  %2064 = vst [vmem:[%s5 + $0x3c] sm:$0xf] %v2014
  %2065 = vst [vmem:[%s5 + $0x40] sm:$0xf] %v2015
  %2066 = vst [vmem:[%s5 + $0x44] sm:$0xf] %v2016
  %2067 = vst [vmem:[%s5 + $0x48] sm:$0xf] %v2017
  %2068 = vst [vmem:[%s5 + $0x4c] sm:$0xf] %v2018
  %2069 = vst [vmem:[%s5 + $0x50] sm:$0xf] %v2019
  %2070 = vst [vmem:[%s5 + $0x54] sm:$0xf] %v2020
  %2071 = vst [vmem:[%s5 + $0x58] sm:$0xf] %v2021
  %2072 = vst [vmem:[%s5 + $0x5c] sm:$0xf] %v2022
  %2073 = vst [vmem:[%s5 + $0x60] sm:$0xf] %v2023
  // Predicated region
  $region22: #{_lambda_.10} parent=0 // pred_check
    _
  $region23: #{_lambda_.10} parent=0 // pred_check_branch
    %2075 = sbr.rel (0) target = $region25
  $region24: #{_lambda_.10} parent=0 // pred_region
    _
  $region25: #{_lambda_.10} parent=0 // pred_fallthru
    _
  // Predicated region
  $region26: #{_lambda_.10} parent=0 // pred_check
    _
  $region27: #{_lambda_.10} parent=0 // pred_check_branch
    %2077 = sbr.rel (0) target = $region29
  $region28: #{_lambda_.10} parent=0 // pred_region
    _
  $region29: #{_lambda_.10} parent=0 // pred_fallthru
    _

// kernel: squeeze.1
$region0: #{squeeze.1}
  %s0 = inlined_call_operand.vmem [shape: f32[42], index: 0, kind: input, shape index: {}]
  %s1 = inlined_call_operand.hbm [shape: f32[2,21], index: 1, kind: output, shape index: {}]
  $region1: #{squeeze.1} parent=0
    #allocation0 [shape = 'u8[1024]{0}', space=vmem, size = 0x400, scoped, tag = 'operand span for operand 1']
    #allocation1 [shape = 's32[1]{0}', space=sflag, size = 0x4, scoped, tag = 'scoped memory for squeeze.1']
    #allocation2 [shape = 'u8[4096]{0}', space=vmem, size = 0x1000, scoped, tag = 'scoped mem for output reshape']
    #allocation3 [shape = 'u8[4096]{0}', space=vmem, size = 0x1000, scoped, tag = 'scoped mem for input reshape']
    %2 = vsyncpa [#allocation1], 0
    %s4 = sshllo.u32 0, 1
    %v5 = vld [vmem:[%s0] sm:%s4]
    %6 = vst [vmem:[#allocation3] sm:%s4] %v5
    %v7 = vld [vmem:[#allocation3] sm:$0x1]
    %vm8 = vcmask 171008
    %9 = vst.msk [vmem:[#allocation2] sm:$0x1] %vm8, %v7
    %v10 = vld [vmem:[#allocation3] sm:$0x1]
    %11 = vrot.lane.b32.xlu0 %v10, 107
    %v12 = vpop.permute.xlu0 %11
    %vm13 = vcmask 171008
    %s14 = scalar_lea.vmem [#allocation2], 1
    %15 = vst.msk [vmem:[%s14] sm:$0x1] %vm13, %v12
    %s17 = sshllo.u32 0, 2
    %v19 = vld [vmem:[#allocation2] sm:%s17]
    %s20 = sshllo.u32 0, 2
    %21 = vst [vmem:[#allocation0] sm:%s20] %v19
    %s23 = ssub.s32 32, 32
    %24 = vsyncadd [#allocation1], %s23
    %s26 = sshll.u32 [#allocation0], 4
    %s27 = int_to_ptr.vmem [resolvable:$true] %s26
    %29 = dma.vmem_to_hbm [thread:$0]  %s27, 32, %s1, [#allocation1]
    %30 = dma.done [#allocation1], 32
    %31 = vsyncpa [#allocation1], 1

// kernel: _lambda_.11
$region0: #{_lambda_.11}
  #allocation0 [shape = 'u32[]', space=smem, size = 0x4, offset = 0x4, fixed_abs, tag = 'smem constant byte address 0x4 - core index']
  #allocation1 [shape = 'u32[144,128]{1,0:T(1,128)}', space=vmem, size = 0x12000, scoped, tag = 'internal scratch']
  %s0 = inlined_call_operand.vmem [shape: bf16[128,1152], index: 0, kind: input, shape index: {}]
  %s1 = inlined_call_operand.vmem [shape: bf16[1152,128], index: 1, kind: input, shape index: {}]
  %s2 = inlined_call_operand.vmem [shape: f32[128,128], index: 2, kind: input, shape index: {}]
  %s3 = inlined_call_operand.vmem [shape: f32[1,128], index: 3, kind: output, shape index: {}]
  %s4 = sld [smem:[#allocation0]]
  $region22: #{_lambda_.11} parent=0
    _
  %s6 = ssub.s32 1, %s4
  %s7 = scalar_select 0, %s6, %s4
  // Predicated region
  $region2: #{_lambda_.11} parent=0 // pred_check
    _
  $region3: #{_lambda_.11} parent=0 // pred_check_branch
    %9 = sbr.rel (0) target = $region5
  $region4: #{_lambda_.11} parent=0 // pred_region
    _
  $region5: #{_lambda_.11} parent=0 // pred_fallthru
    _
  // Predicated region
  $region6: #{_lambda_.11} parent=0 // pred_check
    _
  $region7: #{_lambda_.11} parent=0 // pred_check_branch
    %11 = sbr.rel (0) target = $region9
  $region8: #{_lambda_.11} parent=0 // pred_region
    _
  $region9: #{_lambda_.11} parent=0 // pred_fallthru
    _
  // Predicated region
  $region10: #{_lambda_.11} parent=0 // pred_check
    _
  $region11: #{_lambda_.11} parent=0 // pred_check_branch
    %13 = sbr.rel (0) target = $region13
  $region12: #{_lambda_.11} parent=0 // pred_region
    _
  $region13: #{_lambda_.11} parent=0 // pred_fallthru
    _
  %v15 = vld [vmem:[%s0] sm:$0xff]
  %v16 = vld [vmem:[%s0 + $0x8] sm:$0xff]
  %v17 = vld [vmem:[%s0 + $0x10] sm:$0xff]
  %v18 = vld [vmem:[%s0 + $0x18] sm:$0xff]
  %v19 = vld [vmem:[%s0 + $0x20] sm:$0xf]
  %v20 = vld [vmem:[%s0 + $0x24] sm:$0xff]
  %v21 = vld [vmem:[%s0 + $0x2c] sm:$0xff]
  %v22 = vld [vmem:[%s0 + $0x34] sm:$0xff]
  %v23 = vld [vmem:[%s0 + $0x3c] sm:$0xff]
  %v24 = vld [vmem:[%s0 + $0x44] sm:$0xf]
  %v25 = vld [vmem:[%s0 + $0x48] sm:$0xff]
  %v26 = vld [vmem:[%s0 + $0x50] sm:$0xff]
  %v27 = vld [vmem:[%s0 + $0x58] sm:$0xff]
  %v28 = vld [vmem:[%s0 + $0x60] sm:$0xff]
  %v29 = vld [vmem:[%s0 + $0x68] sm:$0xf]
  %v30 = vld [vmem:[%s0 + $0x6c] sm:$0xff]
  %v31 = vld [vmem:[%s0 + $0x74] sm:$0xff]
  %v32 = vld [vmem:[%s0 + $0x7c] sm:$0xff]
  %v33 = vld [vmem:[%s0 + $0x84] sm:$0xff]
  %v34 = vld [vmem:[%s0 + $0x8c] sm:$0xf]
  %v35 = vld [vmem:[%s0 + $0x90] sm:$0xff]
  %v36 = vld [vmem:[%s0 + $0x98] sm:$0xff]
  %v37 = vld [vmem:[%s0 + $0xa0] sm:$0xff]
  %v38 = vld [vmem:[%s0 + $0xa8] sm:$0xff]
  %v39 = vld [vmem:[%s0 + $0xb0] sm:$0xf]
  %v40 = vld [vmem:[%s0 + $0xb4] sm:$0xff]
  %v41 = vld [vmem:[%s0 + $0xbc] sm:$0xff]
  %v42 = vld [vmem:[%s0 + $0xc4] sm:$0xff]
  %v43 = vld [vmem:[%s0 + $0xcc] sm:$0xff]
  %v44 = vld [vmem:[%s0 + $0xd4] sm:$0xf]
  %v45 = vld [vmem:[%s0 + $0xd8] sm:$0xff]
  %v46 = vld [vmem:[%s0 + $0xe0] sm:$0xff]
  %v47 = vld [vmem:[%s0 + $0xe8] sm:$0xff]
  %v48 = vld [vmem:[%s0 + $0xf0] sm:$0xff]
  %v49 = vld [vmem:[%s0 + $0xf8] sm:$0xf]
  %v50 = vld [vmem:[%s0 + $0xfc] sm:$0xff]
  %v51 = vld [vmem:[%s0 + $0x104] sm:$0xff]
  %v52 = vld [vmem:[%s0 + $0x10c] sm:$0xff]
  %v53 = vld [vmem:[%s0 + $0x114] sm:$0xff]
  %v54 = vld [vmem:[%s0 + $0x11c] sm:$0xf]
  %v55 = vld [vmem:[%s0 + $0x120] sm:$0xff]
  %v56 = vld [vmem:[%s0 + $0x128] sm:$0xff]
  %v57 = vld [vmem:[%s0 + $0x130] sm:$0xff]
  %v58 = vld [vmem:[%s0 + $0x138] sm:$0xff]
  %v59 = vld [vmem:[%s0 + $0x140] sm:$0xf]
  %v60 = vld [vmem:[%s0 + $0x144] sm:$0xff]
  %v61 = vld [vmem:[%s0 + $0x14c] sm:$0xff]
  %v62 = vld [vmem:[%s0 + $0x154] sm:$0xff]
  %v63 = vld [vmem:[%s0 + $0x15c] sm:$0xff]
  %v64 = vld [vmem:[%s0 + $0x164] sm:$0xf]
  %v65 = vld [vmem:[%s0 + $0x168] sm:$0xff]
  %v66 = vld [vmem:[%s0 + $0x170] sm:$0xff]
  %v67 = vld [vmem:[%s0 + $0x178] sm:$0xff]
  %v68 = vld [vmem:[%s0 + $0x180] sm:$0xff]
  %v69 = vld [vmem:[%s0 + $0x188] sm:$0xf]
  %v70 = vld [vmem:[%s0 + $0x18c] sm:$0xff]
  %v71 = vld [vmem:[%s0 + $0x194] sm:$0xff]
  %v72 = vld [vmem:[%s0 + $0x19c] sm:$0xff]
  %v73 = vld [vmem:[%s0 + $0x1a4] sm:$0xff]
  %v74 = vld [vmem:[%s0 + $0x1ac] sm:$0xf]
  %v75 = vld [vmem:[%s0 + $0x1b0] sm:$0xff]
  %v76 = vld [vmem:[%s0 + $0x1b8] sm:$0xff]
  %v77 = vld [vmem:[%s0 + $0x1c0] sm:$0xff]
  %v78 = vld [vmem:[%s0 + $0x1c8] sm:$0xff]
  %v79 = vld [vmem:[%s0 + $0x1d0] sm:$0xf]
  %v80 = vld [vmem:[%s0 + $0x1d4] sm:$0xff]
  %v81 = vld [vmem:[%s0 + $0x1dc] sm:$0xff]
  %v82 = vld [vmem:[%s0 + $0x1e4] sm:$0xff]
  %v83 = vld [vmem:[%s0 + $0x1ec] sm:$0xff]
  %v84 = vld [vmem:[%s0 + $0x1f4] sm:$0xf]
  %v85 = vld [vmem:[%s0 + $0x1f8] sm:$0xff]
  %v86 = vld [vmem:[%s0 + $0x200] sm:$0xff]
  %v87 = vld [vmem:[%s0 + $0x208] sm:$0xff]
  %v88 = vld [vmem:[%s0 + $0x210] sm:$0xff]
  %v89 = vld [vmem:[%s0 + $0x218] sm:$0xf]
  %v90 = vld [vmem:[%s0 + $0x21c] sm:$0xff]
  %v91 = vld [vmem:[%s0 + $0x224] sm:$0xff]
  %v92 = vld [vmem:[%s0 + $0x22c] sm:$0xff]
  %v93 = vld [vmem:[%s0 + $0x234] sm:$0xff]
  %v94 = vld [vmem:[%s0 + $0x23c] sm:$0xf]
  %v95 = vld [vmem:[%s1] sm:$0xf]
  %v96 = vld [vmem:[%s1 + $0x4] sm:$0xf]
  %v97 = vld [vmem:[%s1 + $0x8] sm:$0xf]
  %v98 = vld [vmem:[%s1 + $0xc] sm:$0xf]
  %v99 = vld [vmem:[%s1 + $0x10] sm:$0xf]
  %v100 = vld [vmem:[%s1 + $0x14] sm:$0xf]
  %v101 = vld [vmem:[%s1 + $0x18] sm:$0xf]
  %v102 = vld [vmem:[%s1 + $0x1c] sm:$0xf]
  %v103 = vld [vmem:[%s1 + $0x20] sm:$0xf]
  %v104 = vld [vmem:[%s1 + $0x24] sm:$0xf]
  %v105 = vld [vmem:[%s1 + $0x28] sm:$0xf]
  %v106 = vld [vmem:[%s1 + $0x2c] sm:$0xf]
  %v107 = vld [vmem:[%s1 + $0x30] sm:$0xf]
  %v108 = vld [vmem:[%s1 + $0x34] sm:$0xf]
  %v109 = vld [vmem:[%s1 + $0x38] sm:$0xf]
  %v110 = vld [vmem:[%s1 + $0x3c] sm:$0xf]
  %v111 = vld [vmem:[%s1 + $0x40] sm:$0xf]
  %v112 = vld [vmem:[%s1 + $0x44] sm:$0xf]
  %v113 = vld [vmem:[%s1 + $0x48] sm:$0xf]
  %v114 = vld [vmem:[%s1 + $0x4c] sm:$0xf]
  %v115 = vld [vmem:[%s1 + $0x50] sm:$0xf]
  %v116 = vld [vmem:[%s1 + $0x54] sm:$0xf]
  %v117 = vld [vmem:[%s1 + $0x58] sm:$0xf]
  %v118 = vld [vmem:[%s1 + $0x5c] sm:$0xf]
  %v119 = vld [vmem:[%s1 + $0x60] sm:$0xf]
  %v120 = vld [vmem:[%s1 + $0x64] sm:$0xf]
  %v121 = vld [vmem:[%s1 + $0x68] sm:$0xf]
  %v122 = vld [vmem:[%s1 + $0x6c] sm:$0xf]
  %v123 = vld [vmem:[%s1 + $0x70] sm:$0xf]
  %v124 = vld [vmem:[%s1 + $0x74] sm:$0xf]
  %v125 = vld [vmem:[%s1 + $0x78] sm:$0xf]
  %v126 = vld [vmem:[%s1 + $0x7c] sm:$0xf]
  %v127 = vld [vmem:[%s1 + $0x80] sm:$0xf]
  %v128 = vld [vmem:[%s1 + $0x84] sm:$0xf]
  %v129 = vld [vmem:[%s1 + $0x88] sm:$0xf]
  %v130 = vld [vmem:[%s1 + $0x8c] sm:$0xf]
  %v131 = vld [vmem:[%s1 + $0x90] sm:$0xf]
  %v132 = vld [vmem:[%s1 + $0x94] sm:$0xf]
  %v133 = vld [vmem:[%s1 + $0x98] sm:$0xf]
  %v134 = vld [vmem:[%s1 + $0x9c] sm:$0xf]
  %v135 = vld [vmem:[%s1 + $0xa0] sm:$0xf]
  %v136 = vld [vmem:[%s1 + $0xa4] sm:$0xf]
  %v137 = vld [vmem:[%s1 + $0xa8] sm:$0xf]
  %v138 = vld [vmem:[%s1 + $0xac] sm:$0xf]
  %v139 = vld [vmem:[%s1 + $0xb0] sm:$0xf]
  %v140 = vld [vmem:[%s1 + $0xb4] sm:$0xf]
  %v141 = vld [vmem:[%s1 + $0xb8] sm:$0xf]
  %v142 = vld [vmem:[%s1 + $0xbc] sm:$0xf]
  %v143 = vld [vmem:[%s1 + $0xc0] sm:$0xf]
  %v144 = vld [vmem:[%s1 + $0xc4] sm:$0xf]
  %v145 = vld [vmem:[%s1 + $0xc8] sm:$0xf]
  %v146 = vld [vmem:[%s1 + $0xcc] sm:$0xf]
  %v147 = vld [vmem:[%s1 + $0xd0] sm:$0xf]
  %v148 = vld [vmem:[%s1 + $0xd4] sm:$0xf]
  %v149 = vld [vmem:[%s1 + $0xd8] sm:$0xf]
  %v150 = vld [vmem:[%s1 + $0xdc] sm:$0xf]
  %v151 = vld [vmem:[%s1 + $0xe0] sm:$0xf]
  %v152 = vld [vmem:[%s1 + $0xe4] sm:$0xf]
  %v153 = vld [vmem:[%s1 + $0xe8] sm:$0xf]
  %v154 = vld [vmem:[%s1 + $0xec] sm:$0xf]
  %v155 = vld [vmem:[%s1 + $0xf0] sm:$0xf]
  %v156 = vld [vmem:[%s1 + $0xf4] sm:$0xf]
  %v157 = vld [vmem:[%s1 + $0xf8] sm:$0xf]
  %v158 = vld [vmem:[%s1 + $0xfc] sm:$0xf]
  %v159 = vld [vmem:[%s1 + $0x100] sm:$0xf]
  %v160 = vld [vmem:[%s1 + $0x104] sm:$0xf]
  %v161 = vld [vmem:[%s1 + $0x108] sm:$0xf]
  %v162 = vld [vmem:[%s1 + $0x10c] sm:$0xf]
  %v163 = vld [vmem:[%s1 + $0x110] sm:$0xf]
  %v164 = vld [vmem:[%s1 + $0x114] sm:$0xf]
  %v165 = vld [vmem:[%s1 + $0x118] sm:$0xf]
  %v166 = vld [vmem:[%s1 + $0x11c] sm:$0xf]
  %v167 = vld [vmem:[%s1 + $0x120] sm:$0xf]
  %v168 = vld [vmem:[%s1 + $0x124] sm:$0xf]
  %v169 = vld [vmem:[%s1 + $0x128] sm:$0xf]
  %v170 = vld [vmem:[%s1 + $0x12c] sm:$0xf]
  %v171 = vld [vmem:[%s1 + $0x130] sm:$0xf]
  %v172 = vld [vmem:[%s1 + $0x134] sm:$0xf]
  %v173 = vld [vmem:[%s1 + $0x138] sm:$0xf]
  %v174 = vld [vmem:[%s1 + $0x13c] sm:$0xf]
  %v175 = vld [vmem:[%s1 + $0x140] sm:$0xf]
  %v176 = vld [vmem:[%s1 + $0x144] sm:$0xf]
  %v177 = vld [vmem:[%s1 + $0x148] sm:$0xf]
  %v178 = vld [vmem:[%s1 + $0x14c] sm:$0xf]
  %v179 = vld [vmem:[%s1 + $0x150] sm:$0xf]
  %v180 = vld [vmem:[%s1 + $0x154] sm:$0xf]
  %v181 = vld [vmem:[%s1 + $0x158] sm:$0xf]
  %v182 = vld [vmem:[%s1 + $0x15c] sm:$0xf]
  %v183 = vld [vmem:[%s1 + $0x160] sm:$0xf]
  %v184 = vld [vmem:[%s1 + $0x164] sm:$0xf]
  %v185 = vld [vmem:[%s1 + $0x168] sm:$0xf]
  %v186 = vld [vmem:[%s1 + $0x16c] sm:$0xf]
  %v187 = vld [vmem:[%s1 + $0x170] sm:$0xf]
  %v188 = vld [vmem:[%s1 + $0x174] sm:$0xf]
  %v189 = vld [vmem:[%s1 + $0x178] sm:$0xf]
  %v190 = vld [vmem:[%s1 + $0x17c] sm:$0xf]
  %v191 = vld [vmem:[%s1 + $0x180] sm:$0xf]
  %v192 = vld [vmem:[%s1 + $0x184] sm:$0xf]
  %v193 = vld [vmem:[%s1 + $0x188] sm:$0xf]
  %v194 = vld [vmem:[%s1 + $0x18c] sm:$0xf]
  %v195 = vld [vmem:[%s1 + $0x190] sm:$0xf]
  %v196 = vld [vmem:[%s1 + $0x194] sm:$0xf]
  %v197 = vld [vmem:[%s1 + $0x198] sm:$0xf]
  %v198 = vld [vmem:[%s1 + $0x19c] sm:$0xf]
  %v199 = vld [vmem:[%s1 + $0x1a0] sm:$0xf]
  %v200 = vld [vmem:[%s1 + $0x1a4] sm:$0xf]
  %v201 = vld [vmem:[%s1 + $0x1a8] sm:$0xf]
  %v202 = vld [vmem:[%s1 + $0x1ac] sm:$0xf]
  %v203 = vld [vmem:[%s1 + $0x1b0] sm:$0xf]
  %v204 = vld [vmem:[%s1 + $0x1b4] sm:$0xf]
  %v205 = vld [vmem:[%s1 + $0x1b8] sm:$0xf]
  %v206 = vld [vmem:[%s1 + $0x1bc] sm:$0xf]
  %v207 = vld [vmem:[%s1 + $0x1c0] sm:$0xf]
  %v208 = vld [vmem:[%s1 + $0x1c4] sm:$0xf]
  %v209 = vld [vmem:[%s1 + $0x1c8] sm:$0xf]
  %v210 = vld [vmem:[%s1 + $0x1cc] sm:$0xf]
  %v211 = vld [vmem:[%s1 + $0x1d0] sm:$0xf]
  %v212 = vld [vmem:[%s1 + $0x1d4] sm:$0xf]
  %v213 = vld [vmem:[%s1 + $0x1d8] sm:$0xf]
  %v214 = vld [vmem:[%s1 + $0x1dc] sm:$0xf]
  %v215 = vld [vmem:[%s1 + $0x1e0] sm:$0xf]
  %v216 = vld [vmem:[%s1 + $0x1e4] sm:$0xf]
  %v217 = vld [vmem:[%s1 + $0x1e8] sm:$0xf]
  %v218 = vld [vmem:[%s1 + $0x1ec] sm:$0xf]
  %v219 = vld [vmem:[%s1 + $0x1f0] sm:$0xf]
  %v220 = vld [vmem:[%s1 + $0x1f4] sm:$0xf]
  %v221 = vld [vmem:[%s1 + $0x1f8] sm:$0xf]
  %v222 = vld [vmem:[%s1 + $0x1fc] sm:$0xf]
  %v223 = vld [vmem:[%s1 + $0x200] sm:$0xf]
  %v224 = vld [vmem:[%s1 + $0x204] sm:$0xf]
  %v225 = vld [vmem:[%s1 + $0x208] sm:$0xf]
  %v226 = vld [vmem:[%s1 + $0x20c] sm:$0xf]
  %v227 = vld [vmem:[%s1 + $0x210] sm:$0xf]
  %v228 = vld [vmem:[%s1 + $0x214] sm:$0xf]
  %v229 = vld [vmem:[%s1 + $0x218] sm:$0xf]
  %v230 = vld [vmem:[%s1 + $0x21c] sm:$0xf]
  %v231 = vld [vmem:[%s1 + $0x220] sm:$0xf]
  %v232 = vld [vmem:[%s1 + $0x224] sm:$0xf]
  %v233 = vld [vmem:[%s1 + $0x228] sm:$0xf]
  %v234 = vld [vmem:[%s1 + $0x22c] sm:$0xf]
  %v235 = vld [vmem:[%s1 + $0x230] sm:$0xf]
  %v236 = vld [vmem:[%s1 + $0x234] sm:$0xf]
  %v237 = vld [vmem:[%s1 + $0x238] sm:$0xf]
  %v238 = vld [vmem:[%s1 + $0x23c] sm:$0xf]
  %v319 = vunpack.c.l.b16 %v15
  %v320 = vunpack.c.h.b16 %v15
  %v321 = vunpack.c.l.b16 %v16
  %v322 = vunpack.c.h.b16 %v16
  %v323 = vunpack.c.l.b16 %v17
  %v324 = vunpack.c.h.b16 %v17
  %v325 = vunpack.c.l.b16 %v18
  %v326 = vunpack.c.h.b16 %v18
  %v327 = vunpack.c.l.b16 %v19
  %v328 = vunpack.c.l.b16 %v20
  %v329 = vunpack.c.h.b16 %v20
  %v330 = vunpack.c.l.b16 %v21
  %v331 = vunpack.c.h.b16 %v21
  %v332 = vunpack.c.l.b16 %v22
  %v333 = vunpack.c.h.b16 %v22
  %v334 = vunpack.c.l.b16 %v23
  %v335 = vunpack.c.h.b16 %v23
  %v336 = vunpack.c.l.b16 %v24
  %v337 = vunpack.c.l.b16 %v25
  %v338 = vunpack.c.h.b16 %v25
  %v339 = vunpack.c.l.b16 %v26
  %v340 = vunpack.c.h.b16 %v26
  %v341 = vunpack.c.l.b16 %v27
  %v342 = vunpack.c.h.b16 %v27
  %v343 = vunpack.c.l.b16 %v28
  %v344 = vunpack.c.h.b16 %v28
  %v345 = vunpack.c.l.b16 %v29
  %v346 = vunpack.c.l.b16 %v30
  %v347 = vunpack.c.h.b16 %v30
  %v348 = vunpack.c.l.b16 %v31
  %v349 = vunpack.c.h.b16 %v31
  %v350 = vunpack.c.l.b16 %v32
  %v351 = vunpack.c.h.b16 %v32
  %v352 = vunpack.c.l.b16 %v33
  %v353 = vunpack.c.h.b16 %v33
  %v354 = vunpack.c.l.b16 %v34
  %v355 = vunpack.c.l.b16 %v35
  %v356 = vunpack.c.h.b16 %v35
  %v357 = vunpack.c.l.b16 %v36
  %v358 = vunpack.c.h.b16 %v36
  %v359 = vunpack.c.l.b16 %v37
  %v360 = vunpack.c.h.b16 %v37
  %v361 = vunpack.c.l.b16 %v38
  %v362 = vunpack.c.h.b16 %v38
  %v363 = vunpack.c.l.b16 %v39
  %v364 = vunpack.c.l.b16 %v40
  %v365 = vunpack.c.h.b16 %v40
  %v366 = vunpack.c.l.b16 %v41
  %v367 = vunpack.c.h.b16 %v41
  %v368 = vunpack.c.l.b16 %v42
  %v369 = vunpack.c.h.b16 %v42
  %v370 = vunpack.c.l.b16 %v43
  %v371 = vunpack.c.h.b16 %v43
  %v372 = vunpack.c.l.b16 %v44
  %v373 = vunpack.c.l.b16 %v45
  %v374 = vunpack.c.h.b16 %v45
  %v375 = vunpack.c.l.b16 %v46
  %v376 = vunpack.c.h.b16 %v46
  %v377 = vunpack.c.l.b16 %v47
  %v378 = vunpack.c.h.b16 %v47
  %v379 = vunpack.c.l.b16 %v48
  %v380 = vunpack.c.h.b16 %v48
  %v381 = vunpack.c.l.b16 %v49
  %v382 = vunpack.c.l.b16 %v50
  %v383 = vunpack.c.h.b16 %v50
  %v384 = vunpack.c.l.b16 %v51
  %v385 = vunpack.c.h.b16 %v51
  %v386 = vunpack.c.l.b16 %v52
  %v387 = vunpack.c.h.b16 %v52
  %v388 = vunpack.c.l.b16 %v53
  %v389 = vunpack.c.h.b16 %v53
  %v390 = vunpack.c.l.b16 %v54
  %v391 = vunpack.c.l.b16 %v55
  %v392 = vunpack.c.h.b16 %v55
  %v393 = vunpack.c.l.b16 %v56
  %v394 = vunpack.c.h.b16 %v56
  %v395 = vunpack.c.l.b16 %v57
  %v396 = vunpack.c.h.b16 %v57
  %v397 = vunpack.c.l.b16 %v58
  %v398 = vunpack.c.h.b16 %v58
  %v399 = vunpack.c.l.b16 %v59
  %v400 = vunpack.c.l.b16 %v60
  %v401 = vunpack.c.h.b16 %v60
  %v402 = vunpack.c.l.b16 %v61
  %v403 = vunpack.c.h.b16 %v61
  %v404 = vunpack.c.l.b16 %v62
  %v405 = vunpack.c.h.b16 %v62
  %v406 = vunpack.c.l.b16 %v63
  %v407 = vunpack.c.h.b16 %v63
  %v408 = vunpack.c.l.b16 %v64
  %v409 = vunpack.c.l.b16 %v65
  %v410 = vunpack.c.h.b16 %v65
  %v411 = vunpack.c.l.b16 %v66
  %v412 = vunpack.c.h.b16 %v66
  %v413 = vunpack.c.l.b16 %v67
  %v414 = vunpack.c.h.b16 %v67
  %v415 = vunpack.c.l.b16 %v68
  %v416 = vunpack.c.h.b16 %v68
  %v417 = vunpack.c.l.b16 %v69
  %v418 = vunpack.c.l.b16 %v70
  %v419 = vunpack.c.h.b16 %v70
  %v420 = vunpack.c.l.b16 %v71
  %v421 = vunpack.c.h.b16 %v71
  %v422 = vunpack.c.l.b16 %v72
  %v423 = vunpack.c.h.b16 %v72
  %v424 = vunpack.c.l.b16 %v73
  %v425 = vunpack.c.h.b16 %v73
  %v426 = vunpack.c.l.b16 %v74
  %v427 = vunpack.c.l.b16 %v75
  %v428 = vunpack.c.h.b16 %v75
  %v429 = vunpack.c.l.b16 %v76
  %v430 = vunpack.c.h.b16 %v76
  %v431 = vunpack.c.l.b16 %v77
  %v432 = vunpack.c.h.b16 %v77
  %v433 = vunpack.c.l.b16 %v78
  %v434 = vunpack.c.h.b16 %v78
  %v435 = vunpack.c.l.b16 %v79
  %v436 = vunpack.c.l.b16 %v80
  %v437 = vunpack.c.h.b16 %v80
  %v438 = vunpack.c.l.b16 %v81
  %v439 = vunpack.c.h.b16 %v81
  %v440 = vunpack.c.l.b16 %v82
  %v441 = vunpack.c.h.b16 %v82
  %v442 = vunpack.c.l.b16 %v83
  %v443 = vunpack.c.h.b16 %v83
  %v444 = vunpack.c.l.b16 %v84
  %v445 = vunpack.c.l.b16 %v85
  %v446 = vunpack.c.h.b16 %v85
  %v447 = vunpack.c.l.b16 %v86
  %v448 = vunpack.c.h.b16 %v86
  %v449 = vunpack.c.l.b16 %v87
  %v450 = vunpack.c.h.b16 %v87
  %v451 = vunpack.c.l.b16 %v88
  %v452 = vunpack.c.h.b16 %v88
  %v453 = vunpack.c.l.b16 %v89
  %v454 = vunpack.c.l.b16 %v90
  %v455 = vunpack.c.h.b16 %v90
  %v456 = vunpack.c.l.b16 %v91
  %v457 = vunpack.c.h.b16 %v91
  %v458 = vunpack.c.l.b16 %v92
  %v459 = vunpack.c.h.b16 %v92
  %v460 = vunpack.c.l.b16 %v93
  %v461 = vunpack.c.h.b16 %v93
  %v462 = vunpack.c.l.b16 %v94
  %v463 = vpack.c.b16 %v328, %v319
  %v464 = vpack.c.b16 %v329, %v320
  %v465 = vpack.c.b16 %v330, %v321
  %v466 = vpack.c.b16 %v331, %v322
  %v467 = vpack.c.b16 %v332, %v323
  %v468 = vpack.c.b16 %v333, %v324
  %v469 = vpack.c.b16 %v334, %v325
  %v470 = vpack.c.b16 %v335, %v326
  %v471 = vpack.c.b16 %v336, %v327
  %v472 = vpack.c.b16 %v346, %v337
  %v473 = vpack.c.b16 %v347, %v338
  %v474 = vpack.c.b16 %v348, %v339
  %v475 = vpack.c.b16 %v349, %v340
  %v476 = vpack.c.b16 %v350, %v341
  %v477 = vpack.c.b16 %v351, %v342
  %v478 = vpack.c.b16 %v352, %v343
  %v479 = vpack.c.b16 %v353, %v344
  %v480 = vpack.c.b16 %v354, %v345
  %v481 = vpack.c.b16 %v364, %v355
  %v482 = vpack.c.b16 %v365, %v356
  %v483 = vpack.c.b16 %v366, %v357
  %v484 = vpack.c.b16 %v367, %v358
  %v485 = vpack.c.b16 %v368, %v359
  %v486 = vpack.c.b16 %v369, %v360
  %v487 = vpack.c.b16 %v370, %v361
  %v488 = vpack.c.b16 %v371, %v362
  %v489 = vpack.c.b16 %v372, %v363
  %v490 = vpack.c.b16 %v382, %v373
  %v491 = vpack.c.b16 %v383, %v374
  %v492 = vpack.c.b16 %v384, %v375
  %v493 = vpack.c.b16 %v385, %v376
  %v494 = vpack.c.b16 %v386, %v377
  %v495 = vpack.c.b16 %v387, %v378
  %v496 = vpack.c.b16 %v388, %v379
  %v497 = vpack.c.b16 %v389, %v380
  %v498 = vpack.c.b16 %v390, %v381
  %v499 = vpack.c.b16 %v400, %v391
  %v500 = vpack.c.b16 %v401, %v392
  %v501 = vpack.c.b16 %v402, %v393
  %v502 = vpack.c.b16 %v403, %v394
  %v503 = vpack.c.b16 %v404, %v395
  %v504 = vpack.c.b16 %v405, %v396
  %v505 = vpack.c.b16 %v406, %v397
  %v506 = vpack.c.b16 %v407, %v398
  %v507 = vpack.c.b16 %v408, %v399
  %v508 = vpack.c.b16 %v418, %v409
  %v509 = vpack.c.b16 %v419, %v410
  %v510 = vpack.c.b16 %v420, %v411
  %v511 = vpack.c.b16 %v421, %v412
  %v512 = vpack.c.b16 %v422, %v413
  %v513 = vpack.c.b16 %v423, %v414
  %v514 = vpack.c.b16 %v424, %v415
  %v515 = vpack.c.b16 %v425, %v416
  %v516 = vpack.c.b16 %v426, %v417
  %v517 = vpack.c.b16 %v436, %v427
  %v518 = vpack.c.b16 %v437, %v428
  %v519 = vpack.c.b16 %v438, %v429
  %v520 = vpack.c.b16 %v439, %v430
  %v521 = vpack.c.b16 %v440, %v431
  %v522 = vpack.c.b16 %v441, %v432
  %v523 = vpack.c.b16 %v442, %v433
  %v524 = vpack.c.b16 %v443, %v434
  %v525 = vpack.c.b16 %v444, %v435
  %v526 = vpack.c.b16 %v454, %v445
  %v527 = vpack.c.b16 %v455, %v446
  %v528 = vpack.c.b16 %v456, %v447
  %v529 = vpack.c.b16 %v457, %v448
  %v530 = vpack.c.b16 %v458, %v449
  %v531 = vpack.c.b16 %v459, %v450
  %v532 = vpack.c.b16 %v460, %v451
  %v533 = vpack.c.b16 %v461, %v452
  %v534 = vpack.c.b16 %v462, %v453
  %v751 = vunpack.c.l.b16 %v95
  %v752 = vunpack.c.l.b16 %v96
  %v753 = vunpack.c.l.b16 %v97
  %v754 = vunpack.c.l.b16 %v98
  %v755 = vunpack.c.l.b16 %v99
  %v756 = vunpack.c.l.b16 %v100
  %v757 = vunpack.c.l.b16 %v101
  %v758 = vunpack.c.l.b16 %v102
  %v759 = vunpack.c.l.b16 %v103
  %v760 = vunpack.c.l.b16 %v104
  %v761 = vunpack.c.l.b16 %v105
  %v762 = vunpack.c.l.b16 %v106
  %v763 = vunpack.c.l.b16 %v107
  %v764 = vunpack.c.l.b16 %v108
  %v765 = vunpack.c.l.b16 %v109
  %v766 = vunpack.c.l.b16 %v110
  %v767 = vunpack.c.l.b16 %v111
  %v768 = vunpack.c.l.b16 %v112
  %v769 = vunpack.c.l.b16 %v113
  %v770 = vunpack.c.l.b16 %v114
  %v771 = vunpack.c.l.b16 %v115
  %v772 = vunpack.c.l.b16 %v116
  %v773 = vunpack.c.l.b16 %v117
  %v774 = vunpack.c.l.b16 %v118
  %v775 = vunpack.c.l.b16 %v119
  %v776 = vunpack.c.l.b16 %v120
  %v777 = vunpack.c.l.b16 %v121
  %v778 = vunpack.c.l.b16 %v122
  %v779 = vunpack.c.l.b16 %v123
  %v780 = vunpack.c.l.b16 %v124
  %v781 = vunpack.c.l.b16 %v125
  %v782 = vunpack.c.l.b16 %v126
  %v783 = vunpack.c.l.b16 %v127
  %v784 = vunpack.c.l.b16 %v128
  %v785 = vunpack.c.l.b16 %v129
  %v786 = vunpack.c.l.b16 %v130
  %v787 = vunpack.c.l.b16 %v131
  %v788 = vunpack.c.l.b16 %v132
  %v789 = vunpack.c.l.b16 %v133
  %v790 = vunpack.c.l.b16 %v134
  %v791 = vunpack.c.l.b16 %v135
  %v792 = vunpack.c.l.b16 %v136
  %v793 = vunpack.c.l.b16 %v137
  %v794 = vunpack.c.l.b16 %v138
  %v795 = vunpack.c.l.b16 %v139
  %v796 = vunpack.c.l.b16 %v140
  %v797 = vunpack.c.l.b16 %v141
  %v798 = vunpack.c.l.b16 %v142
  %v799 = vunpack.c.l.b16 %v143
  %v800 = vunpack.c.l.b16 %v144
  %v801 = vunpack.c.l.b16 %v145
  %v802 = vunpack.c.l.b16 %v146
  %v803 = vunpack.c.l.b16 %v147
  %v804 = vunpack.c.l.b16 %v148
  %v805 = vunpack.c.l.b16 %v149
  %v806 = vunpack.c.l.b16 %v150
  %v807 = vunpack.c.l.b16 %v151
  %v808 = vunpack.c.l.b16 %v152
  %v809 = vunpack.c.l.b16 %v153
  %v810 = vunpack.c.l.b16 %v154
  %v811 = vunpack.c.l.b16 %v155
  %v812 = vunpack.c.l.b16 %v156
  %v813 = vunpack.c.l.b16 %v157
  %v814 = vunpack.c.l.b16 %v158
  %v815 = vunpack.c.l.b16 %v159
  %v816 = vunpack.c.l.b16 %v160
  %v817 = vunpack.c.l.b16 %v161
  %v818 = vunpack.c.l.b16 %v162
  %v819 = vunpack.c.l.b16 %v163
  %v820 = vunpack.c.l.b16 %v164
  %v821 = vunpack.c.l.b16 %v165
  %v822 = vunpack.c.l.b16 %v166
  %v823 = vunpack.c.l.b16 %v167
  %v824 = vunpack.c.l.b16 %v168
  %v825 = vunpack.c.l.b16 %v169
  %v826 = vunpack.c.l.b16 %v170
  %v827 = vunpack.c.l.b16 %v171
  %v828 = vunpack.c.l.b16 %v172
  %v829 = vunpack.c.l.b16 %v173
  %v830 = vunpack.c.l.b16 %v174
  %v831 = vunpack.c.l.b16 %v175
  %v832 = vunpack.c.l.b16 %v176
  %v833 = vunpack.c.l.b16 %v177
  %v834 = vunpack.c.l.b16 %v178
  %v835 = vunpack.c.l.b16 %v179
  %v836 = vunpack.c.l.b16 %v180
  %v837 = vunpack.c.l.b16 %v181
  %v838 = vunpack.c.l.b16 %v182
  %v839 = vunpack.c.l.b16 %v183
  %v840 = vunpack.c.l.b16 %v184
  %v841 = vunpack.c.l.b16 %v185
  %v842 = vunpack.c.l.b16 %v186
  %v843 = vunpack.c.l.b16 %v187
  %v844 = vunpack.c.l.b16 %v188
  %v845 = vunpack.c.l.b16 %v189
  %v846 = vunpack.c.l.b16 %v190
  %v847 = vunpack.c.l.b16 %v191
  %v848 = vunpack.c.l.b16 %v192
  %v849 = vunpack.c.l.b16 %v193
  %v850 = vunpack.c.l.b16 %v194
  %v851 = vunpack.c.l.b16 %v195
  %v852 = vunpack.c.l.b16 %v196
  %v853 = vunpack.c.l.b16 %v197
  %v854 = vunpack.c.l.b16 %v198
  %v855 = vunpack.c.l.b16 %v199
  %v856 = vunpack.c.l.b16 %v200
  %v857 = vunpack.c.l.b16 %v201
  %v858 = vunpack.c.l.b16 %v202
  %v859 = vunpack.c.l.b16 %v203
  %v860 = vunpack.c.l.b16 %v204
  %v861 = vunpack.c.l.b16 %v205
  %v862 = vunpack.c.l.b16 %v206
  %v863 = vunpack.c.l.b16 %v207
  %v864 = vunpack.c.l.b16 %v208
  %v865 = vunpack.c.l.b16 %v209
  %v866 = vunpack.c.l.b16 %v210
  %v867 = vunpack.c.l.b16 %v211
  %v868 = vunpack.c.l.b16 %v212
  %v869 = vunpack.c.l.b16 %v213
  %v870 = vunpack.c.l.b16 %v214
  %v871 = vunpack.c.l.b16 %v215
  %v872 = vunpack.c.l.b16 %v216
  %v873 = vunpack.c.l.b16 %v217
  %v874 = vunpack.c.l.b16 %v218
  %v875 = vunpack.c.l.b16 %v219
  %v876 = vunpack.c.l.b16 %v220
  %v877 = vunpack.c.l.b16 %v221
  %v878 = vunpack.c.l.b16 %v222
  %v879 = vunpack.c.l.b16 %v223
  %v880 = vunpack.c.l.b16 %v224
  %v881 = vunpack.c.l.b16 %v225
  %v882 = vunpack.c.l.b16 %v226
  %v883 = vunpack.c.l.b16 %v227
  %v884 = vunpack.c.l.b16 %v228
  %v885 = vunpack.c.l.b16 %v229
  %v886 = vunpack.c.l.b16 %v230
  %v887 = vunpack.c.l.b16 %v231
  %v888 = vunpack.c.l.b16 %v232
  %v889 = vunpack.c.l.b16 %v233
  %v890 = vunpack.c.l.b16 %v234
  %v891 = vunpack.c.l.b16 %v235
  %v892 = vunpack.c.l.b16 %v236
  %v893 = vunpack.c.l.b16 %v237
  %v894 = vunpack.c.l.b16 %v238
  %v895 = vpack.c.b16 %v752, %v751
  %v896 = vpack.c.b16 %v754, %v753
  %v897 = vpack.c.b16 %v756, %v755
  %v898 = vpack.c.b16 %v758, %v757
  %v899 = vpack.c.b16 %v760, %v759
  %v900 = vpack.c.b16 %v762, %v761
  %v901 = vpack.c.b16 %v764, %v763
  %v902 = vpack.c.b16 %v766, %v765
  %v903 = vpack.c.b16 %v768, %v767
  %v904 = vpack.c.b16 %v770, %v769
  %v905 = vpack.c.b16 %v772, %v771
  %v906 = vpack.c.b16 %v774, %v773
  %v907 = vpack.c.b16 %v776, %v775
  %v908 = vpack.c.b16 %v778, %v777
  %v909 = vpack.c.b16 %v780, %v779
  %v910 = vpack.c.b16 %v782, %v781
  %v911 = vpack.c.b16 %v784, %v783
  %v912 = vpack.c.b16 %v786, %v785
  %v913 = vpack.c.b16 %v788, %v787
  %v914 = vpack.c.b16 %v790, %v789
  %v915 = vpack.c.b16 %v792, %v791
  %v916 = vpack.c.b16 %v794, %v793
  %v917 = vpack.c.b16 %v796, %v795
  %v918 = vpack.c.b16 %v798, %v797
  %v919 = vpack.c.b16 %v800, %v799
  %v920 = vpack.c.b16 %v802, %v801
  %v921 = vpack.c.b16 %v804, %v803
  %v922 = vpack.c.b16 %v806, %v805
  %v923 = vpack.c.b16 %v808, %v807
  %v924 = vpack.c.b16 %v810, %v809
  %v925 = vpack.c.b16 %v812, %v811
  %v926 = vpack.c.b16 %v814, %v813
  %v927 = vpack.c.b16 %v816, %v815
  %v928 = vpack.c.b16 %v818, %v817
  %v929 = vpack.c.b16 %v820, %v819
  %v930 = vpack.c.b16 %v822, %v821
  %v931 = vpack.c.b16 %v824, %v823
  %v932 = vpack.c.b16 %v826, %v825
  %v933 = vpack.c.b16 %v828, %v827
  %v934 = vpack.c.b16 %v830, %v829
  %v935 = vpack.c.b16 %v832, %v831
  %v936 = vpack.c.b16 %v834, %v833
  %v937 = vpack.c.b16 %v836, %v835
  %v938 = vpack.c.b16 %v838, %v837
  %v939 = vpack.c.b16 %v840, %v839
  %v940 = vpack.c.b16 %v842, %v841
  %v941 = vpack.c.b16 %v844, %v843
  %v942 = vpack.c.b16 %v846, %v845
  %v943 = vpack.c.b16 %v848, %v847
  %v944 = vpack.c.b16 %v850, %v849
  %v945 = vpack.c.b16 %v852, %v851
  %v946 = vpack.c.b16 %v854, %v853
  %v947 = vpack.c.b16 %v856, %v855
  %v948 = vpack.c.b16 %v858, %v857
  %v949 = vpack.c.b16 %v860, %v859
  %v950 = vpack.c.b16 %v862, %v861
  %v951 = vpack.c.b16 %v864, %v863
  %v952 = vpack.c.b16 %v866, %v865
  %v953 = vpack.c.b16 %v868, %v867
  %v954 = vpack.c.b16 %v870, %v869
  %v955 = vpack.c.b16 %v872, %v871
  %v956 = vpack.c.b16 %v874, %v873
  %v957 = vpack.c.b16 %v876, %v875
  %v958 = vpack.c.b16 %v878, %v877
  %v959 = vpack.c.b16 %v880, %v879
  %v960 = vpack.c.b16 %v882, %v881
  %v961 = vpack.c.b16 %v884, %v883
  %v962 = vpack.c.b16 %v886, %v885
  %v963 = vpack.c.b16 %v888, %v887
  %v964 = vpack.c.b16 %v890, %v889
  %v965 = vpack.c.b16 %v892, %v891
  %v966 = vpack.c.b16 %v894, %v893
  %1039 = vmatprep.subr.bf16.mxu0 0
  %1040 = vmatpush1.bf16.msra.mxu0 %v895
  %1041 = vmatprep.subr.bf16.mxu0 0
  %1042 = vmatpush1.bf16.msra.mxu0 %v896
  %1043 = vmatprep.subr.bf16.mxu0 0
  %1044 = vmatpush1.bf16.msra.mxu0 %v897
  %1045 = vmatprep.subr.bf16.mxu0 0
  %1046 = vmatpush1.bf16.msra.mxu0 %v898
  %1047 = vmatprep.subr.bf16.mxu0 0
  %1048 = vmatpush1.bf16.msra.mxu0 %v899
  %1049 = vmatprep.subr.bf16.mxu0 0
  %1050 = vmatpush1.bf16.msra.mxu0 %v900
  %1051 = vmatprep.subr.bf16.mxu0 0
  %1052 = vmatpush1.bf16.msra.mxu0 %v901
  %1053 = vmatprep.subr.bf16.mxu0 0
  %1054 = vmatpush1.bf16.msra.mxu0 %v902
  %1055 = vmatprep.subr.bf16.mxu0 0
  %1056 = vmatpush1.bf16.msra.mxu0 %v903
  %1057 = vmatprep.subr.bf16.mxu0 0
  %1058 = vmatpush1.bf16.msra.mxu0 %v904
  %1059 = vmatprep.subr.bf16.mxu0 0
  %1060 = vmatpush1.bf16.msra.mxu0 %v905
  %1061 = vmatprep.subr.bf16.mxu0 0
  %1062 = vmatpush1.bf16.msra.mxu0 %v906
  %1063 = vmatprep.subr.bf16.mxu0 0
  %1064 = vmatpush1.bf16.msra.mxu0 %v907
  %1065 = vmatprep.subr.bf16.mxu0 0
  %1066 = vmatpush1.bf16.msra.mxu0 %v908
  %1067 = vmatprep.subr.bf16.mxu0 0
  %1068 = vmatpush1.bf16.msra.mxu0 %v909
  %1069 = vmatprep.subr.bf16.mxu0 0
  %1070 = vmatpush1.bf16.msra.mxu0 %v910
  %1071 = vmatprep.mubr.bf16.mxu0 %v464
  %1072 = vmatmul.mubr.bf16.gmra.mrb[0].mxu0 %v463
  %v1073 = vpop.f32.mrb[0].mxu0
  %v1074 = vadd.f32 0.0, %v1073
  %v1075 = vpop.f32.mrb[0].mxu0
  %v1076 = vpop.f32.mrb[0].mxu0
  %v1077 = vadd.f32 0.0, %v1076
  %v1078 = vpop.f32.mrb[0].mxu0
  %1079 = vmatprep.mubr.bf16.mxu0 %v473
  %1080 = vmatmul.mubr.bf16.gmra.mrb[0].mxu0 %v472
  %v1081 = vpop.f32.mrb[0].mxu0
  %v1082 = vadd.f32 0.0, %v1081
  %v1083 = vpop.f32.mrb[0].mxu0
  %v1084 = vpop.f32.mrb[0].mxu0
  %v1085 = vadd.f32 0.0, %v1084
  %v1086 = vpop.f32.mrb[0].mxu0
  %1087 = vmatprep.mubr.bf16.mxu0 %v482
  %1088 = vmatmul.mubr.bf16.gmra.mrb[0].mxu0 %v481
  %v1089 = vpop.f32.mrb[0].mxu0
  %v1090 = vadd.f32 0.0, %v1089
  %v1091 = vpop.f32.mrb[0].mxu0
  %v1092 = vpop.f32.mrb[0].mxu0
  %v1093 = vadd.f32 0.0, %v1092
  %v1094 = vpop.f32.mrb[0].mxu0
  %1095 = vmatprep.mubr.bf16.mxu0 %v491
  %1096 = vmatmul.mubr.bf16.gmra.mrb[0].mxu0 %v490
  %v1097 = vpop.f32.mrb[0].mxu0
  %v1098 = vadd.f32 0.0, %v1097
  %v1099 = vpop.f32.mrb[0].mxu0
  %v1100 = vpop.f32.mrb[0].mxu0
  %v1101 = vadd.f32 0.0, %v1100
  %v1102 = vpop.f32.mrb[0].mxu0
  %1103 = vmatprep.mubr.bf16.mxu0 %v500
  %1104 = vmatmul.mubr.bf16.gmra.mrb[0].mxu0 %v499
  %v1105 = vpop.f32.mrb[0].mxu0
  %v1106 = vadd.f32 0.0, %v1105
  %v1107 = vpop.f32.mrb[0].mxu0
  %v1108 = vpop.f32.mrb[0].mxu0
  %v1109 = vadd.f32 0.0, %v1108
  %v1110 = vpop.f32.mrb[0].mxu0
  %1111 = vmatprep.mubr.bf16.mxu0 %v509
  %1112 = vmatmul.mubr.bf16.gmra.mrb[0].mxu0 %v508
  %v1113 = vpop.f32.mrb[0].mxu0
  %v1114 = vadd.f32 0.0, %v1113
  %v1115 = vpop.f32.mrb[0].mxu0
  %v1116 = vpop.f32.mrb[0].mxu0
  %v1117 = vadd.f32 0.0, %v1116
  %v1118 = vpop.f32.mrb[0].mxu0
  %1119 = vmatprep.mubr.bf16.mxu0 %v518
  %1120 = vmatmul.mubr.bf16.gmra.mrb[0].mxu0 %v517
  %v1121 = vpop.f32.mrb[0].mxu0
  %v1122 = vadd.f32 0.0, %v1121
  %v1123 = vpop.f32.mrb[0].mxu0
  %v1124 = vpop.f32.mrb[0].mxu0
  %v1125 = vadd.f32 0.0, %v1124
  %v1126 = vpop.f32.mrb[0].mxu0
  %1127 = vmatprep.mubr.bf16.mxu0 %v527
  %1128 = vmatmul.mubr.bf16.gmra.mrb[0].mxu0 %v526
  %v1129 = vpop.f32.mrb[0].mxu0
  %v1130 = vadd.f32 0.0, %v1129
  %v1131 = vpop.f32.mrb[0].mxu0
  %v1132 = vpop.f32.mrb[0].mxu0
  %v1133 = vadd.f32 0.0, %v1132
  %v1134 = vpop.f32.mrb[0].mxu0
  %1135 = vdwg.mxu0
  %1136 = vmatprep.subr.bf16.mxu0 0
  %1137 = vmatpush1.bf16.msra.mxu0 %v911
  %1138 = vmatprep.subr.bf16.mxu0 0
  %1139 = vmatpush1.bf16.msra.mxu0 %v912
  %1140 = vmatprep.subr.bf16.mxu0 0
  %1141 = vmatpush1.bf16.msra.mxu0 %v913
  %1142 = vmatprep.subr.bf16.mxu0 0
  %1143 = vmatpush1.bf16.msra.mxu0 %v914
  %1144 = vmatprep.subr.bf16.mxu0 0
  %1145 = vmatpush1.bf16.msra.mxu0 %v915
  %1146 = vmatprep.subr.bf16.mxu0 0
  %1147 = vmatpush1.bf16.msra.mxu0 %v916
  %1148 = vmatprep.subr.bf16.mxu0 0
  %1149 = vmatpush1.bf16.msra.mxu0 %v917
  %1150 = vmatprep.subr.bf16.mxu0 0
  %1151 = vmatpush1.bf16.msra.mxu0 %v918
  %1152 = vmatprep.subr.bf16.mxu0 0
  %1153 = vmatpush1.bf16.msra.mxu0 %v919
  %1154 = vmatprep.subr.bf16.mxu0 0
  %1155 = vmatpush1.bf16.msra.mxu0 %v920
  %1156 = vmatprep.subr.bf16.mxu0 0
  %1157 = vmatpush1.bf16.msra.mxu0 %v921
  %1158 = vmatprep.subr.bf16.mxu0 0
  %1159 = vmatpush1.bf16.msra.mxu0 %v922
  %1160 = vmatprep.subr.bf16.mxu0 0
  %1161 = vmatpush1.bf16.msra.mxu0 %v923
  %1162 = vmatprep.subr.bf16.mxu0 0
  %1163 = vmatpush1.bf16.msra.mxu0 %v924
  %1164 = vmatprep.subr.bf16.mxu0 0
  %1165 = vmatpush1.bf16.msra.mxu0 %v925
  %1166 = vmatprep.subr.bf16.mxu0 0
  %1167 = vmatpush1.bf16.msra.mxu0 %v926
  %1168 = vmatprep.mubr.bf16.mxu0 %v466
  %1169 = vmatmul.mubr.bf16.gmra.mrb[0].mxu0 %v465
  %v1170 = vpop.f32.mrb[0].mxu0
  %v1171 = vadd.f32 %v1074, %v1170
  %v1172 = vpop.f32.mrb[0].mxu0
  %v1173 = vpop.f32.mrb[0].mxu0
  %v1174 = vadd.f32 %v1077, %v1173
  %v1175 = vpop.f32.mrb[0].mxu0
  %1176 = vmatprep.mubr.bf16.mxu0 %v475
  %1177 = vmatmul.mubr.bf16.gmra.mrb[0].mxu0 %v474
  %v1178 = vpop.f32.mrb[0].mxu0
  %v1179 = vadd.f32 %v1082, %v1178
  %v1180 = vpop.f32.mrb[0].mxu0
  %v1181 = vpop.f32.mrb[0].mxu0
  %v1182 = vadd.f32 %v1085, %v1181
  %v1183 = vpop.f32.mrb[0].mxu0
  %1184 = vmatprep.mubr.bf16.mxu0 %v484
  %1185 = vmatmul.mubr.bf16.gmra.mrb[0].mxu0 %v483
  %v1186 = vpop.f32.mrb[0].mxu0
  %v1187 = vadd.f32 %v1090, %v1186
  %v1188 = vpop.f32.mrb[0].mxu0
  %v1189 = vpop.f32.mrb[0].mxu0
  %v1190 = vadd.f32 %v1093, %v1189
  %v1191 = vpop.f32.mrb[0].mxu0
  %1192 = vmatprep.mubr.bf16.mxu0 %v493
  %1193 = vmatmul.mubr.bf16.gmra.mrb[0].mxu0 %v492
  %v1194 = vpop.f32.mrb[0].mxu0
  %v1195 = vadd.f32 %v1098, %v1194
  %v1196 = vpop.f32.mrb[0].mxu0
  %v1197 = vpop.f32.mrb[0].mxu0
  %v1198 = vadd.f32 %v1101, %v1197
  %v1199 = vpop.f32.mrb[0].mxu0
  %1200 = vmatprep.mubr.bf16.mxu0 %v502
  %1201 = vmatmul.mubr.bf16.gmra.mrb[0].mxu0 %v501
  %v1202 = vpop.f32.mrb[0].mxu0
  %v1203 = vadd.f32 %v1106, %v1202
  %v1204 = vpop.f32.mrb[0].mxu0
  %v1205 = vpop.f32.mrb[0].mxu0
  %v1206 = vadd.f32 %v1109, %v1205
  %v1207 = vpop.f32.mrb[0].mxu0
  %1208 = vmatprep.mubr.bf16.mxu0 %v511
  %1209 = vmatmul.mubr.bf16.gmra.mrb[0].mxu0 %v510
  %v1210 = vpop.f32.mrb[0].mxu0
  %v1211 = vadd.f32 %v1114, %v1210
  %v1212 = vpop.f32.mrb[0].mxu0
  %v1213 = vpop.f32.mrb[0].mxu0
  %v1214 = vadd.f32 %v1117, %v1213
  %v1215 = vpop.f32.mrb[0].mxu0
  %1216 = vmatprep.mubr.bf16.mxu0 %v520
  %1217 = vmatmul.mubr.bf16.gmra.mrb[0].mxu0 %v519
  %v1218 = vpop.f32.mrb[0].mxu0
  %v1219 = vadd.f32 %v1122, %v1218
  %v1220 = vpop.f32.mrb[0].mxu0
  %v1221 = vpop.f32.mrb[0].mxu0
  %v1222 = vadd.f32 %v1125, %v1221
  %v1223 = vpop.f32.mrb[0].mxu0
  %1224 = vmatprep.mubr.bf16.mxu0 %v529
  %1225 = vmatmul.mubr.bf16.gmra.mrb[0].mxu0 %v528
  %v1226 = vpop.f32.mrb[0].mxu0
  %v1227 = vadd.f32 %v1130, %v1226
  %v1228 = vpop.f32.mrb[0].mxu0
  %v1229 = vpop.f32.mrb[0].mxu0
  %v1230 = vadd.f32 %v1133, %v1229
  %v1231 = vpop.f32.mrb[0].mxu0
  %1232 = vdwg.mxu0
  %1233 = vmatprep.subr.bf16.mxu0 0
  %1234 = vmatpush1.bf16.msra.mxu0 %v927
  %1235 = vmatprep.subr.bf16.mxu0 0
  %1236 = vmatpush1.bf16.msra.mxu0 %v928
  %1237 = vmatprep.subr.bf16.mxu0 0
  %1238 = vmatpush1.bf16.msra.mxu0 %v929
  %1239 = vmatprep.subr.bf16.mxu0 0
  %1240 = vmatpush1.bf16.msra.mxu0 %v930
  %1241 = vmatprep.subr.bf16.mxu0 0
  %1242 = vmatpush1.bf16.msra.mxu0 %v931
  %1243 = vmatprep.subr.bf16.mxu0 0
  %1244 = vmatpush1.bf16.msra.mxu0 %v932
  %1245 = vmatprep.subr.bf16.mxu0 0
  %1246 = vmatpush1.bf16.msra.mxu0 %v933
  %1247 = vmatprep.subr.bf16.mxu0 0
  %1248 = vmatpush1.bf16.msra.mxu0 %v934
  %1249 = vmatprep.subr.bf16.mxu0 0
  %1250 = vmatpush1.bf16.msra.mxu0 %v935
  %1251 = vmatprep.subr.bf16.mxu0 0
  %1252 = vmatpush1.bf16.msra.mxu0 %v936
  %1253 = vmatprep.subr.bf16.mxu0 0
  %1254 = vmatpush1.bf16.msra.mxu0 %v937
  %1255 = vmatprep.subr.bf16.mxu0 0
  %1256 = vmatpush1.bf16.msra.mxu0 %v938
  %1257 = vmatprep.subr.bf16.mxu0 0
  %1258 = vmatpush1.bf16.msra.mxu0 %v939
  %1259 = vmatprep.subr.bf16.mxu0 0
  %1260 = vmatpush1.bf16.msra.mxu0 %v940
  %1261 = vmatprep.subr.bf16.mxu0 0
  %1262 = vmatpush1.bf16.msra.mxu0 %v941
  %1263 = vmatprep.subr.bf16.mxu0 0
  %1264 = vmatpush1.bf16.msra.mxu0 %v942
  %1265 = vmatprep.mubr.bf16.mxu0 %v468
  %1266 = vmatmul.mubr.bf16.gmra.mrb[0].mxu0 %v467
  %v1267 = vpop.f32.mrb[0].mxu0
  %v1268 = vadd.f32 %v1171, %v1267
  %v1269 = vpop.f32.mrb[0].mxu0
  %v1270 = vpop.f32.mrb[0].mxu0
  %v1271 = vadd.f32 %v1174, %v1270
  %v1272 = vpop.f32.mrb[0].mxu0
  %1273 = vmatprep.mubr.bf16.mxu0 %v477
  %1274 = vmatmul.mubr.bf16.gmra.mrb[0].mxu0 %v476
  %v1275 = vpop.f32.mrb[0].mxu0
  %v1276 = vadd.f32 %v1179, %v1275
  %v1277 = vpop.f32.mrb[0].mxu0
  %v1278 = vpop.f32.mrb[0].mxu0
  %v1279 = vadd.f32 %v1182, %v1278
  %v1280 = vpop.f32.mrb[0].mxu0
  %1281 = vmatprep.mubr.bf16.mxu0 %v486
  %1282 = vmatmul.mubr.bf16.gmra.mrb[0].mxu0 %v485
  %v1283 = vpop.f32.mrb[0].mxu0
  %v1284 = vadd.f32 %v1187, %v1283
  %v1285 = vpop.f32.mrb[0].mxu0
  %v1286 = vpop.f32.mrb[0].mxu0
  %v1287 = vadd.f32 %v1190, %v1286
  %v1288 = vpop.f32.mrb[0].mxu0
  %1289 = vmatprep.mubr.bf16.mxu0 %v495
  %1290 = vmatmul.mubr.bf16.gmra.mrb[0].mxu0 %v494
  %v1291 = vpop.f32.mrb[0].mxu0
  %v1292 = vadd.f32 %v1195, %v1291
  %v1293 = vpop.f32.mrb[0].mxu0
  %v1294 = vpop.f32.mrb[0].mxu0
  %v1295 = vadd.f32 %v1198, %v1294
  %v1296 = vpop.f32.mrb[0].mxu0
  %1297 = vmatprep.mubr.bf16.mxu0 %v504
  %1298 = vmatmul.mubr.bf16.gmra.mrb[0].mxu0 %v503
  %v1299 = vpop.f32.mrb[0].mxu0
  %v1300 = vadd.f32 %v1203, %v1299
  %v1301 = vpop.f32.mrb[0].mxu0
  %v1302 = vpop.f32.mrb[0].mxu0
  %v1303 = vadd.f32 %v1206, %v1302
  %v1304 = vpop.f32.mrb[0].mxu0
  %1305 = vmatprep.mubr.bf16.mxu0 %v513
  %1306 = vmatmul.mubr.bf16.gmra.mrb[0].mxu0 %v512
  %v1307 = vpop.f32.mrb[0].mxu0
  %v1308 = vadd.f32 %v1211, %v1307
  %v1309 = vpop.f32.mrb[0].mxu0
  %v1310 = vpop.f32.mrb[0].mxu0
  %v1311 = vadd.f32 %v1214, %v1310
  %v1312 = vpop.f32.mrb[0].mxu0
  %1313 = vmatprep.mubr.bf16.mxu0 %v522
  %1314 = vmatmul.mubr.bf16.gmra.mrb[0].mxu0 %v521
  %v1315 = vpop.f32.mrb[0].mxu0
  %v1316 = vadd.f32 %v1219, %v1315
  %v1317 = vpop.f32.mrb[0].mxu0
  %v1318 = vpop.f32.mrb[0].mxu0
  %v1319 = vadd.f32 %v1222, %v1318
  %v1320 = vpop.f32.mrb[0].mxu0
  %1321 = vmatprep.mubr.bf16.mxu0 %v531
  %1322 = vmatmul.mubr.bf16.gmra.mrb[0].mxu0 %v530
  %v1323 = vpop.f32.mrb[0].mxu0
  %v1324 = vadd.f32 %v1227, %v1323
  %v1325 = vpop.f32.mrb[0].mxu0
  %v1326 = vpop.f32.mrb[0].mxu0
  %v1327 = vadd.f32 %v1230, %v1326
  %v1328 = vpop.f32.mrb[0].mxu0
  %1329 = vdwg.mxu0
  %1330 = vmatprep.subr.bf16.mxu0 0
  %1331 = vmatpush1.bf16.msra.mxu0 %v943
  %1332 = vmatprep.subr.bf16.mxu0 0
  %1333 = vmatpush1.bf16.msra.mxu0 %v944
  %1334 = vmatprep.subr.bf16.mxu0 0
  %1335 = vmatpush1.bf16.msra.mxu0 %v945
  %1336 = vmatprep.subr.bf16.mxu0 0
  %1337 = vmatpush1.bf16.msra.mxu0 %v946
  %1338 = vmatprep.subr.bf16.mxu0 0
  %1339 = vmatpush1.bf16.msra.mxu0 %v947
  %1340 = vmatprep.subr.bf16.mxu0 0
  %1341 = vmatpush1.bf16.msra.mxu0 %v948
  %1342 = vmatprep.subr.bf16.mxu0 0
  %1343 = vmatpush1.bf16.msra.mxu0 %v949
  %1344 = vmatprep.subr.bf16.mxu0 0
  %1345 = vmatpush1.bf16.msra.mxu0 %v950
  %1346 = vmatprep.subr.bf16.mxu0 0
  %1347 = vmatpush1.bf16.msra.mxu0 %v951
  %1348 = vmatprep.subr.bf16.mxu0 0
  %1349 = vmatpush1.bf16.msra.mxu0 %v952
  %1350 = vmatprep.subr.bf16.mxu0 0
  %1351 = vmatpush1.bf16.msra.mxu0 %v953
  %1352 = vmatprep.subr.bf16.mxu0 0
  %1353 = vmatpush1.bf16.msra.mxu0 %v954
  %1354 = vmatprep.subr.bf16.mxu0 0
  %1355 = vmatpush1.bf16.msra.mxu0 %v955
  %1356 = vmatprep.subr.bf16.mxu0 0
  %1357 = vmatpush1.bf16.msra.mxu0 %v956
  %1358 = vmatprep.subr.bf16.mxu0 0
  %1359 = vmatpush1.bf16.msra.mxu0 %v957
  %1360 = vmatprep.subr.bf16.mxu0 0
  %1361 = vmatpush1.bf16.msra.mxu0 %v958
  %1362 = vmatprep.mubr.bf16.mxu0 %v470
  %1363 = vmatmul.mubr.bf16.gmra.mrb[0].mxu0 %v469
  %v1364 = vpop.f32.mrb[0].mxu0
  %v1365 = vadd.f32 %v1268, %v1364
  %v1366 = vpop.f32.mrb[0].mxu0
  %v1367 = vpop.f32.mrb[0].mxu0
  %v1368 = vadd.f32 %v1271, %v1367
  %v1369 = vpop.f32.mrb[0].mxu0
  %1370 = vmatprep.mubr.bf16.mxu0 %v479
  %1371 = vmatmul.mubr.bf16.gmra.mrb[0].mxu0 %v478
  %v1372 = vpop.f32.mrb[0].mxu0
  %v1373 = vadd.f32 %v1276, %v1372
  %v1374 = vpop.f32.mrb[0].mxu0
  %v1375 = vpop.f32.mrb[0].mxu0
  %v1376 = vadd.f32 %v1279, %v1375
  %v1377 = vpop.f32.mrb[0].mxu0
  %1378 = vmatprep.mubr.bf16.mxu0 %v488
  %1379 = vmatmul.mubr.bf16.gmra.mrb[0].mxu0 %v487
  %v1380 = vpop.f32.mrb[0].mxu0
  %v1381 = vadd.f32 %v1284, %v1380
  %v1382 = vpop.f32.mrb[0].mxu0
  %v1383 = vpop.f32.mrb[0].mxu0
  %v1384 = vadd.f32 %v1287, %v1383
  %v1385 = vpop.f32.mrb[0].mxu0
  %1386 = vmatprep.mubr.bf16.mxu0 %v497
  %1387 = vmatmul.mubr.bf16.gmra.mrb[0].mxu0 %v496
  %v1388 = vpop.f32.mrb[0].mxu0
  %v1389 = vadd.f32 %v1292, %v1388
  %v1390 = vpop.f32.mrb[0].mxu0
  %v1391 = vpop.f32.mrb[0].mxu0
  %v1392 = vadd.f32 %v1295, %v1391
  %v1393 = vpop.f32.mrb[0].mxu0
  %1394 = vmatprep.mubr.bf16.mxu0 %v506
  %1395 = vmatmul.mubr.bf16.gmra.mrb[0].mxu0 %v505
  %v1396 = vpop.f32.mrb[0].mxu0
  %v1397 = vadd.f32 %v1300, %v1396
  %v1398 = vpop.f32.mrb[0].mxu0
  %v1399 = vpop.f32.mrb[0].mxu0
  %v1400 = vadd.f32 %v1303, %v1399
  %v1401 = vpop.f32.mrb[0].mxu0
  %1402 = vmatprep.mubr.bf16.mxu0 %v515
  %1403 = vmatmul.mubr.bf16.gmra.mrb[0].mxu0 %v514
  %v1404 = vpop.f32.mrb[0].mxu0
  %v1405 = vadd.f32 %v1308, %v1404
  %v1406 = vpop.f32.mrb[0].mxu0
  %v1407 = vpop.f32.mrb[0].mxu0
  %v1408 = vadd.f32 %v1311, %v1407
  %v1409 = vpop.f32.mrb[0].mxu0
  %1410 = vmatprep.mubr.bf16.mxu0 %v524
  %1411 = vmatmul.mubr.bf16.gmra.mrb[0].mxu0 %v523
  %v1412 = vpop.f32.mrb[0].mxu0
  %v1413 = vadd.f32 %v1316, %v1412
  %v1414 = vpop.f32.mrb[0].mxu0
  %v1415 = vpop.f32.mrb[0].mxu0
  %v1416 = vadd.f32 %v1319, %v1415
  %v1417 = vpop.f32.mrb[0].mxu0
  %1418 = vmatprep.mubr.bf16.mxu0 %v533
  %1419 = vmatmul.mubr.bf16.gmra.mrb[0].mxu0 %v532
  %v1420 = vpop.f32.mrb[0].mxu0
  %v1421 = vadd.f32 %v1324, %v1420
  %v1422 = vpop.f32.mrb[0].mxu0
  %v1423 = vpop.f32.mrb[0].mxu0
  %v1424 = vadd.f32 %v1327, %v1423
  %v1425 = vpop.f32.mrb[0].mxu0
  %1426 = vdwg.mxu0
  %1427 = vmatprep.subr.bf16.mxu0 0
  %1428 = vmatpush1.bf16.msra.mxu0 %v959
  %1429 = vmatprep.subr.bf16.mxu0 0
  %1430 = vmatpush1.bf16.msra.mxu0 %v960
  %1431 = vmatprep.subr.bf16.mxu0 0
  %1432 = vmatpush1.bf16.msra.mxu0 %v961
  %1433 = vmatprep.subr.bf16.mxu0 0
  %1434 = vmatpush1.bf16.msra.mxu0 %v962
  %1435 = vmatprep.subr.bf16.mxu0 0
  %1436 = vmatpush1.bf16.msra.mxu0 %v963
  %1437 = vmatprep.subr.bf16.mxu0 0
  %1438 = vmatpush1.bf16.msra.mxu0 %v964
  %1439 = vmatprep.subr.bf16.mxu0 0
  %1440 = vmatpush1.bf16.msra.mxu0 %v965
  %1441 = vmatprep.subr.bf16.mxu0 0
  %1442 = vmatpush1.bf16.msra.mxu0 %v966
  %1443 = vmatprep.subr.bf16.mxu0 0
  %1444 = vmatpush1.bf16.msra.mxu0 0
  %1445 = vmatprep.subr.bf16.mxu0 0
  %1446 = vmatpush1.bf16.msra.mxu0 0
  %1447 = vmatprep.subr.bf16.mxu0 0
  %1448 = vmatpush1.bf16.msra.mxu0 0
  %1449 = vmatprep.subr.bf16.mxu0 0
  %1450 = vmatpush1.bf16.msra.mxu0 0
  %1451 = vmatprep.subr.bf16.mxu0 0
  %1452 = vmatpush1.bf16.msra.mxu0 0
  %1453 = vmatprep.subr.bf16.mxu0 0
  %1454 = vmatpush1.bf16.msra.mxu0 0
  %1455 = vmatprep.subr.bf16.mxu0 0
  %1456 = vmatpush1.bf16.msra.mxu0 0
  %1457 = vmatprep.subr.bf16.mxu0 0
  %1458 = vmatpush1.bf16.msra.mxu0 0
  %1459 = vmatprep.mubr.bf16.mxu0 0
  %1460 = vmatmul.mubr.bf16.gmra.mrb[0].mxu0 %v471
  %v1461 = vpop.f32.mrb[0].mxu0
  %v1462 = vadd.f32 %v1365, %v1461
  %v1463 = vpop.f32.mrb[0].mxu0
  %v1464 = vpop.f32.mrb[0].mxu0
  %v1465 = vadd.f32 %v1368, %v1464
  %v1466 = vpop.f32.mrb[0].mxu0
  %1467 = vmatprep.mubr.bf16.mxu0 0
  %1468 = vmatmul.mubr.bf16.gmra.mrb[0].mxu0 %v480
  %v1469 = vpop.f32.mrb[0].mxu0
  %v1470 = vadd.f32 %v1373, %v1469
  %v1471 = vpop.f32.mrb[0].mxu0
  %v1472 = vpop.f32.mrb[0].mxu0
  %v1473 = vadd.f32 %v1376, %v1472
  %v1474 = vpop.f32.mrb[0].mxu0
  %1475 = vmatprep.mubr.bf16.mxu0 0
  %1476 = vmatmul.mubr.bf16.gmra.mrb[0].mxu0 %v489
  %v1477 = vpop.f32.mrb[0].mxu0
  %v1478 = vadd.f32 %v1381, %v1477
  %v1479 = vpop.f32.mrb[0].mxu0
  %v1480 = vpop.f32.mrb[0].mxu0
  %v1481 = vadd.f32 %v1384, %v1480
  %v1482 = vpop.f32.mrb[0].mxu0
  %1483 = vmatprep.mubr.bf16.mxu0 0
  %1484 = vmatmul.mubr.bf16.gmra.mrb[0].mxu0 %v498
  %v1485 = vpop.f32.mrb[0].mxu0
  %v1486 = vadd.f32 %v1389, %v1485
  %v1487 = vpop.f32.mrb[0].mxu0
  %v1488 = vpop.f32.mrb[0].mxu0
  %v1489 = vadd.f32 %v1392, %v1488
  %v1490 = vpop.f32.mrb[0].mxu0
  %1491 = vmatprep.mubr.bf16.mxu0 0
  %1492 = vmatmul.mubr.bf16.gmra.mrb[0].mxu0 %v507
  %v1493 = vpop.f32.mrb[0].mxu0
  %v1494 = vadd.f32 %v1397, %v1493
  %v1495 = vpop.f32.mrb[0].mxu0
  %v1496 = vpop.f32.mrb[0].mxu0
  %v1497 = vadd.f32 %v1400, %v1496
  %v1498 = vpop.f32.mrb[0].mxu0
  %1499 = vmatprep.mubr.bf16.mxu0 0
  %1500 = vmatmul.mubr.bf16.gmra.mrb[0].mxu0 %v516
  %v1501 = vpop.f32.mrb[0].mxu0
  %v1502 = vadd.f32 %v1405, %v1501
  %v1503 = vpop.f32.mrb[0].mxu0
  %v1504 = vpop.f32.mrb[0].mxu0
  %v1505 = vadd.f32 %v1408, %v1504
  %v1506 = vpop.f32.mrb[0].mxu0
  %1507 = vmatprep.mubr.bf16.mxu0 0
  %1508 = vmatmul.mubr.bf16.gmra.mrb[0].mxu0 %v525
  %v1509 = vpop.f32.mrb[0].mxu0
  %v1510 = vadd.f32 %v1413, %v1509
  %v1511 = vpop.f32.mrb[0].mxu0
  %v1512 = vpop.f32.mrb[0].mxu0
  %v1513 = vadd.f32 %v1416, %v1512
  %v1514 = vpop.f32.mrb[0].mxu0
  %1515 = vmatprep.mubr.bf16.mxu0 0
  %1516 = vmatmul.mubr.bf16.gmra.mrb[0].mxu0 %v534
  %v1517 = vpop.f32.mrb[0].mxu0
  %v1518 = vadd.f32 %v1421, %v1517
  %v1519 = vpop.f32.mrb[0].mxu0
  %v1520 = vpop.f32.mrb[0].mxu0
  %v1521 = vadd.f32 %v1424, %v1520
  %v1522 = vpop.f32.mrb[0].mxu0
  %1523 = vdwg.mxu0
  %v1524 = vld [vmem:[%s2] sm:$0xff]
  %v1525 = vld [vmem:[%s2 + $0x8] sm:$0xff]
  %v1526 = vld [vmem:[%s2 + $0x10] sm:$0xff]
  %v1527 = vld [vmem:[%s2 + $0x18] sm:$0xff]
  %v1528 = vld [vmem:[%s2 + $0x20] sm:$0xff]
  %v1529 = vld [vmem:[%s2 + $0x28] sm:$0xff]
  %v1530 = vld [vmem:[%s2 + $0x30] sm:$0xff]
  %v1531 = vld [vmem:[%s2 + $0x38] sm:$0xff]
  %v1532 = vld [vmem:[%s2 + $0x40] sm:$0xff]
  %v1533 = vld [vmem:[%s2 + $0x48] sm:$0xff]
  %v1534 = vld [vmem:[%s2 + $0x50] sm:$0xff]
  %v1535 = vld [vmem:[%s2 + $0x58] sm:$0xff]
  %v1536 = vld [vmem:[%s2 + $0x60] sm:$0xff]
  %v1537 = vld [vmem:[%s2 + $0x68] sm:$0xff]
  %v1538 = vld [vmem:[%s2 + $0x70] sm:$0xff]
  %v1539 = vld [vmem:[%s2 + $0x78] sm:$0xff]
  %vm1540 = vcmp.gt.f32.partialorder %v1524, 0.5
  %vm1541 = vcmp.gt.f32.partialorder %v1525, 0.5
  %vm1542 = vcmp.gt.f32.partialorder %v1526, 0.5
  %vm1543 = vcmp.gt.f32.partialorder %v1527, 0.5
  %vm1544 = vcmp.gt.f32.partialorder %v1528, 0.5
  %vm1545 = vcmp.gt.f32.partialorder %v1529, 0.5
  %vm1546 = vcmp.gt.f32.partialorder %v1530, 0.5
  %vm1547 = vcmp.gt.f32.partialorder %v1531, 0.5
  %vm1548 = vcmp.gt.f32.partialorder %v1532, 0.5
  %vm1549 = vcmp.gt.f32.partialorder %v1533, 0.5
  %vm1550 = vcmp.gt.f32.partialorder %v1534, 0.5
  %vm1551 = vcmp.gt.f32.partialorder %v1535, 0.5
  %vm1552 = vcmp.gt.f32.partialorder %v1536, 0.5
  %vm1553 = vcmp.gt.f32.partialorder %v1537, 0.5
  %vm1554 = vcmp.gt.f32.partialorder %v1538, 0.5
  %vm1555 = vcmp.gt.f32.partialorder %v1539, 0.5
  %1557 = vset.pattern.permute.xlu0 0
  %1558 = vperm.xlu0 %1557, %v1462
  %v1559 = vpop.permute.xlu0 %1558
  %1562 = vset.pattern.permute.xlu0 0
  %1563 = vperm.xlu0 %1562, %v1465
  %v1564 = vpop.permute.xlu0 %1563
  %1567 = vset.pattern.permute.xlu0 0
  %1568 = vperm.xlu0 %1567, %v1470
  %v1569 = vpop.permute.xlu0 %1568
  %1572 = vset.pattern.permute.xlu0 0
  %1573 = vperm.xlu0 %1572, %v1473
  %v1574 = vpop.permute.xlu0 %1573
  %1577 = vset.pattern.permute.xlu0 0
  %1578 = vperm.xlu0 %1577, %v1478
  %v1579 = vpop.permute.xlu0 %1578
  %1582 = vset.pattern.permute.xlu0 0
  %1583 = vperm.xlu0 %1582, %v1481
  %v1584 = vpop.permute.xlu0 %1583
  %1587 = vset.pattern.permute.xlu0 0
  %1588 = vperm.xlu0 %1587, %v1486
  %v1589 = vpop.permute.xlu0 %1588
  %1592 = vset.pattern.permute.xlu0 0
  %1593 = vperm.xlu0 %1592, %v1489
  %v1594 = vpop.permute.xlu0 %1593
  %1597 = vset.pattern.permute.xlu0 0
  %1598 = vperm.xlu0 %1597, %v1494
  %v1599 = vpop.permute.xlu0 %1598
  %1602 = vset.pattern.permute.xlu0 0
  %1603 = vperm.xlu0 %1602, %v1497
  %v1604 = vpop.permute.xlu0 %1603
  %1607 = vset.pattern.permute.xlu0 0
  %1608 = vperm.xlu0 %1607, %v1502
  %v1609 = vpop.permute.xlu0 %1608
  %1612 = vset.pattern.permute.xlu0 0
  %1613 = vperm.xlu0 %1612, %v1505
  %v1614 = vpop.permute.xlu0 %1613
  %1617 = vset.pattern.permute.xlu0 0
  %1618 = vperm.xlu0 %1617, %v1510
  %v1619 = vpop.permute.xlu0 %1618
  %1622 = vset.pattern.permute.xlu0 0
  %1623 = vperm.xlu0 %1622, %v1513
  %v1624 = vpop.permute.xlu0 %1623
  %1627 = vset.pattern.permute.xlu0 0
  %1628 = vperm.xlu0 %1627, %v1518
  %v1629 = vpop.permute.xlu0 %1628
  %1632 = vset.pattern.permute.xlu0 0
  %1633 = vperm.xlu0 %1632, %v1521
  %v1634 = vpop.permute.xlu0 %1633
  %v1636 = vsel %vm1540, %v1559, -inf
  %v1637 = vsel %vm1541, %v1564, -inf
  %v1638 = vsel %vm1542, %v1569, -inf
  %v1639 = vsel %vm1543, %v1574, -inf
  %v1640 = vsel %vm1544, %v1579, -inf
  %v1641 = vsel %vm1545, %v1584, -inf
  %v1642 = vsel %vm1546, %v1589, -inf
  %v1643 = vsel %vm1547, %v1594, -inf
  %v1644 = vsel %vm1548, %v1599, -inf
  %v1645 = vsel %vm1549, %v1604, -inf
  %v1646 = vsel %vm1550, %v1609, -inf
  %v1647 = vsel %vm1551, %v1614, -inf
  %v1648 = vsel %vm1552, %v1619, -inf
  %v1649 = vsel %vm1553, %v1624, -inf
  %v1650 = vsel %vm1554, %v1629, -inf
  %v1651 = vsel %vm1555, %v1634, -inf
  %v1652 = vmax.f32 %v1636, %v1640
  %v1653 = vmax.f32 %v1637, %v1641
  %v1654 = vmax.f32 %v1638, %v1642
  %v1655 = vmax.f32 %v1639, %v1643
  %v1656 = vmax.f32 %v1652, %v1644
  %v1657 = vmax.f32 %v1653, %v1645
  %v1658 = vmax.f32 %v1654, %v1646
  %v1659 = vmax.f32 %v1655, %v1647
  %v1660 = vmax.f32 %v1656, %v1648
  %v1661 = vmax.f32 %v1657, %v1649
  %v1662 = vmax.f32 %v1658, %v1650
  %v1663 = vmax.f32 %v1659, %v1651
  %v1664 = vmax.f32 %v1660, %v1661
  %v1665 = vmax.f32 %v1662, %v1663
  %v1666 = vmax.f32 %v1664, %v1665
  %v1667 = vrot.slane %v1666, 4
  %v1668 = vmax.f32 %v1666, %v1667
  %v1669 = vrot.slane %v1668, 2
  %v1670 = vmax.f32 %v1668, %v1669
  %v1671 = vrot.slane %v1670, 1
  %v1672 = vmax.f32 %v1670, %v1671
  %1673 = vst [vmem:[%s3] sm:$0x1] %v1672
  // Predicated region
  $region14: #{_lambda_.11} parent=0 // pred_check
    _
  $region15: #{_lambda_.11} parent=0 // pred_check_branch
    %1675 = sbr.rel (0) target = $region17
  $region16: #{_lambda_.11} parent=0 // pred_region
    _
  $region17: #{_lambda_.11} parent=0 // pred_fallthru
    _
  // Predicated region
  $region18: #{_lambda_.11} parent=0 // pred_check
    _
  $region19: #{_lambda_.11} parent=0 // pred_check_branch
    %1677 = sbr.rel (0) target = $region21
  $region20: #{_lambda_.11} parent=0 // pred_region
    _
  $region21: #{_lambda_.11} parent=0 // pred_fallthru
    _

</llo_original>
